<compile_context>
chip_gen: v5e
topology: v5e:2x2
jax: 0.10.0
libtpu: 0.0.40
codegen_flags: <defaults>
</compile_context>

<pallas_src>
import math
import functools

import jax
import jax.numpy as jnp
from jax.experimental import pallas as pl
from jax.experimental.pallas import tpu as pltpu


# ----------------------------------------------------------------------------
# Fused Pallas kernel
# ----------------------------------------------------------------------------

def _fused_actor_kernel(
        xee_ref, xeo_ref, xoe_ref, xoo_ref,
        wc1_ref, bc1_ref, wc2_ref, bc2_ref, wc3_ref, bc3_ref, wc4_ref, bc4_ref,
        wfc_ref, bfc_ref, g_ref, be_ref,
        wt1_ref, bt1_ref, wt2_ref, bt2_ref,
        wmu_ref, bmu_ref, wls_ref, bls_ref,
        noise_ref,
        out_ref,
        act1_ref, act2_ref, act3_ref, act4_ref, z_ref,
        *, batch, spatial, log_std_min, log_std_max):
    nf = wc1_ref.shape[1]                      # conv channels (8)
    A = wmu_ref.shape[1]                       # action dim
    w_half = spatial // 2                      # stored activation width (16)
    oh1 = (spatial - 3) // 2 + 1               # 15
    oh2, oh3, oh4 = oh1 - 2, oh1 - 4, oh1 - 6  # 13, 11, 9
    n1 = oh1 * w_half                          # conv1 output lanes (240)
    act_lanes = act4_ref.shape[1]              # per-channel lane stride (256)

    # Zero all scratch / output padding once: overrun reads of the full-width
    # trick then hit zeros (finite), and garbage lanes are killed by zero FC
    # weight rows.
    for ref in (act1_ref, act2_ref, act3_ref, act4_ref, z_ref):
        ref[...] = jnp.zeros(ref.shape, jnp.float32)
    out_ref[...] = jnp.zeros(out_ref.shape, jnp.float32)

    # Hoist weight / bias loads out of the batch loop (no per-iteration
    # re-broadcasts).
    wc1 = [wc1_ref[k] for k in range(9)]
    wc2 = [wc2_ref[k] for k in range(9)]
    wc3 = [wc3_ref[k] for k in range(9)]
    wc4 = [wc4_ref[k] for k in range(9)]
    bc1, bc2, bc3, bc4 = bc1_ref[...], bc2_ref[...], bc3_ref[...], bc4_ref[...]
    bfc = bfc_ref[...]

    planes = (xee_ref, xeo_ref, xoe_ref, xoo_ref)   # [row parity][col parity]

    def conv_s1(src_ref, dst_ref, wlist, bias, oh_out):
        # 3x3 stride-1 valid conv, activations kept as (C, H*w_half):
        # for tap (i, j) the needed inputs are a contiguous lane slice.
        n = oh_out * w_half
        acc = jnp.zeros((nf, n), jnp.float32)
        for i in range(3):
            for j in range(3):
                acc = acc + jnp.dot(wlist[i * 3 + j],
                                    src_ref[:, pl.ds(i * w_half + j, n)],
                                    preferred_element_type=jnp.float32)
        dst_ref[:, 0:n] = jnp.maximum(acc + bias, 0.0)

    for b in range(batch):
        # ---- conv1: 3x3, stride 2, obs/255 folded into a single post-scale --
        # Parity planes make every tap a contiguous lane slice of a plane, so
        # the stride-2 output is produced directly (no wide buffer/compaction).
        acc = jnp.zeros((nf, n1), jnp.float32)
        for i in range(3):
            for j in range(3):
                src = planes[(i % 2) * 2 + (j % 2)]
                off = (i // 2) * w_half + (j // 2)
                acc = acc + jnp.dot(wc1[i * 3 + j],
                                    src[b, :, pl.ds(off, n1)],
                                    preferred_element_type=jnp.float32)
        act1_ref[:, 0:n1] = jnp.maximum(acc * (1.0 / 255.0) + bc1, 0.0)

        # ---- conv2..conv4: 3x3 stride 1 ------------------------------------
        conv_s1(act1_ref, act2_ref, wc2, bc2, oh2)
        conv_s1(act2_ref, act3_ref, wc3, bc3, oh3)
        conv_s1(act3_ref, act4_ref, wc4, bc4, oh4)

        # ---- encoder FC (garbage/pad lanes have zero weight rows) -----------
        zb = bfc
        for c in range(nf):
            zb = zb + jnp.dot(act4_ref[pl.ds(c, 1), :],
                              wfc_ref[pl.ds(c * act_lanes, act_lanes), :],
                              preferred_element_type=jnp.float32)
        z_ref[pl.ds(b, 1), :] = zb

    # ---- LayerNorm(eps=1e-5, biased var) + tanh on the padded (8, F) batch --
    y = z_ref[...]
    mean = jnp.mean(y, axis=-1, keepdims=True)
    var = jnp.mean(jnp.square(y - mean), axis=-1, keepdims=True)
    z = jnp.tanh((y - mean) * jax.lax.rsqrt(var + 1e-5) * g_ref[...] + be_ref[...])

    # ---- actor trunk + Gaussian sampling + tanh squash -----------------------
    h1 = jnp.maximum(jnp.dot(z, wt1_ref[...],
                             preferred_element_type=jnp.float32) + bt1_ref[...], 0.0)
    h2 = jnp.maximum(jnp.dot(h1, wt2_ref[...],
                             preferred_element_type=jnp.float32) + bt2_ref[...], 0.0)
    mu = jnp.dot(h2, wmu_ref[...], preferred_element_type=jnp.float32) + bmu_ref[...]
    ls = jnp.dot(h2, wls_ref[...], preferred_element_type=jnp.float32) + bls_ref[...]
    ls = jnp.tanh(ls)
    ls = log_std_min + 0.5 * (log_std_max - log_std_min) * (ls + 1.0)

    noise = noise_ref[...]
    pi_pre = mu + noise * jnp.exp(ls)

    # gaussian_logprob(noise, log_std)
    log_pi = (jnp.sum(-0.5 * jnp.square(noise) - ls, axis=-1, keepdims=True)
              - 0.5 * math.log(2.0 * math.pi) * A)

    # squash(mu, pi, log_pi)
    mu_t = jnp.tanh(mu)
    pi_t = jnp.tanh(pi_pre)
    log_pi = log_pi - jnp.sum(
        jnp.log(jnp.maximum(1.0 - jnp.square(pi_t), 0.0) + 1e-6),
        axis=-1, keepdims=True)

    # ---- packed lane-dense output: [mu | pi | log_std | log_pi | 0 pad] ------
    out_ref[:, 0:A] = mu_t
    out_ref[:, A:2 * A] = pi_t
    out_ref[:, 2 * A:3 * A] = ls
    out_ref[:, 3 * A:3 * A + 1] = log_pi


# ----------------------------------------------------------------------------
# Parameter init (kernel-ready layouts) + a pure-JAX reference
# ----------------------------------------------------------------------------

def init_params(key, state_cc, num_filters, feature_dim, hidden_dim, action_dim,
                spatial):
    keys = jax.random.split(key, 12)
    p, raw = {}, {}
    chans = [state_cc] + [num_filters] * 4
    strides = [2, 1, 1, 1]
    out = spatial
    for li in range(4):
        cin, cout = chans[li], chans[li + 1]
        w = jax.random.normal(keys[li], (3, 3, cin, cout), jnp.float32) / math.sqrt(9 * cin)
        b = jnp.zeros((cout,), jnp.float32)
        raw[f"conv{li + 1}"] = (w, b)
        # kernel layout: row i*3+j holds K[i, j].T of shape (cout, cin)
        p[f"wc{li + 1}"] = jnp.transpose(w, (0, 1, 3, 2)).reshape(9, cout, cin)
        p[f"bc{li + 1}"] = b.reshape(cout, 1)
        out = (out - 3) // strides[li] + 1

    flat_dim = out * out * num_filters                 # (h, w, c) flatten order
    w_half = spatial // 2
    act_lanes = 256
    assert out * w_half + 2 * w_half + 2 <= act_lanes

    def lin(k, din, dout):
        w = jax.random.normal(k, (din, dout), jnp.float32) / math.sqrt(din)
        return w, jnp.zeros((1, dout), jnp.float32)

    wfc_small, bfc = lin(keys[4], flat_dim, feature_dim)
    # Embed FC rows into the kernel's padded activation layout:
    #   big row = c*act_lanes + h*w_half + w ; garbage/pad rows stay zero.
    hh, ww, cc = jnp.meshgrid(jnp.arange(out), jnp.arange(out),
                              jnp.arange(num_filters), indexing="ij")
    small_rows = ((hh * out + ww) * num_filters + cc).reshape(-1)
    big_rows = (cc * act_lanes + hh * w_half + ww).reshape(-1)
    wfc_big = jnp.zeros((num_filters * act_lanes, feature_dim), jnp.float32)
    wfc_big = wfc_big.at[big_rows].set(wfc_small[small_rows])

    p["wfc"], p["bfc"] = wfc_big, bfc
    p["ln_gamma"] = jnp.ones((1, feature_dim), jnp.float32)
    p["ln_beta"] = jnp.zeros((1, feature_dim), jnp.float32)
    p["wt1"], p["bt1"] = lin(keys[5], feature_dim, hidden_dim)
    p["wt2"], p["bt2"] = lin(keys[6], hidden_dim, hidden_dim)
    # final Linear(hidden, 2A) split column-wise into mu / log_std halves
    # (identical to torch .chunk(2, dim=-1) on the fused output).
    p["wmu"], p["bmu"] = lin(keys[7], hidden_dim, action_dim)
    p["wls"], p["bls"] = lin(keys[8], hidden_dim, action_dim)

    raw.update(wfc_small=wfc_small, bfc=bfc, ln_gamma=p["ln_gamma"],
               ln_beta=p["ln_beta"], wt1=p["wt1"], bt1=p["bt1"], wt2=p["wt2"],
               bt2=p["bt2"], wmu=p["wmu"], bmu=p["bmu"], wls=p["wls"],
               bls=p["bls"])
    return p, raw


def reference_forward(raw, s_nchw, noise, log_std_min, log_std_max):
    """Pure-JAX (non-Pallas) reference of the same forward pass."""
    x = jnp.transpose(s_nchw.astype(jnp.float32) / 255.0, (0, 2, 3, 1))   # NHWC
    for li, st in enumerate([2, 1, 1, 1]):
        w, b = raw[f"conv{li + 1}"]
        B_, H, W, _ = x.shape
        OH, OW = (H - 3) // st + 1, (W - 3) // st + 1
        y = jnp.zeros((B_, OH, OW, w.shape[3]), jnp.float32)
        for i in range(3):
            for j in range(3):
                xs = x[:, i:i + st * OH:st, j:j + st * OW:st, :]
                y = y + jnp.einsum("bhwc,cd->bhwd", xs, w[i, j])
        x = jnp.maximum(y + b, 0.0)
    h = x.reshape(x.shape[0], -1)
    y = h @ raw["wfc_small"] + raw["bfc"]
    mean = jnp.mean(y, axis=-1, keepdims=True)
    var = jnp.mean(jnp.square(y - mean), axis=-1, keepdims=True)
    z = jnp.tanh((y - mean) * jax.lax.rsqrt(var + 1e-5) * raw["ln_gamma"]
                 + raw["ln_beta"])
    h1 = jnp.maximum(z @ raw["wt1"] + raw["bt1"], 0.0)
    h2 = jnp.maximum(h1 @ raw["wt2"] + raw["bt2"], 0.0)
    mu = h2 @ raw["wmu"] + raw["bmu"]
    ls = jnp.tanh(h2 @ raw["wls"] + raw["bls"])
    ls = log_std_min + 0.5 * (log_std_max - log_std_min) * (ls + 1.0)
    pi = mu + noise * jnp.exp(ls)
    A = mu.shape[1]
    log_pi = (jnp.sum(-0.5 * jnp.square(noise) - ls, axis=-1, keepdims=True)
              - 0.5 * math.log(2.0 * math.pi) * A)
    mu_t, pi_t = jnp.tanh(mu), jnp.tanh(pi)
    log_pi = log_pi - jnp.sum(
        jnp.log(jnp.maximum(1.0 - jnp.square(pi_t), 0.0) + 1e-6),
        axis=-1, keepdims=True)
    return mu_t, pi_t, log_pi, ls


# ----------------------------------------------------------------------------
# Forward wrapper (single pallas_call)
# ----------------------------------------------------------------------------

@functools.partial(jax.jit, static_argnums=(3, 4))
def sacae_actor_forward(params, s_nchw, noise, log_std_min, log_std_max):
    B, C, H, W = s_nchw.shape
    A = noise.shape[1]
    nf = params["bc1"].shape[0]
    F = params["ln_gamma"].shape[1]
    act_lanes = params["wfc"].shape[0] // nf
    assert H == W and H % 2 == 0 and B <= 8 and 3 * A + 1 <= 128
    w_half = W // 2
    plane_lanes = (H // 2) * w_half

    x = s_nchw.astype(jnp.float32)

    # Parity planes (layout prep only; four tiny XLA slices + pads).  Padding
    # lanes stay zero so in-kernel overrun reads are finite.
    def plane(rp, cp):
        return jnp.pad(x[:, :, rp::2, cp::2].reshape(B, C, plane_lanes),
                       ((0, 0), (0, 0), (0, 128)))

    xee, xeo, xoe, xoo = plane(0, 0), plane(0, 1), plane(1, 0), plane(1, 1)
    # torch.randn_like(mu) equivalent drawn outside the kernel; pad batch to 8.
    noise_p = jnp.zeros((8, A), jnp.float32).at[:B, :].set(noise)

    args = (xee, xeo, xoe, xoo,
            params["wc1"], params["bc1"], params["wc2"], params["bc2"],
            params["wc3"], params["bc3"], params["wc4"], params["bc4"],
            params["wfc"], params["bfc"], params["ln_gamma"], params["ln_beta"],
            params["wt1"], params["bt1"], params["wt2"], params["bt2"],
            params["wmu"], params["bmu"], params["wls"], params["bls"], noise_p)

    def full(shape):
        nd = len(shape)
        return pl.BlockSpec(shape, lambda i, _nd=nd: (0,) * _nd)

    out = pl.pallas_call(
        functools.partial(_fused_actor_kernel, batch=B, spatial=H,
                          log_std_min=float(log_std_min),
                          log_std_max=float(log_std_max)),
        grid=(1,),
        in_specs=[full(a.shape) for a in args],
        out_specs=full((8, 128)),
        out_shape=jax.ShapeDtypeStruct((8, 128), jnp.float32),
        scratch_shapes=[
            pltpu.VMEM((nf, act_lanes), jnp.float32),    # act1
            pltpu.VMEM((nf, act_lanes), jnp.float32),    # act2
            pltpu.VMEM((nf, act_lanes), jnp.float32),    # act3
            pltpu.VMEM((nf, act_lanes), jnp.float32),    # act4
            pltpu.VMEM((8, F), jnp.float32),             # encoder features z
        ],
        compiler_params=pltpu.CompilerParams(dimension_semantics=("arbitrary",)),
    )(*args)

    mu = out[:B, 0:A]
    pi = out[:B, A:2 * A]
    log_std = out[:B, 2 * A:3 * A]
    log_pi = out[:B, 3 * A:3 * A + 1]
    return mu, pi, log_pi, log_std


# ----------------------------------------------------------------------------
# Main
# ----------------------------------------------------------------------------

if __name__ == "__main__":
    key = jax.random.PRNGKey(0)
    k_obs, k_params, k_noise = jax.random.split(key, 3)

    B, state_cc, spatial = 2, 4, 32
    num_filters = 8
    encoder_feature_dim = 32
    hidden_dim = 32
    action_dim = 4
    log_std_min, log_std_max = -10.0, 2.0

    s = jax.random.uniform(k_obs, (B, state_cc, spatial, spatial),
                           minval=0.0, maxval=255.0, dtype=jnp.float32)
    params, raw = init_params(k_params, state_cc, num_filters,
                              encoder_feature_dim, hidden_dim, action_dim,
                              spatial)
    noise = jax.random.normal(k_noise, (B, action_dim), jnp.float32)

    mu, pi, log_pi, log_std = sacae_actor_forward(
        params, s, noise, log_std_min, log_std_max)
    jax.block_until_ready((mu, pi, log_pi, log_std))

    assert mu.shape == (B, action_dim)
    assert pi.shape == (B, action_dim)
    assert log_pi.shape == (B, 1)
    assert log_std.shape == (B, action_dim)

    # Cross-check against the pure-JAX reference.
    r_mu, r_pi, r_lp, r_ls = reference_forward(raw, s, noise,
                                               log_std_min, log_std_max)
    for a, b in ((mu, r_mu), (pi, r_pi), (log_pi, r_lp), (log_std, r_ls)):
        assert bool(jnp.all(jnp.isfinite(a)))
        assert bool(jnp.allclose(a, b, rtol=5e-2, atol=5e-2))

    print("KERNEL_OK")
</pallas_src>

<mosaic_0001>
module attributes {stable_mosaic.version = 11 : i64} {
  func.func @_fused_actor_kernel(%arg0: i32, %arg1: memref<2x4x384xf32, #tpu.memory_space<vmem>>, %arg2: memref<2x4x384xf32, #tpu.memory_space<vmem>>, %arg3: memref<2x4x384xf32, #tpu.memory_space<vmem>>, %arg4: memref<2x4x384xf32, #tpu.memory_space<vmem>>, %arg5: memref<9x8x4xf32, #tpu.memory_space<vmem>>, %arg6: memref<8x1xf32, #tpu.memory_space<vmem>>, %arg7: memref<9x8x8xf32, #tpu.memory_space<vmem>>, %arg8: memref<8x1xf32, #tpu.memory_space<vmem>>, %arg9: memref<9x8x8xf32, #tpu.memory_space<vmem>>, %arg10: memref<8x1xf32, #tpu.memory_space<vmem>>, %arg11: memref<9x8x8xf32, #tpu.memory_space<vmem>>, %arg12: memref<8x1xf32, #tpu.memory_space<vmem>>, %arg13: memref<2048x32xf32, #tpu.memory_space<vmem>>, %arg14: memref<1x32xf32, #tpu.memory_space<vmem>>, %arg15: memref<1x32xf32, #tpu.memory_space<vmem>>, %arg16: memref<1x32xf32, #tpu.memory_space<vmem>>, %arg17: memref<32x32xf32, #tpu.memory_space<vmem>>, %arg18: memref<1x32xf32, #tpu.memory_space<vmem>>, %arg19: memref<32x32xf32, #tpu.memory_space<vmem>>, %arg20: memref<1x32xf32, #tpu.memory_space<vmem>>, %arg21: memref<32x4xf32, #tpu.memory_space<vmem>>, %arg22: memref<1x4xf32, #tpu.memory_space<vmem>>, %arg23: memref<32x4xf32, #tpu.memory_space<vmem>>, %arg24: memref<1x4xf32, #tpu.memory_space<vmem>>, %arg25: memref<8x4xf32, #tpu.memory_space<vmem>>, %arg26: memref<8x128xf32, #tpu.memory_space<vmem>>, %arg27: memref<8x256xf32, #tpu.memory_space<vmem>>, %arg28: memref<8x256xf32, #tpu.memory_space<vmem>>, %arg29: memref<8x256xf32, #tpu.memory_space<vmem>>, %arg30: memref<8x256xf32, #tpu.memory_space<vmem>>, %arg31: memref<8x32xf32, #tpu.memory_space<vmem>>) attributes {dimension_semantics = [#tpu.dimension_semantics<arbitrary>], iteration_bounds = array<i64: 1>, scalar_prefetch = 0 : i64, scratch_operands = 5 : i64, tpu.core_type = #tpu.core_type<tc>, window_params = [{pipeline_mode = #tpu.pipeline_mode<synchronous>, transform_indices = @transform_0, window_bounds = array<i64: 2, 4, 384>}, {pipeline_mode = #tpu.pipeline_mode<synchronous>, transform_indices = @transform_1, window_bounds = array<i64: 2, 4, 384>}, {pipeline_mode = #tpu.pipeline_mode<synchronous>, transform_indices = @transform_2, window_bounds = array<i64: 2, 4, 384>}, {pipeline_mode = #tpu.pipeline_mode<synchronous>, transform_indices = @transform_3, window_bounds = array<i64: 2, 4, 384>}, {pipeline_mode = #tpu.pipeline_mode<synchronous>, transform_indices = @transform_4, window_bounds = array<i64: 9, 8, 4>}, {pipeline_mode = #tpu.pipeline_mode<synchronous>, transform_indices = @transform_5, window_bounds = array<i64: 8, 1>}, {pipeline_mode = #tpu.pipeline_mode<synchronous>, transform_indices = @transform_6, window_bounds = array<i64: 9, 8, 8>}, {pipeline_mode = #tpu.pipeline_mode<synchronous>, transform_indices = @transform_7, window_bounds = array<i64: 8, 1>}, {pipeline_mode = #tpu.pipeline_mode<synchronous>, transform_indices = @transform_8, window_bounds = array<i64: 9, 8, 8>}, {pipeline_mode = #tpu.pipeline_mode<synchronous>, transform_indices = @transform_9, window_bounds = array<i64: 8, 1>}, {pipeline_mode = #tpu.pipeline_mode<synchronous>, transform_indices = @transform_10, window_bounds = array<i64: 9, 8, 8>}, {pipeline_mode = #tpu.pipeline_mode<synchronous>, transform_indices = @transform_11, window_bounds = array<i64: 8, 1>}, {pipeline_mode = #tpu.pipeline_mode<synchronous>, transform_indices = @transform_12, window_bounds = array<i64: 2048, 32>}, {pipeline_mode = #tpu.pipeline_mode<synchronous>, transform_indices = @transform_13, window_bounds = array<i64: 1, 32>}, {pipeline_mode = #tpu.pipeline_mode<synchronous>, transform_indices = @transform_14, window_bounds = array<i64: 1, 32>}, {pipeline_mode = #tpu.pipeline_mode<synchronous>, transform_indices = @transform_15, window_bounds = array<i64: 1, 32>}, {pipeline_mode = #tpu.pipeline_mode<synchronous>, transform_indices = @transform_16, window_bounds = array<i64: 32, 32>}, {pipeline_mode = #tpu.pipeline_mode<synchronous>, transform_indices = @transform_17, window_bounds = array<i64: 1, 32>}, {pipeline_mode = #tpu.pipeline_mode<synchronous>, transform_indices = @transform_18, window_bounds = array<i64: 32, 32>}, {pipeline_mode = #tpu.pipeline_mode<synchronous>, transform_indices = @transform_19, window_bounds = array<i64: 1, 32>}, {pipeline_mode = #tpu.pipeline_mode<synchronous>, transform_indices = @transform_20, window_bounds = array<i64: 32, 4>}, {pipeline_mode = #tpu.pipeline_mode<synchronous>, transform_indices = @transform_21, window_bounds = array<i64: 1, 4>}, {pipeline_mode = #tpu.pipeline_mode<synchronous>, transform_indices = @transform_22, window_bounds = array<i64: 32, 4>}, {pipeline_mode = #tpu.pipeline_mode<synchronous>, transform_indices = @transform_23, window_bounds = array<i64: 1, 4>}, {pipeline_mode = #tpu.pipeline_mode<synchronous>, transform_indices = @transform_24, window_bounds = array<i64: 8, 4>}, {pipeline_mode = #tpu.pipeline_mode<synchronous>, transform_indices = @transform_25, window_bounds = array<i64: 8, 128>}]} {
    %cst = arith.constant 0.000000e+00 : f32
    %0 = vector.broadcast %cst : f32 to vector<8x256xf32>
    %c0 = arith.constant 0 : index
    %c0_0 = arith.constant 0 : index
    %1 = vector.load %arg27[%c0, %c0_0] : memref<8x256xf32, #tpu.memory_space<vmem>>, vector<8x256xf32>
    tpu.vector_store %arg27[%c0, %c0_0], %0 {strides = array<i32>} : memref<8x256xf32, #tpu.memory_space<vmem>>, vector<8x256xf32>,
    %cst_1 = arith.constant 0.000000e+00 : f32
    %2 = vector.broadcast %cst_1 : f32 to vector<8x256xf32>
    %c0_2 = arith.constant 0 : index
    %c0_3 = arith.constant 0 : index
    %3 = vector.load %arg28[%c0_2, %c0_3] : memref<8x256xf32, #tpu.memory_space<vmem>>, vector<8x256xf32>
    tpu.vector_store %arg28[%c0_2, %c0_3], %2 {strides = array<i32>} : memref<8x256xf32, #tpu.memory_space<vmem>>, vector<8x256xf32>,
    %cst_4 = arith.constant 0.000000e+00 : f32
    %4 = vector.broadcast %cst_4 : f32 to vector<8x256xf32>
    %c0_5 = arith.constant 0 : index
    %c0_6 = arith.constant 0 : index
    %5 = vector.load %arg29[%c0_5, %c0_6] : memref<8x256xf32, #tpu.memory_space<vmem>>, vector<8x256xf32>
    tpu.vector_store %arg29[%c0_5, %c0_6], %4 {strides = array<i32>} : memref<8x256xf32, #tpu.memory_space<vmem>>, vector<8x256xf32>,
    %cst_7 = arith.constant 0.000000e+00 : f32
    %6 = vector.broadcast %cst_7 : f32 to vector<8x256xf32>
    %c0_8 = arith.constant 0 : index
    %c0_9 = arith.constant 0 : index
    %7 = vector.load %arg30[%c0_8, %c0_9] : memref<8x256xf32, #tpu.memory_space<vmem>>, vector<8x256xf32>
    tpu.vector_store %arg30[%c0_8, %c0_9], %6 {strides = array<i32>} : memref<8x256xf32, #tpu.memory_space<vmem>>, vector<8x256xf32>,
    %cst_10 = arith.constant 0.000000e+00 : f32
    %8 = vector.broadcast %cst_10 : f32 to vector<8x32xf32>
    %c0_11 = arith.constant 0 : index
    %c0_12 = arith.constant 0 : index
    %9 = vector.load %arg31[%c0_11, %c0_12] : memref<8x32xf32, #tpu.memory_space<vmem>>, vector<8x32xf32>
    tpu.vector_store %arg31[%c0_11, %c0_12], %8 {strides = array<i32>} : memref<8x32xf32, #tpu.memory_space<vmem>>, vector<8x32xf32>,
    %cst_13 = arith.constant 0.000000e+00 : f32
    %10 = vector.broadcast %cst_13 : f32 to vector<8x128xf32>
    %c0_14 = arith.constant 0 : index
    %c0_15 = arith.constant 0 : index
    %11 = vector.load %arg26[%c0_14, %c0_15] : memref<8x128xf32, #tpu.memory_space<vmem>>, vector<8x128xf32>
    tpu.vector_store %arg26[%c0_14, %c0_15], %10 {strides = array<i32>} : memref<8x128xf32, #tpu.memory_space<vmem>>, vector<8x128xf32>,
    %c0_16 = arith.constant 0 : index
    %c0_17 = arith.constant 0 : index
    %c0_18 = arith.constant 0 : index
    %12 = vector.load %arg5[%c0_16, %c0_17, %c0_18] : memref<9x8x4xf32, #tpu.memory_space<vmem>>, vector<1x8x4xf32>
    %13 = vector.shape_cast %12 : vector<1x8x4xf32> to vector<8x4xf32>
    %c1 = arith.constant 1 : index
    %c0_19 = arith.constant 0 : index
    %c0_20 = arith.constant 0 : index
    %14 = vector.load %arg5[%c1, %c0_19, %c0_20] : memref<9x8x4xf32, #tpu.memory_space<vmem>>, vector<1x8x4xf32>
    %15 = vector.shape_cast %14 : vector<1x8x4xf32> to vector<8x4xf32>
    %c2 = arith.constant 2 : index
    %c0_21 = arith.constant 0 : index
    %c0_22 = arith.constant 0 : index
    %16 = vector.load %arg5[%c2, %c0_21, %c0_22] : memref<9x8x4xf32, #tpu.memory_space<vmem>>, vector<1x8x4xf32>
    %17 = vector.shape_cast %16 : vector<1x8x4xf32> to vector<8x4xf32>
    %c3 = arith.constant 3 : index
    %c0_23 = arith.constant 0 : index
    %c0_24 = arith.constant 0 : index
    %18 = vector.load %arg5[%c3, %c0_23, %c0_24] : memref<9x8x4xf32, #tpu.memory_space<vmem>>, vector<1x8x4xf32>
    %19 = vector.shape_cast %18 : vector<1x8x4xf32> to vector<8x4xf32>
    %c4 = arith.constant 4 : index
    %c0_25 = arith.constant 0 : index
    %c0_26 = arith.constant 0 : index
    %20 = vector.load %arg5[%c4, %c0_25, %c0_26] : memref<9x8x4xf32, #tpu.memory_space<vmem>>, vector<1x8x4xf32>
    %21 = vector.shape_cast %20 : vector<1x8x4xf32> to vector<8x4xf32>
    %c5 = arith.constant 5 : index
    %c0_27 = arith.constant 0 : index
    %c0_28 = arith.constant 0 : index
    %22 = vector.load %arg5[%c5, %c0_27, %c0_28] : memref<9x8x4xf32, #tpu.memory_space<vmem>>, vector<1x8x4xf32>
    %23 = vector.shape_cast %22 : vector<1x8x4xf32> to vector<8x4xf32>
    %c6 = arith.constant 6 : index
    %c0_29 = arith.constant 0 : index
    %c0_30 = arith.constant 0 : index
    %24 = vector.load %arg5[%c6, %c0_29, %c0_30] : memref<9x8x4xf32, #tpu.memory_space<vmem>>, vector<1x8x4xf32>
    %25 = vector.shape_cast %24 : vector<1x8x4xf32> to vector<8x4xf32>
    %c7 = arith.constant 7 : index
    %c0_31 = arith.constant 0 : index
    %c0_32 = arith.constant 0 : index
    %26 = vector.load %arg5[%c7, %c0_31, %c0_32] : memref<9x8x4xf32, #tpu.memory_space<vmem>>, vector<1x8x4xf32>
    %27 = vector.shape_cast %26 : vector<1x8x4xf32> to vector<8x4xf32>
    %c8 = arith.constant 8 : index
    %c0_33 = arith.constant 0 : index
    %c0_34 = arith.constant 0 : index
    %28 = vector.load %arg5[%c8, %c0_33, %c0_34] : memref<9x8x4xf32, #tpu.memory_space<vmem>>, vector<1x8x4xf32>
    %29 = vector.shape_cast %28 : vector<1x8x4xf32> to vector<8x4xf32>
    %c0_35 = arith.constant 0 : index
    %c0_36 = arith.constant 0 : index
    %c0_37 = arith.constant 0 : index
    %30 = vector.load %arg7[%c0_35, %c0_36, %c0_37] : memref<9x8x8xf32, #tpu.memory_space<vmem>>, vector<1x8x8xf32>
    %31 = vector.shape_cast %30 : vector<1x8x8xf32> to vector<8x8xf32>
    %c1_38 = arith.constant 1 : index
    %c0_39 = arith.constant 0 : index
    %c0_40 = arith.constant 0 : index
    %32 = vector.load %arg7[%c1_38, %c0_39, %c0_40] : memref<9x8x8xf32, #tpu.memory_space<vmem>>, vector<1x8x8xf32>
    %33 = vector.shape_cast %32 : vector<1x8x8xf32> to vector<8x8xf32>
    %c2_41 = arith.constant 2 : index
    %c0_42 = arith.constant 0 : index
    %c0_43 = arith.constant 0 : index
    %34 = vector.load %arg7[%c2_41, %c0_42, %c0_43] : memref<9x8x8xf32, #tpu.memory_space<vmem>>, vector<1x8x8xf32>
    %35 = vector.shape_cast %34 : vector<1x8x8xf32> to vector<8x8xf32>
    %c3_44 = arith.constant 3 : index
    %c0_45 = arith.constant 0 : index
    %c0_46 = arith.constant 0 : index
    %36 = vector.load %arg7[%c3_44, %c0_45, %c0_46] : memref<9x8x8xf32, #tpu.memory_space<vmem>>, vector<1x8x8xf32>
    %37 = vector.shape_cast %36 : vector<1x8x8xf32> to vector<8x8xf32>
    %c4_47 = arith.constant 4 : index
    %c0_48 = arith.constant 0 : index
    %c0_49 = arith.constant 0 : index
    %38 = vector.load %arg7[%c4_47, %c0_48, %c0_49] : memref<9x8x8xf32, #tpu.memory_space<vmem>>, vector<1x8x8xf32>
    %39 = vector.shape_cast %38 : vector<1x8x8xf32> to vector<8x8xf32>
    %c5_50 = arith.constant 5 : index
    %c0_51 = arith.constant 0 : index
    %c0_52 = arith.constant 0 : index
    %40 = vector.load %arg7[%c5_50, %c0_51, %c0_52] : memref<9x8x8xf32, #tpu.memory_space<vmem>>, vector<1x8x8xf32>
    %41 = vector.shape_cast %40 : vector<1x8x8xf32> to vector<8x8xf32>
    %c6_53 = arith.constant 6 : index
    %c0_54 = arith.constant 0 : index
    %c0_55 = arith.constant 0 : index
    %42 = vector.load %arg7[%c6_53, %c0_54, %c0_55] : memref<9x8x8xf32, #tpu.memory_space<vmem>>, vector<1x8x8xf32>
    %43 = vector.shape_cast %42 : vector<1x8x8xf32> to vector<8x8xf32>
    %c7_56 = arith.constant 7 : index
    %c0_57 = arith.constant 0 : index
    %c0_58 = arith.constant 0 : index
    %44 = vector.load %arg7[%c7_56, %c0_57, %c0_58] : memref<9x8x8xf32, #tpu.memory_space<vmem>>, vector<1x8x8xf32>
    %45 = vector.shape_cast %44 : vector<1x8x8xf32> to vector<8x8xf32>
    %c8_59 = arith.constant 8 : index
    %c0_60 = arith.constant 0 : index
    %c0_61 = arith.constant 0 : index
    %46 = vector.load %arg7[%c8_59, %c0_60, %c0_61] : memref<9x8x8xf32, #tpu.memory_space<vmem>>, vector<1x8x8xf32>
    %47 = vector.shape_cast %46 : vector<1x8x8xf32> to vector<8x8xf32>
    %c0_62 = arith.constant 0 : index
    %c0_63 = arith.constant 0 : index
    %c0_64 = arith.constant 0 : index
    %48 = vector.load %arg9[%c0_62, %c0_63, %c0_64] : memref<9x8x8xf32, #tpu.memory_space<vmem>>, vector<1x8x8xf32>
    %49 = vector.shape_cast %48 : vector<1x8x8xf32> to vector<8x8xf32>
    %c1_65 = arith.constant 1 : index
    %c0_66 = arith.constant 0 : index
    %c0_67 = arith.constant 0 : index
    %50 = vector.load %arg9[%c1_65, %c0_66, %c0_67] : memref<9x8x8xf32, #tpu.memory_space<vmem>>, vector<1x8x8xf32>
    %51 = vector.shape_cast %50 : vector<1x8x8xf32> to vector<8x8xf32>
    %c2_68 = arith.constant 2 : index
    %c0_69 = arith.constant 0 : index
    %c0_70 = arith.constant 0 : index
    %52 = vector.load %arg9[%c2_68, %c0_69, %c0_70] : memref<9x8x8xf32, #tpu.memory_space<vmem>>, vector<1x8x8xf32>
    %53 = vector.shape_cast %52 : vector<1x8x8xf32> to vector<8x8xf32>
    %c3_71 = arith.constant 3 : index
    %c0_72 = arith.constant 0 : index
    %c0_73 = arith.constant 0 : index
    %54 = vector.load %arg9[%c3_71, %c0_72, %c0_73] : memref<9x8x8xf32, #tpu.memory_space<vmem>>, vector<1x8x8xf32>
    %55 = vector.shape_cast %54 : vector<1x8x8xf32> to vector<8x8xf32>
    %c4_74 = arith.constant 4 : index
    %c0_75 = arith.constant 0 : index
    %c0_76 = arith.constant 0 : index
    %56 = vector.load %arg9[%c4_74, %c0_75, %c0_76] : memref<9x8x8xf32, #tpu.memory_space<vmem>>, vector<1x8x8xf32>
    %57 = vector.shape_cast %56 : vector<1x8x8xf32> to vector<8x8xf32>
    %c5_77 = arith.constant 5 : index
    %c0_78 = arith.constant 0 : index
    %c0_79 = arith.constant 0 : index
    %58 = vector.load %arg9[%c5_77, %c0_78, %c0_79] : memref<9x8x8xf32, #tpu.memory_space<vmem>>, vector<1x8x8xf32>
    %59 = vector.shape_cast %58 : vector<1x8x8xf32> to vector<8x8xf32>
    %c6_80 = arith.constant 6 : index
    %c0_81 = arith.constant 0 : index
    %c0_82 = arith.constant 0 : index
    %60 = vector.load %arg9[%c6_80, %c0_81, %c0_82] : memref<9x8x8xf32, #tpu.memory_space<vmem>>, vector<1x8x8xf32>
    %61 = vector.shape_cast %60 : vector<1x8x8xf32> to vector<8x8xf32>
    %c7_83 = arith.constant 7 : index
    %c0_84 = arith.constant 0 : index
    %c0_85 = arith.constant 0 : index
    %62 = vector.load %arg9[%c7_83, %c0_84, %c0_85] : memref<9x8x8xf32, #tpu.memory_space<vmem>>, vector<1x8x8xf32>
    %63 = vector.shape_cast %62 : vector<1x8x8xf32> to vector<8x8xf32>
    %c8_86 = arith.constant 8 : index
    %c0_87 = arith.constant 0 : index
    %c0_88 = arith.constant 0 : index
    %64 = vector.load %arg9[%c8_86, %c0_87, %c0_88] : memref<9x8x8xf32, #tpu.memory_space<vmem>>, vector<1x8x8xf32>
    %65 = vector.shape_cast %64 : vector<1x8x8xf32> to vector<8x8xf32>
    %c0_89 = arith.constant 0 : index
    %c0_90 = arith.constant 0 : index
    %c0_91 = arith.constant 0 : index
    %66 = vector.load %arg11[%c0_89, %c0_90, %c0_91] : memref<9x8x8xf32, #tpu.memory_space<vmem>>, vector<1x8x8xf32>
    %67 = vector.shape_cast %66 : vector<1x8x8xf32> to vector<8x8xf32>
    %c1_92 = arith.constant 1 : index
    %c0_93 = arith.constant 0 : index
    %c0_94 = arith.constant 0 : index
    %68 = vector.load %arg11[%c1_92, %c0_93, %c0_94] : memref<9x8x8xf32, #tpu.memory_space<vmem>>, vector<1x8x8xf32>
    %69 = vector.shape_cast %68 : vector<1x8x8xf32> to vector<8x8xf32>
    %c2_95 = arith.constant 2 : index
    %c0_96 = arith.constant 0 : index
    %c0_97 = arith.constant 0 : index
    %70 = vector.load %arg11[%c2_95, %c0_96, %c0_97] : memref<9x8x8xf32, #tpu.memory_space<vmem>>, vector<1x8x8xf32>
    %71 = vector.shape_cast %70 : vector<1x8x8xf32> to vector<8x8xf32>
    %c3_98 = arith.constant 3 : index
    %c0_99 = arith.constant 0 : index
    %c0_100 = arith.constant 0 : index
    %72 = vector.load %arg11[%c3_98, %c0_99, %c0_100] : memref<9x8x8xf32, #tpu.memory_space<vmem>>, vector<1x8x8xf32>
    %73 = vector.shape_cast %72 : vector<1x8x8xf32> to vector<8x8xf32>
    %c4_101 = arith.constant 4 : index
    %c0_102 = arith.constant 0 : index
    %c0_103 = arith.constant 0 : index
    %74 = vector.load %arg11[%c4_101, %c0_102, %c0_103] : memref<9x8x8xf32, #tpu.memory_space<vmem>>, vector<1x8x8xf32>
    %75 = vector.shape_cast %74 : vector<1x8x8xf32> to vector<8x8xf32>
    %c5_104 = arith.constant 5 : index
    %c0_105 = arith.constant 0 : index
    %c0_106 = arith.constant 0 : index
    %76 = vector.load %arg11[%c5_104, %c0_105, %c0_106] : memref<9x8x8xf32, #tpu.memory_space<vmem>>, vector<1x8x8xf32>
    %77 = vector.shape_cast %76 : vector<1x8x8xf32> to vector<8x8xf32>
    %c6_107 = arith.constant 6 : index
    %c0_108 = arith.constant 0 : index
    %c0_109 = arith.constant 0 : index
    %78 = vector.load %arg11[%c6_107, %c0_108, %c0_109] : memref<9x8x8xf32, #tpu.memory_space<vmem>>, vector<1x8x8xf32>
    %79 = vector.shape_cast %78 : vector<1x8x8xf32> to vector<8x8xf32>
    %c7_110 = arith.constant 7 : index
    %c0_111 = arith.constant 0 : index
    %c0_112 = arith.constant 0 : index
    %80 = vector.load %arg11[%c7_110, %c0_111, %c0_112] : memref<9x8x8xf32, #tpu.memory_space<vmem>>, vector<1x8x8xf32>
    %81 = vector.shape_cast %80 : vector<1x8x8xf32> to vector<8x8xf32>
    %c8_113 = arith.constant 8 : index
    %c0_114 = arith.constant 0 : index
    %c0_115 = arith.constant 0 : index
    %82 = vector.load %arg11[%c8_113, %c0_114, %c0_115] : memref<9x8x8xf32, #tpu.memory_space<vmem>>, vector<1x8x8xf32>
    %83 = vector.shape_cast %82 : vector<1x8x8xf32> to vector<8x8xf32>
    %c0_116 = arith.constant 0 : index
    %c0_117 = arith.constant 0 : index
    %84 = vector.load %arg6[%c0_116, %c0_117] : memref<8x1xf32, #tpu.memory_space<vmem>>, vector<8x1xf32>
    %c0_118 = arith.constant 0 : index
    %c0_119 = arith.constant 0 : index
    %85 = vector.load %arg8[%c0_118, %c0_119] : memref<8x1xf32, #tpu.memory_space<vmem>>, vector<8x1xf32>
    %c0_120 = arith.constant 0 : index
    %c0_121 = arith.constant 0 : index
    %86 = vector.load %arg10[%c0_120, %c0_121] : memref<8x1xf32, #tpu.memory_space<vmem>>, vector<8x1xf32>
    %c0_122 = arith.constant 0 : index
    %c0_123 = arith.constant 0 : index
    %87 = vector.load %arg12[%c0_122, %c0_123] : memref<8x1xf32, #tpu.memory_space<vmem>>, vector<8x1xf32>
    %c0_124 = arith.constant 0 : index
    %c0_125 = arith.constant 0 : index
    %88 = vector.load %arg14[%c0_124, %c0_125] : memref<1x32xf32, #tpu.memory_space<vmem>>, vector<1x32xf32>
    %cst_126 = arith.constant 0.000000e+00 : f32
    %89 = vector.broadcast %cst_126 : f32 to vector<8x240xf32>
    %c0_127 = arith.constant 0 : index
    %c0_128 = arith.constant 0 : index
    %c0_129 = arith.constant 0 : index
    %90 = vector.load %arg1[%c0_127, %c0_128, %c0_129] : memref<2x4x384xf32, #tpu.memory_space<vmem>>, vector<1x4x240xf32>
    %91 = vector.shape_cast %90 : vector<1x4x240xf32> to vector<4x240xf32>
    %cst_130 = arith.constant dense<0.000000e+00> : vector<8x240xf32>
    %92 = tpu.matmul %13, %91, %cst_130 {dimension_numbers = #tpu.dot_dimension_numbers<[1], [0], [0], [1], [0, 0, 1, 1], [], []>} : vector<8x4xf32>, vector<4x240xf32>, vector<8x240xf32> -> vector<8x240xf32>
    %93 = arith.addf %89, %92 : vector<8x240xf32>
    %c0_131 = arith.constant 0 : index
    %c0_132 = arith.constant 0 : index
    %c0_133 = arith.constant 0 : index
    %94 = vector.load %arg2[%c0_131, %c0_132, %c0_133] : memref<2x4x384xf32, #tpu.memory_space<vmem>>, vector<1x4x240xf32>
    %95 = vector.shape_cast %94 : vector<1x4x240xf32> to vector<4x240xf32>
    %cst_134 = arith.constant dense<0.000000e+00> : vector<8x240xf32>
    %96 = tpu.matmul %15, %95, %cst_134 {dimension_numbers = #tpu.dot_dimension_numbers<[1], [0], [0], [1], [0, 0, 1, 1], [], []>} : vector<8x4xf32>, vector<4x240xf32>, vector<8x240xf32> -> vector<8x240xf32>
    %97 = arith.addf %93, %96 : vector<8x240xf32>
    %c0_135 = arith.constant 0 : index
    %c0_136 = arith.constant 0 : index
    %c1_137 = arith.constant 1 : index
    %98 = vector.load %arg1[%c0_135, %c0_136, %c1_137] : memref<2x4x384xf32, #tpu.memory_space<vmem>>, vector<1x4x240xf32>
    %99 = vector.shape_cast %98 : vector<1x4x240xf32> to vector<4x240xf32>
    %cst_138 = arith.constant dense<0.000000e+00> : vector<8x240xf32>
    %100 = tpu.matmul %17, %99, %cst_138 {dimension_numbers = #tpu.dot_dimension_numbers<[1], [0], [0], [1], [0, 0, 1, 1], [], []>} : vector<8x4xf32>, vector<4x240xf32>, vector<8x240xf32> -> vector<8x240xf32>
    %101 = arith.addf %97, %100 : vector<8x240xf32>
    %c0_139 = arith.constant 0 : index
    %c0_140 = arith.constant 0 : index
    %c0_141 = arith.constant 0 : index
    %102 = vector.load %arg3[%c0_139, %c0_140, %c0_141] : memref<2x4x384xf32, #tpu.memory_space<vmem>>, vector<1x4x240xf32>
    %103 = vector.shape_cast %102 : vector<1x4x240xf32> to vector<4x240xf32>
    %cst_142 = arith.constant dense<0.000000e+00> : vector<8x240xf32>
    %104 = tpu.matmul %19, %103, %cst_142 {dimension_numbers = #tpu.dot_dimension_numbers<[1], [0], [0], [1], [0, 0, 1, 1], [], []>} : vector<8x4xf32>, vector<4x240xf32>, vector<8x240xf32> -> vector<8x240xf32>
    %105 = arith.addf %101, %104 : vector<8x240xf32>
    %c0_143 = arith.constant 0 : index
    %c0_144 = arith.constant 0 : index
    %c0_145 = arith.constant 0 : index
    %106 = vector.load %arg4[%c0_143, %c0_144, %c0_145] : memref<2x4x384xf32, #tpu.memory_space<vmem>>, vector<1x4x240xf32>
    %107 = vector.shape_cast %106 : vector<1x4x240xf32> to vector<4x240xf32>
    %cst_146 = arith.constant dense<0.000000e+00> : vector<8x240xf32>
    %108 = tpu.matmul %21, %107, %cst_146 {dimension_numbers = #tpu.dot_dimension_numbers<[1], [0], [0], [1], [0, 0, 1, 1], [], []>} : vector<8x4xf32>, vector<4x240xf32>, vector<8x240xf32> -> vector<8x240xf32>
    %109 = arith.addf %105, %108 : vector<8x240xf32>
    %c0_147 = arith.constant 0 : index
    %c0_148 = arith.constant 0 : index
    %c1_149 = arith.constant 1 : index
    %110 = vector.load %arg3[%c0_147, %c0_148, %c1_149] : memref<2x4x384xf32, #tpu.memory_space<vmem>>, vector<1x4x240xf32>
    %111 = vector.shape_cast %110 : vector<1x4x240xf32> to vector<4x240xf32>
    %cst_150 = arith.constant dense<0.000000e+00> : vector<8x240xf32>
    %112 = tpu.matmul %23, %111, %cst_150 {dimension_numbers = #tpu.dot_dimension_numbers<[1], [0], [0], [1], [0, 0, 1, 1], [], []>} : vector<8x4xf32>, vector<4x240xf32>, vector<8x240xf32> -> vector<8x240xf32>
    %113 = arith.addf %109, %112 : vector<8x240xf32>
    %c0_151 = arith.constant 0 : index
    %c0_152 = arith.constant 0 : index
    %c16 = arith.constant 16 : index
    %114 = vector.load %arg1[%c0_151, %c0_152, %c16] : memref<2x4x384xf32, #tpu.memory_space<vmem>>, vector<1x4x240xf32>
    %115 = vector.shape_cast %114 : vector<1x4x240xf32> to vector<4x240xf32>
    %cst_153 = arith.constant dense<0.000000e+00> : vector<8x240xf32>
    %116 = tpu.matmul %25, %115, %cst_153 {dimension_numbers = #tpu.dot_dimension_numbers<[1], [0], [0], [1], [0, 0, 1, 1], [], []>} : vector<8x4xf32>, vector<4x240xf32>, vector<8x240xf32> -> vector<8x240xf32>
    %117 = arith.addf %113, %116 : vector<8x240xf32>
    %c0_154 = arith.constant 0 : index
    %c0_155 = arith.constant 0 : index
    %c16_156 = arith.constant 16 : index
    %118 = vector.load %arg2[%c0_154, %c0_155, %c16_156] : memref<2x4x384xf32, #tpu.memory_space<vmem>>, vector<1x4x240xf32>
    %119 = vector.shape_cast %118 : vector<1x4x240xf32> to vector<4x240xf32>
    %cst_157 = arith.constant dense<0.000000e+00> : vector<8x240xf32>
    %120 = tpu.matmul %27, %119, %cst_157 {dimension_numbers = #tpu.dot_dimension_numbers<[1], [0], [0], [1], [0, 0, 1, 1], [], []>} : vector<8x4xf32>, vector<4x240xf32>, vector<8x240xf32> -> vector<8x240xf32>
    %121 = arith.addf %117, %120 : vector<8x240xf32>
    %c0_158 = arith.constant 0 : index
    %c0_159 = arith.constant 0 : index
    %c17 = arith.constant 17 : index
    %122 = vector.load %arg1[%c0_158, %c0_159, %c17] : memref<2x4x384xf32, #tpu.memory_space<vmem>>, vector<1x4x240xf32>
    %123 = vector.shape_cast %122 : vector<1x4x240xf32> to vector<4x240xf32>
    %cst_160 = arith.constant dense<0.000000e+00> : vector<8x240xf32>
    %124 = tpu.matmul %29, %123, %cst_160 {dimension_numbers = #tpu.dot_dimension_numbers<[1], [0], [0], [1], [0, 0, 1, 1], [], []>} : vector<8x4xf32>, vector<4x240xf32>, vector<8x240xf32> -> vector<8x240xf32>
    %125 = arith.addf %121, %124 : vector<8x240xf32>
    %cst_161 = arith.constant 0.00392156886 : f32
    %126 = vector.broadcast %cst_161 : f32 to vector<8x240xf32>
    %127 = arith.mulf %125, %126 : vector<8x240xf32>
    %128 = vector.broadcast %84 : vector<8x1xf32> to vector<8x240xf32>
    %129 = arith.addf %127, %128 : vector<8x240xf32>
    %cst_162 = arith.constant 0.000000e+00 : f32
    %130 = vector.broadcast %cst_162 : f32 to vector<8x240xf32>
    %131 = arith.maximumf %129, %130 : vector<8x240xf32>
    %c0_163 = arith.constant 0 : index
    %c0_164 = arith.constant 0 : index
    %132 = vector.load %arg27[%c0_163, %c0_164] : memref<8x256xf32, #tpu.memory_space<vmem>>, vector<8x240xf32>
    tpu.vector_store %arg27[%c0_163, %c0_164], %131 {strides = array<i32>} : memref<8x256xf32, #tpu.memory_space<vmem>>, vector<8x240xf32>,
    %cst_165 = arith.constant 0.000000e+00 : f32
    %133 = vector.broadcast %cst_165 : f32 to vector<8x208xf32>
    %c0_166 = arith.constant 0 : index
    %c0_167 = arith.constant 0 : index
    %134 = vector.load %arg27[%c0_166, %c0_167] : memref<8x256xf32, #tpu.memory_space<vmem>>, vector<8x208xf32>
    %cst_168 = arith.constant dense<0.000000e+00> : vector<8x208xf32>
    %135 = tpu.matmul %31, %134, %cst_168 {dimension_numbers = #tpu.dot_dimension_numbers<[1], [0], [0], [1], [0, 0, 1, 1], [], []>} : vector<8x8xf32>, vector<8x208xf32>, vector<8x208xf32> -> vector<8x208xf32>
    %136 = arith.addf %133, %135 : vector<8x208xf32>
    %c0_169 = arith.constant 0 : index
    %c1_170 = arith.constant 1 : index
    %137 = vector.load %arg27[%c0_169, %c1_170] : memref<8x256xf32, #tpu.memory_space<vmem>>, vector<8x208xf32>
    %cst_171 = arith.constant dense<0.000000e+00> : vector<8x208xf32>
    %138 = tpu.matmul %33, %137, %cst_171 {dimension_numbers = #tpu.dot_dimension_numbers<[1], [0], [0], [1], [0, 0, 1, 1], [], []>} : vector<8x8xf32>, vector<8x208xf32>, vector<8x208xf32> -> vector<8x208xf32>
    %139 = arith.addf %136, %138 : vector<8x208xf32>
    %c0_172 = arith.constant 0 : index
    %c2_173 = arith.constant 2 : index
    %140 = vector.load %arg27[%c0_172, %c2_173] : memref<8x256xf32, #tpu.memory_space<vmem>>, vector<8x208xf32>
    %cst_174 = arith.constant dense<0.000000e+00> : vector<8x208xf32>
    %141 = tpu.matmul %35, %140, %cst_174 {dimension_numbers = #tpu.dot_dimension_numbers<[1], [0], [0], [1], [0, 0, 1, 1], [], []>} : vector<8x8xf32>, vector<8x208xf32>, vector<8x208xf32> -> vector<8x208xf32>
    %142 = arith.addf %139, %141 : vector<8x208xf32>
    %c0_175 = arith.constant 0 : index
    %c16_176 = arith.constant 16 : index
    %143 = vector.load %arg27[%c0_175, %c16_176] : memref<8x256xf32, #tpu.memory_space<vmem>>, vector<8x208xf32>
    %cst_177 = arith.constant dense<0.000000e+00> : vector<8x208xf32>
    %144 = tpu.matmul %37, %143, %cst_177 {dimension_numbers = #tpu.dot_dimension_numbers<[1], [0], [0], [1], [0, 0, 1, 1], [], []>} : vector<8x8xf32>, vector<8x208xf32>, vector<8x208xf32> -> vector<8x208xf32>
    %145 = arith.addf %142, %144 : vector<8x208xf32>
    %c0_178 = arith.constant 0 : index
    %c17_179 = arith.constant 17 : index
    %146 = vector.load %arg27[%c0_178, %c17_179] : memref<8x256xf32, #tpu.memory_space<vmem>>, vector<8x208xf32>
    %cst_180 = arith.constant dense<0.000000e+00> : vector<8x208xf32>
    %147 = tpu.matmul %39, %146, %cst_180 {dimension_numbers = #tpu.dot_dimension_numbers<[1], [0], [0], [1], [0, 0, 1, 1], [], []>} : vector<8x8xf32>, vector<8x208xf32>, vector<8x208xf32> -> vector<8x208xf32>
    %148 = arith.addf %145, %147 : vector<8x208xf32>
    %c0_181 = arith.constant 0 : index
    %c18 = arith.constant 18 : index
    %149 = vector.load %arg27[%c0_181, %c18] : memref<8x256xf32, #tpu.memory_space<vmem>>, vector<8x208xf32>
    %cst_182 = arith.constant dense<0.000000e+00> : vector<8x208xf32>
    %150 = tpu.matmul %41, %149, %cst_182 {dimension_numbers = #tpu.dot_dimension_numbers<[1], [0], [0], [1], [0, 0, 1, 1], [], []>} : vector<8x8xf32>, vector<8x208xf32>, vector<8x208xf32> -> vector<8x208xf32>
    %151 = arith.addf %148, %150 : vector<8x208xf32>
    %c0_183 = arith.constant 0 : index
    %c32 = arith.constant 32 : index
    %152 = vector.load %arg27[%c0_183, %c32] : memref<8x256xf32, #tpu.memory_space<vmem>>, vector<8x208xf32>
    %cst_184 = arith.constant dense<0.000000e+00> : vector<8x208xf32>
    %153 = tpu.matmul %43, %152, %cst_184 {dimension_numbers = #tpu.dot_dimension_numbers<[1], [0], [0], [1], [0, 0, 1, 1], [], []>} : vector<8x8xf32>, vector<8x208xf32>, vector<8x208xf32> -> vector<8x208xf32>
    %154 = arith.addf %151, %153 : vector<8x208xf32>
    %c0_185 = arith.constant 0 : index
    %c33 = arith.constant 33 : index
    %155 = vector.load %arg27[%c0_185, %c33] : memref<8x256xf32, #tpu.memory_space<vmem>>, vector<8x208xf32>
    %cst_186 = arith.constant dense<0.000000e+00> : vector<8x208xf32>
    %156 = tpu.matmul %45, %155, %cst_186 {dimension_numbers = #tpu.dot_dimension_numbers<[1], [0], [0], [1], [0, 0, 1, 1], [], []>} : vector<8x8xf32>, vector<8x208xf32>, vector<8x208xf32> -> vector<8x208xf32>
    %157 = arith.addf %154, %156 : vector<8x208xf32>
    %c0_187 = arith.constant 0 : index
    %c34 = arith.constant 34 : index
    %158 = vector.load %arg27[%c0_187, %c34] : memref<8x256xf32, #tpu.memory_space<vmem>>, vector<8x208xf32>
    %cst_188 = arith.constant dense<0.000000e+00> : vector<8x208xf32>
    %159 = tpu.matmul %47, %158, %cst_188 {dimension_numbers = #tpu.dot_dimension_numbers<[1], [0], [0], [1], [0, 0, 1, 1], [], []>} : vector<8x8xf32>, vector<8x208xf32>, vector<8x208xf32> -> vector<8x208xf32>
    %160 = arith.addf %157, %159 : vector<8x208xf32>
    %161 = vector.broadcast %85 : vector<8x1xf32> to vector<8x208xf32>
    %162 = arith.addf %160, %161 : vector<8x208xf32>
    %cst_189 = arith.constant 0.000000e+00 : f32
    %163 = vector.broadcast %cst_189 : f32 to vector<8x208xf32>
    %164 = arith.maximumf %162, %163 : vector<8x208xf32>
    %c0_190 = arith.constant 0 : index
    %c0_191 = arith.constant 0 : index
    %165 = vector.load %arg28[%c0_190, %c0_191] : memref<8x256xf32, #tpu.memory_space<vmem>>, vector<8x208xf32>
    tpu.vector_store %arg28[%c0_190, %c0_191], %164 {strides = array<i32>} : memref<8x256xf32, #tpu.memory_space<vmem>>, vector<8x208xf32>,
    %cst_192 = arith.constant 0.000000e+00 : f32
    %166 = vector.broadcast %cst_192 : f32 to vector<8x176xf32>
    %c0_193 = arith.constant 0 : index
    %c0_194 = arith.constant 0 : index
    %167 = vector.load %arg28[%c0_193, %c0_194] : memref<8x256xf32, #tpu.memory_space<vmem>>, vector<8x176xf32>
    %cst_195 = arith.constant dense<0.000000e+00> : vector<8x176xf32>
    %168 = tpu.matmul %49, %167, %cst_195 {dimension_numbers = #tpu.dot_dimension_numbers<[1], [0], [0], [1], [0, 0, 1, 1], [], []>} : vector<8x8xf32>, vector<8x176xf32>, vector<8x176xf32> -> vector<8x176xf32>
    %169 = arith.addf %166, %168 : vector<8x176xf32>
    %c0_196 = arith.constant 0 : index
    %c1_197 = arith.constant 1 : index
    %170 = vector.load %arg28[%c0_196, %c1_197] : memref<8x256xf32, #tpu.memory_space<vmem>>, vector<8x176xf32>
    %cst_198 = arith.constant dense<0.000000e+00> : vector<8x176xf32>
    %171 = tpu.matmul %51, %170, %cst_198 {dimension_numbers = #tpu.dot_dimension_numbers<[1], [0], [0], [1], [0, 0, 1, 1], [], []>} : vector<8x8xf32>, vector<8x176xf32>, vector<8x176xf32> -> vector<8x176xf32>
    %172 = arith.addf %169, %171 : vector<8x176xf32>
    %c0_199 = arith.constant 0 : index
    %c2_200 = arith.constant 2 : index
    %173 = vector.load %arg28[%c0_199, %c2_200] : memref<8x256xf32, #tpu.memory_space<vmem>>, vector<8x176xf32>
    %cst_201 = arith.constant dense<0.000000e+00> : vector<8x176xf32>
    %174 = tpu.matmul %53, %173, %cst_201 {dimension_numbers = #tpu.dot_dimension_numbers<[1], [0], [0], [1], [0, 0, 1, 1], [], []>} : vector<8x8xf32>, vector<8x176xf32>, vector<8x176xf32> -> vector<8x176xf32>
    %175 = arith.addf %172, %174 : vector<8x176xf32>
    %c0_202 = arith.constant 0 : index
    %c16_203 = arith.constant 16 : index
    %176 = vector.load %arg28[%c0_202, %c16_203] : memref<8x256xf32, #tpu.memory_space<vmem>>, vector<8x176xf32>
    %cst_204 = arith.constant dense<0.000000e+00> : vector<8x176xf32>
    %177 = tpu.matmul %55, %176, %cst_204 {dimension_numbers = #tpu.dot_dimension_numbers<[1], [0], [0], [1], [0, 0, 1, 1], [], []>} : vector<8x8xf32>, vector<8x176xf32>, vector<8x176xf32> -> vector<8x176xf32>
    %178 = arith.addf %175, %177 : vector<8x176xf32>
    %c0_205 = arith.constant 0 : index
    %c17_206 = arith.constant 17 : index
    %179 = vector.load %arg28[%c0_205, %c17_206] : memref<8x256xf32, #tpu.memory_space<vmem>>, vector<8x176xf32>
    %cst_207 = arith.constant dense<0.000000e+00> : vector<8x176xf32>
    %180 = tpu.matmul %57, %179, %cst_207 {dimension_numbers = #tpu.dot_dimension_numbers<[1], [0], [0], [1], [0, 0, 1, 1], [], []>} : vector<8x8xf32>, vector<8x176xf32>, vector<8x176xf32> -> vector<8x176xf32>
    %181 = arith.addf %178, %180 : vector<8x176xf32>
    %c0_208 = arith.constant 0 : index
    %c18_209 = arith.constant 18 : index
    %182 = vector.load %arg28[%c0_208, %c18_209] : memref<8x256xf32, #tpu.memory_space<vmem>>, vector<8x176xf32>
    %cst_210 = arith.constant dense<0.000000e+00> : vector<8x176xf32>
    %183 = tpu.matmul %59, %182, %cst_210 {dimension_numbers = #tpu.dot_dimension_numbers<[1], [0], [0], [1], [0, 0, 1, 1], [], []>} : vector<8x8xf32>, vector<8x176xf32>, vector<8x176xf32> -> vector<8x176xf32>
    %184 = arith.addf %181, %183 : vector<8x176xf32>
    %c0_211 = arith.constant 0 : index
    %c32_212 = arith.constant 32 : index
    %185 = vector.load %arg28[%c0_211, %c32_212] : memref<8x256xf32, #tpu.memory_space<vmem>>, vector<8x176xf32>
    %cst_213 = arith.constant dense<0.000000e+00> : vector<8x176xf32>
    %186 = tpu.matmul %61, %185, %cst_213 {dimension_numbers = #tpu.dot_dimension_numbers<[1], [0], [0], [1], [0, 0, 1, 1], [], []>} : vector<8x8xf32>, vector<8x176xf32>, vector<8x176xf32> -> vector<8x176xf32>
    %187 = arith.addf %184, %186 : vector<8x176xf32>
    %c0_214 = arith.constant 0 : index
    %c33_215 = arith.constant 33 : index
    %188 = vector.load %arg28[%c0_214, %c33_215] : memref<8x256xf32, #tpu.memory_space<vmem>>, vector<8x176xf32>
    %cst_216 = arith.constant dense<0.000000e+00> : vector<8x176xf32>
    %189 = tpu.matmul %63, %188, %cst_216 {dimension_numbers = #tpu.dot_dimension_numbers<[1], [0], [0], [1], [0, 0, 1, 1], [], []>} : vector<8x8xf32>, vector<8x176xf32>, vector<8x176xf32> -> vector<8x176xf32>
    %190 = arith.addf %187, %189 : vector<8x176xf32>
    %c0_217 = arith.constant 0 : index
    %c34_218 = arith.constant 34 : index
    %191 = vector.load %arg28[%c0_217, %c34_218] : memref<8x256xf32, #tpu.memory_space<vmem>>, vector<8x176xf32>
    %cst_219 = arith.constant dense<0.000000e+00> : vector<8x176xf32>
    %192 = tpu.matmul %65, %191, %cst_219 {dimension_numbers = #tpu.dot_dimension_numbers<[1], [0], [0], [1], [0, 0, 1, 1], [], []>} : vector<8x8xf32>, vector<8x176xf32>, vector<8x176xf32> -> vector<8x176xf32>
    %193 = arith.addf %190, %192 : vector<8x176xf32>
    %194 = vector.broadcast %86 : vector<8x1xf32> to vector<8x176xf32>
    %195 = arith.addf %193, %194 : vector<8x176xf32>
    %cst_220 = arith.constant 0.000000e+00 : f32
    %196 = vector.broadcast %cst_220 : f32 to vector<8x176xf32>
    %197 = arith.maximumf %195, %196 : vector<8x176xf32>
    %c0_221 = arith.constant 0 : index
    %c0_222 = arith.constant 0 : index
    %198 = vector.load %arg29[%c0_221, %c0_222] : memref<8x256xf32, #tpu.memory_space<vmem>>, vector<8x176xf32>
    tpu.vector_store %arg29[%c0_221, %c0_222], %197 {strides = array<i32>} : memref<8x256xf32, #tpu.memory_space<vmem>>, vector<8x176xf32>,
    %cst_223 = arith.constant 0.000000e+00 : f32
    %199 = vector.broadcast %cst_223 : f32 to vector<8x144xf32>
    %c0_224 = arith.constant 0 : index
    %c0_225 = arith.constant 0 : index
    %200 = vector.load %arg29[%c0_224, %c0_225] : memref<8x256xf32, #tpu.memory_space<vmem>>, vector<8x144xf32>
    %cst_226 = arith.constant dense<0.000000e+00> : vector<8x144xf32>
    %201 = tpu.matmul %67, %200, %cst_226 {dimension_numbers = #tpu.dot_dimension_numbers<[1], [0], [0], [1], [0, 0, 1, 1], [], []>} : vector<8x8xf32>, vector<8x144xf32>, vector<8x144xf32> -> vector<8x144xf32>
    %202 = arith.addf %199, %201 : vector<8x144xf32>
    %c0_227 = arith.constant 0 : index
    %c1_228 = arith.constant 1 : index
    %203 = vector.load %arg29[%c0_227, %c1_228] : memref<8x256xf32, #tpu.memory_space<vmem>>, vector<8x144xf32>
    %cst_229 = arith.constant dense<0.000000e+00> : vector<8x144xf32>
    %204 = tpu.matmul %69, %203, %cst_229 {dimension_numbers = #tpu.dot_dimension_numbers<[1], [0], [0], [1], [0, 0, 1, 1], [], []>} : vector<8x8xf32>, vector<8x144xf32>, vector<8x144xf32> -> vector<8x144xf32>
    %205 = arith.addf %202, %204 : vector<8x144xf32>
    %c0_230 = arith.constant 0 : index
    %c2_231 = arith.constant 2 : index
    %206 = vector.load %arg29[%c0_230, %c2_231] : memref<8x256xf32, #tpu.memory_space<vmem>>, vector<8x144xf32>
    %cst_232 = arith.constant dense<0.000000e+00> : vector<8x144xf32>
    %207 = tpu.matmul %71, %206, %cst_232 {dimension_numbers = #tpu.dot_dimension_numbers<[1], [0], [0], [1], [0, 0, 1, 1], [], []>} : vector<8x8xf32>, vector<8x144xf32>, vector<8x144xf32> -> vector<8x144xf32>
    %208 = arith.addf %205, %207 : vector<8x144xf32>
    %c0_233 = arith.constant 0 : index
    %c16_234 = arith.constant 16 : index
    %209 = vector.load %arg29[%c0_233, %c16_234] : memref<8x256xf32, #tpu.memory_space<vmem>>, vector<8x144xf32>
    %cst_235 = arith.constant dense<0.000000e+00> : vector<8x144xf32>
    %210 = tpu.matmul %73, %209, %cst_235 {dimension_numbers = #tpu.dot_dimension_numbers<[1], [0], [0], [1], [0, 0, 1, 1], [], []>} : vector<8x8xf32>, vector<8x144xf32>, vector<8x144xf32> -> vector<8x144xf32>
    %211 = arith.addf %208, %210 : vector<8x144xf32>
    %c0_236 = arith.constant 0 : index
    %c17_237 = arith.constant 17 : index
    %212 = vector.load %arg29[%c0_236, %c17_237] : memref<8x256xf32, #tpu.memory_space<vmem>>, vector<8x144xf32>
    %cst_238 = arith.constant dense<0.000000e+00> : vector<8x144xf32>
    %213 = tpu.matmul %75, %212, %cst_238 {dimension_numbers = #tpu.dot_dimension_numbers<[1], [0], [0], [1], [0, 0, 1, 1], [], []>} : vector<8x8xf32>, vector<8x144xf32>, vector<8x144xf32> -> vector<8x144xf32>
    %214 = arith.addf %211, %213 : vector<8x144xf32>
    %c0_239 = arith.constant 0 : index
    %c18_240 = arith.constant 18 : index
    %215 = vector.load %arg29[%c0_239, %c18_240] : memref<8x256xf32, #tpu.memory_space<vmem>>, vector<8x144xf32>
    %cst_241 = arith.constant dense<0.000000e+00> : vector<8x144xf32>
    %216 = tpu.matmul %77, %215, %cst_241 {dimension_numbers = #tpu.dot_dimension_numbers<[1], [0], [0], [1], [0, 0, 1, 1], [], []>} : vector<8x8xf32>, vector<8x144xf32>, vector<8x144xf32> -> vector<8x144xf32>
    %217 = arith.addf %214, %216 : vector<8x144xf32>
    %c0_242 = arith.constant 0 : index
    %c32_243 = arith.constant 32 : index
    %218 = vector.load %arg29[%c0_242, %c32_243] : memref<8x256xf32, #tpu.memory_space<vmem>>, vector<8x144xf32>
    %cst_244 = arith.constant dense<0.000000e+00> : vector<8x144xf32>
    %219 = tpu.matmul %79, %218, %cst_244 {dimension_numbers = #tpu.dot_dimension_numbers<[1], [0], [0], [1], [0, 0, 1, 1], [], []>} : vector<8x8xf32>, vector<8x144xf32>, vector<8x144xf32> -> vector<8x144xf32>
    %220 = arith.addf %217, %219 : vector<8x144xf32>
    %c0_245 = arith.constant 0 : index
    %c33_246 = arith.constant 33 : index
    %221 = vector.load %arg29[%c0_245, %c33_246] : memref<8x256xf32, #tpu.memory_space<vmem>>, vector<8x144xf32>
    %cst_247 = arith.constant dense<0.000000e+00> : vector<8x144xf32>
    %222 = tpu.matmul %81, %221, %cst_247 {dimension_numbers = #tpu.dot_dimension_numbers<[1], [0], [0], [1], [0, 0, 1, 1], [], []>} : vector<8x8xf32>, vector<8x144xf32>, vector<8x144xf32> -> vector<8x144xf32>
    %223 = arith.addf %220, %222 : vector<8x144xf32>
    %c0_248 = arith.constant 0 : index
    %c34_249 = arith.constant 34 : index
    %224 = vector.load %arg29[%c0_248, %c34_249] : memref<8x256xf32, #tpu.memory_space<vmem>>, vector<8x144xf32>
    %cst_250 = arith.constant dense<0.000000e+00> : vector<8x144xf32>
    %225 = tpu.matmul %83, %224, %cst_250 {dimension_numbers = #tpu.dot_dimension_numbers<[1], [0], [0], [1], [0, 0, 1, 1], [], []>} : vector<8x8xf32>, vector<8x144xf32>, vector<8x144xf32> -> vector<8x144xf32>
    %226 = arith.addf %223, %225 : vector<8x144xf32>
    %227 = vector.broadcast %87 : vector<8x1xf32> to vector<8x144xf32>
    %228 = arith.addf %226, %227 : vector<8x144xf32>
    %cst_251 = arith.constant 0.000000e+00 : f32
    %229 = vector.broadcast %cst_251 : f32 to vector<8x144xf32>
    %230 = arith.maximumf %228, %229 : vector<8x144xf32>
    %c0_252 = arith.constant 0 : index
    %c0_253 = arith.constant 0 : index
    %231 = vector.load %arg30[%c0_252, %c0_253] : memref<8x256xf32, #tpu.memory_space<vmem>>, vector<8x144xf32>
    tpu.vector_store %arg30[%c0_252, %c0_253], %230 {strides = array<i32>} : memref<8x256xf32, #tpu.memory_space<vmem>>, vector<8x144xf32>,
    %c0_254 = arith.constant 0 : index
    %c0_255 = arith.constant 0 : index
    %232 = vector.load %arg30[%c0_254, %c0_255] : memref<8x256xf32, #tpu.memory_space<vmem>>, vector<1x256xf32>
    %c0_256 = arith.constant 0 : index
    %c0_257 = arith.constant 0 : index
    %233 = vector.load %arg13[%c0_256, %c0_257] : memref<2048x32xf32, #tpu.memory_space<vmem>>, vector<256x32xf32>
    %cst_258 = arith.constant dense<0.000000e+00> : vector<1x32xf32>
    %234 = tpu.matmul %232, %233, %cst_258 {dimension_numbers = #tpu.dot_dimension_numbers<[1], [0], [0], [1], [0, 0, 1, 1], [], []>} : vector<1x256xf32>, vector<256x32xf32>, vector<1x32xf32> -> vector<1x32xf32>
    %235 = arith.addf %88, %234 : vector<1x32xf32>
    %c1_259 = arith.constant 1 : index
    %c0_260 = arith.constant 0 : index
    %236 = vector.load %arg30[%c1_259, %c0_260] : memref<8x256xf32, #tpu.memory_space<vmem>>, vector<1x256xf32>
    %c256 = arith.constant 256 : index
    %c0_261 = arith.constant 0 : index
    %237 = vector.load %arg13[%c256, %c0_261] : memref<2048x32xf32, #tpu.memory_space<vmem>>, vector<256x32xf32>
    %cst_262 = arith.constant dense<0.000000e+00> : vector<1x32xf32>
    %238 = tpu.matmul %236, %237, %cst_262 {dimension_numbers = #tpu.dot_dimension_numbers<[1], [0], [0], [1], [0, 0, 1, 1], [], []>} : vector<1x256xf32>, vector<256x32xf32>, vector<1x32xf32> -> vector<1x32xf32>
    %239 = arith.addf %235, %238 : vector<1x32xf32>
    %c2_263 = arith.constant 2 : index
    %c0_264 = arith.constant 0 : index
    %240 = vector.load %arg30[%c2_263, %c0_264] : memref<8x256xf32, #tpu.memory_space<vmem>>, vector<1x256xf32>
    %c512 = arith.constant 512 : index
    %c0_265 = arith.constant 0 : index
    %241 = vector.load %arg13[%c512, %c0_265] : memref<2048x32xf32, #tpu.memory_space<vmem>>, vector<256x32xf32>
    %cst_266 = arith.constant dense<0.000000e+00> : vector<1x32xf32>
    %242 = tpu.matmul %240, %241, %cst_266 {dimension_numbers = #tpu.dot_dimension_numbers<[1], [0], [0], [1], [0, 0, 1, 1], [], []>} : vector<1x256xf32>, vector<256x32xf32>, vector<1x32xf32> -> vector<1x32xf32>
    %243 = arith.addf %239, %242 : vector<1x32xf32>
    %c3_267 = arith.constant 3 : index
    %c0_268 = arith.constant 0 : index
    %244 = vector.load %arg30[%c3_267, %c0_268] : memref<8x256xf32, #tpu.memory_space<vmem>>, vector<1x256xf32>
    %c768 = arith.constant 768 : index
    %c0_269 = arith.constant 0 : index
    %245 = vector.load %arg13[%c768, %c0_269] : memref<2048x32xf32, #tpu.memory_space<vmem>>, vector<256x32xf32>
    %cst_270 = arith.constant dense<0.000000e+00> : vector<1x32xf32>
    %246 = tpu.matmul %244, %245, %cst_270 {dimension_numbers = #tpu.dot_dimension_numbers<[1], [0], [0], [1], [0, 0, 1, 1], [], []>} : vector<1x256xf32>, vector<256x32xf32>, vector<1x32xf32> -> vector<1x32xf32>
    %247 = arith.addf %243, %246 : vector<1x32xf32>
    %c4_271 = arith.constant 4 : index
    %c0_272 = arith.constant 0 : index
    %248 = vector.load %arg30[%c4_271, %c0_272] : memref<8x256xf32, #tpu.memory_space<vmem>>, vector<1x256xf32>
    %c1024 = arith.constant 1024 : index
    %c0_273 = arith.constant 0 : index
    %249 = vector.load %arg13[%c1024, %c0_273] : memref<2048x32xf32, #tpu.memory_space<vmem>>, vector<256x32xf32>
    %cst_274 = arith.constant dense<0.000000e+00> : vector<1x32xf32>
    %250 = tpu.matmul %248, %249, %cst_274 {dimension_numbers = #tpu.dot_dimension_numbers<[1], [0], [0], [1], [0, 0, 1, 1], [], []>} : vector<1x256xf32>, vector<256x32xf32>, vector<1x32xf32> -> vector<1x32xf32>
    %251 = arith.addf %247, %250 : vector<1x32xf32>
    %c5_275 = arith.constant 5 : index
    %c0_276 = arith.constant 0 : index
    %252 = vector.load %arg30[%c5_275, %c0_276] : memref<8x256xf32, #tpu.memory_space<vmem>>, vector<1x256xf32>
    %c1280 = arith.constant 1280 : index
    %c0_277 = arith.constant 0 : index
    %253 = vector.load %arg13[%c1280, %c0_277] : memref<2048x32xf32, #tpu.memory_space<vmem>>, vector<256x32xf32>
    %cst_278 = arith.constant dense<0.000000e+00> : vector<1x32xf32>
    %254 = tpu.matmul %252, %253, %cst_278 {dimension_numbers = #tpu.dot_dimension_numbers<[1], [0], [0], [1], [0, 0, 1, 1], [], []>} : vector<1x256xf32>, vector<256x32xf32>, vector<1x32xf32> -> vector<1x32xf32>
    %255 = arith.addf %251, %254 : vector<1x32xf32>
    %c6_279 = arith.constant 6 : index
    %c0_280 = arith.constant 0 : index
    %256 = vector.load %arg30[%c6_279, %c0_280] : memref<8x256xf32, #tpu.memory_space<vmem>>, vector<1x256xf32>
    %c1536 = arith.constant 1536 : index
    %c0_281 = arith.constant 0 : index
    %257 = vector.load %arg13[%c1536, %c0_281] : memref<2048x32xf32, #tpu.memory_space<vmem>>, vector<256x32xf32>
    %cst_282 = arith.constant dense<0.000000e+00> : vector<1x32xf32>
    %258 = tpu.matmul %256, %257, %cst_282 {dimension_numbers = #tpu.dot_dimension_numbers<[1], [0], [0], [1], [0, 0, 1, 1], [], []>} : vector<1x256xf32>, vector<256x32xf32>, vector<1x32xf32> -> vector<1x32xf32>
    %259 = arith.addf %255, %258 : vector<1x32xf32>
    %c7_283 = arith.constant 7 : index
    %c0_284 = arith.constant 0 : index
    %260 = vector.load %arg30[%c7_283, %c0_284] : memref<8x256xf32, #tpu.memory_space<vmem>>, vector<1x256xf32>
    %c1792 = arith.constant 1792 : index
    %c0_285 = arith.constant 0 : index
    %261 = vector.load %arg13[%c1792, %c0_285] : memref<2048x32xf32, #tpu.memory_space<vmem>>, vector<256x32xf32>
    %cst_286 = arith.constant dense<0.000000e+00> : vector<1x32xf32>
    %262 = tpu.matmul %260, %261, %cst_286 {dimension_numbers = #tpu.dot_dimension_numbers<[1], [0], [0], [1], [0, 0, 1, 1], [], []>} : vector<1x256xf32>, vector<256x32xf32>, vector<1x32xf32> -> vector<1x32xf32>
    %263 = arith.addf %259, %262 : vector<1x32xf32>
    %c0_287 = arith.constant 0 : index
    %c0_288 = arith.constant 0 : index
    %264 = vector.load %arg31[%c0_287, %c0_288] : memref<8x32xf32, #tpu.memory_space<vmem>>, vector<1x32xf32>
    tpu.vector_store %arg31[%c0_287, %c0_288], %263 {strides = array<i32>} : memref<8x32xf32, #tpu.memory_space<vmem>>, vector<1x32xf32>,
    %cst_289 = arith.constant 0.000000e+00 : f32
    %265 = vector.broadcast %cst_289 : f32 to vector<8x240xf32>
    %c1_290 = arith.constant 1 : index
    %c0_291 = arith.constant 0 : index
    %c0_292 = arith.constant 0 : index
    %266 = vector.load %arg1[%c1_290, %c0_291, %c0_292] : memref<2x4x384xf32, #tpu.memory_space<vmem>>, vector<1x4x240xf32>
    %267 = vector.shape_cast %266 : vector<1x4x240xf32> to vector<4x240xf32>
    %cst_293 = arith.constant dense<0.000000e+00> : vector<8x240xf32>
    %268 = tpu.matmul %13, %267, %cst_293 {dimension_numbers = #tpu.dot_dimension_numbers<[1], [0], [0], [1], [0, 0, 1, 1], [], []>} : vector<8x4xf32>, vector<4x240xf32>, vector<8x240xf32> -> vector<8x240xf32>
    %269 = arith.addf %265, %268 : vector<8x240xf32>
    %c1_294 = arith.constant 1 : index
    %c0_295 = arith.constant 0 : index
    %c0_296 = arith.constant 0 : index
    %270 = vector.load %arg2[%c1_294, %c0_295, %c0_296] : memref<2x4x384xf32, #tpu.memory_space<vmem>>, vector<1x4x240xf32>
    %271 = vector.shape_cast %270 : vector<1x4x240xf32> to vector<4x240xf32>
    %cst_297 = arith.constant dense<0.000000e+00> : vector<8x240xf32>
    %272 = tpu.matmul %15, %271, %cst_297 {dimension_numbers = #tpu.dot_dimension_numbers<[1], [0], [0], [1], [0, 0, 1, 1], [], []>} : vector<8x4xf32>, vector<4x240xf32>, vector<8x240xf32> -> vector<8x240xf32>
    %273 = arith.addf %269, %272 : vector<8x240xf32>
    %c1_298 = arith.constant 1 : index
    %c0_299 = arith.constant 0 : index
    %c1_300 = arith.constant 1 : index
    %274 = vector.load %arg1[%c1_298, %c0_299, %c1_300] : memref<2x4x384xf32, #tpu.memory_space<vmem>>, vector<1x4x240xf32>
    %275 = vector.shape_cast %274 : vector<1x4x240xf32> to vector<4x240xf32>
    %cst_301 = arith.constant dense<0.000000e+00> : vector<8x240xf32>
    %276 = tpu.matmul %17, %275, %cst_301 {dimension_numbers = #tpu.dot_dimension_numbers<[1], [0], [0], [1], [0, 0, 1, 1], [], []>} : vector<8x4xf32>, vector<4x240xf32>, vector<8x240xf32> -> vector<8x240xf32>
    %277 = arith.addf %273, %276 : vector<8x240xf32>
    %c1_302 = arith.constant 1 : index
    %c0_303 = arith.constant 0 : index
    %c0_304 = arith.constant 0 : index
    %278 = vector.load %arg3[%c1_302, %c0_303, %c0_304] : memref<2x4x384xf32, #tpu.memory_space<vmem>>, vector<1x4x240xf32>
    %279 = vector.shape_cast %278 : vector<1x4x240xf32> to vector<4x240xf32>
    %cst_305 = arith.constant dense<0.000000e+00> : vector<8x240xf32>
    %280 = tpu.matmul %19, %279, %cst_305 {dimension_numbers = #tpu.dot_dimension_numbers<[1], [0], [0], [1], [0, 0, 1, 1], [], []>} : vector<8x4xf32>, vector<4x240xf32>, vector<8x240xf32> -> vector<8x240xf32>
    %281 = arith.addf %277, %280 : vector<8x240xf32>
    %c1_306 = arith.constant 1 : index
    %c0_307 = arith.constant 0 : index
    %c0_308 = arith.constant 0 : index
    %282 = vector.load %arg4[%c1_306, %c0_307, %c0_308] : memref<2x4x384xf32, #tpu.memory_space<vmem>>, vector<1x4x240xf32>
    %283 = vector.shape_cast %282 : vector<1x4x240xf32> to vector<4x240xf32>
    %cst_309 = arith.constant dense<0.000000e+00> : vector<8x240xf32>
    %284 = tpu.matmul %21, %283, %cst_309 {dimension_numbers = #tpu.dot_dimension_numbers<[1], [0], [0], [1], [0, 0, 1, 1], [], []>} : vector<8x4xf32>, vector<4x240xf32>, vector<8x240xf32> -> vector<8x240xf32>
    %285 = arith.addf %281, %284 : vector<8x240xf32>
    %c1_310 = arith.constant 1 : index
    %c0_311 = arith.constant 0 : index
    %c1_312 = arith.constant 1 : index
    %286 = vector.load %arg3[%c1_310, %c0_311, %c1_312] : memref<2x4x384xf32, #tpu.memory_space<vmem>>, vector<1x4x240xf32>
    %287 = vector.shape_cast %286 : vector<1x4x240xf32> to vector<4x240xf32>
    %cst_313 = arith.constant dense<0.000000e+00> : vector<8x240xf32>
    %288 = tpu.matmul %23, %287, %cst_313 {dimension_numbers = #tpu.dot_dimension_numbers<[1], [0], [0], [1], [0, 0, 1, 1], [], []>} : vector<8x4xf32>, vector<4x240xf32>, vector<8x240xf32> -> vector<8x240xf32>
    %289 = arith.addf %285, %288 : vector<8x240xf32>
    %c1_314 = arith.constant 1 : index
    %c0_315 = arith.constant 0 : index
    %c16_316 = arith.constant 16 : index
    %290 = vector.load %arg1[%c1_314, %c0_315, %c16_316] : memref<2x4x384xf32, #tpu.memory_space<vmem>>, vector<1x4x240xf32>
    %291 = vector.shape_cast %290 : vector<1x4x240xf32> to vector<4x240xf32>
    %cst_317 = arith.constant dense<0.000000e+00> : vector<8x240xf32>
    %292 = tpu.matmul %25, %291, %cst_317 {dimension_numbers = #tpu.dot_dimension_numbers<[1], [0], [0], [1], [0, 0, 1, 1], [], []>} : vector<8x4xf32>, vector<4x240xf32>, vector<8x240xf32> -> vector<8x240xf32>
    %293 = arith.addf %289, %292 : vector<8x240xf32>
    %c1_318 = arith.constant 1 : index
    %c0_319 = arith.constant 0 : index
    %c16_320 = arith.constant 16 : index
    %294 = vector.load %arg2[%c1_318, %c0_319, %c16_320] : memref<2x4x384xf32, #tpu.memory_space<vmem>>, vector<1x4x240xf32>
    %295 = vector.shape_cast %294 : vector<1x4x240xf32> to vector<4x240xf32>
    %cst_321 = arith.constant dense<0.000000e+00> : vector<8x240xf32>
    %296 = tpu.matmul %27, %295, %cst_321 {dimension_numbers = #tpu.dot_dimension_numbers<[1], [0], [0], [1], [0, 0, 1, 1], [], []>} : vector<8x4xf32>, vector<4x240xf32>, vector<8x240xf32> -> vector<8x240xf32>
    %297 = arith.addf %293, %296 : vector<8x240xf32>
    %c1_322 = arith.constant 1 : index
    %c0_323 = arith.constant 0 : index
    %c17_324 = arith.constant 17 : index
    %298 = vector.load %arg1[%c1_322, %c0_323, %c17_324] : memref<2x4x384xf32, #tpu.memory_space<vmem>>, vector<1x4x240xf32>
    %299 = vector.shape_cast %298 : vector<1x4x240xf32> to vector<4x240xf32>
    %cst_325 = arith.constant dense<0.000000e+00> : vector<8x240xf32>
    %300 = tpu.matmul %29, %299, %cst_325 {dimension_numbers = #tpu.dot_dimension_numbers<[1], [0], [0], [1], [0, 0, 1, 1], [], []>} : vector<8x4xf32>, vector<4x240xf32>, vector<8x240xf32> -> vector<8x240xf32>
    %301 = arith.addf %297, %300 : vector<8x240xf32>
    %cst_326 = arith.constant 0.00392156886 : f32
    %302 = vector.broadcast %cst_326 : f32 to vector<8x240xf32>
    %303 = arith.mulf %301, %302 : vector<8x240xf32>
    %304 = vector.broadcast %84 : vector<8x1xf32> to vector<8x240xf32>
    %305 = arith.addf %303, %304 : vector<8x240xf32>
    %cst_327 = arith.constant 0.000000e+00 : f32
    %306 = vector.broadcast %cst_327 : f32 to vector<8x240xf32>
    %307 = arith.maximumf %305, %306 : vector<8x240xf32>
    %c0_328 = arith.constant 0 : index
    %c0_329 = arith.constant 0 : index
    %308 = vector.load %arg27[%c0_328, %c0_329] : memref<8x256xf32, #tpu.memory_space<vmem>>, vector<8x240xf32>
    tpu.vector_store %arg27[%c0_328, %c0_329], %307 {strides = array<i32>} : memref<8x256xf32, #tpu.memory_space<vmem>>, vector<8x240xf32>,
    %cst_330 = arith.constant 0.000000e+00 : f32
    %309 = vector.broadcast %cst_330 : f32 to vector<8x208xf32>
    %c0_331 = arith.constant 0 : index
    %c0_332 = arith.constant 0 : index
    %310 = vector.load %arg27[%c0_331, %c0_332] : memref<8x256xf32, #tpu.memory_space<vmem>>, vector<8x208xf32>
    %cst_333 = arith.constant dense<0.000000e+00> : vector<8x208xf32>
    %311 = tpu.matmul %31, %310, %cst_333 {dimension_numbers = #tpu.dot_dimension_numbers<[1], [0], [0], [1], [0, 0, 1, 1], [], []>} : vector<8x8xf32>, vector<8x208xf32>, vector<8x208xf32> -> vector<8x208xf32>
    %312 = arith.addf %309, %311 : vector<8x208xf32>
    %c0_334 = arith.constant 0 : index
    %c1_335 = arith.constant 1 : index
    %313 = vector.load %arg27[%c0_334, %c1_335] : memref<8x256xf32, #tpu.memory_space<vmem>>, vector<8x208xf32>
    %cst_336 = arith.constant dense<0.000000e+00> : vector<8x208xf32>
    %314 = tpu.matmul %33, %313, %cst_336 {dimension_numbers = #tpu.dot_dimension_numbers<[1], [0], [0], [1], [0, 0, 1, 1], [], []>} : vector<8x8xf32>, vector<8x208xf32>, vector<8x208xf32> -> vector<8x208xf32>
    %315 = arith.addf %312, %314 : vector<8x208xf32>
    %c0_337 = arith.constant 0 : index
    %c2_338 = arith.constant 2 : index
    %316 = vector.load %arg27[%c0_337, %c2_338] : memref<8x256xf32, #tpu.memory_space<vmem>>, vector<8x208xf32>
    %cst_339 = arith.constant dense<0.000000e+00> : vector<8x208xf32>
    %317 = tpu.matmul %35, %316, %cst_339 {dimension_numbers = #tpu.dot_dimension_numbers<[1], [0], [0], [1], [0, 0, 1, 1], [], []>} : vector<8x8xf32>, vector<8x208xf32>, vector<8x208xf32> -> vector<8x208xf32>
    %318 = arith.addf %315, %317 : vector<8x208xf32>
    %c0_340 = arith.constant 0 : index
    %c16_341 = arith.constant 16 : index
    %319 = vector.load %arg27[%c0_340, %c16_341] : memref<8x256xf32, #tpu.memory_space<vmem>>, vector<8x208xf32>
    %cst_342 = arith.constant dense<0.000000e+00> : vector<8x208xf32>
    %320 = tpu.matmul %37, %319, %cst_342 {dimension_numbers = #tpu.dot_dimension_numbers<[1], [0], [0], [1], [0, 0, 1, 1], [], []>} : vector<8x8xf32>, vector<8x208xf32>, vector<8x208xf32> -> vector<8x208xf32>
    %321 = arith.addf %318, %320 : vector<8x208xf32>
    %c0_343 = arith.constant 0 : index
    %c17_344 = arith.constant 17 : index
    %322 = vector.load %arg27[%c0_343, %c17_344] : memref<8x256xf32, #tpu.memory_space<vmem>>, vector<8x208xf32>
    %cst_345 = arith.constant dense<0.000000e+00> : vector<8x208xf32>
    %323 = tpu.matmul %39, %322, %cst_345 {dimension_numbers = #tpu.dot_dimension_numbers<[1], [0], [0], [1], [0, 0, 1, 1], [], []>} : vector<8x8xf32>, vector<8x208xf32>, vector<8x208xf32> -> vector<8x208xf32>
    %324 = arith.addf %321, %323 : vector<8x208xf32>
    %c0_346 = arith.constant 0 : index
    %c18_347 = arith.constant 18 : index
    %325 = vector.load %arg27[%c0_346, %c18_347] : memref<8x256xf32, #tpu.memory_space<vmem>>, vector<8x208xf32>
    %cst_348 = arith.constant dense<0.000000e+00> : vector<8x208xf32>
    %326 = tpu.matmul %41, %325, %cst_348 {dimension_numbers = #tpu.dot_dimension_numbers<[1], [0], [0], [1], [0, 0, 1, 1], [], []>} : vector<8x8xf32>, vector<8x208xf32>, vector<8x208xf32> -> vector<8x208xf32>
    %327 = arith.addf %324, %326 : vector<8x208xf32>
    %c0_349 = arith.constant 0 : index
    %c32_350 = arith.constant 32 : index
    %328 = vector.load %arg27[%c0_349, %c32_350] : memref<8x256xf32, #tpu.memory_space<vmem>>, vector<8x208xf32>
    %cst_351 = arith.constant dense<0.000000e+00> : vector<8x208xf32>
    %329 = tpu.matmul %43, %328, %cst_351 {dimension_numbers = #tpu.dot_dimension_numbers<[1], [0], [0], [1], [0, 0, 1, 1], [], []>} : vector<8x8xf32>, vector<8x208xf32>, vector<8x208xf32> -> vector<8x208xf32>
    %330 = arith.addf %327, %329 : vector<8x208xf32>
    %c0_352 = arith.constant 0 : index
    %c33_353 = arith.constant 33 : index
    %331 = vector.load %arg27[%c0_352, %c33_353] : memref<8x256xf32, #tpu.memory_space<vmem>>, vector<8x208xf32>
    %cst_354 = arith.constant dense<0.000000e+00> : vector<8x208xf32>
    %332 = tpu.matmul %45, %331, %cst_354 {dimension_numbers = #tpu.dot_dimension_numbers<[1], [0], [0], [1], [0, 0, 1, 1], [], []>} : vector<8x8xf32>, vector<8x208xf32>, vector<8x208xf32> -> vector<8x208xf32>
    %333 = arith.addf %330, %332 : vector<8x208xf32>
    %c0_355 = arith.constant 0 : index
    %c34_356 = arith.constant 34 : index
    %334 = vector.load %arg27[%c0_355, %c34_356] : memref<8x256xf32, #tpu.memory_space<vmem>>, vector<8x208xf32>
    %cst_357 = arith.constant dense<0.000000e+00> : vector<8x208xf32>
    %335 = tpu.matmul %47, %334, %cst_357 {dimension_numbers = #tpu.dot_dimension_numbers<[1], [0], [0], [1], [0, 0, 1, 1], [], []>} : vector<8x8xf32>, vector<8x208xf32>, vector<8x208xf32> -> vector<8x208xf32>
    %336 = arith.addf %333, %335 : vector<8x208xf32>
    %337 = vector.broadcast %85 : vector<8x1xf32> to vector<8x208xf32>
    %338 = arith.addf %336, %337 : vector<8x208xf32>
    %cst_358 = arith.constant 0.000000e+00 : f32
    %339 = vector.broadcast %cst_358 : f32 to vector<8x208xf32>
    %340 = arith.maximumf %338, %339 : vector<8x208xf32>
    %c0_359 = arith.constant 0 : index
    %c0_360 = arith.constant 0 : index
    %341 = vector.load %arg28[%c0_359, %c0_360] : memref<8x256xf32, #tpu.memory_space<vmem>>, vector<8x208xf32>
    tpu.vector_store %arg28[%c0_359, %c0_360], %340 {strides = array<i32>} : memref<8x256xf32, #tpu.memory_space<vmem>>, vector<8x208xf32>,
    %cst_361 = arith.constant 0.000000e+00 : f32
    %342 = vector.broadcast %cst_361 : f32 to vector<8x176xf32>
    %c0_362 = arith.constant 0 : index
    %c0_363 = arith.constant 0 : index
    %343 = vector.load %arg28[%c0_362, %c0_363] : memref<8x256xf32, #tpu.memory_space<vmem>>, vector<8x176xf32>
    %cst_364 = arith.constant dense<0.000000e+00> : vector<8x176xf32>
    %344 = tpu.matmul %49, %343, %cst_364 {dimension_numbers = #tpu.dot_dimension_numbers<[1], [0], [0], [1], [0, 0, 1, 1], [], []>} : vector<8x8xf32>, vector<8x176xf32>, vector<8x176xf32> -> vector<8x176xf32>
    %345 = arith.addf %342, %344 : vector<8x176xf32>
    %c0_365 = arith.constant 0 : index
    %c1_366 = arith.constant 1 : index
    %346 = vector.load %arg28[%c0_365, %c1_366] : memref<8x256xf32, #tpu.memory_space<vmem>>, vector<8x176xf32>
    %cst_367 = arith.constant dense<0.000000e+00> : vector<8x176xf32>
    %347 = tpu.matmul %51, %346, %cst_367 {dimension_numbers = #tpu.dot_dimension_numbers<[1], [0], [0], [1], [0, 0, 1, 1], [], []>} : vector<8x8xf32>, vector<8x176xf32>, vector<8x176xf32> -> vector<8x176xf32>
    %348 = arith.addf %345, %347 : vector<8x176xf32>
    %c0_368 = arith.constant 0 : index
    %c2_369 = arith.constant 2 : index
    %349 = vector.load %arg28[%c0_368, %c2_369] : memref<8x256xf32, #tpu.memory_space<vmem>>, vector<8x176xf32>
    %cst_370 = arith.constant dense<0.000000e+00> : vector<8x176xf32>
    %350 = tpu.matmul %53, %349, %cst_370 {dimension_numbers = #tpu.dot_dimension_numbers<[1], [0], [0], [1], [0, 0, 1, 1], [], []>} : vector<8x8xf32>, vector<8x176xf32>, vector<8x176xf32> -> vector<8x176xf32>
    %351 = arith.addf %348, %350 : vector<8x176xf32>
    %c0_371 = arith.constant 0 : index
    %c16_372 = arith.constant 16 : index
    %352 = vector.load %arg28[%c0_371, %c16_372] : memref<8x256xf32, #tpu.memory_space<vmem>>, vector<8x176xf32>
    %cst_373 = arith.constant dense<0.000000e+00> : vector<8x176xf32>
    %353 = tpu.matmul %55, %352, %cst_373 {dimension_numbers = #tpu.dot_dimension_numbers<[1], [0], [0], [1], [0, 0, 1, 1], [], []>} : vector<8x8xf32>, vector<8x176xf32>, vector<8x176xf32> -> vector<8x176xf32>
    %354 = arith.addf %351, %353 : vector<8x176xf32>
    %c0_374 = arith.constant 0 : index
    %c17_375 = arith.constant 17 : index
    %355 = vector.load %arg28[%c0_374, %c17_375] : memref<8x256xf32, #tpu.memory_space<vmem>>, vector<8x176xf32>
    %cst_376 = arith.constant dense<0.000000e+00> : vector<8x176xf32>
    %356 = tpu.matmul %57, %355, %cst_376 {dimension_numbers = #tpu.dot_dimension_numbers<[1], [0], [0], [1], [0, 0, 1, 1], [], []>} : vector<8x8xf32>, vector<8x176xf32>, vector<8x176xf32> -> vector<8x176xf32>
    %357 = arith.addf %354, %356 : vector<8x176xf32>
    %c0_377 = arith.constant 0 : index
    %c18_378 = arith.constant 18 : index
    %358 = vector.load %arg28[%c0_377, %c18_378] : memref<8x256xf32, #tpu.memory_space<vmem>>, vector<8x176xf32>
    %cst_379 = arith.constant dense<0.000000e+00> : vector<8x176xf32>
    %359 = tpu.matmul %59, %358, %cst_379 {dimension_numbers = #tpu.dot_dimension_numbers<[1], [0], [0], [1], [0, 0, 1, 1], [], []>} : vector<8x8xf32>, vector<8x176xf32>, vector<8x176xf32> -> vector<8x176xf32>
    %360 = arith.addf %357, %359 : vector<8x176xf32>
    %c0_380 = arith.constant 0 : index
    %c32_381 = arith.constant 32 : index
    %361 = vector.load %arg28[%c0_380, %c32_381] : memref<8x256xf32, #tpu.memory_space<vmem>>, vector<8x176xf32>
    %cst_382 = arith.constant dense<0.000000e+00> : vector<8x176xf32>
    %362 = tpu.matmul %61, %361, %cst_382 {dimension_numbers = #tpu.dot_dimension_numbers<[1], [0], [0], [1], [0, 0, 1, 1], [], []>} : vector<8x8xf32>, vector<8x176xf32>, vector<8x176xf32> -> vector<8x176xf32>
    %363 = arith.addf %360, %362 : vector<8x176xf32>
    %c0_383 = arith.constant 0 : index
    %c33_384 = arith.constant 33 : index
    %364 = vector.load %arg28[%c0_383, %c33_384] : memref<8x256xf32, #tpu.memory_space<vmem>>, vector<8x176xf32>
    %cst_385 = arith.constant dense<0.000000e+00> : vector<8x176xf32>
    %365 = tpu.matmul %63, %364, %cst_385 {dimension_numbers = #tpu.dot_dimension_numbers<[1], [0], [0], [1], [0, 0, 1, 1], [], []>} : vector<8x8xf32>, vector<8x176xf32>, vector<8x176xf32> -> vector<8x176xf32>
    %366 = arith.addf %363, %365 : vector<8x176xf32>
    %c0_386 = arith.constant 0 : index
    %c34_387 = arith.constant 34 : index
    %367 = vector.load %arg28[%c0_386, %c34_387] : memref<8x256xf32, #tpu.memory_space<vmem>>, vector<8x176xf32>
    %cst_388 = arith.constant dense<0.000000e+00> : vector<8x176xf32>
    %368 = tpu.matmul %65, %367, %cst_388 {dimension_numbers = #tpu.dot_dimension_numbers<[1], [0], [0], [1], [0, 0, 1, 1], [], []>} : vector<8x8xf32>, vector<8x176xf32>, vector<8x176xf32> -> vector<8x176xf32>
    %369 = arith.addf %366, %368 : vector<8x176xf32>
    %370 = vector.broadcast %86 : vector<8x1xf32> to vector<8x176xf32>
    %371 = arith.addf %369, %370 : vector<8x176xf32>
    %cst_389 = arith.constant 0.000000e+00 : f32
    %372 = vector.broadcast %cst_389 : f32 to vector<8x176xf32>
    %373 = arith.maximumf %371, %372 : vector<8x176xf32>
    %c0_390 = arith.constant 0 : index
    %c0_391 = arith.constant 0 : index
    %374 = vector.load %arg29[%c0_390, %c0_391] : memref<8x256xf32, #tpu.memory_space<vmem>>, vector<8x176xf32>
    tpu.vector_store %arg29[%c0_390, %c0_391], %373 {strides = array<i32>} : memref<8x256xf32, #tpu.memory_space<vmem>>, vector<8x176xf32>,
    %cst_392 = arith.constant 0.000000e+00 : f32
    %375 = vector.broadcast %cst_392 : f32 to vector<8x144xf32>
    %c0_393 = arith.constant 0 : index
    %c0_394 = arith.constant 0 : index
    %376 = vector.load %arg29[%c0_393, %c0_394] : memref<8x256xf32, #tpu.memory_space<vmem>>, vector<8x144xf32>
    %cst_395 = arith.constant dense<0.000000e+00> : vector<8x144xf32>
    %377 = tpu.matmul %67, %376, %cst_395 {dimension_numbers = #tpu.dot_dimension_numbers<[1], [0], [0], [1], [0, 0, 1, 1], [], []>} : vector<8x8xf32>, vector<8x144xf32>, vector<8x144xf32> -> vector<8x144xf32>
    %378 = arith.addf %375, %377 : vector<8x144xf32>
    %c0_396 = arith.constant 0 : index
    %c1_397 = arith.constant 1 : index
    %379 = vector.load %arg29[%c0_396, %c1_397] : memref<8x256xf32, #tpu.memory_space<vmem>>, vector<8x144xf32>
    %cst_398 = arith.constant dense<0.000000e+00> : vector<8x144xf32>
    %380 = tpu.matmul %69, %379, %cst_398 {dimension_numbers = #tpu.dot_dimension_numbers<[1], [0], [0], [1], [0, 0, 1, 1], [], []>} : vector<8x8xf32>, vector<8x144xf32>, vector<8x144xf32> -> vector<8x144xf32>
    %381 = arith.addf %378, %380 : vector<8x144xf32>
    %c0_399 = arith.constant 0 : index
    %c2_400 = arith.constant 2 : index
    %382 = vector.load %arg29[%c0_399, %c2_400] : memref<8x256xf32, #tpu.memory_space<vmem>>, vector<8x144xf32>
    %cst_401 = arith.constant dense<0.000000e+00> : vector<8x144xf32>
    %383 = tpu.matmul %71, %382, %cst_401 {dimension_numbers = #tpu.dot_dimension_numbers<[1], [0], [0], [1], [0, 0, 1, 1], [], []>} : vector<8x8xf32>, vector<8x144xf32>, vector<8x144xf32> -> vector<8x144xf32>
    %384 = arith.addf %381, %383 : vector<8x144xf32>
    %c0_402 = arith.constant 0 : index
    %c16_403 = arith.constant 16 : index
    %385 = vector.load %arg29[%c0_402, %c16_403] : memref<8x256xf32, #tpu.memory_space<vmem>>, vector<8x144xf32>
    %cst_404 = arith.constant dense<0.000000e+00> : vector<8x144xf32>
    %386 = tpu.matmul %73, %385, %cst_404 {dimension_numbers = #tpu.dot_dimension_numbers<[1], [0], [0], [1], [0, 0, 1, 1], [], []>} : vector<8x8xf32>, vector<8x144xf32>, vector<8x144xf32> -> vector<8x144xf32>
    %387 = arith.addf %384, %386 : vector<8x144xf32>
    %c0_405 = arith.constant 0 : index
    %c17_406 = arith.constant 17 : index
    %388 = vector.load %arg29[%c0_405, %c17_406] : memref<8x256xf32, #tpu.memory_space<vmem>>, vector<8x144xf32>
    %cst_407 = arith.constant dense<0.000000e+00> : vector<8x144xf32>
    %389 = tpu.matmul %75, %388, %cst_407 {dimension_numbers = #tpu.dot_dimension_numbers<[1], [0], [0], [1], [0, 0, 1, 1], [], []>} : vector<8x8xf32>, vector<8x144xf32>, vector<8x144xf32> -> vector<8x144xf32>
    %390 = arith.addf %387, %389 : vector<8x144xf32>
    %c0_408 = arith.constant 0 : index
    %c18_409 = arith.constant 18 : index
    %391 = vector.load %arg29[%c0_408, %c18_409] : memref<8x256xf32, #tpu.memory_space<vmem>>, vector<8x144xf32>
    %cst_410 = arith.constant dense<0.000000e+00> : vector<8x144xf32>
    %392 = tpu.matmul %77, %391, %cst_410 {dimension_numbers = #tpu.dot_dimension_numbers<[1], [0], [0], [1], [0, 0, 1, 1], [], []>} : vector<8x8xf32>, vector<8x144xf32>, vector<8x144xf32> -> vector<8x144xf32>
    %393 = arith.addf %390, %392 : vector<8x144xf32>
    %c0_411 = arith.constant 0 : index
    %c32_412 = arith.constant 32 : index
    %394 = vector.load %arg29[%c0_411, %c32_412] : memref<8x256xf32, #tpu.memory_space<vmem>>, vector<8x144xf32>
    %cst_413 = arith.constant dense<0.000000e+00> : vector<8x144xf32>
    %395 = tpu.matmul %79, %394, %cst_413 {dimension_numbers = #tpu.dot_dimension_numbers<[1], [0], [0], [1], [0, 0, 1, 1], [], []>} : vector<8x8xf32>, vector<8x144xf32>, vector<8x144xf32> -> vector<8x144xf32>
    %396 = arith.addf %393, %395 : vector<8x144xf32>
    %c0_414 = arith.constant 0 : index
    %c33_415 = arith.constant 33 : index
    %397 = vector.load %arg29[%c0_414, %c33_415] : memref<8x256xf32, #tpu.memory_space<vmem>>, vector<8x144xf32>
    %cst_416 = arith.constant dense<0.000000e+00> : vector<8x144xf32>
    %398 = tpu.matmul %81, %397, %cst_416 {dimension_numbers = #tpu.dot_dimension_numbers<[1], [0], [0], [1], [0, 0, 1, 1], [], []>} : vector<8x8xf32>, vector<8x144xf32>, vector<8x144xf32> -> vector<8x144xf32>
    %399 = arith.addf %396, %398 : vector<8x144xf32>
    %c0_417 = arith.constant 0 : index
    %c34_418 = arith.constant 34 : index
    %400 = vector.load %arg29[%c0_417, %c34_418] : memref<8x256xf32, #tpu.memory_space<vmem>>, vector<8x144xf32>
    %cst_419 = arith.constant dense<0.000000e+00> : vector<8x144xf32>
    %401 = tpu.matmul %83, %400, %cst_419 {dimension_numbers = #tpu.dot_dimension_numbers<[1], [0], [0], [1], [0, 0, 1, 1], [], []>} : vector<8x8xf32>, vector<8x144xf32>, vector<8x144xf32> -> vector<8x144xf32>
    %402 = arith.addf %399, %401 : vector<8x144xf32>
    %403 = vector.broadcast %87 : vector<8x1xf32> to vector<8x144xf32>
    %404 = arith.addf %402, %403 : vector<8x144xf32>
    %cst_420 = arith.constant 0.000000e+00 : f32
    %405 = vector.broadcast %cst_420 : f32 to vector<8x144xf32>
    %406 = arith.maximumf %404, %405 : vector<8x144xf32>
    %c0_421 = arith.constant 0 : index
    %c0_422 = arith.constant 0 : index
    %407 = vector.load %arg30[%c0_421, %c0_422] : memref<8x256xf32, #tpu.memory_space<vmem>>, vector<8x144xf32>
    tpu.vector_store %arg30[%c0_421, %c0_422], %406 {strides = array<i32>} : memref<8x256xf32, #tpu.memory_space<vmem>>, vector<8x144xf32>,
    %c0_423 = arith.constant 0 : index
    %c0_424 = arith.constant 0 : index
    %408 = vector.load %arg30[%c0_423, %c0_424] : memref<8x256xf32, #tpu.memory_space<vmem>>, vector<1x256xf32>
    %c0_425 = arith.constant 0 : index
    %c0_426 = arith.constant 0 : index
    %409 = vector.load %arg13[%c0_425, %c0_426] : memref<2048x32xf32, #tpu.memory_space<vmem>>, vector<256x32xf32>
    %cst_427 = arith.constant dense<0.000000e+00> : vector<1x32xf32>
    %410 = tpu.matmul %408, %409, %cst_427 {dimension_numbers = #tpu.dot_dimension_numbers<[1], [0], [0], [1], [0, 0, 1, 1], [], []>} : vector<1x256xf32>, vector<256x32xf32>, vector<1x32xf32> -> vector<1x32xf32>
    %411 = arith.addf %88, %410 : vector<1x32xf32>
    %c1_428 = arith.constant 1 : index
    %c0_429 = arith.constant 0 : index
    %412 = vector.load %arg30[%c1_428, %c0_429] : memref<8x256xf32, #tpu.memory_space<vmem>>, vector<1x256xf32>
    %c256_430 = arith.constant 256 : index
    %c0_431 = arith.constant 0 : index
    %413 = vector.load %arg13[%c256_430, %c0_431] : memref<2048x32xf32, #tpu.memory_space<vmem>>, vector<256x32xf32>
    %cst_432 = arith.constant dense<0.000000e+00> : vector<1x32xf32>
    %414 = tpu.matmul %412, %413, %cst_432 {dimension_numbers = #tpu.dot_dimension_numbers<[1], [0], [0], [1], [0, 0, 1, 1], [], []>} : vector<1x256xf32>, vector<256x32xf32>, vector<1x32xf32> -> vector<1x32xf32>
    %415 = arith.addf %411, %414 : vector<1x32xf32>
    %c2_433 = arith.constant 2 : index
    %c0_434 = arith.constant 0 : index
    %416 = vector.load %arg30[%c2_433, %c0_434] : memref<8x256xf32, #tpu.memory_space<vmem>>, vector<1x256xf32>
    %c512_435 = arith.constant 512 : index
    %c0_436 = arith.constant 0 : index
    %417 = vector.load %arg13[%c512_435, %c0_436] : memref<2048x32xf32, #tpu.memory_space<vmem>>, vector<256x32xf32>
    %cst_437 = arith.constant dense<0.000000e+00> : vector<1x32xf32>
    %418 = tpu.matmul %416, %417, %cst_437 {dimension_numbers = #tpu.dot_dimension_numbers<[1], [0], [0], [1], [0, 0, 1, 1], [], []>} : vector<1x256xf32>, vector<256x32xf32>, vector<1x32xf32> -> vector<1x32xf32>
    %419 = arith.addf %415, %418 : vector<1x32xf32>
    %c3_438 = arith.constant 3 : index
    %c0_439 = arith.constant 0 : index
    %420 = vector.load %arg30[%c3_438, %c0_439] : memref<8x256xf32, #tpu.memory_space<vmem>>, vector<1x256xf32>
    %c768_440 = arith.constant 768 : index
    %c0_441 = arith.constant 0 : index
    %421 = vector.load %arg13[%c768_440, %c0_441] : memref<2048x32xf32, #tpu.memory_space<vmem>>, vector<256x32xf32>
    %cst_442 = arith.constant dense<0.000000e+00> : vector<1x32xf32>
    %422 = tpu.matmul %420, %421, %cst_442 {dimension_numbers = #tpu.dot_dimension_numbers<[1], [0], [0], [1], [0, 0, 1, 1], [], []>} : vector<1x256xf32>, vector<256x32xf32>, vector<1x32xf32> -> vector<1x32xf32>
    %423 = arith.addf %419, %422 : vector<1x32xf32>
    %c4_443 = arith.constant 4 : index
    %c0_444 = arith.constant 0 : index
    %424 = vector.load %arg30[%c4_443, %c0_444] : memref<8x256xf32, #tpu.memory_space<vmem>>, vector<1x256xf32>
    %c1024_445 = arith.constant 1024 : index
    %c0_446 = arith.constant 0 : index
    %425 = vector.load %arg13[%c1024_445, %c0_446] : memref<2048x32xf32, #tpu.memory_space<vmem>>, vector<256x32xf32>
    %cst_447 = arith.constant dense<0.000000e+00> : vector<1x32xf32>
    %426 = tpu.matmul %424, %425, %cst_447 {dimension_numbers = #tpu.dot_dimension_numbers<[1], [0], [0], [1], [0, 0, 1, 1], [], []>} : vector<1x256xf32>, vector<256x32xf32>, vector<1x32xf32> -> vector<1x32xf32>
    %427 = arith.addf %423, %426 : vector<1x32xf32>
    %c5_448 = arith.constant 5 : index
    %c0_449 = arith.constant 0 : index
    %428 = vector.load %arg30[%c5_448, %c0_449] : memref<8x256xf32, #tpu.memory_space<vmem>>, vector<1x256xf32>
    %c1280_450 = arith.constant 1280 : index
    %c0_451 = arith.constant 0 : index
    %429 = vector.load %arg13[%c1280_450, %c0_451] : memref<2048x32xf32, #tpu.memory_space<vmem>>, vector<256x32xf32>
    %cst_452 = arith.constant dense<0.000000e+00> : vector<1x32xf32>
    %430 = tpu.matmul %428, %429, %cst_452 {dimension_numbers = #tpu.dot_dimension_numbers<[1], [0], [0], [1], [0, 0, 1, 1], [], []>} : vector<1x256xf32>, vector<256x32xf32>, vector<1x32xf32> -> vector<1x32xf32>
    %431 = arith.addf %427, %430 : vector<1x32xf32>
    %c6_453 = arith.constant 6 : index
    %c0_454 = arith.constant 0 : index
    %432 = vector.load %arg30[%c6_453, %c0_454] : memref<8x256xf32, #tpu.memory_space<vmem>>, vector<1x256xf32>
    %c1536_455 = arith.constant 1536 : index
    %c0_456 = arith.constant 0 : index
    %433 = vector.load %arg13[%c1536_455, %c0_456] : memref<2048x32xf32, #tpu.memory_space<vmem>>, vector<256x32xf32>
    %cst_457 = arith.constant dense<0.000000e+00> : vector<1x32xf32>
    %434 = tpu.matmul %432, %433, %cst_457 {dimension_numbers = #tpu.dot_dimension_numbers<[1], [0], [0], [1], [0, 0, 1, 1], [], []>} : vector<1x256xf32>, vector<256x32xf32>, vector<1x32xf32> -> vector<1x32xf32>
    %435 = arith.addf %431, %434 : vector<1x32xf32>
    %c7_458 = arith.constant 7 : index
    %c0_459 = arith.constant 0 : index
    %436 = vector.load %arg30[%c7_458, %c0_459] : memref<8x256xf32, #tpu.memory_space<vmem>>, vector<1x256xf32>
    %c1792_460 = arith.constant 1792 : index
    %c0_461 = arith.constant 0 : index
    %437 = vector.load %arg13[%c1792_460, %c0_461] : memref<2048x32xf32, #tpu.memory_space<vmem>>, vector<256x32xf32>
    %cst_462 = arith.constant dense<0.000000e+00> : vector<1x32xf32>
    %438 = tpu.matmul %436, %437, %cst_462 {dimension_numbers = #tpu.dot_dimension_numbers<[1], [0], [0], [1], [0, 0, 1, 1], [], []>} : vector<1x256xf32>, vector<256x32xf32>, vector<1x32xf32> -> vector<1x32xf32>
    %439 = arith.addf %435, %438 : vector<1x32xf32>
    %c1_463 = arith.constant 1 : index
    %c0_464 = arith.constant 0 : index
    %440 = vector.load %arg31[%c1_463, %c0_464] : memref<8x32xf32, #tpu.memory_space<vmem>>, vector<1x32xf32>
    tpu.vector_store %arg31[%c1_463, %c0_464], %439 {strides = array<i32>} : memref<8x32xf32, #tpu.memory_space<vmem>>, vector<1x32xf32>,
    %c0_465 = arith.constant 0 : index
    %c0_466 = arith.constant 0 : index
    %441 = vector.load %arg31[%c0_465, %c0_466] : memref<8x32xf32, #tpu.memory_space<vmem>>, vector<8x32xf32>
    %cst_467 = arith.constant dense<0.000000e+00> : vector<8xf32>
    %442 = vector.multi_reduction <add>, %441, %cst_467 [1] : vector<8x32xf32> to vector<8xf32>
    %443 = vector.shape_cast %442 : vector<8xf32> to vector<8x1xf32>
    %cst_468 = arith.constant 3.200000e+01 : f32
    %444 = vector.broadcast %cst_468 : f32 to vector<8x1xf32>
    %445 = arith.divf %443, %444 : vector<8x1xf32>
    %446 = vector.broadcast %445 : vector<8x1xf32> to vector<8x32xf32>
    %447 = arith.subf %441, %446 : vector<8x32xf32>
    %448 = arith.mulf %447, %447 : vector<8x32xf32>
    %cst_469 = arith.constant dense<0.000000e+00> : vector<8xf32>
    %449 = vector.multi_reduction <add>, %448, %cst_469 [1] : vector<8x32xf32> to vector<8xf32>
    %450 = vector.shape_cast %449 : vector<8xf32> to vector<8x1xf32>
    %cst_470 = arith.constant 3.200000e+01 : f32
    %451 = vector.broadcast %cst_470 : f32 to vector<8x1xf32>
    %452 = arith.divf %450, %451 : vector<8x1xf32>
    %453 = vector.broadcast %445 : vector<8x1xf32> to vector<8x32xf32>
    %454 = arith.subf %441, %453 : vector<8x32xf32>
    %cst_471 = arith.constant 9.99999974E-6 : f32
    %455 = vector.broadcast %cst_471 : f32 to vector<8x1xf32>
    %456 = arith.addf %452, %455 : vector<8x1xf32>
    %457 = math.rsqrt %456 : vector<8x1xf32>
    %458 = vector.broadcast %457 : vector<8x1xf32> to vector<8x32xf32>
    %459 = arith.mulf %454, %458 : vector<8x32xf32>
    %c0_472 = arith.constant 0 : index
    %c0_473 = arith.constant 0 : index
    %460 = vector.load %arg15[%c0_472, %c0_473] : memref<1x32xf32, #tpu.memory_space<vmem>>, vector<1x32xf32>
    %461 = vector.broadcast %460 : vector<1x32xf32> to vector<8x32xf32>
    %462 = arith.mulf %459, %461 : vector<8x32xf32>
    %c0_474 = arith.constant 0 : index
    %c0_475 = arith.constant 0 : index
    %463 = vector.load %arg16[%c0_474, %c0_475] : memref<1x32xf32, #tpu.memory_space<vmem>>, vector<1x32xf32>
    %464 = vector.broadcast %463 : vector<1x32xf32> to vector<8x32xf32>
    %465 = arith.addf %462, %464 : vector<8x32xf32>
    %466 = math.tanh %465 : vector<8x32xf32>
    %c0_476 = arith.constant 0 : index
    %c0_477 = arith.constant 0 : index
    %467 = vector.load %arg17[%c0_476, %c0_477] : memref<32x32xf32, #tpu.memory_space<vmem>>, vector<32x32xf32>
    %cst_478 = arith.constant dense<0.000000e+00> : vector<8x32xf32>
    %468 = tpu.matmul %466, %467, %cst_478 {dimension_numbers = #tpu.dot_dimension_numbers<[1], [0], [0], [1], [0, 0, 1, 1], [], []>} : vector<8x32xf32>, vector<32x32xf32>, vector<8x32xf32> -> vector<8x32xf32>
    %c0_479 = arith.constant 0 : index
    %c0_480 = arith.constant 0 : index
    %469 = vector.load %arg18[%c0_479, %c0_480] : memref<1x32xf32, #tpu.memory_space<vmem>>, vector<1x32xf32>
    %470 = vector.broadcast %469 : vector<1x32xf32> to vector<8x32xf32>
    %471 = arith.addf %468, %470 : vector<8x32xf32>
    %cst_481 = arith.constant 0.000000e+00 : f32
    %472 = vector.broadcast %cst_481 : f32 to vector<8x32xf32>
    %473 = arith.maximumf %471, %472 : vector<8x32xf32>
    %c0_482 = arith.constant 0 : index
    %c0_483 = arith.constant 0 : index
    %474 = vector.load %arg19[%c0_482, %c0_483] : memref<32x32xf32, #tpu.memory_space<vmem>>, vector<32x32xf32>
    %cst_484 = arith.constant dense<0.000000e+00> : vector<8x32xf32>
    %475 = tpu.matmul %473, %474, %cst_484 {dimension_numbers = #tpu.dot_dimension_numbers<[1], [0], [0], [1], [0, 0, 1, 1], [], []>} : vector<8x32xf32>, vector<32x32xf32>, vector<8x32xf32> -> vector<8x32xf32>
    %c0_485 = arith.constant 0 : index
    %c0_486 = arith.constant 0 : index
    %476 = vector.load %arg20[%c0_485, %c0_486] : memref<1x32xf32, #tpu.memory_space<vmem>>, vector<1x32xf32>
    %477 = vector.broadcast %476 : vector<1x32xf32> to vector<8x32xf32>
    %478 = arith.addf %475, %477 : vector<8x32xf32>
    %cst_487 = arith.constant 0.000000e+00 : f32
    %479 = vector.broadcast %cst_487 : f32 to vector<8x32xf32>
    %480 = arith.maximumf %478, %479 : vector<8x32xf32>
    %c0_488 = arith.constant 0 : index
    %c0_489 = arith.constant 0 : index
    %481 = vector.load %arg21[%c0_488, %c0_489] : memref<32x4xf32, #tpu.memory_space<vmem>>, vector<32x4xf32>
    %cst_490 = arith.constant dense<0.000000e+00> : vector<8x4xf32>
    %482 = tpu.matmul %480, %481, %cst_490 {dimension_numbers = #tpu.dot_dimension_numbers<[1], [0], [0], [1], [0, 0, 1, 1], [], []>} : vector<8x32xf32>, vector<32x4xf32>, vector<8x4xf32> -> vector<8x4xf32>
    %c0_491 = arith.constant 0 : index
    %c0_492 = arith.constant 0 : index
    %483 = vector.load %arg22[%c0_491, %c0_492] : memref<1x4xf32, #tpu.memory_space<vmem>>, vector<1x4xf32>
    %484 = vector.broadcast %483 : vector<1x4xf32> to vector<8x4xf32>
    %485 = arith.addf %482, %484 : vector<8x4xf32>
    %c0_493 = arith.constant 0 : index
    %c0_494 = arith.constant 0 : index
    %486 = vector.load %arg23[%c0_493, %c0_494] : memref<32x4xf32, #tpu.memory_space<vmem>>, vector<32x4xf32>
    %cst_495 = arith.constant dense<0.000000e+00> : vector<8x4xf32>
    %487 = tpu.matmul %480, %486, %cst_495 {dimension_numbers = #tpu.dot_dimension_numbers<[1], [0], [0], [1], [0, 0, 1, 1], [], []>} : vector<8x32xf32>, vector<32x4xf32>, vector<8x4xf32> -> vector<8x4xf32>
    %c0_496 = arith.constant 0 : index
    %c0_497 = arith.constant 0 : index
    %488 = vector.load %arg24[%c0_496, %c0_497] : memref<1x4xf32, #tpu.memory_space<vmem>>, vector<1x4xf32>
    %489 = vector.broadcast %488 : vector<1x4xf32> to vector<8x4xf32>
    %490 = arith.addf %487, %489 : vector<8x4xf32>
    %491 = math.tanh %490 : vector<8x4xf32>
    %cst_498 = arith.constant 1.000000e+00 : f32
    %492 = vector.broadcast %cst_498 : f32 to vector<8x4xf32>
    %493 = arith.addf %491, %492 : vector<8x4xf32>
    %cst_499 = arith.constant 6.000000e+00 : f32
    %494 = vector.broadcast %cst_499 : f32 to vector<8x4xf32>
    %495 = arith.mulf %494, %493 : vector<8x4xf32>
    %cst_500 = arith.constant -1.000000e+01 : f32
    %496 = vector.broadcast %cst_500 : f32 to vector<8x4xf32>
    %497 = arith.addf %496, %495 : vector<8x4xf32>
    %c0_501 = arith.constant 0 : index
    %c0_502 = arith.constant 0 : index
    %498 = vector.load %arg25[%c0_501, %c0_502] : memref<8x4xf32, #tpu.memory_space<vmem>>, vector<8x4xf32>
    %499 = math.exp %497 : vector<8x4xf32>
    %500 = arith.mulf %498, %499 : vector<8x4xf32>
    %501 = arith.addf %485, %500 : vector<8x4xf32>
    %502 = arith.mulf %498, %498 : vector<8x4xf32>
    %cst_503 = arith.constant -5.000000e-01 : f32
    %503 = vector.broadcast %cst_503 : f32 to vector<8x4xf32>
    %504 = arith.mulf %503, %502 : vector<8x4xf32>
    %505 = arith.subf %504, %497 : vector<8x4xf32>
    %cst_504 = arith.constant dense<0.000000e+00> : vector<8xf32>
    %506 = vector.multi_reduction <add>, %505, %cst_504 [1] : vector<8x4xf32> to vector<8xf32>
    %507 = vector.shape_cast %506 : vector<8xf32> to vector<8x1xf32>
    %cst_505 = arith.constant 3.67575407 : f32
    %508 = vector.broadcast %cst_505 : f32 to vector<8x1xf32>
    %509 = arith.subf %507, %508 : vector<8x1xf32>
    %510 = math.tanh %485 : vector<8x4xf32>
    %511 = math.tanh %501 : vector<8x4xf32>
    %512 = arith.mulf %511, %511 : vector<8x4xf32>
    %cst_506 = arith.constant 1.000000e+00 : f32
    %513 = vector.broadcast %cst_506 : f32 to vector<8x4xf32>
    %514 = arith.subf %513, %512 : vector<8x4xf32>
    %cst_507 = arith.constant 0.000000e+00 : f32
    %515 = vector.broadcast %cst_507 : f32 to vector<8x4xf32>
    %516 = arith.maximumf %514, %515 : vector<8x4xf32>
    %cst_508 = arith.constant 9.99999997E-7 : f32
    %517 = vector.broadcast %cst_508 : f32 to vector<8x4xf32>
    %518 = arith.addf %516, %517 : vector<8x4xf32>
    %519 = math.log %518 : vector<8x4xf32>
    %cst_509 = arith.constant dense<0.000000e+00> : vector<8xf32>
    %520 = vector.multi_reduction <add>, %519, %cst_509 [1] : vector<8x4xf32> to vector<8xf32>
    %521 = vector.shape_cast %520 : vector<8xf32> to vector<8x1xf32>
    %522 = arith.subf %509, %521 : vector<8x1xf32>
    %c0_510 = arith.constant 0 : index
    %c0_511 = arith.constant 0 : index
    %523 = vector.load %arg26[%c0_510, %c0_511] : memref<8x128xf32, #tpu.memory_space<vmem>>, vector<8x4xf32>
    tpu.vector_store %arg26[%c0_510, %c0_511], %510 {strides = array<i32>} : memref<8x128xf32, #tpu.memory_space<vmem>>, vector<8x4xf32>,
    %c0_512 = arith.constant 0 : index
    %c4_513 = arith.constant 4 : index
    %524 = vector.load %arg26[%c0_512, %c4_513] : memref<8x128xf32, #tpu.memory_space<vmem>>, vector<8x4xf32>
    tpu.vector_store %arg26[%c0_512, %c4_513], %511 {strides = array<i32>} : memref<8x128xf32, #tpu.memory_space<vmem>>, vector<8x4xf32>,
    %c0_514 = arith.constant 0 : index
    %c8_515 = arith.constant 8 : index
    %525 = vector.load %arg26[%c0_514, %c8_515] : memref<8x128xf32, #tpu.memory_space<vmem>>, vector<8x4xf32>
    tpu.vector_store %arg26[%c0_514, %c8_515], %497 {strides = array<i32>} : memref<8x128xf32, #tpu.memory_space<vmem>>, vector<8x4xf32>,
    %c0_516 = arith.constant 0 : index
    %c12 = arith.constant 12 : index
    %526 = vector.load %arg26[%c0_516, %c12] : memref<8x128xf32, #tpu.memory_space<vmem>>, vector<8x1xf32>
    tpu.vector_store %arg26[%c0_516, %c12], %522 {strides = array<i32>} : memref<8x128xf32, #tpu.memory_space<vmem>>, vector<8x1xf32>,
    return
  }
  func.func @transform_0(%arg0: i32) -> (i32, i32, i32) {
    %c0_i32 = arith.constant 0 : i32
    %c0_i32_0 = arith.constant 0 : i32
    %c0_i32_1 = arith.constant 0 : i32
    %c0_i32_2 = arith.constant 0 : i32
    return %c0_i32, %c0_i32_0, %c0_i32_1 : i32, i32, i32
  }
  func.func @transform_1(%arg0: i32) -> (i32, i32, i32) {
    %c0_i32 = arith.constant 0 : i32
    %c0_i32_0 = arith.constant 0 : i32
    %c0_i32_1 = arith.constant 0 : i32
    %c0_i32_2 = arith.constant 0 : i32
    return %c0_i32, %c0_i32_0, %c0_i32_1 : i32, i32, i32
  }
  func.func @transform_2(%arg0: i32) -> (i32, i32, i32) {
    %c0_i32 = arith.constant 0 : i32
    %c0_i32_0 = arith.constant 0 : i32
    %c0_i32_1 = arith.constant 0 : i32
    %c0_i32_2 = arith.constant 0 : i32
    return %c0_i32, %c0_i32_0, %c0_i32_1 : i32, i32, i32
  }
  func.func @transform_3(%arg0: i32) -> (i32, i32, i32) {
    %c0_i32 = arith.constant 0 : i32
    %c0_i32_0 = arith.constant 0 : i32
    %c0_i32_1 = arith.constant 0 : i32
    %c0_i32_2 = arith.constant 0 : i32
    return %c0_i32, %c0_i32_0, %c0_i32_1 : i32, i32, i32
  }
  func.func @transform_4(%arg0: i32) -> (i32, i32, i32) {
    %c0_i32 = arith.constant 0 : i32
    %c0_i32_0 = arith.constant 0 : i32
    %c0_i32_1 = arith.constant 0 : i32
    %c0_i32_2 = arith.constant 0 : i32
    return %c0_i32, %c0_i32_0, %c0_i32_1 : i32, i32, i32
  }
  func.func @transform_5(%arg0: i32) -> (i32, i32) {
    %c0_i32 = arith.constant 0 : i32
    %c0_i32_0 = arith.constant 0 : i32
    %c0_i32_1 = arith.constant 0 : i32
    return %c0_i32, %c0_i32_0 : i32, i32
  }
  func.func @transform_6(%arg0: i32) -> (i32, i32, i32) {
    %c0_i32 = arith.constant 0 : i32
    %c0_i32_0 = arith.constant 0 : i32
    %c0_i32_1 = arith.constant 0 : i32
    %c0_i32_2 = arith.constant 0 : i32
    return %c0_i32, %c0_i32_0, %c0_i32_1 : i32, i32, i32
  }
  func.func @transform_7(%arg0: i32) -> (i32, i32) {
    %c0_i32 = arith.constant 0 : i32
    %c0_i32_0 = arith.constant 0 : i32
    %c0_i32_1 = arith.constant 0 : i32
    return %c0_i32, %c0_i32_0 : i32, i32
  }
  func.func @transform_8(%arg0: i32) -> (i32, i32, i32) {
    %c0_i32 = arith.constant 0 : i32
    %c0_i32_0 = arith.constant 0 : i32
    %c0_i32_1 = arith.constant 0 : i32
    %c0_i32_2 = arith.constant 0 : i32
    return %c0_i32, %c0_i32_0, %c0_i32_1 : i32, i32, i32
  }
  func.func @transform_9(%arg0: i32) -> (i32, i32) {
    %c0_i32 = arith.constant 0 : i32
    %c0_i32_0 = arith.constant 0 : i32
    %c0_i32_1 = arith.constant 0 : i32
    return %c0_i32, %c0_i32_0 : i32, i32
  }
  func.func @transform_10(%arg0: i32) -> (i32, i32, i32) {
    %c0_i32 = arith.constant 0 : i32
    %c0_i32_0 = arith.constant 0 : i32
    %c0_i32_1 = arith.constant 0 : i32
    %c0_i32_2 = arith.constant 0 : i32
    return %c0_i32, %c0_i32_0, %c0_i32_1 : i32, i32, i32
  }
  func.func @transform_11(%arg0: i32) -> (i32, i32) {
    %c0_i32 = arith.constant 0 : i32
    %c0_i32_0 = arith.constant 0 : i32
    %c0_i32_1 = arith.constant 0 : i32
    return %c0_i32, %c0_i32_0 : i32, i32
  }
  func.func @transform_12(%arg0: i32) -> (i32, i32) {
    %c0_i32 = arith.constant 0 : i32
    %c0_i32_0 = arith.constant 0 : i32
    %c0_i32_1 = arith.constant 0 : i32
    return %c0_i32, %c0_i32_0 : i32, i32
  }
  func.func @transform_13(%arg0: i32) -> (i32, i32) {
    %c0_i32 = arith.constant 0 : i32
    %c0_i32_0 = arith.constant 0 : i32
    %c0_i32_1 = arith.constant 0 : i32
    return %c0_i32, %c0_i32_0 : i32, i32
  }
  func.func @transform_14(%arg0: i32) -> (i32, i32) {
    %c0_i32 = arith.constant 0 : i32
    %c0_i32_0 = arith.constant 0 : i32
    %c0_i32_1 = arith.constant 0 : i32
    return %c0_i32, %c0_i32_0 : i32, i32
  }
  func.func @transform_15(%arg0: i32) -> (i32, i32) {
    %c0_i32 = arith.constant 0 : i32
    %c0_i32_0 = arith.constant 0 : i32
    %c0_i32_1 = arith.constant 0 : i32
    return %c0_i32, %c0_i32_0 : i32, i32
  }
  func.func @transform_16(%arg0: i32) -> (i32, i32) {
    %c0_i32 = arith.constant 0 : i32
    %c0_i32_0 = arith.constant 0 : i32
    %c0_i32_1 = arith.constant 0 : i32
    return %c0_i32, %c0_i32_0 : i32, i32
  }
  func.func @transform_17(%arg0: i32) -> (i32, i32) {
    %c0_i32 = arith.constant 0 : i32
    %c0_i32_0 = arith.constant 0 : i32
    %c0_i32_1 = arith.constant 0 : i32
    return %c0_i32, %c0_i32_0 : i32, i32
  }
  func.func @transform_18(%arg0: i32) -> (i32, i32) {
    %c0_i32 = arith.constant 0 : i32
    %c0_i32_0 = arith.constant 0 : i32
    %c0_i32_1 = arith.constant 0 : i32
    return %c0_i32, %c0_i32_0 : i32, i32
  }
  func.func @transform_19(%arg0: i32) -> (i32, i32) {
    %c0_i32 = arith.constant 0 : i32
    %c0_i32_0 = arith.constant 0 : i32
    %c0_i32_1 = arith.constant 0 : i32
    return %c0_i32, %c0_i32_0 : i32, i32
  }
  func.func @transform_20(%arg0: i32) -> (i32, i32) {
    %c0_i32 = arith.constant 0 : i32
    %c0_i32_0 = arith.constant 0 : i32
    %c0_i32_1 = arith.constant 0 : i32
    return %c0_i32, %c0_i32_0 : i32, i32
  }
  func.func @transform_21(%arg0: i32) -> (i32, i32) {
    %c0_i32 = arith.constant 0 : i32
    %c0_i32_0 = arith.constant 0 : i32
    %c0_i32_1 = arith.constant 0 : i32
    return %c0_i32, %c0_i32_0 : i32, i32
  }
  func.func @transform_22(%arg0: i32) -> (i32, i32) {
    %c0_i32 = arith.constant 0 : i32
    %c0_i32_0 = arith.constant 0 : i32
    %c0_i32_1 = arith.constant 0 : i32
    return %c0_i32, %c0_i32_0 : i32, i32
  }
  func.func @transform_23(%arg0: i32) -> (i32, i32) {
    %c0_i32 = arith.constant 0 : i32
    %c0_i32_0 = arith.constant 0 : i32
    %c0_i32_1 = arith.constant 0 : i32
    return %c0_i32, %c0_i32_0 : i32, i32
  }
  func.func @transform_24(%arg0: i32) -> (i32, i32) {
    %c0_i32 = arith.constant 0 : i32
    %c0_i32_0 = arith.constant 0 : i32
    %c0_i32_1 = arith.constant 0 : i32
    return %c0_i32, %c0_i32_0 : i32, i32
  }
  func.func @transform_25(%arg0: i32) -> (i32, i32) {
    %c0_i32 = arith.constant 0 : i32
    %c0_i32_0 = arith.constant 0 : i32
    %c0_i32_1 = arith.constant 0 : i32
    return %c0_i32, %c0_i32_0 : i32, i32
  }
}

</mosaic_0001>

<llo_original>
// kernel: sacae_actor_forward.1
$region0: #{sacae_actor_forward.1}
  #allocation0 [shape = 'u32[]', space=smem, size = 0x4, offset = 0x4, fixed_abs, tag = 'smem constant byte address 0x4 - core index']
  #allocation1 [shape = 'u32[72,128]{1,0:T(1,128)}', space=vmem, size = 0x9000, scoped, tag = 'internal scratch']
  #allocation2 [shape = 'f32[8,256]{1,0:T(8,128)}', space=vmem, size = 0x2000, scoped, tag = 'scratch operand']
  #allocation3 [shape = 'f32[8,256]{1,0:T(8,128)}', space=vmem, size = 0x2000, scoped, tag = 'scratch operand']
  #allocation4 [shape = 'f32[8,256]{1,0:T(8,128)}', space=vmem, size = 0x2000, scoped, tag = 'scratch operand']
  #allocation5 [shape = 'f32[8,256]{1,0:T(8,128)}', space=vmem, size = 0x2000, scoped, tag = 'scratch operand']
  #allocation6 [shape = 'f32[8,32]{1,0:T(8,128)}', space=vmem, size = 0x1000, scoped, tag = 'scratch operand']
  %s0 = inlined_call_operand.vmem [shape: f32[2,4,384], index: 0, kind: input, shape index: {}]
  %s1 = inlined_call_operand.vmem [shape: f32[2,4,384], index: 1, kind: input, shape index: {}]
  %s2 = inlined_call_operand.vmem [shape: f32[2,4,384], index: 2, kind: input, shape index: {}]
  %s3 = inlined_call_operand.vmem [shape: f32[2,4,384], index: 3, kind: input, shape index: {}]
  %s4 = inlined_call_operand.vmem [shape: f32[9,8,4], index: 4, kind: input, shape index: {}]
  %s5 = inlined_call_operand.vmem [shape: f32[8,1], index: 5, kind: input, shape index: {}]
  %s6 = inlined_call_operand.vmem [shape: f32[9,8,8], index: 6, kind: input, shape index: {}]
  %s7 = inlined_call_operand.vmem [shape: f32[8,1], index: 7, kind: input, shape index: {}]
  %s8 = inlined_call_operand.vmem [shape: f32[9,8,8], index: 8, kind: input, shape index: {}]
  %s9 = inlined_call_operand.vmem [shape: f32[8,1], index: 9, kind: input, shape index: {}]
  %s10 = inlined_call_operand.vmem [shape: f32[9,8,8], index: 10, kind: input, shape index: {}]
  %s11 = inlined_call_operand.vmem [shape: f32[8,1], index: 11, kind: input, shape index: {}]
  %s12 = inlined_call_operand.vmem [shape: f32[2048,32], index: 12, kind: input, shape index: {}]
  %s13 = inlined_call_operand.vmem [shape: f32[1,32], index: 13, kind: input, shape index: {}]
  %s14 = inlined_call_operand.vmem [shape: f32[1,32], index: 14, kind: input, shape index: {}]
  %s15 = inlined_call_operand.vmem [shape: f32[1,32], index: 15, kind: input, shape index: {}]
  %s16 = inlined_call_operand.vmem [shape: f32[32,32], index: 16, kind: input, shape index: {}]
  %s17 = inlined_call_operand.vmem [shape: f32[1,32], index: 17, kind: input, shape index: {}]
  %s18 = inlined_call_operand.vmem [shape: f32[32,32], index: 18, kind: input, shape index: {}]
  %s19 = inlined_call_operand.vmem [shape: f32[1,32], index: 19, kind: input, shape index: {}]
  %s20 = inlined_call_operand.vmem [shape: f32[32,4], index: 20, kind: input, shape index: {}]
  %s21 = inlined_call_operand.vmem [shape: f32[1,4], index: 21, kind: input, shape index: {}]
  %s22 = inlined_call_operand.vmem [shape: f32[32,4], index: 22, kind: input, shape index: {}]
  %s23 = inlined_call_operand.vmem [shape: f32[1,4], index: 23, kind: input, shape index: {}]
  %s24 = inlined_call_operand.vmem [shape: f32[8,4], index: 24, kind: input, shape index: {}]
  %s25 = inlined_call_operand.vmem [shape: f32[8,128], index: 25, kind: output, shape index: {}]
  %s26 = sld [smem:[#allocation0]]
  $region110: #{sacae_actor_forward.1} parent=0
    _
  %s28 = ssub.s32 1, %s26
  %s29 = scalar_select 0, %s28, %s26
  // Predicated region
  $region2: #{sacae_actor_forward.1} parent=0 // pred_check
    _
  $region3: #{sacae_actor_forward.1} parent=0 // pred_check_branch
    %31 = sbr.rel (0) target = $region5
  $region4: #{sacae_actor_forward.1} parent=0 // pred_region
    _
  $region5: #{sacae_actor_forward.1} parent=0 // pred_fallthru
    _
  // Predicated region
  $region6: #{sacae_actor_forward.1} parent=0 // pred_check
    _
  $region7: #{sacae_actor_forward.1} parent=0 // pred_check_branch
    %33 = sbr.rel (0) target = $region9
  $region8: #{sacae_actor_forward.1} parent=0 // pred_region
    _
  $region9: #{sacae_actor_forward.1} parent=0 // pred_fallthru
    _
  // Predicated region
  $region10: #{sacae_actor_forward.1} parent=0 // pred_check
    _
  $region11: #{sacae_actor_forward.1} parent=0 // pred_check_branch
    %35 = sbr.rel (0) target = $region13
  $region12: #{sacae_actor_forward.1} parent=0 // pred_region
    _
  $region13: #{sacae_actor_forward.1} parent=0 // pred_fallthru
    _
  // Predicated region
  $region14: #{sacae_actor_forward.1} parent=0 // pred_check
    _
  $region15: #{sacae_actor_forward.1} parent=0 // pred_check_branch
    %37 = sbr.rel (0) target = $region17
  $region16: #{sacae_actor_forward.1} parent=0 // pred_region
    _
  $region17: #{sacae_actor_forward.1} parent=0 // pred_fallthru
    _
  // Predicated region
  $region18: #{sacae_actor_forward.1} parent=0 // pred_check
    _
  $region19: #{sacae_actor_forward.1} parent=0 // pred_check_branch
    %39 = sbr.rel (0) target = $region21
  $region20: #{sacae_actor_forward.1} parent=0 // pred_region
    _
  $region21: #{sacae_actor_forward.1} parent=0 // pred_fallthru
    _
  // Predicated region
  $region22: #{sacae_actor_forward.1} parent=0 // pred_check
    _
  $region23: #{sacae_actor_forward.1} parent=0 // pred_check_branch
    %41 = sbr.rel (0) target = $region25
  $region24: #{sacae_actor_forward.1} parent=0 // pred_region
    _
  $region25: #{sacae_actor_forward.1} parent=0 // pred_fallthru
    _
  // Predicated region
  $region26: #{sacae_actor_forward.1} parent=0 // pred_check
    _
  $region27: #{sacae_actor_forward.1} parent=0 // pred_check_branch
    %43 = sbr.rel (0) target = $region29
  $region28: #{sacae_actor_forward.1} parent=0 // pred_region
    _
  $region29: #{sacae_actor_forward.1} parent=0 // pred_fallthru
    _
  // Predicated region
  $region30: #{sacae_actor_forward.1} parent=0 // pred_check
    _
  $region31: #{sacae_actor_forward.1} parent=0 // pred_check_branch
    %45 = sbr.rel (0) target = $region33
  $region32: #{sacae_actor_forward.1} parent=0 // pred_region
    _
  $region33: #{sacae_actor_forward.1} parent=0 // pred_fallthru
    _
  // Predicated region
  $region34: #{sacae_actor_forward.1} parent=0 // pred_check
    _
  $region35: #{sacae_actor_forward.1} parent=0 // pred_check_branch
    %47 = sbr.rel (0) target = $region37
  $region36: #{sacae_actor_forward.1} parent=0 // pred_region
    _
  $region37: #{sacae_actor_forward.1} parent=0 // pred_fallthru
    _
  // Predicated region
  $region38: #{sacae_actor_forward.1} parent=0 // pred_check
    _
  $region39: #{sacae_actor_forward.1} parent=0 // pred_check_branch
    %49 = sbr.rel (0) target = $region41
  $region40: #{sacae_actor_forward.1} parent=0 // pred_region
    _
  $region41: #{sacae_actor_forward.1} parent=0 // pred_fallthru
    _
  // Predicated region
  $region42: #{sacae_actor_forward.1} parent=0 // pred_check
    _
  $region43: #{sacae_actor_forward.1} parent=0 // pred_check_branch
    %51 = sbr.rel (0) target = $region45
  $region44: #{sacae_actor_forward.1} parent=0 // pred_region
    _
  $region45: #{sacae_actor_forward.1} parent=0 // pred_fallthru
    _
  // Predicated region
  $region46: #{sacae_actor_forward.1} parent=0 // pred_check
    _
  $region47: #{sacae_actor_forward.1} parent=0 // pred_check_branch
    %53 = sbr.rel (0) target = $region49
  $region48: #{sacae_actor_forward.1} parent=0 // pred_region
    _
  $region49: #{sacae_actor_forward.1} parent=0 // pred_fallthru
    _
  // Predicated region
  $region50: #{sacae_actor_forward.1} parent=0 // pred_check
    _
  $region51: #{sacae_actor_forward.1} parent=0 // pred_check_branch
    %55 = sbr.rel (0) target = $region53
  $region52: #{sacae_actor_forward.1} parent=0 // pred_region
    _
  $region53: #{sacae_actor_forward.1} parent=0 // pred_fallthru
    _
  // Predicated region
  $region54: #{sacae_actor_forward.1} parent=0 // pred_check
    _
  $region55: #{sacae_actor_forward.1} parent=0 // pred_check_branch
    %57 = sbr.rel (0) target = $region57
  $region56: #{sacae_actor_forward.1} parent=0 // pred_region
    _
  $region57: #{sacae_actor_forward.1} parent=0 // pred_fallthru
    _
  // Predicated region
  $region58: #{sacae_actor_forward.1} parent=0 // pred_check
    _
  $region59: #{sacae_actor_forward.1} parent=0 // pred_check_branch
    %59 = sbr.rel (0) target = $region61
  $region60: #{sacae_actor_forward.1} parent=0 // pred_region
    _
  $region61: #{sacae_actor_forward.1} parent=0 // pred_fallthru
    _
  // Predicated region
  $region62: #{sacae_actor_forward.1} parent=0 // pred_check
    _
  $region63: #{sacae_actor_forward.1} parent=0 // pred_check_branch
    %61 = sbr.rel (0) target = $region65
  $region64: #{sacae_actor_forward.1} parent=0 // pred_region
    _
  $region65: #{sacae_actor_forward.1} parent=0 // pred_fallthru
    _
  // Predicated region
  $region66: #{sacae_actor_forward.1} parent=0 // pred_check
    _
  $region67: #{sacae_actor_forward.1} parent=0 // pred_check_branch
    %63 = sbr.rel (0) target = $region69
  $region68: #{sacae_actor_forward.1} parent=0 // pred_region
    _
  $region69: #{sacae_actor_forward.1} parent=0 // pred_fallthru
    _
  // Predicated region
  $region70: #{sacae_actor_forward.1} parent=0 // pred_check
    _
  $region71: #{sacae_actor_forward.1} parent=0 // pred_check_branch
    %65 = sbr.rel (0) target = $region73
  $region72: #{sacae_actor_forward.1} parent=0 // pred_region
    _
  $region73: #{sacae_actor_forward.1} parent=0 // pred_fallthru
    _
  // Predicated region
  $region74: #{sacae_actor_forward.1} parent=0 // pred_check
    _
  $region75: #{sacae_actor_forward.1} parent=0 // pred_check_branch
    %67 = sbr.rel (0) target = $region77
  $region76: #{sacae_actor_forward.1} parent=0 // pred_region
    _
  $region77: #{sacae_actor_forward.1} parent=0 // pred_fallthru
    _
  // Predicated region
  $region78: #{sacae_actor_forward.1} parent=0 // pred_check
    _
  $region79: #{sacae_actor_forward.1} parent=0 // pred_check_branch
    %69 = sbr.rel (0) target = $region81
  $region80: #{sacae_actor_forward.1} parent=0 // pred_region
    _
  $region81: #{sacae_actor_forward.1} parent=0 // pred_fallthru
    _
  // Predicated region
  $region82: #{sacae_actor_forward.1} parent=0 // pred_check
    _
  $region83: #{sacae_actor_forward.1} parent=0 // pred_check_branch
    %71 = sbr.rel (0) target = $region85
  $region84: #{sacae_actor_forward.1} parent=0 // pred_region
    _
  $region85: #{sacae_actor_forward.1} parent=0 // pred_fallthru
    _
  // Predicated region
  $region86: #{sacae_actor_forward.1} parent=0 // pred_check
    _
  $region87: #{sacae_actor_forward.1} parent=0 // pred_check_branch
    %73 = sbr.rel (0) target = $region89
  $region88: #{sacae_actor_forward.1} parent=0 // pred_region
    _
  $region89: #{sacae_actor_forward.1} parent=0 // pred_fallthru
    _
  // Predicated region
  $region90: #{sacae_actor_forward.1} parent=0 // pred_check
    _
  $region91: #{sacae_actor_forward.1} parent=0 // pred_check_branch
    %75 = sbr.rel (0) target = $region93
  $region92: #{sacae_actor_forward.1} parent=0 // pred_region
    _
  $region93: #{sacae_actor_forward.1} parent=0 // pred_fallthru
    _
  // Predicated region
  $region94: #{sacae_actor_forward.1} parent=0 // pred_check
    _
  $region95: #{sacae_actor_forward.1} parent=0 // pred_check_branch
    %77 = sbr.rel (0) target = $region97
  $region96: #{sacae_actor_forward.1} parent=0 // pred_region
    _
  $region97: #{sacae_actor_forward.1} parent=0 // pred_fallthru
    _
  // Predicated region
  $region98: #{sacae_actor_forward.1} parent=0 // pred_check
    _
  $region99: #{sacae_actor_forward.1} parent=0 // pred_check_branch
    %79 = sbr.rel (0) target = $region101
  $region100: #{sacae_actor_forward.1} parent=0 // pred_region
    _
  $region101: #{sacae_actor_forward.1} parent=0 // pred_fallthru
    _
  %80 = vst [vmem:[#allocation2] sm:$0xff] 0.0
  %81 = vst [vmem:[#allocation2 + $0x8] sm:$0xff] 0.0
  %82 = vst [vmem:[#allocation3] sm:$0xff] 0.0
  %83 = vst [vmem:[#allocation3 + $0x8] sm:$0xff] 0.0
  %84 = vst [vmem:[#allocation4] sm:$0xff] 0.0
  %85 = vst [vmem:[#allocation4 + $0x8] sm:$0xff] 0.0
  %86 = vst [vmem:[#allocation5] sm:$0xff] 0.0
  %87 = vst [vmem:[#allocation5 + $0x8] sm:$0xff] 0.0
  %vm88 = vcmask 261120
  %89 = vst.msk [vmem:[#allocation6] sm:$0xff] %vm88, 0.0
  %90 = vst [vmem:[%s25] sm:$0xff] 0.0
  %v91 = vld [vmem:[%s4] sm:$0xff]
  %s92 = scalar_lea.vmem %s4, 8
  %v93 = vld [vmem:[%s92] sm:$0xff]
  %s94 = scalar_lea.vmem %s4, 16
  %v95 = vld [vmem:[%s94] sm:$0xff]
  %s96 = scalar_lea.vmem %s4, 24
  %v97 = vld [vmem:[%s96] sm:$0xff]
  %s98 = scalar_lea.vmem %s4, 32
  %v99 = vld [vmem:[%s98] sm:$0xff]
  %s100 = scalar_lea.vmem %s4, 40
  %v101 = vld [vmem:[%s100] sm:$0xff]
  %s102 = scalar_lea.vmem %s4, 48
  %v103 = vld [vmem:[%s102] sm:$0xff]
  %s104 = scalar_lea.vmem %s4, 56
  %v105 = vld [vmem:[%s104] sm:$0xff]
  %s106 = scalar_lea.vmem %s4, 64
  %v107 = vld [vmem:[%s106] sm:$0xff]
  %v108 = vld [vmem:[%s6] sm:$0xff]
  %s109 = scalar_lea.vmem %s6, 8
  %v110 = vld [vmem:[%s109] sm:$0xff]
  %s111 = scalar_lea.vmem %s6, 16
  %v112 = vld [vmem:[%s111] sm:$0xff]
  %s113 = scalar_lea.vmem %s6, 24
  %v114 = vld [vmem:[%s113] sm:$0xff]
  %s115 = scalar_lea.vmem %s6, 32
  %v116 = vld [vmem:[%s115] sm:$0xff]
  %s117 = scalar_lea.vmem %s6, 40
  %v118 = vld [vmem:[%s117] sm:$0xff]
  %s119 = scalar_lea.vmem %s6, 48
  %v120 = vld [vmem:[%s119] sm:$0xff]
  %s121 = scalar_lea.vmem %s6, 56
  %v122 = vld [vmem:[%s121] sm:$0xff]
  %s123 = scalar_lea.vmem %s6, 64
  %v124 = vld [vmem:[%s123] sm:$0xff]
  %v125 = vld [vmem:[%s8] sm:$0xff]
  %s126 = scalar_lea.vmem %s8, 8
  %v127 = vld [vmem:[%s126] sm:$0xff]
  %s128 = scalar_lea.vmem %s8, 16
  %v129 = vld [vmem:[%s128] sm:$0xff]
  %s130 = scalar_lea.vmem %s8, 24
  %v131 = vld [vmem:[%s130] sm:$0xff]
  %s132 = scalar_lea.vmem %s8, 32
  %v133 = vld [vmem:[%s132] sm:$0xff]
  %s134 = scalar_lea.vmem %s8, 40
  %v135 = vld [vmem:[%s134] sm:$0xff]
  %s136 = scalar_lea.vmem %s8, 48
  %v137 = vld [vmem:[%s136] sm:$0xff]
  %s138 = scalar_lea.vmem %s8, 56
  %v139 = vld [vmem:[%s138] sm:$0xff]
  %s140 = scalar_lea.vmem %s8, 64
  %v141 = vld [vmem:[%s140] sm:$0xff]
  %v142 = vld [vmem:[%s10] sm:$0xff]
  %s143 = scalar_lea.vmem %s10, 8
  %v144 = vld [vmem:[%s143] sm:$0xff]
  %s145 = scalar_lea.vmem %s10, 16
  %v146 = vld [vmem:[%s145] sm:$0xff]
  %s147 = scalar_lea.vmem %s10, 24
  %v148 = vld [vmem:[%s147] sm:$0xff]
  %s149 = scalar_lea.vmem %s10, 32
  %v150 = vld [vmem:[%s149] sm:$0xff]
  %s151 = scalar_lea.vmem %s10, 40
  %v152 = vld [vmem:[%s151] sm:$0xff]
  %s153 = scalar_lea.vmem %s10, 48
  %v154 = vld [vmem:[%s153] sm:$0xff]
  %s155 = scalar_lea.vmem %s10, 56
  %v156 = vld [vmem:[%s155] sm:$0xff]
  %s157 = scalar_lea.vmem %s10, 64
  %v158 = vld [vmem:[%s157] sm:$0xff]
  %v159 = vld [vmem:[%s5] sm:$0xff]
  %v160 = vld [vmem:[%s7] sm:$0xff]
  %v161 = vld [vmem:[%s9] sm:$0xff]
  %v162 = vld [vmem:[%s11] sm:$0xff]
  %v163 = vld [vmem:[%s13] sm:$0x1]
  %v164 = vld [vmem:[%s0] sm:$0xff]
  %v165 = vld [vmem:[%s1] sm:$0xff]
  %167 = vst [vmem:[#allocation1] ss:$2 sm:$0xff] %v165
  %v168 = vld.sshfl [vmem:[#allocation1] sm:$0xff pattern:$0x75316420]
  %v169 = vld.sshfl [vmem:[#allocation1 + $0x8] sm:$0xff pattern:$0x75316420]
  %vm170 = vcmask 31744
  %v172 = vsel %vm170, %v93, 0
  %vm174 = vcmask 1043456
  %v175 = vsel %vm174, %v168, 0
  %v177 = vsel %vm174, %v169, 0
  %179 = vmatpush.msra.mxu0 0.0
  %180 = vmatpush.msra.mxu0 0.0
  %181 = vmatpush.msra.mxu0 0.0
  %182 = vmatpush.msra.mxu0 0.0
  %183 = vmatpush.msra.mxu0 0.0
  %184 = vmatpush.msra.mxu0 0.0
  %185 = vmatpush.msra.mxu0 0.0
  %186 = vmatpush.msra.mxu0 0.0
  %187 = vmatpush.msra.mxu0 0.0
  %188 = vmatpush.msra.mxu0 0.0
  %189 = vmatpush.msra.mxu0 0.0
  %190 = vmatpush.msra.mxu0 0.0
  %191 = vmatpush.msra.mxu0 0.0
  %192 = vmatpush.msra.mxu0 0.0
  %193 = vmatpush.msra.mxu0 0.0
  %194 = vmatpush.msra.mxu0 %v175
  %195 = vmatmul.f32.gmra.mxu0 %v172
  %v196 = vpop.f32.mrf.mxu0
  %v197 = vadd.f32 0.0, %v196
  %198 = vdwg.mxu0
  %199 = vmatpush.msra.mxu0 0.0
  %200 = vmatpush.msra.mxu0 0.0
  %201 = vmatpush.msra.mxu0 0.0
  %202 = vmatpush.msra.mxu0 0.0
  %203 = vmatpush.msra.mxu0 0.0
  %204 = vmatpush.msra.mxu0 0.0
  %205 = vmatpush.msra.mxu0 0.0
  %206 = vmatpush.msra.mxu0 0.0
  %207 = vmatpush.msra.mxu0 0.0
  %208 = vmatpush.msra.mxu0 0.0
  %209 = vmatpush.msra.mxu0 0.0
  %210 = vmatpush.msra.mxu0 0.0
  %211 = vmatpush.msra.mxu0 0.0
  %212 = vmatpush.msra.mxu0 0.0
  %213 = vmatpush.msra.mxu0 0.0
  %214 = vmatpush.msra.mxu0 %v177
  %215 = vmatmul.f32.gmra.mxu0 %v172
  %v216 = vpop.f32.mrf.mxu0
  %v217 = vadd.f32 0.0, %v216
  %218 = vdwg.mxu0
  %220 = vst [vmem:[#allocation1] ss:$2 sm:$0xff] %v164
  %v221 = vld.sshfl [vmem:[#allocation1] sm:$0xff pattern:$0x75316420]
  %v222 = vld.sshfl [vmem:[#allocation1 + $0x8] sm:$0xff pattern:$0x75316420]
  %v224 = vsel %vm170, %v91, 0
  %v226 = vsel %vm174, %v221, 0
  %v228 = vsel %vm174, %v222, 0
  %230 = vmatpush.msra.mxu0 0.0
  %231 = vmatpush.msra.mxu0 0.0
  %232 = vmatpush.msra.mxu0 0.0
  %233 = vmatpush.msra.mxu0 0.0
  %234 = vmatpush.msra.mxu0 0.0
  %235 = vmatpush.msra.mxu0 0.0
  %236 = vmatpush.msra.mxu0 0.0
  %237 = vmatpush.msra.mxu0 0.0
  %238 = vmatpush.msra.mxu0 0.0
  %239 = vmatpush.msra.mxu0 0.0
  %240 = vmatpush.msra.mxu0 0.0
  %241 = vmatpush.msra.mxu0 0.0
  %242 = vmatpush.msra.mxu0 0.0
  %243 = vmatpush.msra.mxu0 0.0
  %244 = vmatpush.msra.mxu0 0.0
  %245 = vmatpush.msra.mxu0 %v226
  %246 = vmatmul.f32.gmra.mxu0 %v224
  %v247 = vpop.f32.mrf.mxu0
  %v248 = vadd.f32 %v197, %v247
  %249 = vdwg.mxu0
  %250 = vmatpush.msra.mxu0 0.0
  %251 = vmatpush.msra.mxu0 0.0
  %252 = vmatpush.msra.mxu0 0.0
  %253 = vmatpush.msra.mxu0 0.0
  %254 = vmatpush.msra.mxu0 0.0
  %255 = vmatpush.msra.mxu0 0.0
  %256 = vmatpush.msra.mxu0 0.0
  %257 = vmatpush.msra.mxu0 0.0
  %258 = vmatpush.msra.mxu0 0.0
  %259 = vmatpush.msra.mxu0 0.0
  %260 = vmatpush.msra.mxu0 0.0
  %261 = vmatpush.msra.mxu0 0.0
  %262 = vmatpush.msra.mxu0 0.0
  %263 = vmatpush.msra.mxu0 0.0
  %264 = vmatpush.msra.mxu0 0.0
  %265 = vmatpush.msra.mxu0 %v228
  %266 = vmatmul.f32.gmra.mxu0 %v224
  %v267 = vpop.f32.mrf.mxu0
  %v268 = vadd.f32 %v217, %v267
  %269 = vdwg.mxu0
  %v270 = vld [vmem:[%s0] sm:$0xff]
  %272 = vst [vmem:[#allocation1] ss:$2 sm:$0xff] %v270
  %v273 = vld.sshfl [vmem:[#allocation1] sm:$0xff pattern:$0x75316420]
  %v274 = vld.sshfl [vmem:[#allocation1 + $0x8] sm:$0xff pattern:$0x75316420]
  %275 = vrot.lane.b32.xlu0 %v273, 127
  %v276 = vpop.permute.xlu0 %275
  %277 = vrot.lane.b32.xlu0 %v274, 127
  %v278 = vpop.permute.xlu0 %277
  %vm279 = vcmask 1039360
  %v280 = vsel %vm279, %v276, %v278
  %v282 = vsel %vm170, %v95, 0
  %v284 = vsel %vm174, %v280, 0
  %v286 = vsel %vm174, %v278, 0
  %288 = vmatpush.msra.mxu0 0.0
  %289 = vmatpush.msra.mxu0 0.0
  %290 = vmatpush.msra.mxu0 0.0
  %291 = vmatpush.msra.mxu0 0.0
  %292 = vmatpush.msra.mxu0 0.0
  %293 = vmatpush.msra.mxu0 0.0
  %294 = vmatpush.msra.mxu0 0.0
  %295 = vmatpush.msra.mxu0 0.0
  %296 = vmatpush.msra.mxu0 0.0
  %297 = vmatpush.msra.mxu0 0.0
  %298 = vmatpush.msra.mxu0 0.0
  %299 = vmatpush.msra.mxu0 0.0
  %300 = vmatpush.msra.mxu0 0.0
  %301 = vmatpush.msra.mxu0 0.0
  %302 = vmatpush.msra.mxu0 0.0
  %303 = vmatpush.msra.mxu0 %v284
  %304 = vmatmul.f32.gmra.mxu0 %v282
  %v305 = vpop.f32.mrf.mxu0
  %v306 = vadd.f32 0.0, %v305
  %307 = vdwg.mxu0
  %308 = vmatpush.msra.mxu0 0.0
  %309 = vmatpush.msra.mxu0 0.0
  %310 = vmatpush.msra.mxu0 0.0
  %311 = vmatpush.msra.mxu0 0.0
  %312 = vmatpush.msra.mxu0 0.0
  %313 = vmatpush.msra.mxu0 0.0
  %314 = vmatpush.msra.mxu0 0.0
  %315 = vmatpush.msra.mxu0 0.0
  %316 = vmatpush.msra.mxu0 0.0
  %317 = vmatpush.msra.mxu0 0.0
  %318 = vmatpush.msra.mxu0 0.0
  %319 = vmatpush.msra.mxu0 0.0
  %320 = vmatpush.msra.mxu0 0.0
  %321 = vmatpush.msra.mxu0 0.0
  %322 = vmatpush.msra.mxu0 0.0
  %323 = vmatpush.msra.mxu0 %v286
  %324 = vmatmul.f32.gmra.mxu0 %v282
  %v325 = vpop.f32.mrf.mxu0
  %v326 = vadd.f32 0.0, %v325
  %327 = vdwg.mxu0
  %v328 = vadd.f32 %v248, %v306
  %v329 = vadd.f32 %v268, %v326
  %v330 = vld [vmem:[%s2] sm:$0xff]
  %332 = vst [vmem:[#allocation1] ss:$2 sm:$0xff] %v330
  %v333 = vld.sshfl [vmem:[#allocation1] sm:$0xff pattern:$0x75316420]
  %v334 = vld.sshfl [vmem:[#allocation1 + $0x8] sm:$0xff pattern:$0x75316420]
  %v336 = vsel %vm170, %v97, 0
  %v338 = vsel %vm174, %v333, 0
  %v340 = vsel %vm174, %v334, 0
  %342 = vmatpush.msra.mxu0 0.0
  %343 = vmatpush.msra.mxu0 0.0
  %344 = vmatpush.msra.mxu0 0.0
  %345 = vmatpush.msra.mxu0 0.0
  %346 = vmatpush.msra.mxu0 0.0
  %347 = vmatpush.msra.mxu0 0.0
  %348 = vmatpush.msra.mxu0 0.0
  %349 = vmatpush.msra.mxu0 0.0
  %350 = vmatpush.msra.mxu0 0.0
  %351 = vmatpush.msra.mxu0 0.0
  %352 = vmatpush.msra.mxu0 0.0
  %353 = vmatpush.msra.mxu0 0.0
  %354 = vmatpush.msra.mxu0 0.0
  %355 = vmatpush.msra.mxu0 0.0
  %356 = vmatpush.msra.mxu0 0.0
  %357 = vmatpush.msra.mxu0 %v338
  %358 = vmatmul.f32.gmra.mxu0 %v336
  %v359 = vpop.f32.mrf.mxu0
  %v360 = vadd.f32 0.0, %v359
  %361 = vdwg.mxu0
  %362 = vmatpush.msra.mxu0 0.0
  %363 = vmatpush.msra.mxu0 0.0
  %364 = vmatpush.msra.mxu0 0.0
  %365 = vmatpush.msra.mxu0 0.0
  %366 = vmatpush.msra.mxu0 0.0
  %367 = vmatpush.msra.mxu0 0.0
  %368 = vmatpush.msra.mxu0 0.0
  %369 = vmatpush.msra.mxu0 0.0
  %370 = vmatpush.msra.mxu0 0.0
  %371 = vmatpush.msra.mxu0 0.0
  %372 = vmatpush.msra.mxu0 0.0
  %373 = vmatpush.msra.mxu0 0.0
  %374 = vmatpush.msra.mxu0 0.0
  %375 = vmatpush.msra.mxu0 0.0
  %376 = vmatpush.msra.mxu0 0.0
  %377 = vmatpush.msra.mxu0 %v340
  %378 = vmatmul.f32.gmra.mxu0 %v336
  %v379 = vpop.f32.mrf.mxu0
  %v380 = vadd.f32 0.0, %v379
  %381 = vdwg.mxu0
  %v382 = vadd.f32 %v328, %v360
  %v383 = vadd.f32 %v329, %v380
  %v384 = vld [vmem:[%s3] sm:$0xff]
  %386 = vst [vmem:[#allocation1] ss:$2 sm:$0xff] %v384
  %v387 = vld.sshfl [vmem:[#allocation1] sm:$0xff pattern:$0x75316420]
  %v388 = vld.sshfl [vmem:[#allocation1 + $0x8] sm:$0xff pattern:$0x75316420]
  %v390 = vsel %vm170, %v99, 0
  %v392 = vsel %vm174, %v387, 0
  %v394 = vsel %vm174, %v388, 0
  %396 = vmatpush.msra.mxu0 0.0
  %397 = vmatpush.msra.mxu0 0.0
  %398 = vmatpush.msra.mxu0 0.0
  %399 = vmatpush.msra.mxu0 0.0
  %400 = vmatpush.msra.mxu0 0.0
  %401 = vmatpush.msra.mxu0 0.0
  %402 = vmatpush.msra.mxu0 0.0
  %403 = vmatpush.msra.mxu0 0.0
  %404 = vmatpush.msra.mxu0 0.0
  %405 = vmatpush.msra.mxu0 0.0
  %406 = vmatpush.msra.mxu0 0.0
  %407 = vmatpush.msra.mxu0 0.0
  %408 = vmatpush.msra.mxu0 0.0
  %409 = vmatpush.msra.mxu0 0.0
  %410 = vmatpush.msra.mxu0 0.0
  %411 = vmatpush.msra.mxu0 %v392
  %412 = vmatmul.f32.gmra.mxu0 %v390
  %v413 = vpop.f32.mrf.mxu0
  %v414 = vadd.f32 0.0, %v413
  %415 = vdwg.mxu0
  %416 = vmatpush.msra.mxu0 0.0
  %417 = vmatpush.msra.mxu0 0.0
  %418 = vmatpush.msra.mxu0 0.0
  %419 = vmatpush.msra.mxu0 0.0
  %420 = vmatpush.msra.mxu0 0.0
  %421 = vmatpush.msra.mxu0 0.0
  %422 = vmatpush.msra.mxu0 0.0
  %423 = vmatpush.msra.mxu0 0.0
  %424 = vmatpush.msra.mxu0 0.0
  %425 = vmatpush.msra.mxu0 0.0
  %426 = vmatpush.msra.mxu0 0.0
  %427 = vmatpush.msra.mxu0 0.0
  %428 = vmatpush.msra.mxu0 0.0
  %429 = vmatpush.msra.mxu0 0.0
  %430 = vmatpush.msra.mxu0 0.0
  %431 = vmatpush.msra.mxu0 %v394
  %432 = vmatmul.f32.gmra.mxu0 %v390
  %v433 = vpop.f32.mrf.mxu0
  %v434 = vadd.f32 0.0, %v433
  %435 = vdwg.mxu0
  %v436 = vadd.f32 %v382, %v414
  %v437 = vadd.f32 %v383, %v434
  %v438 = vld [vmem:[%s2] sm:$0xff]
  %440 = vst [vmem:[#allocation1] ss:$2 sm:$0xff] %v438
  %v441 = vld.sshfl [vmem:[#allocation1] sm:$0xff pattern:$0x75316420]
  %v442 = vld.sshfl [vmem:[#allocation1 + $0x8] sm:$0xff pattern:$0x75316420]
  %443 = vrot.lane.b32.xlu0 %v441, 127
  %v444 = vpop.permute.xlu0 %443
  %445 = vrot.lane.b32.xlu0 %v442, 127
  %v446 = vpop.permute.xlu0 %445
  %v447 = vsel %vm279, %v444, %v446
  %v449 = vsel %vm170, %v101, 0
  %v451 = vsel %vm174, %v447, 0
  %v453 = vsel %vm174, %v446, 0
  %455 = vmatpush.msra.mxu0 0.0
  %456 = vmatpush.msra.mxu0 0.0
  %457 = vmatpush.msra.mxu0 0.0
  %458 = vmatpush.msra.mxu0 0.0
  %459 = vmatpush.msra.mxu0 0.0
  %460 = vmatpush.msra.mxu0 0.0
  %461 = vmatpush.msra.mxu0 0.0
  %462 = vmatpush.msra.mxu0 0.0
  %463 = vmatpush.msra.mxu0 0.0
  %464 = vmatpush.msra.mxu0 0.0
  %465 = vmatpush.msra.mxu0 0.0
  %466 = vmatpush.msra.mxu0 0.0
  %467 = vmatpush.msra.mxu0 0.0
  %468 = vmatpush.msra.mxu0 0.0
  %469 = vmatpush.msra.mxu0 0.0
  %470 = vmatpush.msra.mxu0 %v451
  %471 = vmatmul.f32.gmra.mxu0 %v449
  %v472 = vpop.f32.mrf.mxu0
  %v473 = vadd.f32 0.0, %v472
  %474 = vdwg.mxu0
  %475 = vmatpush.msra.mxu0 0.0
  %476 = vmatpush.msra.mxu0 0.0
  %477 = vmatpush.msra.mxu0 0.0
  %478 = vmatpush.msra.mxu0 0.0
  %479 = vmatpush.msra.mxu0 0.0
  %480 = vmatpush.msra.mxu0 0.0
  %481 = vmatpush.msra.mxu0 0.0
  %482 = vmatpush.msra.mxu0 0.0
  %483 = vmatpush.msra.mxu0 0.0
  %484 = vmatpush.msra.mxu0 0.0
  %485 = vmatpush.msra.mxu0 0.0
  %486 = vmatpush.msra.mxu0 0.0
  %487 = vmatpush.msra.mxu0 0.0
  %488 = vmatpush.msra.mxu0 0.0
  %489 = vmatpush.msra.mxu0 0.0
  %490 = vmatpush.msra.mxu0 %v453
  %491 = vmatmul.f32.gmra.mxu0 %v449
  %v492 = vpop.f32.mrf.mxu0
  %v493 = vadd.f32 0.0, %v492
  %494 = vdwg.mxu0
  %v495 = vadd.f32 %v436, %v473
  %v496 = vadd.f32 %v437, %v493
  %v497 = vld [vmem:[%s0] sm:$0xff]
  %499 = vst [vmem:[#allocation1] ss:$2 sm:$0xff] %v497
  %v500 = vld.sshfl [vmem:[#allocation1] sm:$0xff pattern:$0x75316420]
  %v501 = vld.sshfl [vmem:[#allocation1 + $0x8] sm:$0xff pattern:$0x75316420]
  %502 = vrot.lane.b32.xlu0 %v500, 112
  %v503 = vpop.permute.xlu0 %502
  %504 = vrot.lane.b32.xlu0 %v501, 112
  %v505 = vpop.permute.xlu0 %504
  %vm506 = vcmask 916480
  %v507 = vsel %vm506, %v503, %v505
  %v509 = vsel %vm170, %v103, 0
  %v511 = vsel %vm174, %v507, 0
  %v513 = vsel %vm174, %v505, 0
  %515 = vmatpush.msra.mxu0 0.0
  %516 = vmatpush.msra.mxu0 0.0
  %517 = vmatpush.msra.mxu0 0.0
  %518 = vmatpush.msra.mxu0 0.0
  %519 = vmatpush.msra.mxu0 0.0
  %520 = vmatpush.msra.mxu0 0.0
  %521 = vmatpush.msra.mxu0 0.0
  %522 = vmatpush.msra.mxu0 0.0
  %523 = vmatpush.msra.mxu0 0.0
  %524 = vmatpush.msra.mxu0 0.0
  %525 = vmatpush.msra.mxu0 0.0
  %526 = vmatpush.msra.mxu0 0.0
  %527 = vmatpush.msra.mxu0 0.0
  %528 = vmatpush.msra.mxu0 0.0
  %529 = vmatpush.msra.mxu0 0.0
  %530 = vmatpush.msra.mxu0 %v511
  %531 = vmatmul.f32.gmra.mxu0 %v509
  %v532 = vpop.f32.mrf.mxu0
  %v533 = vadd.f32 0.0, %v532
  %534 = vdwg.mxu0
  %535 = vmatpush.msra.mxu0 0.0
  %536 = vmatpush.msra.mxu0 0.0
  %537 = vmatpush.msra.mxu0 0.0
  %538 = vmatpush.msra.mxu0 0.0
  %539 = vmatpush.msra.mxu0 0.0
  %540 = vmatpush.msra.mxu0 0.0
  %541 = vmatpush.msra.mxu0 0.0
  %542 = vmatpush.msra.mxu0 0.0
  %543 = vmatpush.msra.mxu0 0.0
  %544 = vmatpush.msra.mxu0 0.0
  %545 = vmatpush.msra.mxu0 0.0
  %546 = vmatpush.msra.mxu0 0.0
  %547 = vmatpush.msra.mxu0 0.0
  %548 = vmatpush.msra.mxu0 0.0
  %549 = vmatpush.msra.mxu0 0.0
  %550 = vmatpush.msra.mxu0 %v513
  %551 = vmatmul.f32.gmra.mxu0 %v509
  %v552 = vpop.f32.mrf.mxu0
  %v553 = vadd.f32 0.0, %v552
  %554 = vdwg.mxu0
  %v555 = vadd.f32 %v495, %v533
  %v556 = vadd.f32 %v496, %v553
  %v557 = vld [vmem:[%s1] sm:$0xff]
  %559 = vst [vmem:[#allocation1] ss:$2 sm:$0xff] %v557
  %v560 = vld.sshfl [vmem:[#allocation1] sm:$0xff pattern:$0x75316420]
  %v561 = vld.sshfl [vmem:[#allocation1 + $0x8] sm:$0xff pattern:$0x75316420]
  %562 = vrot.lane.b32.xlu0 %v560, 112
  %v563 = vpop.permute.xlu0 %562
  %564 = vrot.lane.b32.xlu0 %v561, 112
  %v565 = vpop.permute.xlu0 %564
  %v566 = vsel %vm506, %v563, %v565
  %v568 = vsel %vm170, %v105, 0
  %v570 = vsel %vm174, %v566, 0
  %v572 = vsel %vm174, %v565, 0
  %574 = vmatpush.msra.mxu0 0.0
  %575 = vmatpush.msra.mxu0 0.0
  %576 = vmatpush.msra.mxu0 0.0
  %577 = vmatpush.msra.mxu0 0.0
  %578 = vmatpush.msra.mxu0 0.0
  %579 = vmatpush.msra.mxu0 0.0
  %580 = vmatpush.msra.mxu0 0.0
  %581 = vmatpush.msra.mxu0 0.0
  %582 = vmatpush.msra.mxu0 0.0
  %583 = vmatpush.msra.mxu0 0.0
  %584 = vmatpush.msra.mxu0 0.0
  %585 = vmatpush.msra.mxu0 0.0
  %586 = vmatpush.msra.mxu0 0.0
  %587 = vmatpush.msra.mxu0 0.0
  %588 = vmatpush.msra.mxu0 0.0
  %589 = vmatpush.msra.mxu0 %v570
  %590 = vmatmul.f32.gmra.mxu0 %v568
  %v591 = vpop.f32.mrf.mxu0
  %v592 = vadd.f32 0.0, %v591
  %593 = vdwg.mxu0
  %594 = vmatpush.msra.mxu0 0.0
  %595 = vmatpush.msra.mxu0 0.0
  %596 = vmatpush.msra.mxu0 0.0
  %597 = vmatpush.msra.mxu0 0.0
  %598 = vmatpush.msra.mxu0 0.0
  %599 = vmatpush.msra.mxu0 0.0
  %600 = vmatpush.msra.mxu0 0.0
  %601 = vmatpush.msra.mxu0 0.0
  %602 = vmatpush.msra.mxu0 0.0
  %603 = vmatpush.msra.mxu0 0.0
  %604 = vmatpush.msra.mxu0 0.0
  %605 = vmatpush.msra.mxu0 0.0
  %606 = vmatpush.msra.mxu0 0.0
  %607 = vmatpush.msra.mxu0 0.0
  %608 = vmatpush.msra.mxu0 0.0
  %609 = vmatpush.msra.mxu0 %v572
  %610 = vmatmul.f32.gmra.mxu0 %v568
  %v611 = vpop.f32.mrf.mxu0
  %v612 = vadd.f32 0.0, %v611
  %613 = vdwg.mxu0
  %v614 = vadd.f32 %v555, %v592
  %v615 = vadd.f32 %v556, %v612
  %v616 = vld [vmem:[%s0] sm:$0xff]
  %v617 = vld [vmem:[%s0 + $0x8] sm:$0xf]
  %620 = vst [vmem:[#allocation1] ss:$2 sm:$0xff] %v616
  %s621 = scalar_lea.vmem [#allocation1], 16
  %622 = vst [vmem:[%s621] ss:$2 sm:$0xff] %v617
  %v623 = vld.sshfl [vmem:[#allocation1] sm:$0xff pattern:$0x75316420]
  %v624 = vld.sshfl [vmem:[#allocation1 + $0x8] sm:$0xff pattern:$0x75316420]
  %v625 = vld.sshfl [vmem:[#allocation1 + $0x10] sm:$0xff pattern:$0x75316420]
  %626 = vrot.lane.b32.xlu0 %v623, 111
  %v627 = vpop.permute.xlu0 %626
  %628 = vrot.lane.b32.xlu0 %v624, 111
  %v629 = vpop.permute.xlu0 %628
  %630 = vrot.lane.b32.xlu0 %v625, 111
  %v631 = vpop.permute.xlu0 %630
  %vm632 = vcmask 908288
  %v633 = vsel %vm632, %v627, %v629
  %v634 = vsel %vm632, %v629, %v631
  %v636 = vsel %vm170, %v107, 0
  %v638 = vsel %vm174, %v633, 0
  %v640 = vsel %vm174, %v634, 0
  %642 = vmatpush.msra.mxu0 0.0
  %643 = vmatpush.msra.mxu0 0.0
  %644 = vmatpush.msra.mxu0 0.0
  %645 = vmatpush.msra.mxu0 0.0
  %646 = vmatpush.msra.mxu0 0.0
  %647 = vmatpush.msra.mxu0 0.0
  %648 = vmatpush.msra.mxu0 0.0
  %649 = vmatpush.msra.mxu0 0.0
  %650 = vmatpush.msra.mxu0 0.0
  %651 = vmatpush.msra.mxu0 0.0
  %652 = vmatpush.msra.mxu0 0.0
  %653 = vmatpush.msra.mxu0 0.0
  %654 = vmatpush.msra.mxu0 0.0
  %655 = vmatpush.msra.mxu0 0.0
  %656 = vmatpush.msra.mxu0 0.0
  %657 = vmatpush.msra.mxu0 %v638
  %658 = vmatmul.f32.gmra.mxu0 %v636
  %v659 = vpop.f32.mrf.mxu0
  %v660 = vadd.f32 0.0, %v659
  %661 = vdwg.mxu0
  %662 = vmatpush.msra.mxu0 0.0
  %663 = vmatpush.msra.mxu0 0.0
  %664 = vmatpush.msra.mxu0 0.0
  %665 = vmatpush.msra.mxu0 0.0
  %666 = vmatpush.msra.mxu0 0.0
  %667 = vmatpush.msra.mxu0 0.0
  %668 = vmatpush.msra.mxu0 0.0
  %669 = vmatpush.msra.mxu0 0.0
  %670 = vmatpush.msra.mxu0 0.0
  %671 = vmatpush.msra.mxu0 0.0
  %672 = vmatpush.msra.mxu0 0.0
  %673 = vmatpush.msra.mxu0 0.0
  %674 = vmatpush.msra.mxu0 0.0
  %675 = vmatpush.msra.mxu0 0.0
  %676 = vmatpush.msra.mxu0 0.0
  %677 = vmatpush.msra.mxu0 %v640
  %678 = vmatmul.f32.gmra.mxu0 %v636
  %v679 = vpop.f32.mrf.mxu0
  %v680 = vadd.f32 0.0, %v679
  %681 = vdwg.mxu0
  %v682 = vadd.f32 %v614, %v660
  %v683 = vadd.f32 %v615, %v680
  %v684 = vmul.f32 %v682, 0.003921569
  %v685 = vmul.f32 %v683, 0.003921569
  %687 = vset.pattern.permute.xlu0 0
  %688 = vperm.xlu0 %687, %v159
  %v689 = vpop.permute.xlu0 %688
  %v691 = vadd.f32 %v684, %v689
  %v692 = vadd.f32 %v685, %v689
  %v693 = vmax.f32 %v691, 0.0
  %v694 = vmax.f32 %v692, 0.0
  %695 = vst [vmem:[#allocation2] sm:$0xff] %v693
  %696 = vst.msk [vmem:[#allocation2 + $0x8] sm:$0xff] %vm506, %v694
  %v697 = vld [vmem:[#allocation2] sm:$0xff]
  %v698 = vld [vmem:[#allocation2 + $0x8] sm:$0xff]
  %701 = vrot.lane.b32.xlu0 %v697, 127
  %v702 = vpop.permute.xlu0 %701
  %703 = vrot.lane.b32.xlu0 %v698, 127
  %v704 = vpop.permute.xlu0 %703
  %v705 = vsel %vm279, %v702, %v704
  %vm708 = vcmask 64512
  %v710 = vsel %vm708, %v110, 0
  %712 = vmatpush.msra.mxu0 0.0
  %713 = vmatpush.msra.mxu0 0.0
  %714 = vmatpush.msra.mxu0 0.0
  %715 = vmatpush.msra.mxu0 0.0
  %716 = vmatpush.msra.mxu0 0.0
  %717 = vmatpush.msra.mxu0 0.0
  %718 = vmatpush.msra.mxu0 0.0
  %719 = vmatpush.msra.mxu0 0.0
  %720 = vmatpush.msra.mxu0 0.0
  %721 = vmatpush.msra.mxu0 0.0
  %722 = vmatpush.msra.mxu0 0.0
  %723 = vmatpush.msra.mxu0 0.0
  %724 = vmatpush.msra.mxu0 0.0
  %725 = vmatpush.msra.mxu0 0.0
  %726 = vmatpush.msra.mxu0 0.0
  %727 = vmatpush.msra.mxu0 %v705
  %728 = vmatmul.f32.gmra.mxu0 %v710
  %v729 = vpop.f32.mrf.mxu0
  %v730 = vadd.f32 0.0, %v729
  %731 = vdwg.mxu0
  %732 = vmatpush.msra.mxu0 0.0
  %733 = vmatpush.msra.mxu0 0.0
  %734 = vmatpush.msra.mxu0 0.0
  %735 = vmatpush.msra.mxu0 0.0
  %736 = vmatpush.msra.mxu0 0.0
  %737 = vmatpush.msra.mxu0 0.0
  %738 = vmatpush.msra.mxu0 0.0
  %739 = vmatpush.msra.mxu0 0.0
  %740 = vmatpush.msra.mxu0 0.0
  %741 = vmatpush.msra.mxu0 0.0
  %742 = vmatpush.msra.mxu0 0.0
  %743 = vmatpush.msra.mxu0 0.0
  %744 = vmatpush.msra.mxu0 0.0
  %745 = vmatpush.msra.mxu0 0.0
  %746 = vmatpush.msra.mxu0 0.0
  %747 = vmatpush.msra.mxu0 %v704
  %748 = vmatmul.f32.gmra.mxu0 %v710
  %v749 = vpop.f32.mrf.mxu0
  %v750 = vadd.f32 0.0, %v749
  %751 = vdwg.mxu0
  %v753 = vsel %vm708, %v108, 0
  %755 = vmatpush.msra.mxu0 0.0
  %756 = vmatpush.msra.mxu0 0.0
  %757 = vmatpush.msra.mxu0 0.0
  %758 = vmatpush.msra.mxu0 0.0
  %759 = vmatpush.msra.mxu0 0.0
  %760 = vmatpush.msra.mxu0 0.0
  %761 = vmatpush.msra.mxu0 0.0
  %762 = vmatpush.msra.mxu0 0.0
  %763 = vmatpush.msra.mxu0 0.0
  %764 = vmatpush.msra.mxu0 0.0
  %765 = vmatpush.msra.mxu0 0.0
  %766 = vmatpush.msra.mxu0 0.0
  %767 = vmatpush.msra.mxu0 0.0
  %768 = vmatpush.msra.mxu0 0.0
  %769 = vmatpush.msra.mxu0 0.0
  %770 = vmatpush.msra.mxu0 %v697
  %771 = vmatmul.f32.gmra.mxu0 %v753
  %v772 = vpop.f32.mrf.mxu0
  %v773 = vadd.f32 %v730, %v772
  %774 = vdwg.mxu0
  %775 = vmatpush.msra.mxu0 0.0
  %776 = vmatpush.msra.mxu0 0.0
  %777 = vmatpush.msra.mxu0 0.0
  %778 = vmatpush.msra.mxu0 0.0
  %779 = vmatpush.msra.mxu0 0.0
  %780 = vmatpush.msra.mxu0 0.0
  %781 = vmatpush.msra.mxu0 0.0
  %782 = vmatpush.msra.mxu0 0.0
  %783 = vmatpush.msra.mxu0 0.0
  %784 = vmatpush.msra.mxu0 0.0
  %785 = vmatpush.msra.mxu0 0.0
  %786 = vmatpush.msra.mxu0 0.0
  %787 = vmatpush.msra.mxu0 0.0
  %788 = vmatpush.msra.mxu0 0.0
  %789 = vmatpush.msra.mxu0 0.0
  %790 = vmatpush.msra.mxu0 %v698
  %791 = vmatmul.f32.gmra.mxu0 %v753
  %v792 = vpop.f32.mrf.mxu0
  %v793 = vadd.f32 %v750, %v792
  %794 = vdwg.mxu0
  %795 = vrot.lane.b32.xlu0 %v697, 126
  %v796 = vpop.permute.xlu0 %795
  %797 = vrot.lane.b32.xlu0 %v698, 126
  %v798 = vpop.permute.xlu0 %797
  %vm799 = vcmask 1031168
  %v800 = vsel %vm799, %v796, %v798
  %v804 = vsel %vm708, %v112, 0
  %806 = vmatpush.msra.mxu0 0.0
  %807 = vmatpush.msra.mxu0 0.0
  %808 = vmatpush.msra.mxu0 0.0
  %809 = vmatpush.msra.mxu0 0.0
  %810 = vmatpush.msra.mxu0 0.0
  %811 = vmatpush.msra.mxu0 0.0
  %812 = vmatpush.msra.mxu0 0.0
  %813 = vmatpush.msra.mxu0 0.0
  %814 = vmatpush.msra.mxu0 0.0
  %815 = vmatpush.msra.mxu0 0.0
  %816 = vmatpush.msra.mxu0 0.0
  %817 = vmatpush.msra.mxu0 0.0
  %818 = vmatpush.msra.mxu0 0.0
  %819 = vmatpush.msra.mxu0 0.0
  %820 = vmatpush.msra.mxu0 0.0
  %821 = vmatpush.msra.mxu0 %v800
  %822 = vmatmul.f32.gmra.mxu0 %v804
  %v823 = vpop.f32.mrf.mxu0
  %v824 = vadd.f32 0.0, %v823
  %825 = vdwg.mxu0
  %826 = vmatpush.msra.mxu0 0.0
  %827 = vmatpush.msra.mxu0 0.0
  %828 = vmatpush.msra.mxu0 0.0
  %829 = vmatpush.msra.mxu0 0.0
  %830 = vmatpush.msra.mxu0 0.0
  %831 = vmatpush.msra.mxu0 0.0
  %832 = vmatpush.msra.mxu0 0.0
  %833 = vmatpush.msra.mxu0 0.0
  %834 = vmatpush.msra.mxu0 0.0
  %835 = vmatpush.msra.mxu0 0.0
  %836 = vmatpush.msra.mxu0 0.0
  %837 = vmatpush.msra.mxu0 0.0
  %838 = vmatpush.msra.mxu0 0.0
  %839 = vmatpush.msra.mxu0 0.0
  %840 = vmatpush.msra.mxu0 0.0
  %841 = vmatpush.msra.mxu0 %v798
  %842 = vmatmul.f32.gmra.mxu0 %v804
  %v843 = vpop.f32.mrf.mxu0
  %v844 = vadd.f32 0.0, %v843
  %845 = vdwg.mxu0
  %v846 = vadd.f32 %v773, %v824
  %v847 = vadd.f32 %v793, %v844
  %848 = vrot.lane.b32.xlu0 %v697, 112
  %v849 = vpop.permute.xlu0 %848
  %850 = vrot.lane.b32.xlu0 %v698, 112
  %v851 = vpop.permute.xlu0 %850
  %v852 = vsel %vm506, %v849, %v851
  %v856 = vsel %vm708, %v114, 0
  %858 = vmatpush.msra.mxu0 0.0
  %859 = vmatpush.msra.mxu0 0.0
  %860 = vmatpush.msra.mxu0 0.0
  %861 = vmatpush.msra.mxu0 0.0
  %862 = vmatpush.msra.mxu0 0.0
  %863 = vmatpush.msra.mxu0 0.0
  %864 = vmatpush.msra.mxu0 0.0
  %865 = vmatpush.msra.mxu0 0.0
  %866 = vmatpush.msra.mxu0 0.0
  %867 = vmatpush.msra.mxu0 0.0
  %868 = vmatpush.msra.mxu0 0.0
  %869 = vmatpush.msra.mxu0 0.0
  %870 = vmatpush.msra.mxu0 0.0
  %871 = vmatpush.msra.mxu0 0.0
  %872 = vmatpush.msra.mxu0 0.0
  %873 = vmatpush.msra.mxu0 %v852
  %874 = vmatmul.f32.gmra.mxu0 %v856
  %v875 = vpop.f32.mrf.mxu0
  %v876 = vadd.f32 0.0, %v875
  %877 = vdwg.mxu0
  %878 = vmatpush.msra.mxu0 0.0
  %879 = vmatpush.msra.mxu0 0.0
  %880 = vmatpush.msra.mxu0 0.0
  %881 = vmatpush.msra.mxu0 0.0
  %882 = vmatpush.msra.mxu0 0.0
  %883 = vmatpush.msra.mxu0 0.0
  %884 = vmatpush.msra.mxu0 0.0
  %885 = vmatpush.msra.mxu0 0.0
  %886 = vmatpush.msra.mxu0 0.0
  %887 = vmatpush.msra.mxu0 0.0
  %888 = vmatpush.msra.mxu0 0.0
  %889 = vmatpush.msra.mxu0 0.0
  %890 = vmatpush.msra.mxu0 0.0
  %891 = vmatpush.msra.mxu0 0.0
  %892 = vmatpush.msra.mxu0 0.0
  %893 = vmatpush.msra.mxu0 %v851
  %894 = vmatmul.f32.gmra.mxu0 %v856
  %v895 = vpop.f32.mrf.mxu0
  %v896 = vadd.f32 0.0, %v895
  %897 = vdwg.mxu0
  %v898 = vadd.f32 %v846, %v876
  %v899 = vadd.f32 %v847, %v896
  %900 = vrot.lane.b32.xlu0 %v697, 111
  %v901 = vpop.permute.xlu0 %900
  %902 = vrot.lane.b32.xlu0 %v698, 111
  %v903 = vpop.permute.xlu0 %902
  %v904 = vsel %vm632, %v901, %v903
  %v908 = vsel %vm708, %v116, 0
  %910 = vmatpush.msra.mxu0 0.0
  %911 = vmatpush.msra.mxu0 0.0
  %912 = vmatpush.msra.mxu0 0.0
  %913 = vmatpush.msra.mxu0 0.0
  %914 = vmatpush.msra.mxu0 0.0
  %915 = vmatpush.msra.mxu0 0.0
  %916 = vmatpush.msra.mxu0 0.0
  %917 = vmatpush.msra.mxu0 0.0
  %918 = vmatpush.msra.mxu0 0.0
  %919 = vmatpush.msra.mxu0 0.0
  %920 = vmatpush.msra.mxu0 0.0
  %921 = vmatpush.msra.mxu0 0.0
  %922 = vmatpush.msra.mxu0 0.0
  %923 = vmatpush.msra.mxu0 0.0
  %924 = vmatpush.msra.mxu0 0.0
  %925 = vmatpush.msra.mxu0 %v904
  %926 = vmatmul.f32.gmra.mxu0 %v908
  %v927 = vpop.f32.mrf.mxu0
  %v928 = vadd.f32 0.0, %v927
  %929 = vdwg.mxu0
  %930 = vmatpush.msra.mxu0 0.0
  %931 = vmatpush.msra.mxu0 0.0
  %932 = vmatpush.msra.mxu0 0.0
  %933 = vmatpush.msra.mxu0 0.0
  %934 = vmatpush.msra.mxu0 0.0
  %935 = vmatpush.msra.mxu0 0.0
  %936 = vmatpush.msra.mxu0 0.0
  %937 = vmatpush.msra.mxu0 0.0
  %938 = vmatpush.msra.mxu0 0.0
  %939 = vmatpush.msra.mxu0 0.0
  %940 = vmatpush.msra.mxu0 0.0
  %941 = vmatpush.msra.mxu0 0.0
  %942 = vmatpush.msra.mxu0 0.0
  %943 = vmatpush.msra.mxu0 0.0
  %944 = vmatpush.msra.mxu0 0.0
  %945 = vmatpush.msra.mxu0 %v903
  %946 = vmatmul.f32.gmra.mxu0 %v908
  %v947 = vpop.f32.mrf.mxu0
  %v948 = vadd.f32 0.0, %v947
  %949 = vdwg.mxu0
  %v950 = vadd.f32 %v898, %v928
  %v951 = vadd.f32 %v899, %v948
  %952 = vrot.lane.b32.xlu0 %v697, 110
  %v953 = vpop.permute.xlu0 %952
  %954 = vrot.lane.b32.xlu0 %v698, 110
  %v955 = vpop.permute.xlu0 %954
  %vm956 = vcmask 900096
  %v957 = vsel %vm956, %v953, %v955
  %v961 = vsel %vm708, %v118, 0
  %963 = vmatpush.msra.mxu0 0.0
  %964 = vmatpush.msra.mxu0 0.0
  %965 = vmatpush.msra.mxu0 0.0
  %966 = vmatpush.msra.mxu0 0.0
  %967 = vmatpush.msra.mxu0 0.0
  %968 = vmatpush.msra.mxu0 0.0
  %969 = vmatpush.msra.mxu0 0.0
  %970 = vmatpush.msra.mxu0 0.0
  %971 = vmatpush.msra.mxu0 0.0
  %972 = vmatpush.msra.mxu0 0.0
  %973 = vmatpush.msra.mxu0 0.0
  %974 = vmatpush.msra.mxu0 0.0
  %975 = vmatpush.msra.mxu0 0.0
  %976 = vmatpush.msra.mxu0 0.0
  %977 = vmatpush.msra.mxu0 0.0
  %978 = vmatpush.msra.mxu0 %v957
  %979 = vmatmul.f32.gmra.mxu0 %v961
  %v980 = vpop.f32.mrf.mxu0
  %v981 = vadd.f32 0.0, %v980
  %982 = vdwg.mxu0
  %983 = vmatpush.msra.mxu0 0.0
  %984 = vmatpush.msra.mxu0 0.0
  %985 = vmatpush.msra.mxu0 0.0
  %986 = vmatpush.msra.mxu0 0.0
  %987 = vmatpush.msra.mxu0 0.0
  %988 = vmatpush.msra.mxu0 0.0
  %989 = vmatpush.msra.mxu0 0.0
  %990 = vmatpush.msra.mxu0 0.0
  %991 = vmatpush.msra.mxu0 0.0
  %992 = vmatpush.msra.mxu0 0.0
  %993 = vmatpush.msra.mxu0 0.0
  %994 = vmatpush.msra.mxu0 0.0
  %995 = vmatpush.msra.mxu0 0.0
  %996 = vmatpush.msra.mxu0 0.0
  %997 = vmatpush.msra.mxu0 0.0
  %998 = vmatpush.msra.mxu0 %v955
  %999 = vmatmul.f32.gmra.mxu0 %v961
  %v1000 = vpop.f32.mrf.mxu0
  %v1001 = vadd.f32 0.0, %v1000
  %1002 = vdwg.mxu0
  %v1003 = vadd.f32 %v950, %v981
  %v1004 = vadd.f32 %v951, %v1001
  %1005 = vrot.lane.b32.xlu0 %v697, 96
  %v1006 = vpop.permute.xlu0 %1005
  %1007 = vrot.lane.b32.xlu0 %v698, 96
  %v1008 = vpop.permute.xlu0 %1007
  %vm1009 = vcmask 785408
  %v1010 = vsel %vm1009, %v1006, %v1008
  %v1014 = vsel %vm708, %v120, 0
  %1016 = vmatpush.msra.mxu0 0.0
  %1017 = vmatpush.msra.mxu0 0.0
  %1018 = vmatpush.msra.mxu0 0.0
  %1019 = vmatpush.msra.mxu0 0.0
  %1020 = vmatpush.msra.mxu0 0.0
  %1021 = vmatpush.msra.mxu0 0.0
  %1022 = vmatpush.msra.mxu0 0.0
  %1023 = vmatpush.msra.mxu0 0.0
  %1024 = vmatpush.msra.mxu0 0.0
  %1025 = vmatpush.msra.mxu0 0.0
  %1026 = vmatpush.msra.mxu0 0.0
  %1027 = vmatpush.msra.mxu0 0.0
  %1028 = vmatpush.msra.mxu0 0.0
  %1029 = vmatpush.msra.mxu0 0.0
  %1030 = vmatpush.msra.mxu0 0.0
  %1031 = vmatpush.msra.mxu0 %v1010
  %1032 = vmatmul.f32.gmra.mxu0 %v1014
  %v1033 = vpop.f32.mrf.mxu0
  %v1034 = vadd.f32 0.0, %v1033
  %1035 = vdwg.mxu0
  %1036 = vmatpush.msra.mxu0 0.0
  %1037 = vmatpush.msra.mxu0 0.0
  %1038 = vmatpush.msra.mxu0 0.0
  %1039 = vmatpush.msra.mxu0 0.0
  %1040 = vmatpush.msra.mxu0 0.0
  %1041 = vmatpush.msra.mxu0 0.0
  %1042 = vmatpush.msra.mxu0 0.0
  %1043 = vmatpush.msra.mxu0 0.0
  %1044 = vmatpush.msra.mxu0 0.0
  %1045 = vmatpush.msra.mxu0 0.0
  %1046 = vmatpush.msra.mxu0 0.0
  %1047 = vmatpush.msra.mxu0 0.0
  %1048 = vmatpush.msra.mxu0 0.0
  %1049 = vmatpush.msra.mxu0 0.0
  %1050 = vmatpush.msra.mxu0 0.0
  %1051 = vmatpush.msra.mxu0 %v1008
  %1052 = vmatmul.f32.gmra.mxu0 %v1014
  %v1053 = vpop.f32.mrf.mxu0
  %v1054 = vadd.f32 0.0, %v1053
  %1055 = vdwg.mxu0
  %v1056 = vadd.f32 %v1003, %v1034
  %v1057 = vadd.f32 %v1004, %v1054
  %1058 = vrot.lane.b32.xlu0 %v697, 95
  %v1059 = vpop.permute.xlu0 %1058
  %1060 = vrot.lane.b32.xlu0 %v698, 95
  %v1061 = vpop.permute.xlu0 %1060
  %vm1062 = vcmask 777216
  %v1063 = vsel %vm1062, %v1059, %v1061
  %v1067 = vsel %vm708, %v122, 0
  %1069 = vmatpush.msra.mxu0 0.0
  %1070 = vmatpush.msra.mxu0 0.0
  %1071 = vmatpush.msra.mxu0 0.0
  %1072 = vmatpush.msra.mxu0 0.0
  %1073 = vmatpush.msra.mxu0 0.0
  %1074 = vmatpush.msra.mxu0 0.0
  %1075 = vmatpush.msra.mxu0 0.0
  %1076 = vmatpush.msra.mxu0 0.0
  %1077 = vmatpush.msra.mxu0 0.0
  %1078 = vmatpush.msra.mxu0 0.0
  %1079 = vmatpush.msra.mxu0 0.0
  %1080 = vmatpush.msra.mxu0 0.0
  %1081 = vmatpush.msra.mxu0 0.0
  %1082 = vmatpush.msra.mxu0 0.0
  %1083 = vmatpush.msra.mxu0 0.0
  %1084 = vmatpush.msra.mxu0 %v1063
  %1085 = vmatmul.f32.gmra.mxu0 %v1067
  %v1086 = vpop.f32.mrf.mxu0
  %v1087 = vadd.f32 0.0, %v1086
  %1088 = vdwg.mxu0
  %1089 = vmatpush.msra.mxu0 0.0
  %1090 = vmatpush.msra.mxu0 0.0
  %1091 = vmatpush.msra.mxu0 0.0
  %1092 = vmatpush.msra.mxu0 0.0
  %1093 = vmatpush.msra.mxu0 0.0
  %1094 = vmatpush.msra.mxu0 0.0
  %1095 = vmatpush.msra.mxu0 0.0
  %1096 = vmatpush.msra.mxu0 0.0
  %1097 = vmatpush.msra.mxu0 0.0
  %1098 = vmatpush.msra.mxu0 0.0
  %1099 = vmatpush.msra.mxu0 0.0
  %1100 = vmatpush.msra.mxu0 0.0
  %1101 = vmatpush.msra.mxu0 0.0
  %1102 = vmatpush.msra.mxu0 0.0
  %1103 = vmatpush.msra.mxu0 0.0
  %1104 = vmatpush.msra.mxu0 %v1061
  %1105 = vmatmul.f32.gmra.mxu0 %v1067
  %v1106 = vpop.f32.mrf.mxu0
  %v1107 = vadd.f32 0.0, %v1106
  %1108 = vdwg.mxu0
  %v1109 = vadd.f32 %v1056, %v1087
  %v1110 = vadd.f32 %v1057, %v1107
  %1111 = vrot.lane.b32.xlu0 %v697, 94
  %v1112 = vpop.permute.xlu0 %1111
  %1113 = vrot.lane.b32.xlu0 %v698, 94
  %v1114 = vpop.permute.xlu0 %1113
  %vm1115 = vcmask 769024
  %v1116 = vsel %vm1115, %v1112, %v1114
  %v1120 = vsel %vm708, %v124, 0
  %1122 = vmatpush.msra.mxu0 0.0
  %1123 = vmatpush.msra.mxu0 0.0
  %1124 = vmatpush.msra.mxu0 0.0
  %1125 = vmatpush.msra.mxu0 0.0
  %1126 = vmatpush.msra.mxu0 0.0
  %1127 = vmatpush.msra.mxu0 0.0
  %1128 = vmatpush.msra.mxu0 0.0
  %1129 = vmatpush.msra.mxu0 0.0
  %1130 = vmatpush.msra.mxu0 0.0
  %1131 = vmatpush.msra.mxu0 0.0
  %1132 = vmatpush.msra.mxu0 0.0
  %1133 = vmatpush.msra.mxu0 0.0
  %1134 = vmatpush.msra.mxu0 0.0
  %1135 = vmatpush.msra.mxu0 0.0
  %1136 = vmatpush.msra.mxu0 0.0
  %1137 = vmatpush.msra.mxu0 %v1116
  %1138 = vmatmul.f32.gmra.mxu0 %v1120
  %v1139 = vpop.f32.mrf.mxu0
  %v1140 = vadd.f32 0.0, %v1139
  %1141 = vdwg.mxu0
  %1142 = vmatpush.msra.mxu0 0.0
  %1143 = vmatpush.msra.mxu0 0.0
  %1144 = vmatpush.msra.mxu0 0.0
  %1145 = vmatpush.msra.mxu0 0.0
  %1146 = vmatpush.msra.mxu0 0.0
  %1147 = vmatpush.msra.mxu0 0.0
  %1148 = vmatpush.msra.mxu0 0.0
  %1149 = vmatpush.msra.mxu0 0.0
  %1150 = vmatpush.msra.mxu0 0.0
  %1151 = vmatpush.msra.mxu0 0.0
  %1152 = vmatpush.msra.mxu0 0.0
  %1153 = vmatpush.msra.mxu0 0.0
  %1154 = vmatpush.msra.mxu0 0.0
  %1155 = vmatpush.msra.mxu0 0.0
  %1156 = vmatpush.msra.mxu0 0.0
  %1157 = vmatpush.msra.mxu0 %v1114
  %1158 = vmatmul.f32.gmra.mxu0 %v1120
  %v1159 = vpop.f32.mrf.mxu0
  %v1160 = vadd.f32 0.0, %v1159
  %1161 = vdwg.mxu0
  %v1162 = vadd.f32 %v1109, %v1140
  %v1163 = vadd.f32 %v1110, %v1160
  %1165 = vset.pattern.permute.xlu0 0
  %1166 = vperm.xlu0 %1165, %v160
  %v1167 = vpop.permute.xlu0 %1166
  %v1169 = vadd.f32 %v1162, %v1167
  %v1170 = vadd.f32 %v1163, %v1167
  %v1171 = vmax.f32 %v1169, 0.0
  %v1172 = vmax.f32 %v1170, 0.0
  %1173 = vst [vmem:[#allocation3] sm:$0xff] %v1171
  %vm1174 = vcmask 654336
  %1175 = vst.msk [vmem:[#allocation3 + $0x8] sm:$0xff] %vm1174, %v1172
  %v1176 = vld [vmem:[#allocation3] sm:$0xff]
  %v1177 = vld [vmem:[#allocation3 + $0x8] sm:$0xff]
  %1180 = vrot.lane.b32.xlu0 %v1176, 127
  %v1181 = vpop.permute.xlu0 %1180
  %1182 = vrot.lane.b32.xlu0 %v1177, 127
  %v1183 = vpop.permute.xlu0 %1182
  %v1184 = vsel %vm279, %v1181, %v1183
  %v1188 = vsel %vm708, %v127, 0
  %1190 = vmatpush.msra.mxu0 0.0
  %1191 = vmatpush.msra.mxu0 0.0
  %1192 = vmatpush.msra.mxu0 0.0
  %1193 = vmatpush.msra.mxu0 0.0
  %1194 = vmatpush.msra.mxu0 0.0
  %1195 = vmatpush.msra.mxu0 0.0
  %1196 = vmatpush.msra.mxu0 0.0
  %1197 = vmatpush.msra.mxu0 0.0
  %1198 = vmatpush.msra.mxu0 0.0
  %1199 = vmatpush.msra.mxu0 0.0
  %1200 = vmatpush.msra.mxu0 0.0
  %1201 = vmatpush.msra.mxu0 0.0
  %1202 = vmatpush.msra.mxu0 0.0
  %1203 = vmatpush.msra.mxu0 0.0
  %1204 = vmatpush.msra.mxu0 0.0
  %1205 = vmatpush.msra.mxu0 %v1184
  %1206 = vmatmul.f32.gmra.mxu0 %v1188
  %v1207 = vpop.f32.mrf.mxu0
  %v1208 = vadd.f32 0.0, %v1207
  %1209 = vdwg.mxu0
  %1210 = vmatpush.msra.mxu0 0.0
  %1211 = vmatpush.msra.mxu0 0.0
  %1212 = vmatpush.msra.mxu0 0.0
  %1213 = vmatpush.msra.mxu0 0.0
  %1214 = vmatpush.msra.mxu0 0.0
  %1215 = vmatpush.msra.mxu0 0.0
  %1216 = vmatpush.msra.mxu0 0.0
  %1217 = vmatpush.msra.mxu0 0.0
  %1218 = vmatpush.msra.mxu0 0.0
  %1219 = vmatpush.msra.mxu0 0.0
  %1220 = vmatpush.msra.mxu0 0.0
  %1221 = vmatpush.msra.mxu0 0.0
  %1222 = vmatpush.msra.mxu0 0.0
  %1223 = vmatpush.msra.mxu0 0.0
  %1224 = vmatpush.msra.mxu0 0.0
  %1225 = vmatpush.msra.mxu0 %v1183
  %1226 = vmatmul.f32.gmra.mxu0 %v1188
  %v1227 = vpop.f32.mrf.mxu0
  %v1228 = vadd.f32 0.0, %v1227
  %1229 = vdwg.mxu0
  %v1231 = vsel %vm708, %v125, 0
  %1233 = vmatpush.msra.mxu0 0.0
  %1234 = vmatpush.msra.mxu0 0.0
  %1235 = vmatpush.msra.mxu0 0.0
  %1236 = vmatpush.msra.mxu0 0.0
  %1237 = vmatpush.msra.mxu0 0.0
  %1238 = vmatpush.msra.mxu0 0.0
  %1239 = vmatpush.msra.mxu0 0.0
  %1240 = vmatpush.msra.mxu0 0.0
  %1241 = vmatpush.msra.mxu0 0.0
  %1242 = vmatpush.msra.mxu0 0.0
  %1243 = vmatpush.msra.mxu0 0.0
  %1244 = vmatpush.msra.mxu0 0.0
  %1245 = vmatpush.msra.mxu0 0.0
  %1246 = vmatpush.msra.mxu0 0.0
  %1247 = vmatpush.msra.mxu0 0.0
  %1248 = vmatpush.msra.mxu0 %v1176
  %1249 = vmatmul.f32.gmra.mxu0 %v1231
  %v1250 = vpop.f32.mrf.mxu0
  %v1251 = vadd.f32 %v1208, %v1250
  %1252 = vdwg.mxu0
  %1253 = vmatpush.msra.mxu0 0.0
  %1254 = vmatpush.msra.mxu0 0.0
  %1255 = vmatpush.msra.mxu0 0.0
  %1256 = vmatpush.msra.mxu0 0.0
  %1257 = vmatpush.msra.mxu0 0.0
  %1258 = vmatpush.msra.mxu0 0.0
  %1259 = vmatpush.msra.mxu0 0.0
  %1260 = vmatpush.msra.mxu0 0.0
  %1261 = vmatpush.msra.mxu0 0.0
  %1262 = vmatpush.msra.mxu0 0.0
  %1263 = vmatpush.msra.mxu0 0.0
  %1264 = vmatpush.msra.mxu0 0.0
  %1265 = vmatpush.msra.mxu0 0.0
  %1266 = vmatpush.msra.mxu0 0.0
  %1267 = vmatpush.msra.mxu0 0.0
  %1268 = vmatpush.msra.mxu0 %v1177
  %1269 = vmatmul.f32.gmra.mxu0 %v1231
  %v1270 = vpop.f32.mrf.mxu0
  %v1271 = vadd.f32 %v1228, %v1270
  %1272 = vdwg.mxu0
  %1273 = vrot.lane.b32.xlu0 %v1176, 126
  %v1274 = vpop.permute.xlu0 %1273
  %1275 = vrot.lane.b32.xlu0 %v1177, 126
  %v1276 = vpop.permute.xlu0 %1275
  %v1277 = vsel %vm799, %v1274, %v1276
  %v1281 = vsel %vm708, %v129, 0
  %1283 = vmatpush.msra.mxu0 0.0
  %1284 = vmatpush.msra.mxu0 0.0
  %1285 = vmatpush.msra.mxu0 0.0
  %1286 = vmatpush.msra.mxu0 0.0
  %1287 = vmatpush.msra.mxu0 0.0
  %1288 = vmatpush.msra.mxu0 0.0
  %1289 = vmatpush.msra.mxu0 0.0
  %1290 = vmatpush.msra.mxu0 0.0
  %1291 = vmatpush.msra.mxu0 0.0
  %1292 = vmatpush.msra.mxu0 0.0
  %1293 = vmatpush.msra.mxu0 0.0
  %1294 = vmatpush.msra.mxu0 0.0
  %1295 = vmatpush.msra.mxu0 0.0
  %1296 = vmatpush.msra.mxu0 0.0
  %1297 = vmatpush.msra.mxu0 0.0
  %1298 = vmatpush.msra.mxu0 %v1277
  %1299 = vmatmul.f32.gmra.mxu0 %v1281
  %v1300 = vpop.f32.mrf.mxu0
  %v1301 = vadd.f32 0.0, %v1300
  %1302 = vdwg.mxu0
  %1303 = vmatpush.msra.mxu0 0.0
  %1304 = vmatpush.msra.mxu0 0.0
  %1305 = vmatpush.msra.mxu0 0.0
  %1306 = vmatpush.msra.mxu0 0.0
  %1307 = vmatpush.msra.mxu0 0.0
  %1308 = vmatpush.msra.mxu0 0.0
  %1309 = vmatpush.msra.mxu0 0.0
  %1310 = vmatpush.msra.mxu0 0.0
  %1311 = vmatpush.msra.mxu0 0.0
  %1312 = vmatpush.msra.mxu0 0.0
  %1313 = vmatpush.msra.mxu0 0.0
  %1314 = vmatpush.msra.mxu0 0.0
  %1315 = vmatpush.msra.mxu0 0.0
  %1316 = vmatpush.msra.mxu0 0.0
  %1317 = vmatpush.msra.mxu0 0.0
  %1318 = vmatpush.msra.mxu0 %v1276
  %1319 = vmatmul.f32.gmra.mxu0 %v1281
  %v1320 = vpop.f32.mrf.mxu0
  %v1321 = vadd.f32 0.0, %v1320
  %1322 = vdwg.mxu0
  %v1323 = vadd.f32 %v1251, %v1301
  %v1324 = vadd.f32 %v1271, %v1321
  %1325 = vrot.lane.b32.xlu0 %v1176, 112
  %v1326 = vpop.permute.xlu0 %1325
  %1327 = vrot.lane.b32.xlu0 %v1177, 112
  %v1328 = vpop.permute.xlu0 %1327
  %v1329 = vsel %vm506, %v1326, %v1328
  %v1333 = vsel %vm708, %v131, 0
  %1335 = vmatpush.msra.mxu0 0.0
  %1336 = vmatpush.msra.mxu0 0.0
  %1337 = vmatpush.msra.mxu0 0.0
  %1338 = vmatpush.msra.mxu0 0.0
  %1339 = vmatpush.msra.mxu0 0.0
  %1340 = vmatpush.msra.mxu0 0.0
  %1341 = vmatpush.msra.mxu0 0.0
  %1342 = vmatpush.msra.mxu0 0.0
  %1343 = vmatpush.msra.mxu0 0.0
  %1344 = vmatpush.msra.mxu0 0.0
  %1345 = vmatpush.msra.mxu0 0.0
  %1346 = vmatpush.msra.mxu0 0.0
  %1347 = vmatpush.msra.mxu0 0.0
  %1348 = vmatpush.msra.mxu0 0.0
  %1349 = vmatpush.msra.mxu0 0.0
  %1350 = vmatpush.msra.mxu0 %v1329
  %1351 = vmatmul.f32.gmra.mxu0 %v1333
  %v1352 = vpop.f32.mrf.mxu0
  %v1353 = vadd.f32 0.0, %v1352
  %1354 = vdwg.mxu0
  %1355 = vmatpush.msra.mxu0 0.0
  %1356 = vmatpush.msra.mxu0 0.0
  %1357 = vmatpush.msra.mxu0 0.0
  %1358 = vmatpush.msra.mxu0 0.0
  %1359 = vmatpush.msra.mxu0 0.0
  %1360 = vmatpush.msra.mxu0 0.0
  %1361 = vmatpush.msra.mxu0 0.0
  %1362 = vmatpush.msra.mxu0 0.0
  %1363 = vmatpush.msra.mxu0 0.0
  %1364 = vmatpush.msra.mxu0 0.0
  %1365 = vmatpush.msra.mxu0 0.0
  %1366 = vmatpush.msra.mxu0 0.0
  %1367 = vmatpush.msra.mxu0 0.0
  %1368 = vmatpush.msra.mxu0 0.0
  %1369 = vmatpush.msra.mxu0 0.0
  %1370 = vmatpush.msra.mxu0 %v1328
  %1371 = vmatmul.f32.gmra.mxu0 %v1333
  %v1372 = vpop.f32.mrf.mxu0
  %v1373 = vadd.f32 0.0, %v1372
  %1374 = vdwg.mxu0
  %v1375 = vadd.f32 %v1323, %v1353
  %v1376 = vadd.f32 %v1324, %v1373
  %1377 = vrot.lane.b32.xlu0 %v1176, 111
  %v1378 = vpop.permute.xlu0 %1377
  %1379 = vrot.lane.b32.xlu0 %v1177, 111
  %v1380 = vpop.permute.xlu0 %1379
  %v1381 = vsel %vm632, %v1378, %v1380
  %v1385 = vsel %vm708, %v133, 0
  %1387 = vmatpush.msra.mxu0 0.0
  %1388 = vmatpush.msra.mxu0 0.0
  %1389 = vmatpush.msra.mxu0 0.0
  %1390 = vmatpush.msra.mxu0 0.0
  %1391 = vmatpush.msra.mxu0 0.0
  %1392 = vmatpush.msra.mxu0 0.0
  %1393 = vmatpush.msra.mxu0 0.0
  %1394 = vmatpush.msra.mxu0 0.0
  %1395 = vmatpush.msra.mxu0 0.0
  %1396 = vmatpush.msra.mxu0 0.0
  %1397 = vmatpush.msra.mxu0 0.0
  %1398 = vmatpush.msra.mxu0 0.0
  %1399 = vmatpush.msra.mxu0 0.0
  %1400 = vmatpush.msra.mxu0 0.0
  %1401 = vmatpush.msra.mxu0 0.0
  %1402 = vmatpush.msra.mxu0 %v1381
  %1403 = vmatmul.f32.gmra.mxu0 %v1385
  %v1404 = vpop.f32.mrf.mxu0
  %v1405 = vadd.f32 0.0, %v1404
  %1406 = vdwg.mxu0
  %1407 = vmatpush.msra.mxu0 0.0
  %1408 = vmatpush.msra.mxu0 0.0
  %1409 = vmatpush.msra.mxu0 0.0
  %1410 = vmatpush.msra.mxu0 0.0
  %1411 = vmatpush.msra.mxu0 0.0
  %1412 = vmatpush.msra.mxu0 0.0
  %1413 = vmatpush.msra.mxu0 0.0
  %1414 = vmatpush.msra.mxu0 0.0
  %1415 = vmatpush.msra.mxu0 0.0
  %1416 = vmatpush.msra.mxu0 0.0
  %1417 = vmatpush.msra.mxu0 0.0
  %1418 = vmatpush.msra.mxu0 0.0
  %1419 = vmatpush.msra.mxu0 0.0
  %1420 = vmatpush.msra.mxu0 0.0
  %1421 = vmatpush.msra.mxu0 0.0
  %1422 = vmatpush.msra.mxu0 %v1380
  %1423 = vmatmul.f32.gmra.mxu0 %v1385
  %v1424 = vpop.f32.mrf.mxu0
  %v1425 = vadd.f32 0.0, %v1424
  %1426 = vdwg.mxu0
  %v1427 = vadd.f32 %v1375, %v1405
  %v1428 = vadd.f32 %v1376, %v1425
  %1429 = vrot.lane.b32.xlu0 %v1176, 110
  %v1430 = vpop.permute.xlu0 %1429
  %1431 = vrot.lane.b32.xlu0 %v1177, 110
  %v1432 = vpop.permute.xlu0 %1431
  %v1433 = vsel %vm956, %v1430, %v1432
  %v1437 = vsel %vm708, %v135, 0
  %1439 = vmatpush.msra.mxu0 0.0
  %1440 = vmatpush.msra.mxu0 0.0
  %1441 = vmatpush.msra.mxu0 0.0
  %1442 = vmatpush.msra.mxu0 0.0
  %1443 = vmatpush.msra.mxu0 0.0
  %1444 = vmatpush.msra.mxu0 0.0
  %1445 = vmatpush.msra.mxu0 0.0
  %1446 = vmatpush.msra.mxu0 0.0
  %1447 = vmatpush.msra.mxu0 0.0
  %1448 = vmatpush.msra.mxu0 0.0
  %1449 = vmatpush.msra.mxu0 0.0
  %1450 = vmatpush.msra.mxu0 0.0
  %1451 = vmatpush.msra.mxu0 0.0
  %1452 = vmatpush.msra.mxu0 0.0
  %1453 = vmatpush.msra.mxu0 0.0
  %1454 = vmatpush.msra.mxu0 %v1433
  %1455 = vmatmul.f32.gmra.mxu0 %v1437
  %v1456 = vpop.f32.mrf.mxu0
  %v1457 = vadd.f32 0.0, %v1456
  %1458 = vdwg.mxu0
  %1459 = vmatpush.msra.mxu0 0.0
  %1460 = vmatpush.msra.mxu0 0.0
  %1461 = vmatpush.msra.mxu0 0.0
  %1462 = vmatpush.msra.mxu0 0.0
  %1463 = vmatpush.msra.mxu0 0.0
  %1464 = vmatpush.msra.mxu0 0.0
  %1465 = vmatpush.msra.mxu0 0.0
  %1466 = vmatpush.msra.mxu0 0.0
  %1467 = vmatpush.msra.mxu0 0.0
  %1468 = vmatpush.msra.mxu0 0.0
  %1469 = vmatpush.msra.mxu0 0.0
  %1470 = vmatpush.msra.mxu0 0.0
  %1471 = vmatpush.msra.mxu0 0.0
  %1472 = vmatpush.msra.mxu0 0.0
  %1473 = vmatpush.msra.mxu0 0.0
  %1474 = vmatpush.msra.mxu0 %v1432
  %1475 = vmatmul.f32.gmra.mxu0 %v1437
  %v1476 = vpop.f32.mrf.mxu0
  %v1477 = vadd.f32 0.0, %v1476
  %1478 = vdwg.mxu0
  %v1479 = vadd.f32 %v1427, %v1457
  %v1480 = vadd.f32 %v1428, %v1477
  %1481 = vrot.lane.b32.xlu0 %v1176, 96
  %v1482 = vpop.permute.xlu0 %1481
  %1483 = vrot.lane.b32.xlu0 %v1177, 96
  %v1484 = vpop.permute.xlu0 %1483
  %v1485 = vsel %vm1009, %v1482, %v1484
  %v1489 = vsel %vm708, %v137, 0
  %1491 = vmatpush.msra.mxu0 0.0
  %1492 = vmatpush.msra.mxu0 0.0
  %1493 = vmatpush.msra.mxu0 0.0
  %1494 = vmatpush.msra.mxu0 0.0
  %1495 = vmatpush.msra.mxu0 0.0
  %1496 = vmatpush.msra.mxu0 0.0
  %1497 = vmatpush.msra.mxu0 0.0
  %1498 = vmatpush.msra.mxu0 0.0
  %1499 = vmatpush.msra.mxu0 0.0
  %1500 = vmatpush.msra.mxu0 0.0
  %1501 = vmatpush.msra.mxu0 0.0
  %1502 = vmatpush.msra.mxu0 0.0
  %1503 = vmatpush.msra.mxu0 0.0
  %1504 = vmatpush.msra.mxu0 0.0
  %1505 = vmatpush.msra.mxu0 0.0
  %1506 = vmatpush.msra.mxu0 %v1485
  %1507 = vmatmul.f32.gmra.mxu0 %v1489
  %v1508 = vpop.f32.mrf.mxu0
  %v1509 = vadd.f32 0.0, %v1508
  %1510 = vdwg.mxu0
  %1511 = vmatpush.msra.mxu0 0.0
  %1512 = vmatpush.msra.mxu0 0.0
  %1513 = vmatpush.msra.mxu0 0.0
  %1514 = vmatpush.msra.mxu0 0.0
  %1515 = vmatpush.msra.mxu0 0.0
  %1516 = vmatpush.msra.mxu0 0.0
  %1517 = vmatpush.msra.mxu0 0.0
  %1518 = vmatpush.msra.mxu0 0.0
  %1519 = vmatpush.msra.mxu0 0.0
  %1520 = vmatpush.msra.mxu0 0.0
  %1521 = vmatpush.msra.mxu0 0.0
  %1522 = vmatpush.msra.mxu0 0.0
  %1523 = vmatpush.msra.mxu0 0.0
  %1524 = vmatpush.msra.mxu0 0.0
  %1525 = vmatpush.msra.mxu0 0.0
  %1526 = vmatpush.msra.mxu0 %v1484
  %1527 = vmatmul.f32.gmra.mxu0 %v1489
  %v1528 = vpop.f32.mrf.mxu0
  %v1529 = vadd.f32 0.0, %v1528
  %1530 = vdwg.mxu0
  %v1531 = vadd.f32 %v1479, %v1509
  %v1532 = vadd.f32 %v1480, %v1529
  %1533 = vrot.lane.b32.xlu0 %v1176, 95
  %v1534 = vpop.permute.xlu0 %1533
  %1535 = vrot.lane.b32.xlu0 %v1177, 95
  %v1536 = vpop.permute.xlu0 %1535
  %v1537 = vsel %vm1062, %v1534, %v1536
  %v1541 = vsel %vm708, %v139, 0
  %1543 = vmatpush.msra.mxu0 0.0
  %1544 = vmatpush.msra.mxu0 0.0
  %1545 = vmatpush.msra.mxu0 0.0
  %1546 = vmatpush.msra.mxu0 0.0
  %1547 = vmatpush.msra.mxu0 0.0
  %1548 = vmatpush.msra.mxu0 0.0
  %1549 = vmatpush.msra.mxu0 0.0
  %1550 = vmatpush.msra.mxu0 0.0
  %1551 = vmatpush.msra.mxu0 0.0
  %1552 = vmatpush.msra.mxu0 0.0
  %1553 = vmatpush.msra.mxu0 0.0
  %1554 = vmatpush.msra.mxu0 0.0
  %1555 = vmatpush.msra.mxu0 0.0
  %1556 = vmatpush.msra.mxu0 0.0
  %1557 = vmatpush.msra.mxu0 0.0
  %1558 = vmatpush.msra.mxu0 %v1537
  %1559 = vmatmul.f32.gmra.mxu0 %v1541
  %v1560 = vpop.f32.mrf.mxu0
  %v1561 = vadd.f32 0.0, %v1560
  %1562 = vdwg.mxu0
  %1563 = vmatpush.msra.mxu0 0.0
  %1564 = vmatpush.msra.mxu0 0.0
  %1565 = vmatpush.msra.mxu0 0.0
  %1566 = vmatpush.msra.mxu0 0.0
  %1567 = vmatpush.msra.mxu0 0.0
  %1568 = vmatpush.msra.mxu0 0.0
  %1569 = vmatpush.msra.mxu0 0.0
  %1570 = vmatpush.msra.mxu0 0.0
  %1571 = vmatpush.msra.mxu0 0.0
  %1572 = vmatpush.msra.mxu0 0.0
  %1573 = vmatpush.msra.mxu0 0.0
  %1574 = vmatpush.msra.mxu0 0.0
  %1575 = vmatpush.msra.mxu0 0.0
  %1576 = vmatpush.msra.mxu0 0.0
  %1577 = vmatpush.msra.mxu0 0.0
  %1578 = vmatpush.msra.mxu0 %v1536
  %1579 = vmatmul.f32.gmra.mxu0 %v1541
  %v1580 = vpop.f32.mrf.mxu0
  %v1581 = vadd.f32 0.0, %v1580
  %1582 = vdwg.mxu0
  %v1583 = vadd.f32 %v1531, %v1561
  %v1584 = vadd.f32 %v1532, %v1581
  %1585 = vrot.lane.b32.xlu0 %v1176, 94
  %v1586 = vpop.permute.xlu0 %1585
  %1587 = vrot.lane.b32.xlu0 %v1177, 94
  %v1588 = vpop.permute.xlu0 %1587
  %v1589 = vsel %vm1115, %v1586, %v1588
  %v1593 = vsel %vm708, %v141, 0
  %1595 = vmatpush.msra.mxu0 0.0
  %1596 = vmatpush.msra.mxu0 0.0
  %1597 = vmatpush.msra.mxu0 0.0
  %1598 = vmatpush.msra.mxu0 0.0
  %1599 = vmatpush.msra.mxu0 0.0
  %1600 = vmatpush.msra.mxu0 0.0
  %1601 = vmatpush.msra.mxu0 0.0
  %1602 = vmatpush.msra.mxu0 0.0
  %1603 = vmatpush.msra.mxu0 0.0
  %1604 = vmatpush.msra.mxu0 0.0
  %1605 = vmatpush.msra.mxu0 0.0
  %1606 = vmatpush.msra.mxu0 0.0
  %1607 = vmatpush.msra.mxu0 0.0
  %1608 = vmatpush.msra.mxu0 0.0
  %1609 = vmatpush.msra.mxu0 0.0
  %1610 = vmatpush.msra.mxu0 %v1589
  %1611 = vmatmul.f32.gmra.mxu0 %v1593
  %v1612 = vpop.f32.mrf.mxu0
  %v1613 = vadd.f32 0.0, %v1612
  %1614 = vdwg.mxu0
  %1615 = vmatpush.msra.mxu0 0.0
  %1616 = vmatpush.msra.mxu0 0.0
  %1617 = vmatpush.msra.mxu0 0.0
  %1618 = vmatpush.msra.mxu0 0.0
  %1619 = vmatpush.msra.mxu0 0.0
  %1620 = vmatpush.msra.mxu0 0.0
  %1621 = vmatpush.msra.mxu0 0.0
  %1622 = vmatpush.msra.mxu0 0.0
  %1623 = vmatpush.msra.mxu0 0.0
  %1624 = vmatpush.msra.mxu0 0.0
  %1625 = vmatpush.msra.mxu0 0.0
  %1626 = vmatpush.msra.mxu0 0.0
  %1627 = vmatpush.msra.mxu0 0.0
  %1628 = vmatpush.msra.mxu0 0.0
  %1629 = vmatpush.msra.mxu0 0.0
  %1630 = vmatpush.msra.mxu0 %v1588
  %1631 = vmatmul.f32.gmra.mxu0 %v1593
  %v1632 = vpop.f32.mrf.mxu0
  %v1633 = vadd.f32 0.0, %v1632
  %1634 = vdwg.mxu0
  %v1635 = vadd.f32 %v1583, %v1613
  %v1636 = vadd.f32 %v1584, %v1633
  %1638 = vset.pattern.permute.xlu0 0
  %1639 = vperm.xlu0 %1638, %v161
  %v1640 = vpop.permute.xlu0 %1639
  %v1642 = vadd.f32 %v1635, %v1640
  %v1643 = vadd.f32 %v1636, %v1640
  %v1644 = vmax.f32 %v1642, 0.0
  %v1645 = vmax.f32 %v1643, 0.0
  %1646 = vst [vmem:[#allocation4] sm:$0xff] %v1644
  %vm1647 = vcmask 392192
  %1648 = vst.msk [vmem:[#allocation4 + $0x8] sm:$0xff] %vm1647, %v1645
  %v1649 = vld [vmem:[#allocation4] sm:$0xff]
  %v1650 = vld [vmem:[#allocation4 + $0x8] sm:$0xff]
  %1653 = vrot.lane.b32.xlu0 %v1649, 127
  %v1654 = vpop.permute.xlu0 %1653
  %1655 = vrot.lane.b32.xlu0 %v1650, 127
  %v1656 = vpop.permute.xlu0 %1655
  %v1657 = vsel %vm279, %v1654, %v1656
  %v1661 = vsel %vm708, %v144, 0
  %1663 = vmatpush.msra.mxu0 0.0
  %1664 = vmatpush.msra.mxu0 0.0
  %1665 = vmatpush.msra.mxu0 0.0
  %1666 = vmatpush.msra.mxu0 0.0
  %1667 = vmatpush.msra.mxu0 0.0
  %1668 = vmatpush.msra.mxu0 0.0
  %1669 = vmatpush.msra.mxu0 0.0
  %1670 = vmatpush.msra.mxu0 0.0
  %1671 = vmatpush.msra.mxu0 0.0
  %1672 = vmatpush.msra.mxu0 0.0
  %1673 = vmatpush.msra.mxu0 0.0
  %1674 = vmatpush.msra.mxu0 0.0
  %1675 = vmatpush.msra.mxu0 0.0
  %1676 = vmatpush.msra.mxu0 0.0
  %1677 = vmatpush.msra.mxu0 0.0
  %1678 = vmatpush.msra.mxu0 %v1657
  %1679 = vmatmul.f32.gmra.mxu0 %v1661
  %v1680 = vpop.f32.mrf.mxu0
  %v1681 = vadd.f32 0.0, %v1680
  %1682 = vdwg.mxu0
  %1683 = vmatpush.msra.mxu0 0.0
  %1684 = vmatpush.msra.mxu0 0.0
  %1685 = vmatpush.msra.mxu0 0.0
  %1686 = vmatpush.msra.mxu0 0.0
  %1687 = vmatpush.msra.mxu0 0.0
  %1688 = vmatpush.msra.mxu0 0.0
  %1689 = vmatpush.msra.mxu0 0.0
  %1690 = vmatpush.msra.mxu0 0.0
  %1691 = vmatpush.msra.mxu0 0.0
  %1692 = vmatpush.msra.mxu0 0.0
  %1693 = vmatpush.msra.mxu0 0.0
  %1694 = vmatpush.msra.mxu0 0.0
  %1695 = vmatpush.msra.mxu0 0.0
  %1696 = vmatpush.msra.mxu0 0.0
  %1697 = vmatpush.msra.mxu0 0.0
  %1698 = vmatpush.msra.mxu0 %v1656
  %1699 = vmatmul.f32.gmra.mxu0 %v1661
  %v1700 = vpop.f32.mrf.mxu0
  %v1701 = vadd.f32 0.0, %v1700
  %1702 = vdwg.mxu0
  %v1704 = vsel %vm708, %v142, 0
  %1706 = vmatpush.msra.mxu0 0.0
  %1707 = vmatpush.msra.mxu0 0.0
  %1708 = vmatpush.msra.mxu0 0.0
  %1709 = vmatpush.msra.mxu0 0.0
  %1710 = vmatpush.msra.mxu0 0.0
  %1711 = vmatpush.msra.mxu0 0.0
  %1712 = vmatpush.msra.mxu0 0.0
  %1713 = vmatpush.msra.mxu0 0.0
  %1714 = vmatpush.msra.mxu0 0.0
  %1715 = vmatpush.msra.mxu0 0.0
  %1716 = vmatpush.msra.mxu0 0.0
  %1717 = vmatpush.msra.mxu0 0.0
  %1718 = vmatpush.msra.mxu0 0.0
  %1719 = vmatpush.msra.mxu0 0.0
  %1720 = vmatpush.msra.mxu0 0.0
  %1721 = vmatpush.msra.mxu0 %v1649
  %1722 = vmatmul.f32.gmra.mxu0 %v1704
  %v1723 = vpop.f32.mrf.mxu0
  %v1724 = vadd.f32 %v1681, %v1723
  %1725 = vdwg.mxu0
  %1726 = vmatpush.msra.mxu0 0.0
  %1727 = vmatpush.msra.mxu0 0.0
  %1728 = vmatpush.msra.mxu0 0.0
  %1729 = vmatpush.msra.mxu0 0.0
  %1730 = vmatpush.msra.mxu0 0.0
  %1731 = vmatpush.msra.mxu0 0.0
  %1732 = vmatpush.msra.mxu0 0.0
  %1733 = vmatpush.msra.mxu0 0.0
  %1734 = vmatpush.msra.mxu0 0.0
  %1735 = vmatpush.msra.mxu0 0.0
  %1736 = vmatpush.msra.mxu0 0.0
  %1737 = vmatpush.msra.mxu0 0.0
  %1738 = vmatpush.msra.mxu0 0.0
  %1739 = vmatpush.msra.mxu0 0.0
  %1740 = vmatpush.msra.mxu0 0.0
  %1741 = vmatpush.msra.mxu0 %v1650
  %1742 = vmatmul.f32.gmra.mxu0 %v1704
  %v1743 = vpop.f32.mrf.mxu0
  %v1744 = vadd.f32 %v1701, %v1743
  %1745 = vdwg.mxu0
  %1746 = vrot.lane.b32.xlu0 %v1649, 126
  %v1747 = vpop.permute.xlu0 %1746
  %1748 = vrot.lane.b32.xlu0 %v1650, 126
  %v1749 = vpop.permute.xlu0 %1748
  %v1750 = vsel %vm799, %v1747, %v1749
  %v1754 = vsel %vm708, %v146, 0
  %1756 = vmatpush.msra.mxu0 0.0
  %1757 = vmatpush.msra.mxu0 0.0
  %1758 = vmatpush.msra.mxu0 0.0
  %1759 = vmatpush.msra.mxu0 0.0
  %1760 = vmatpush.msra.mxu0 0.0
  %1761 = vmatpush.msra.mxu0 0.0
  %1762 = vmatpush.msra.mxu0 0.0
  %1763 = vmatpush.msra.mxu0 0.0
  %1764 = vmatpush.msra.mxu0 0.0
  %1765 = vmatpush.msra.mxu0 0.0
  %1766 = vmatpush.msra.mxu0 0.0
  %1767 = vmatpush.msra.mxu0 0.0
  %1768 = vmatpush.msra.mxu0 0.0
  %1769 = vmatpush.msra.mxu0 0.0
  %1770 = vmatpush.msra.mxu0 0.0
  %1771 = vmatpush.msra.mxu0 %v1750
  %1772 = vmatmul.f32.gmra.mxu0 %v1754
  %v1773 = vpop.f32.mrf.mxu0
  %v1774 = vadd.f32 0.0, %v1773
  %1775 = vdwg.mxu0
  %1776 = vmatpush.msra.mxu0 0.0
  %1777 = vmatpush.msra.mxu0 0.0
  %1778 = vmatpush.msra.mxu0 0.0
  %1779 = vmatpush.msra.mxu0 0.0
  %1780 = vmatpush.msra.mxu0 0.0
  %1781 = vmatpush.msra.mxu0 0.0
  %1782 = vmatpush.msra.mxu0 0.0
  %1783 = vmatpush.msra.mxu0 0.0
  %1784 = vmatpush.msra.mxu0 0.0
  %1785 = vmatpush.msra.mxu0 0.0
  %1786 = vmatpush.msra.mxu0 0.0
  %1787 = vmatpush.msra.mxu0 0.0
  %1788 = vmatpush.msra.mxu0 0.0
  %1789 = vmatpush.msra.mxu0 0.0
  %1790 = vmatpush.msra.mxu0 0.0
  %1791 = vmatpush.msra.mxu0 %v1749
  %1792 = vmatmul.f32.gmra.mxu0 %v1754
  %v1793 = vpop.f32.mrf.mxu0
  %v1794 = vadd.f32 0.0, %v1793
  %1795 = vdwg.mxu0
  %v1796 = vadd.f32 %v1724, %v1774
  %v1797 = vadd.f32 %v1744, %v1794
  %1798 = vrot.lane.b32.xlu0 %v1649, 112
  %v1799 = vpop.permute.xlu0 %1798
  %1800 = vrot.lane.b32.xlu0 %v1650, 112
  %v1801 = vpop.permute.xlu0 %1800
  %v1802 = vsel %vm506, %v1799, %v1801
  %v1806 = vsel %vm708, %v148, 0
  %1808 = vmatpush.msra.mxu0 0.0
  %1809 = vmatpush.msra.mxu0 0.0
  %1810 = vmatpush.msra.mxu0 0.0
  %1811 = vmatpush.msra.mxu0 0.0
  %1812 = vmatpush.msra.mxu0 0.0
  %1813 = vmatpush.msra.mxu0 0.0
  %1814 = vmatpush.msra.mxu0 0.0
  %1815 = vmatpush.msra.mxu0 0.0
  %1816 = vmatpush.msra.mxu0 0.0
  %1817 = vmatpush.msra.mxu0 0.0
  %1818 = vmatpush.msra.mxu0 0.0
  %1819 = vmatpush.msra.mxu0 0.0
  %1820 = vmatpush.msra.mxu0 0.0
  %1821 = vmatpush.msra.mxu0 0.0
  %1822 = vmatpush.msra.mxu0 0.0
  %1823 = vmatpush.msra.mxu0 %v1802
  %1824 = vmatmul.f32.gmra.mxu0 %v1806
  %v1825 = vpop.f32.mrf.mxu0
  %v1826 = vadd.f32 0.0, %v1825
  %1827 = vdwg.mxu0
  %1828 = vmatpush.msra.mxu0 0.0
  %1829 = vmatpush.msra.mxu0 0.0
  %1830 = vmatpush.msra.mxu0 0.0
  %1831 = vmatpush.msra.mxu0 0.0
  %1832 = vmatpush.msra.mxu0 0.0
  %1833 = vmatpush.msra.mxu0 0.0
  %1834 = vmatpush.msra.mxu0 0.0
  %1835 = vmatpush.msra.mxu0 0.0
  %1836 = vmatpush.msra.mxu0 0.0
  %1837 = vmatpush.msra.mxu0 0.0
  %1838 = vmatpush.msra.mxu0 0.0
  %1839 = vmatpush.msra.mxu0 0.0
  %1840 = vmatpush.msra.mxu0 0.0
  %1841 = vmatpush.msra.mxu0 0.0
  %1842 = vmatpush.msra.mxu0 0.0
  %1843 = vmatpush.msra.mxu0 %v1801
  %1844 = vmatmul.f32.gmra.mxu0 %v1806
  %v1845 = vpop.f32.mrf.mxu0
  %v1846 = vadd.f32 0.0, %v1845
  %1847 = vdwg.mxu0
  %v1848 = vadd.f32 %v1796, %v1826
  %v1849 = vadd.f32 %v1797, %v1846
  %1850 = vrot.lane.b32.xlu0 %v1649, 111
  %v1851 = vpop.permute.xlu0 %1850
  %1852 = vrot.lane.b32.xlu0 %v1650, 111
  %v1853 = vpop.permute.xlu0 %1852
  %v1854 = vsel %vm632, %v1851, %v1853
  %v1858 = vsel %vm708, %v150, 0
  %1860 = vmatpush.msra.mxu0 0.0
  %1861 = vmatpush.msra.mxu0 0.0
  %1862 = vmatpush.msra.mxu0 0.0
  %1863 = vmatpush.msra.mxu0 0.0
  %1864 = vmatpush.msra.mxu0 0.0
  %1865 = vmatpush.msra.mxu0 0.0
  %1866 = vmatpush.msra.mxu0 0.0
  %1867 = vmatpush.msra.mxu0 0.0
  %1868 = vmatpush.msra.mxu0 0.0
  %1869 = vmatpush.msra.mxu0 0.0
  %1870 = vmatpush.msra.mxu0 0.0
  %1871 = vmatpush.msra.mxu0 0.0
  %1872 = vmatpush.msra.mxu0 0.0
  %1873 = vmatpush.msra.mxu0 0.0
  %1874 = vmatpush.msra.mxu0 0.0
  %1875 = vmatpush.msra.mxu0 %v1854
  %1876 = vmatmul.f32.gmra.mxu0 %v1858
  %v1877 = vpop.f32.mrf.mxu0
  %v1878 = vadd.f32 0.0, %v1877
  %1879 = vdwg.mxu0
  %1880 = vmatpush.msra.mxu0 0.0
  %1881 = vmatpush.msra.mxu0 0.0
  %1882 = vmatpush.msra.mxu0 0.0
  %1883 = vmatpush.msra.mxu0 0.0
  %1884 = vmatpush.msra.mxu0 0.0
  %1885 = vmatpush.msra.mxu0 0.0
  %1886 = vmatpush.msra.mxu0 0.0
  %1887 = vmatpush.msra.mxu0 0.0
  %1888 = vmatpush.msra.mxu0 0.0
  %1889 = vmatpush.msra.mxu0 0.0
  %1890 = vmatpush.msra.mxu0 0.0
  %1891 = vmatpush.msra.mxu0 0.0
  %1892 = vmatpush.msra.mxu0 0.0
  %1893 = vmatpush.msra.mxu0 0.0
  %1894 = vmatpush.msra.mxu0 0.0
  %1895 = vmatpush.msra.mxu0 %v1853
  %1896 = vmatmul.f32.gmra.mxu0 %v1858
  %v1897 = vpop.f32.mrf.mxu0
  %v1898 = vadd.f32 0.0, %v1897
  %1899 = vdwg.mxu0
  %v1900 = vadd.f32 %v1848, %v1878
  %v1901 = vadd.f32 %v1849, %v1898
  %1902 = vrot.lane.b32.xlu0 %v1649, 110
  %v1903 = vpop.permute.xlu0 %1902
  %1904 = vrot.lane.b32.xlu0 %v1650, 110
  %v1905 = vpop.permute.xlu0 %1904
  %v1906 = vsel %vm956, %v1903, %v1905
  %v1910 = vsel %vm708, %v152, 0
  %1912 = vmatpush.msra.mxu0 0.0
  %1913 = vmatpush.msra.mxu0 0.0
  %1914 = vmatpush.msra.mxu0 0.0
  %1915 = vmatpush.msra.mxu0 0.0
  %1916 = vmatpush.msra.mxu0 0.0
  %1917 = vmatpush.msra.mxu0 0.0
  %1918 = vmatpush.msra.mxu0 0.0
  %1919 = vmatpush.msra.mxu0 0.0
  %1920 = vmatpush.msra.mxu0 0.0
  %1921 = vmatpush.msra.mxu0 0.0
  %1922 = vmatpush.msra.mxu0 0.0
  %1923 = vmatpush.msra.mxu0 0.0
  %1924 = vmatpush.msra.mxu0 0.0
  %1925 = vmatpush.msra.mxu0 0.0
  %1926 = vmatpush.msra.mxu0 0.0
  %1927 = vmatpush.msra.mxu0 %v1906
  %1928 = vmatmul.f32.gmra.mxu0 %v1910
  %v1929 = vpop.f32.mrf.mxu0
  %v1930 = vadd.f32 0.0, %v1929
  %1931 = vdwg.mxu0
  %1932 = vmatpush.msra.mxu0 0.0
  %1933 = vmatpush.msra.mxu0 0.0
  %1934 = vmatpush.msra.mxu0 0.0
  %1935 = vmatpush.msra.mxu0 0.0
  %1936 = vmatpush.msra.mxu0 0.0
  %1937 = vmatpush.msra.mxu0 0.0
  %1938 = vmatpush.msra.mxu0 0.0
  %1939 = vmatpush.msra.mxu0 0.0
  %1940 = vmatpush.msra.mxu0 0.0
  %1941 = vmatpush.msra.mxu0 0.0
  %1942 = vmatpush.msra.mxu0 0.0
  %1943 = vmatpush.msra.mxu0 0.0
  %1944 = vmatpush.msra.mxu0 0.0
  %1945 = vmatpush.msra.mxu0 0.0
  %1946 = vmatpush.msra.mxu0 0.0
  %1947 = vmatpush.msra.mxu0 %v1905
  %1948 = vmatmul.f32.gmra.mxu0 %v1910
  %v1949 = vpop.f32.mrf.mxu0
  %v1950 = vadd.f32 0.0, %v1949
  %1951 = vdwg.mxu0
  %v1952 = vadd.f32 %v1900, %v1930
  %v1953 = vadd.f32 %v1901, %v1950
  %1954 = vrot.lane.b32.xlu0 %v1649, 96
  %v1955 = vpop.permute.xlu0 %1954
  %1956 = vrot.lane.b32.xlu0 %v1650, 96
  %v1957 = vpop.permute.xlu0 %1956
  %v1958 = vsel %vm1009, %v1955, %v1957
  %v1962 = vsel %vm708, %v154, 0
  %1964 = vmatpush.msra.mxu0 0.0
  %1965 = vmatpush.msra.mxu0 0.0
  %1966 = vmatpush.msra.mxu0 0.0
  %1967 = vmatpush.msra.mxu0 0.0
  %1968 = vmatpush.msra.mxu0 0.0
  %1969 = vmatpush.msra.mxu0 0.0
  %1970 = vmatpush.msra.mxu0 0.0
  %1971 = vmatpush.msra.mxu0 0.0
  %1972 = vmatpush.msra.mxu0 0.0
  %1973 = vmatpush.msra.mxu0 0.0
  %1974 = vmatpush.msra.mxu0 0.0
  %1975 = vmatpush.msra.mxu0 0.0
  %1976 = vmatpush.msra.mxu0 0.0
  %1977 = vmatpush.msra.mxu0 0.0
  %1978 = vmatpush.msra.mxu0 0.0
  %1979 = vmatpush.msra.mxu0 %v1958
  %1980 = vmatmul.f32.gmra.mxu0 %v1962
  %v1981 = vpop.f32.mrf.mxu0
  %v1982 = vadd.f32 0.0, %v1981
  %1983 = vdwg.mxu0
  %1984 = vmatpush.msra.mxu0 0.0
  %1985 = vmatpush.msra.mxu0 0.0
  %1986 = vmatpush.msra.mxu0 0.0
  %1987 = vmatpush.msra.mxu0 0.0
  %1988 = vmatpush.msra.mxu0 0.0
  %1989 = vmatpush.msra.mxu0 0.0
  %1990 = vmatpush.msra.mxu0 0.0
  %1991 = vmatpush.msra.mxu0 0.0
  %1992 = vmatpush.msra.mxu0 0.0
  %1993 = vmatpush.msra.mxu0 0.0
  %1994 = vmatpush.msra.mxu0 0.0
  %1995 = vmatpush.msra.mxu0 0.0
  %1996 = vmatpush.msra.mxu0 0.0
  %1997 = vmatpush.msra.mxu0 0.0
  %1998 = vmatpush.msra.mxu0 0.0
  %1999 = vmatpush.msra.mxu0 %v1957
  %2000 = vmatmul.f32.gmra.mxu0 %v1962
  %v2001 = vpop.f32.mrf.mxu0
  %v2002 = vadd.f32 0.0, %v2001
  %2003 = vdwg.mxu0
  %v2004 = vadd.f32 %v1952, %v1982
  %v2005 = vadd.f32 %v1953, %v2002
  %2006 = vrot.lane.b32.xlu0 %v1649, 95
  %v2007 = vpop.permute.xlu0 %2006
  %2008 = vrot.lane.b32.xlu0 %v1650, 95
  %v2009 = vpop.permute.xlu0 %2008
  %v2010 = vsel %vm1062, %v2007, %v2009
  %v2014 = vsel %vm708, %v156, 0
  %2016 = vmatpush.msra.mxu0 0.0
  %2017 = vmatpush.msra.mxu0 0.0
  %2018 = vmatpush.msra.mxu0 0.0
  %2019 = vmatpush.msra.mxu0 0.0
  %2020 = vmatpush.msra.mxu0 0.0
  %2021 = vmatpush.msra.mxu0 0.0
  %2022 = vmatpush.msra.mxu0 0.0
  %2023 = vmatpush.msra.mxu0 0.0
  %2024 = vmatpush.msra.mxu0 0.0
  %2025 = vmatpush.msra.mxu0 0.0
  %2026 = vmatpush.msra.mxu0 0.0
  %2027 = vmatpush.msra.mxu0 0.0
  %2028 = vmatpush.msra.mxu0 0.0
  %2029 = vmatpush.msra.mxu0 0.0
  %2030 = vmatpush.msra.mxu0 0.0
  %2031 = vmatpush.msra.mxu0 %v2010
  %2032 = vmatmul.f32.gmra.mxu0 %v2014
  %v2033 = vpop.f32.mrf.mxu0
  %v2034 = vadd.f32 0.0, %v2033
  %2035 = vdwg.mxu0
  %2036 = vmatpush.msra.mxu0 0.0
  %2037 = vmatpush.msra.mxu0 0.0
  %2038 = vmatpush.msra.mxu0 0.0
  %2039 = vmatpush.msra.mxu0 0.0
  %2040 = vmatpush.msra.mxu0 0.0
  %2041 = vmatpush.msra.mxu0 0.0
  %2042 = vmatpush.msra.mxu0 0.0
  %2043 = vmatpush.msra.mxu0 0.0
  %2044 = vmatpush.msra.mxu0 0.0
  %2045 = vmatpush.msra.mxu0 0.0
  %2046 = vmatpush.msra.mxu0 0.0
  %2047 = vmatpush.msra.mxu0 0.0
  %2048 = vmatpush.msra.mxu0 0.0
  %2049 = vmatpush.msra.mxu0 0.0
  %2050 = vmatpush.msra.mxu0 0.0
  %2051 = vmatpush.msra.mxu0 %v2009
  %2052 = vmatmul.f32.gmra.mxu0 %v2014
  %v2053 = vpop.f32.mrf.mxu0
  %v2054 = vadd.f32 0.0, %v2053
  %2055 = vdwg.mxu0
  %v2056 = vadd.f32 %v2004, %v2034
  %v2057 = vadd.f32 %v2005, %v2054
  %2058 = vrot.lane.b32.xlu0 %v1649, 94
  %v2059 = vpop.permute.xlu0 %2058
  %2060 = vrot.lane.b32.xlu0 %v1650, 94
  %v2061 = vpop.permute.xlu0 %2060
  %v2062 = vsel %vm1115, %v2059, %v2061
  %v2066 = vsel %vm708, %v158, 0
  %2068 = vmatpush.msra.mxu0 0.0
  %2069 = vmatpush.msra.mxu0 0.0
  %2070 = vmatpush.msra.mxu0 0.0
  %2071 = vmatpush.msra.mxu0 0.0
  %2072 = vmatpush.msra.mxu0 0.0
  %2073 = vmatpush.msra.mxu0 0.0
  %2074 = vmatpush.msra.mxu0 0.0
  %2075 = vmatpush.msra.mxu0 0.0
  %2076 = vmatpush.msra.mxu0 0.0
  %2077 = vmatpush.msra.mxu0 0.0
  %2078 = vmatpush.msra.mxu0 0.0
  %2079 = vmatpush.msra.mxu0 0.0
  %2080 = vmatpush.msra.mxu0 0.0
  %2081 = vmatpush.msra.mxu0 0.0
  %2082 = vmatpush.msra.mxu0 0.0
  %2083 = vmatpush.msra.mxu0 %v2062
  %2084 = vmatmul.f32.gmra.mxu0 %v2066
  %v2085 = vpop.f32.mrf.mxu0
  %v2086 = vadd.f32 0.0, %v2085
  %2087 = vdwg.mxu0
  %2088 = vmatpush.msra.mxu0 0.0
  %2089 = vmatpush.msra.mxu0 0.0
  %2090 = vmatpush.msra.mxu0 0.0
  %2091 = vmatpush.msra.mxu0 0.0
  %2092 = vmatpush.msra.mxu0 0.0
  %2093 = vmatpush.msra.mxu0 0.0
  %2094 = vmatpush.msra.mxu0 0.0
  %2095 = vmatpush.msra.mxu0 0.0
  %2096 = vmatpush.msra.mxu0 0.0
  %2097 = vmatpush.msra.mxu0 0.0
  %2098 = vmatpush.msra.mxu0 0.0
  %2099 = vmatpush.msra.mxu0 0.0
  %2100 = vmatpush.msra.mxu0 0.0
  %2101 = vmatpush.msra.mxu0 0.0
  %2102 = vmatpush.msra.mxu0 0.0
  %2103 = vmatpush.msra.mxu0 %v2061
  %2104 = vmatmul.f32.gmra.mxu0 %v2066
  %v2105 = vpop.f32.mrf.mxu0
  %v2106 = vadd.f32 0.0, %v2105
  %2107 = vdwg.mxu0
  %v2108 = vadd.f32 %v2056, %v2086
  %v2109 = vadd.f32 %v2057, %v2106
  %2111 = vset.pattern.permute.xlu0 0
  %2112 = vperm.xlu0 %2111, %v162
  %v2113 = vpop.permute.xlu0 %2112
  %v2115 = vadd.f32 %v2108, %v2113
  %v2116 = vadd.f32 %v2109, %v2113
  %v2117 = vmax.f32 %v2115, 0.0
  %v2118 = vmax.f32 %v2116, 0.0
  %2119 = vst [vmem:[#allocation5] sm:$0xff] %v2117
  %vm2120 = vcmask 130048
  %2121 = vst.msk [vmem:[#allocation5 + $0x8] sm:$0xff] %vm2120, %v2118
  %v2122 = vld [vmem:[#allocation5] ss:$8 sm:$0x3]
  %v2123 = vld [vmem:[%s12] sm:$0xff]
  %v2124 = vld [vmem:[%s12 + $0x8] sm:$0xff]
  %v2125 = vld [vmem:[%s12 + $0x10] sm:$0xff]
  %v2126 = vld [vmem:[%s12 + $0x18] sm:$0xff]
  %v2127 = vld [vmem:[%s12 + $0x20] sm:$0xff]
  %v2128 = vld [vmem:[%s12 + $0x28] sm:$0xff]
  %v2129 = vld [vmem:[%s12 + $0x30] sm:$0xff]
  %v2130 = vld [vmem:[%s12 + $0x38] sm:$0xff]
  %v2131 = vld [vmem:[%s12 + $0x40] sm:$0xff]
  %v2132 = vld [vmem:[%s12 + $0x48] sm:$0xff]
  %v2133 = vld [vmem:[%s12 + $0x50] sm:$0xff]
  %v2134 = vld [vmem:[%s12 + $0x58] sm:$0xff]
  %v2135 = vld [vmem:[%s12 + $0x60] sm:$0xff]
  %v2136 = vld [vmem:[%s12 + $0x68] sm:$0xff]
  %v2137 = vld [vmem:[%s12 + $0x70] sm:$0xff]
  %v2138 = vld [vmem:[%s12 + $0x78] sm:$0xff]
  %v2139 = vld [vmem:[%s12 + $0x80] sm:$0xff]
  %v2140 = vld [vmem:[%s12 + $0x88] sm:$0xff]
  %v2141 = vld [vmem:[%s12 + $0x90] sm:$0xff]
  %v2142 = vld [vmem:[%s12 + $0x98] sm:$0xff]
  %v2143 = vld [vmem:[%s12 + $0xa0] sm:$0xff]
  %v2144 = vld [vmem:[%s12 + $0xa8] sm:$0xff]
  %v2145 = vld [vmem:[%s12 + $0xb0] sm:$0xff]
  %v2146 = vld [vmem:[%s12 + $0xb8] sm:$0xff]
  %v2147 = vld [vmem:[%s12 + $0xc0] sm:$0xff]
  %v2148 = vld [vmem:[%s12 + $0xc8] sm:$0xff]
  %v2149 = vld [vmem:[%s12 + $0xd0] sm:$0xff]
  %v2150 = vld [vmem:[%s12 + $0xd8] sm:$0xff]
  %v2151 = vld [vmem:[%s12 + $0xe0] sm:$0xff]
  %v2152 = vld [vmem:[%s12 + $0xe8] sm:$0xff]
  %v2153 = vld [vmem:[%s12 + $0xf0] sm:$0xff]
  %v2154 = vld [vmem:[%s12 + $0xf8] sm:$0xff]
  %v2156 = vperm.slane %v2122, 0
  %v2157 = vperm.slane %v2122, 1
  %2160 = vmatpush.msra.mxu0 %v2138
  %2161 = vmatpush.msra.mxu0 %v2137
  %2162 = vmatpush.msra.mxu0 %v2136
  %2163 = vmatpush.msra.mxu0 %v2135
  %2164 = vmatpush.msra.mxu0 %v2134
  %2165 = vmatpush.msra.mxu0 %v2133
  %2166 = vmatpush.msra.mxu0 %v2132
  %2167 = vmatpush.msra.mxu0 %v2131
  %2168 = vmatpush.msra.mxu0 %v2130
  %2169 = vmatpush.msra.mxu0 %v2129
  %2170 = vmatpush.msra.mxu0 %v2128
  %2171 = vmatpush.msra.mxu0 %v2127
  %2172 = vmatpush.msra.mxu0 %v2126
  %2173 = vmatpush.msra.mxu0 %v2125
  %2174 = vmatpush.msra.mxu0 %v2124
  %2175 = vmatpush.msra.mxu0 %v2123
  %2176 = vmatmul.f32.gmra.mxu0 %v2156
  %v2177 = vpop.f32.mrf.mxu0
  %v2178 = vadd.f32 0.0, %v2177
  %2179 = vdwg.mxu0
  %2180 = vmatpush.msra.mxu0 %v2154
  %2181 = vmatpush.msra.mxu0 %v2153
  %2182 = vmatpush.msra.mxu0 %v2152
  %2183 = vmatpush.msra.mxu0 %v2151
  %2184 = vmatpush.msra.mxu0 %v2150
  %2185 = vmatpush.msra.mxu0 %v2149
  %2186 = vmatpush.msra.mxu0 %v2148
  %2187 = vmatpush.msra.mxu0 %v2147
  %2188 = vmatpush.msra.mxu0 %v2146
  %2189 = vmatpush.msra.mxu0 %v2145
  %2190 = vmatpush.msra.mxu0 %v2144
  %2191 = vmatpush.msra.mxu0 %v2143
  %2192 = vmatpush.msra.mxu0 %v2142
  %2193 = vmatpush.msra.mxu0 %v2141
  %2194 = vmatpush.msra.mxu0 %v2140
  %2195 = vmatpush.msra.mxu0 %v2139
  %2196 = vmatmul.f32.gmra.mxu0 %v2157
  %v2197 = vpop.f32.mrf.mxu0
  %v2198 = vadd.f32 %v2178, %v2197
  %2199 = vdwg.mxu0
  %v2200 = vadd.f32 %v163, %v2198
  %s2201 = scalar_lea.vmem [#allocation5], 1
  %v2202 = vld [vmem:[%s2201] ss:$8 sm:$0x3]
  %v2203 = vld [vmem:[%s12 + $0x100] sm:$0xff]
  %v2204 = vld [vmem:[%s12 + $0x108] sm:$0xff]
  %v2205 = vld [vmem:[%s12 + $0x110] sm:$0xff]
  %v2206 = vld [vmem:[%s12 + $0x118] sm:$0xff]
  %v2207 = vld [vmem:[%s12 + $0x120] sm:$0xff]
  %v2208 = vld [vmem:[%s12 + $0x128] sm:$0xff]
  %v2209 = vld [vmem:[%s12 + $0x130] sm:$0xff]
  %v2210 = vld [vmem:[%s12 + $0x138] sm:$0xff]
  %v2211 = vld [vmem:[%s12 + $0x140] sm:$0xff]
  %v2212 = vld [vmem:[%s12 + $0x148] sm:$0xff]
  %v2213 = vld [vmem:[%s12 + $0x150] sm:$0xff]
  %v2214 = vld [vmem:[%s12 + $0x158] sm:$0xff]
  %v2215 = vld [vmem:[%s12 + $0x160] sm:$0xff]
  %v2216 = vld [vmem:[%s12 + $0x168] sm:$0xff]
  %v2217 = vld [vmem:[%s12 + $0x170] sm:$0xff]
  %v2218 = vld [vmem:[%s12 + $0x178] sm:$0xff]
  %v2219 = vld [vmem:[%s12 + $0x180] sm:$0xff]
  %v2220 = vld [vmem:[%s12 + $0x188] sm:$0xff]
  %v2221 = vld [vmem:[%s12 + $0x190] sm:$0xff]
  %v2222 = vld [vmem:[%s12 + $0x198] sm:$0xff]
  %v2223 = vld [vmem:[%s12 + $0x1a0] sm:$0xff]
  %v2224 = vld [vmem:[%s12 + $0x1a8] sm:$0xff]
  %v2225 = vld [vmem:[%s12 + $0x1b0] sm:$0xff]
  %v2226 = vld [vmem:[%s12 + $0x1b8] sm:$0xff]
  %v2227 = vld [vmem:[%s12 + $0x1c0] sm:$0xff]
  %v2228 = vld [vmem:[%s12 + $0x1c8] sm:$0xff]
  %v2229 = vld [vmem:[%s12 + $0x1d0] sm:$0xff]
  %v2230 = vld [vmem:[%s12 + $0x1d8] sm:$0xff]
  %v2231 = vld [vmem:[%s12 + $0x1e0] sm:$0xff]
  %v2232 = vld [vmem:[%s12 + $0x1e8] sm:$0xff]
  %v2233 = vld [vmem:[%s12 + $0x1f0] sm:$0xff]
  %v2234 = vld [vmem:[%s12 + $0x1f8] sm:$0xff]
  %v2236 = vperm.slane %v2202, 0
  %v2237 = vperm.slane %v2202, 1
  %2240 = vmatpush.msra.mxu0 %v2218
  %2241 = vmatpush.msra.mxu0 %v2217
  %2242 = vmatpush.msra.mxu0 %v2216
  %2243 = vmatpush.msra.mxu0 %v2215
  %2244 = vmatpush.msra.mxu0 %v2214
  %2245 = vmatpush.msra.mxu0 %v2213
  %2246 = vmatpush.msra.mxu0 %v2212
  %2247 = vmatpush.msra.mxu0 %v2211
  %2248 = vmatpush.msra.mxu0 %v2210
  %2249 = vmatpush.msra.mxu0 %v2209
  %2250 = vmatpush.msra.mxu0 %v2208
  %2251 = vmatpush.msra.mxu0 %v2207
  %2252 = vmatpush.msra.mxu0 %v2206
  %2253 = vmatpush.msra.mxu0 %v2205
  %2254 = vmatpush.msra.mxu0 %v2204
  %2255 = vmatpush.msra.mxu0 %v2203
  %2256 = vmatmul.f32.gmra.mxu0 %v2236
  %v2257 = vpop.f32.mrf.mxu0
  %v2258 = vadd.f32 0.0, %v2257
  %2259 = vdwg.mxu0
  %2260 = vmatpush.msra.mxu0 %v2234
  %2261 = vmatpush.msra.mxu0 %v2233
  %2262 = vmatpush.msra.mxu0 %v2232
  %2263 = vmatpush.msra.mxu0 %v2231
  %2264 = vmatpush.msra.mxu0 %v2230
  %2265 = vmatpush.msra.mxu0 %v2229
  %2266 = vmatpush.msra.mxu0 %v2228
  %2267 = vmatpush.msra.mxu0 %v2227
  %2268 = vmatpush.msra.mxu0 %v2226
  %2269 = vmatpush.msra.mxu0 %v2225
  %2270 = vmatpush.msra.mxu0 %v2224
  %2271 = vmatpush.msra.mxu0 %v2223
  %2272 = vmatpush.msra.mxu0 %v2222
  %2273 = vmatpush.msra.mxu0 %v2221
  %2274 = vmatpush.msra.mxu0 %v2220
  %2275 = vmatpush.msra.mxu0 %v2219
  %2276 = vmatmul.f32.gmra.mxu0 %v2237
  %v2277 = vpop.f32.mrf.mxu0
  %v2278 = vadd.f32 %v2258, %v2277
  %2279 = vdwg.mxu0
  %v2280 = vadd.f32 %v2200, %v2278
  %s2281 = scalar_lea.vmem [#allocation5], 2
  %v2282 = vld [vmem:[%s2281] ss:$8 sm:$0x3]
  %v2283 = vld [vmem:[%s12 + $0x200] sm:$0xff]
  %v2284 = vld [vmem:[%s12 + $0x208] sm:$0xff]
  %v2285 = vld [vmem:[%s12 + $0x210] sm:$0xff]
  %v2286 = vld [vmem:[%s12 + $0x218] sm:$0xff]
  %v2287 = vld [vmem:[%s12 + $0x220] sm:$0xff]
  %v2288 = vld [vmem:[%s12 + $0x228] sm:$0xff]
  %v2289 = vld [vmem:[%s12 + $0x230] sm:$0xff]
  %v2290 = vld [vmem:[%s12 + $0x238] sm:$0xff]
  %v2291 = vld [vmem:[%s12 + $0x240] sm:$0xff]
  %v2292 = vld [vmem:[%s12 + $0x248] sm:$0xff]
  %v2293 = vld [vmem:[%s12 + $0x250] sm:$0xff]
  %v2294 = vld [vmem:[%s12 + $0x258] sm:$0xff]
  %v2295 = vld [vmem:[%s12 + $0x260] sm:$0xff]
  %v2296 = vld [vmem:[%s12 + $0x268] sm:$0xff]
  %v2297 = vld [vmem:[%s12 + $0x270] sm:$0xff]
  %v2298 = vld [vmem:[%s12 + $0x278] sm:$0xff]
  %v2299 = vld [vmem:[%s12 + $0x280] sm:$0xff]
  %v2300 = vld [vmem:[%s12 + $0x288] sm:$0xff]
  %v2301 = vld [vmem:[%s12 + $0x290] sm:$0xff]
  %v2302 = vld [vmem:[%s12 + $0x298] sm:$0xff]
  %v2303 = vld [vmem:[%s12 + $0x2a0] sm:$0xff]
  %v2304 = vld [vmem:[%s12 + $0x2a8] sm:$0xff]
  %v2305 = vld [vmem:[%s12 + $0x2b0] sm:$0xff]
  %v2306 = vld [vmem:[%s12 + $0x2b8] sm:$0xff]
  %v2307 = vld [vmem:[%s12 + $0x2c0] sm:$0xff]
  %v2308 = vld [vmem:[%s12 + $0x2c8] sm:$0xff]
  %v2309 = vld [vmem:[%s12 + $0x2d0] sm:$0xff]
  %v2310 = vld [vmem:[%s12 + $0x2d8] sm:$0xff]
  %v2311 = vld [vmem:[%s12 + $0x2e0] sm:$0xff]
  %v2312 = vld [vmem:[%s12 + $0x2e8] sm:$0xff]
  %v2313 = vld [vmem:[%s12 + $0x2f0] sm:$0xff]
  %v2314 = vld [vmem:[%s12 + $0x2f8] sm:$0xff]
  %v2316 = vperm.slane %v2282, 0
  %v2317 = vperm.slane %v2282, 1
  %2320 = vmatpush.msra.mxu0 %v2298
  %2321 = vmatpush.msra.mxu0 %v2297
  %2322 = vmatpush.msra.mxu0 %v2296
  %2323 = vmatpush.msra.mxu0 %v2295
  %2324 = vmatpush.msra.mxu0 %v2294
  %2325 = vmatpush.msra.mxu0 %v2293
  %2326 = vmatpush.msra.mxu0 %v2292
  %2327 = vmatpush.msra.mxu0 %v2291
  %2328 = vmatpush.msra.mxu0 %v2290
  %2329 = vmatpush.msra.mxu0 %v2289
  %2330 = vmatpush.msra.mxu0 %v2288
  %2331 = vmatpush.msra.mxu0 %v2287
  %2332 = vmatpush.msra.mxu0 %v2286
  %2333 = vmatpush.msra.mxu0 %v2285
  %2334 = vmatpush.msra.mxu0 %v2284
  %2335 = vmatpush.msra.mxu0 %v2283
  %2336 = vmatmul.f32.gmra.mxu0 %v2316
  %v2337 = vpop.f32.mrf.mxu0
  %v2338 = vadd.f32 0.0, %v2337
  %2339 = vdwg.mxu0
  %2340 = vmatpush.msra.mxu0 %v2314
  %2341 = vmatpush.msra.mxu0 %v2313
  %2342 = vmatpush.msra.mxu0 %v2312
  %2343 = vmatpush.msra.mxu0 %v2311
  %2344 = vmatpush.msra.mxu0 %v2310
  %2345 = vmatpush.msra.mxu0 %v2309
  %2346 = vmatpush.msra.mxu0 %v2308
  %2347 = vmatpush.msra.mxu0 %v2307
  %2348 = vmatpush.msra.mxu0 %v2306
  %2349 = vmatpush.msra.mxu0 %v2305
  %2350 = vmatpush.msra.mxu0 %v2304
  %2351 = vmatpush.msra.mxu0 %v2303
  %2352 = vmatpush.msra.mxu0 %v2302
  %2353 = vmatpush.msra.mxu0 %v2301
  %2354 = vmatpush.msra.mxu0 %v2300
  %2355 = vmatpush.msra.mxu0 %v2299
  %2356 = vmatmul.f32.gmra.mxu0 %v2317
  %v2357 = vpop.f32.mrf.mxu0
  %v2358 = vadd.f32 %v2338, %v2357
  %2359 = vdwg.mxu0
  %v2360 = vadd.f32 %v2280, %v2358
  %s2361 = scalar_lea.vmem [#allocation5], 3
  %v2362 = vld [vmem:[%s2361] ss:$8 sm:$0x3]
  %v2363 = vld [vmem:[%s12 + $0x300] sm:$0xff]
  %v2364 = vld [vmem:[%s12 + $0x308] sm:$0xff]
  %v2365 = vld [vmem:[%s12 + $0x310] sm:$0xff]
  %v2366 = vld [vmem:[%s12 + $0x318] sm:$0xff]
  %v2367 = vld [vmem:[%s12 + $0x320] sm:$0xff]
  %v2368 = vld [vmem:[%s12 + $0x328] sm:$0xff]
  %v2369 = vld [vmem:[%s12 + $0x330] sm:$0xff]
  %v2370 = vld [vmem:[%s12 + $0x338] sm:$0xff]
  %v2371 = vld [vmem:[%s12 + $0x340] sm:$0xff]
  %v2372 = vld [vmem:[%s12 + $0x348] sm:$0xff]
  %v2373 = vld [vmem:[%s12 + $0x350] sm:$0xff]
  %v2374 = vld [vmem:[%s12 + $0x358] sm:$0xff]
  %v2375 = vld [vmem:[%s12 + $0x360] sm:$0xff]
  %v2376 = vld [vmem:[%s12 + $0x368] sm:$0xff]
  %v2377 = vld [vmem:[%s12 + $0x370] sm:$0xff]
  %v2378 = vld [vmem:[%s12 + $0x378] sm:$0xff]
  %v2379 = vld [vmem:[%s12 + $0x380] sm:$0xff]
  %v2380 = vld [vmem:[%s12 + $0x388] sm:$0xff]
  %v2381 = vld [vmem:[%s12 + $0x390] sm:$0xff]
  %v2382 = vld [vmem:[%s12 + $0x398] sm:$0xff]
  %v2383 = vld [vmem:[%s12 + $0x3a0] sm:$0xff]
  %v2384 = vld [vmem:[%s12 + $0x3a8] sm:$0xff]
  %v2385 = vld [vmem:[%s12 + $0x3b0] sm:$0xff]
  %v2386 = vld [vmem:[%s12 + $0x3b8] sm:$0xff]
  %v2387 = vld [vmem:[%s12 + $0x3c0] sm:$0xff]
  %v2388 = vld [vmem:[%s12 + $0x3c8] sm:$0xff]
  %v2389 = vld [vmem:[%s12 + $0x3d0] sm:$0xff]
  %v2390 = vld [vmem:[%s12 + $0x3d8] sm:$0xff]
  %v2391 = vld [vmem:[%s12 + $0x3e0] sm:$0xff]
  %v2392 = vld [vmem:[%s12 + $0x3e8] sm:$0xff]
  %v2393 = vld [vmem:[%s12 + $0x3f0] sm:$0xff]
  %v2394 = vld [vmem:[%s12 + $0x3f8] sm:$0xff]
  %v2396 = vperm.slane %v2362, 0
  %v2397 = vperm.slane %v2362, 1
  %2400 = vmatpush.msra.mxu0 %v2378
  %2401 = vmatpush.msra.mxu0 %v2377
  %2402 = vmatpush.msra.mxu0 %v2376
  %2403 = vmatpush.msra.mxu0 %v2375
  %2404 = vmatpush.msra.mxu0 %v2374
  %2405 = vmatpush.msra.mxu0 %v2373
  %2406 = vmatpush.msra.mxu0 %v2372
  %2407 = vmatpush.msra.mxu0 %v2371
  %2408 = vmatpush.msra.mxu0 %v2370
  %2409 = vmatpush.msra.mxu0 %v2369
  %2410 = vmatpush.msra.mxu0 %v2368
  %2411 = vmatpush.msra.mxu0 %v2367
  %2412 = vmatpush.msra.mxu0 %v2366
  %2413 = vmatpush.msra.mxu0 %v2365
  %2414 = vmatpush.msra.mxu0 %v2364
  %2415 = vmatpush.msra.mxu0 %v2363
  %2416 = vmatmul.f32.gmra.mxu0 %v2396
  %v2417 = vpop.f32.mrf.mxu0
  %v2418 = vadd.f32 0.0, %v2417
  %2419 = vdwg.mxu0
  %2420 = vmatpush.msra.mxu0 %v2394
  %2421 = vmatpush.msra.mxu0 %v2393
  %2422 = vmatpush.msra.mxu0 %v2392
  %2423 = vmatpush.msra.mxu0 %v2391
  %2424 = vmatpush.msra.mxu0 %v2390
  %2425 = vmatpush.msra.mxu0 %v2389
  %2426 = vmatpush.msra.mxu0 %v2388
  %2427 = vmatpush.msra.mxu0 %v2387
  %2428 = vmatpush.msra.mxu0 %v2386
  %2429 = vmatpush.msra.mxu0 %v2385
  %2430 = vmatpush.msra.mxu0 %v2384
  %2431 = vmatpush.msra.mxu0 %v2383
  %2432 = vmatpush.msra.mxu0 %v2382
  %2433 = vmatpush.msra.mxu0 %v2381
  %2434 = vmatpush.msra.mxu0 %v2380
  %2435 = vmatpush.msra.mxu0 %v2379
  %2436 = vmatmul.f32.gmra.mxu0 %v2397
  %v2437 = vpop.f32.mrf.mxu0
  %v2438 = vadd.f32 %v2418, %v2437
  %2439 = vdwg.mxu0
  %v2440 = vadd.f32 %v2360, %v2438
  %s2441 = scalar_lea.vmem [#allocation5], 4
  %v2442 = vld [vmem:[%s2441] ss:$8 sm:$0x3]
  %v2443 = vld [vmem:[%s12 + $0x400] sm:$0xff]
  %v2444 = vld [vmem:[%s12 + $0x408] sm:$0xff]
  %v2445 = vld [vmem:[%s12 + $0x410] sm:$0xff]
  %v2446 = vld [vmem:[%s12 + $0x418] sm:$0xff]
  %v2447 = vld [vmem:[%s12 + $0x420] sm:$0xff]
  %v2448 = vld [vmem:[%s12 + $0x428] sm:$0xff]
  %v2449 = vld [vmem:[%s12 + $0x430] sm:$0xff]
  %v2450 = vld [vmem:[%s12 + $0x438] sm:$0xff]
  %v2451 = vld [vmem:[%s12 + $0x440] sm:$0xff]
  %v2452 = vld [vmem:[%s12 + $0x448] sm:$0xff]
  %v2453 = vld [vmem:[%s12 + $0x450] sm:$0xff]
  %v2454 = vld [vmem:[%s12 + $0x458] sm:$0xff]
  %v2455 = vld [vmem:[%s12 + $0x460] sm:$0xff]
  %v2456 = vld [vmem:[%s12 + $0x468] sm:$0xff]
  %v2457 = vld [vmem:[%s12 + $0x470] sm:$0xff]
  %v2458 = vld [vmem:[%s12 + $0x478] sm:$0xff]
  %v2459 = vld [vmem:[%s12 + $0x480] sm:$0xff]
  %v2460 = vld [vmem:[%s12 + $0x488] sm:$0xff]
  %v2461 = vld [vmem:[%s12 + $0x490] sm:$0xff]
  %v2462 = vld [vmem:[%s12 + $0x498] sm:$0xff]
  %v2463 = vld [vmem:[%s12 + $0x4a0] sm:$0xff]
  %v2464 = vld [vmem:[%s12 + $0x4a8] sm:$0xff]
  %v2465 = vld [vmem:[%s12 + $0x4b0] sm:$0xff]
  %v2466 = vld [vmem:[%s12 + $0x4b8] sm:$0xff]
  %v2467 = vld [vmem:[%s12 + $0x4c0] sm:$0xff]
  %v2468 = vld [vmem:[%s12 + $0x4c8] sm:$0xff]
  %v2469 = vld [vmem:[%s12 + $0x4d0] sm:$0xff]
  %v2470 = vld [vmem:[%s12 + $0x4d8] sm:$0xff]
  %v2471 = vld [vmem:[%s12 + $0x4e0] sm:$0xff]
  %v2472 = vld [vmem:[%s12 + $0x4e8] sm:$0xff]
  %v2473 = vld [vmem:[%s12 + $0x4f0] sm:$0xff]
  %v2474 = vld [vmem:[%s12 + $0x4f8] sm:$0xff]
  %v2476 = vperm.slane %v2442, 0
  %v2477 = vperm.slane %v2442, 1
  %2480 = vmatpush.msra.mxu0 %v2458
  %2481 = vmatpush.msra.mxu0 %v2457
  %2482 = vmatpush.msra.mxu0 %v2456
  %2483 = vmatpush.msra.mxu0 %v2455
  %2484 = vmatpush.msra.mxu0 %v2454
  %2485 = vmatpush.msra.mxu0 %v2453
  %2486 = vmatpush.msra.mxu0 %v2452
  %2487 = vmatpush.msra.mxu0 %v2451
  %2488 = vmatpush.msra.mxu0 %v2450
  %2489 = vmatpush.msra.mxu0 %v2449
  %2490 = vmatpush.msra.mxu0 %v2448
  %2491 = vmatpush.msra.mxu0 %v2447
  %2492 = vmatpush.msra.mxu0 %v2446
  %2493 = vmatpush.msra.mxu0 %v2445
  %2494 = vmatpush.msra.mxu0 %v2444
  %2495 = vmatpush.msra.mxu0 %v2443
  %2496 = vmatmul.f32.gmra.mxu0 %v2476
  %v2497 = vpop.f32.mrf.mxu0
  %v2498 = vadd.f32 0.0, %v2497
  %2499 = vdwg.mxu0
  %2500 = vmatpush.msra.mxu0 %v2474
  %2501 = vmatpush.msra.mxu0 %v2473
  %2502 = vmatpush.msra.mxu0 %v2472
  %2503 = vmatpush.msra.mxu0 %v2471
  %2504 = vmatpush.msra.mxu0 %v2470
  %2505 = vmatpush.msra.mxu0 %v2469
  %2506 = vmatpush.msra.mxu0 %v2468
  %2507 = vmatpush.msra.mxu0 %v2467
  %2508 = vmatpush.msra.mxu0 %v2466
  %2509 = vmatpush.msra.mxu0 %v2465
  %2510 = vmatpush.msra.mxu0 %v2464
  %2511 = vmatpush.msra.mxu0 %v2463
  %2512 = vmatpush.msra.mxu0 %v2462
  %2513 = vmatpush.msra.mxu0 %v2461
  %2514 = vmatpush.msra.mxu0 %v2460
  %2515 = vmatpush.msra.mxu0 %v2459
  %2516 = vmatmul.f32.gmra.mxu0 %v2477
  %v2517 = vpop.f32.mrf.mxu0
  %v2518 = vadd.f32 %v2498, %v2517
  %2519 = vdwg.mxu0
  %v2520 = vadd.f32 %v2440, %v2518
  %s2521 = scalar_lea.vmem [#allocation5], 5
  %v2522 = vld [vmem:[%s2521] ss:$8 sm:$0x3]
  %v2523 = vld [vmem:[%s12 + $0x500] sm:$0xff]
  %v2524 = vld [vmem:[%s12 + $0x508] sm:$0xff]
  %v2525 = vld [vmem:[%s12 + $0x510] sm:$0xff]
  %v2526 = vld [vmem:[%s12 + $0x518] sm:$0xff]
  %v2527 = vld [vmem:[%s12 + $0x520] sm:$0xff]
  %v2528 = vld [vmem:[%s12 + $0x528] sm:$0xff]
  %v2529 = vld [vmem:[%s12 + $0x530] sm:$0xff]
  %v2530 = vld [vmem:[%s12 + $0x538] sm:$0xff]
  %v2531 = vld [vmem:[%s12 + $0x540] sm:$0xff]
  %v2532 = vld [vmem:[%s12 + $0x548] sm:$0xff]
  %v2533 = vld [vmem:[%s12 + $0x550] sm:$0xff]
  %v2534 = vld [vmem:[%s12 + $0x558] sm:$0xff]
  %v2535 = vld [vmem:[%s12 + $0x560] sm:$0xff]
  %v2536 = vld [vmem:[%s12 + $0x568] sm:$0xff]
  %v2537 = vld [vmem:[%s12 + $0x570] sm:$0xff]
  %v2538 = vld [vmem:[%s12 + $0x578] sm:$0xff]
  %v2539 = vld [vmem:[%s12 + $0x580] sm:$0xff]
  %v2540 = vld [vmem:[%s12 + $0x588] sm:$0xff]
  %v2541 = vld [vmem:[%s12 + $0x590] sm:$0xff]
  %v2542 = vld [vmem:[%s12 + $0x598] sm:$0xff]
  %v2543 = vld [vmem:[%s12 + $0x5a0] sm:$0xff]
  %v2544 = vld [vmem:[%s12 + $0x5a8] sm:$0xff]
  %v2545 = vld [vmem:[%s12 + $0x5b0] sm:$0xff]
  %v2546 = vld [vmem:[%s12 + $0x5b8] sm:$0xff]
  %v2547 = vld [vmem:[%s12 + $0x5c0] sm:$0xff]
  %v2548 = vld [vmem:[%s12 + $0x5c8] sm:$0xff]
  %v2549 = vld [vmem:[%s12 + $0x5d0] sm:$0xff]
  %v2550 = vld [vmem:[%s12 + $0x5d8] sm:$0xff]
  %v2551 = vld [vmem:[%s12 + $0x5e0] sm:$0xff]
  %v2552 = vld [vmem:[%s12 + $0x5e8] sm:$0xff]
  %v2553 = vld [vmem:[%s12 + $0x5f0] sm:$0xff]
  %v2554 = vld [vmem:[%s12 + $0x5f8] sm:$0xff]
  %v2556 = vperm.slane %v2522, 0
  %v2557 = vperm.slane %v2522, 1
  %2560 = vmatpush.msra.mxu0 %v2538
  %2561 = vmatpush.msra.mxu0 %v2537
  %2562 = vmatpush.msra.mxu0 %v2536
  %2563 = vmatpush.msra.mxu0 %v2535
  %2564 = vmatpush.msra.mxu0 %v2534
  %2565 = vmatpush.msra.mxu0 %v2533
  %2566 = vmatpush.msra.mxu0 %v2532
  %2567 = vmatpush.msra.mxu0 %v2531
  %2568 = vmatpush.msra.mxu0 %v2530
  %2569 = vmatpush.msra.mxu0 %v2529
  %2570 = vmatpush.msra.mxu0 %v2528
  %2571 = vmatpush.msra.mxu0 %v2527
  %2572 = vmatpush.msra.mxu0 %v2526
  %2573 = vmatpush.msra.mxu0 %v2525
  %2574 = vmatpush.msra.mxu0 %v2524
  %2575 = vmatpush.msra.mxu0 %v2523
  %2576 = vmatmul.f32.gmra.mxu0 %v2556
  %v2577 = vpop.f32.mrf.mxu0
  %v2578 = vadd.f32 0.0, %v2577
  %2579 = vdwg.mxu0
  %2580 = vmatpush.msra.mxu0 %v2554
  %2581 = vmatpush.msra.mxu0 %v2553
  %2582 = vmatpush.msra.mxu0 %v2552
  %2583 = vmatpush.msra.mxu0 %v2551
  %2584 = vmatpush.msra.mxu0 %v2550
  %2585 = vmatpush.msra.mxu0 %v2549
  %2586 = vmatpush.msra.mxu0 %v2548
  %2587 = vmatpush.msra.mxu0 %v2547
  %2588 = vmatpush.msra.mxu0 %v2546
  %2589 = vmatpush.msra.mxu0 %v2545
  %2590 = vmatpush.msra.mxu0 %v2544
  %2591 = vmatpush.msra.mxu0 %v2543
  %2592 = vmatpush.msra.mxu0 %v2542
  %2593 = vmatpush.msra.mxu0 %v2541
  %2594 = vmatpush.msra.mxu0 %v2540
  %2595 = vmatpush.msra.mxu0 %v2539
  %2596 = vmatmul.f32.gmra.mxu0 %v2557
  %v2597 = vpop.f32.mrf.mxu0
  %v2598 = vadd.f32 %v2578, %v2597
  %2599 = vdwg.mxu0
  %v2600 = vadd.f32 %v2520, %v2598
  %s2601 = scalar_lea.vmem [#allocation5], 6
  %v2602 = vld [vmem:[%s2601] ss:$8 sm:$0x3]
  %v2603 = vld [vmem:[%s12 + $0x600] sm:$0xff]
  %v2604 = vld [vmem:[%s12 + $0x608] sm:$0xff]
  %v2605 = vld [vmem:[%s12 + $0x610] sm:$0xff]
  %v2606 = vld [vmem:[%s12 + $0x618] sm:$0xff]
  %v2607 = vld [vmem:[%s12 + $0x620] sm:$0xff]
  %v2608 = vld [vmem:[%s12 + $0x628] sm:$0xff]
  %v2609 = vld [vmem:[%s12 + $0x630] sm:$0xff]
  %v2610 = vld [vmem:[%s12 + $0x638] sm:$0xff]
  %v2611 = vld [vmem:[%s12 + $0x640] sm:$0xff]
  %v2612 = vld [vmem:[%s12 + $0x648] sm:$0xff]
  %v2613 = vld [vmem:[%s12 + $0x650] sm:$0xff]
  %v2614 = vld [vmem:[%s12 + $0x658] sm:$0xff]
  %v2615 = vld [vmem:[%s12 + $0x660] sm:$0xff]
  %v2616 = vld [vmem:[%s12 + $0x668] sm:$0xff]
  %v2617 = vld [vmem:[%s12 + $0x670] sm:$0xff]
  %v2618 = vld [vmem:[%s12 + $0x678] sm:$0xff]
  %v2619 = vld [vmem:[%s12 + $0x680] sm:$0xff]
  %v2620 = vld [vmem:[%s12 + $0x688] sm:$0xff]
  %v2621 = vld [vmem:[%s12 + $0x690] sm:$0xff]
  %v2622 = vld [vmem:[%s12 + $0x698] sm:$0xff]
  %v2623 = vld [vmem:[%s12 + $0x6a0] sm:$0xff]
  %v2624 = vld [vmem:[%s12 + $0x6a8] sm:$0xff]
  %v2625 = vld [vmem:[%s12 + $0x6b0] sm:$0xff]
  %v2626 = vld [vmem:[%s12 + $0x6b8] sm:$0xff]
  %v2627 = vld [vmem:[%s12 + $0x6c0] sm:$0xff]
  %v2628 = vld [vmem:[%s12 + $0x6c8] sm:$0xff]
  %v2629 = vld [vmem:[%s12 + $0x6d0] sm:$0xff]
  %v2630 = vld [vmem:[%s12 + $0x6d8] sm:$0xff]
  %v2631 = vld [vmem:[%s12 + $0x6e0] sm:$0xff]
  %v2632 = vld [vmem:[%s12 + $0x6e8] sm:$0xff]
  %v2633 = vld [vmem:[%s12 + $0x6f0] sm:$0xff]
  %v2634 = vld [vmem:[%s12 + $0x6f8] sm:$0xff]
  %v2636 = vperm.slane %v2602, 0
  %v2637 = vperm.slane %v2602, 1
  %2640 = vmatpush.msra.mxu0 %v2618
  %2641 = vmatpush.msra.mxu0 %v2617
  %2642 = vmatpush.msra.mxu0 %v2616
  %2643 = vmatpush.msra.mxu0 %v2615
  %2644 = vmatpush.msra.mxu0 %v2614
  %2645 = vmatpush.msra.mxu0 %v2613
  %2646 = vmatpush.msra.mxu0 %v2612
  %2647 = vmatpush.msra.mxu0 %v2611
  %2648 = vmatpush.msra.mxu0 %v2610
  %2649 = vmatpush.msra.mxu0 %v2609
  %2650 = vmatpush.msra.mxu0 %v2608
  %2651 = vmatpush.msra.mxu0 %v2607
  %2652 = vmatpush.msra.mxu0 %v2606
  %2653 = vmatpush.msra.mxu0 %v2605
  %2654 = vmatpush.msra.mxu0 %v2604
  %2655 = vmatpush.msra.mxu0 %v2603
  %2656 = vmatmul.f32.gmra.mxu0 %v2636
  %v2657 = vpop.f32.mrf.mxu0
  %v2658 = vadd.f32 0.0, %v2657
  %2659 = vdwg.mxu0
  %2660 = vmatpush.msra.mxu0 %v2634
  %2661 = vmatpush.msra.mxu0 %v2633
  %2662 = vmatpush.msra.mxu0 %v2632
  %2663 = vmatpush.msra.mxu0 %v2631
  %2664 = vmatpush.msra.mxu0 %v2630
  %2665 = vmatpush.msra.mxu0 %v2629
  %2666 = vmatpush.msra.mxu0 %v2628
  %2667 = vmatpush.msra.mxu0 %v2627
  %2668 = vmatpush.msra.mxu0 %v2626
  %2669 = vmatpush.msra.mxu0 %v2625
  %2670 = vmatpush.msra.mxu0 %v2624
  %2671 = vmatpush.msra.mxu0 %v2623
  %2672 = vmatpush.msra.mxu0 %v2622
  %2673 = vmatpush.msra.mxu0 %v2621
  %2674 = vmatpush.msra.mxu0 %v2620
  %2675 = vmatpush.msra.mxu0 %v2619
  %2676 = vmatmul.f32.gmra.mxu0 %v2637
  %v2677 = vpop.f32.mrf.mxu0
  %v2678 = vadd.f32 %v2658, %v2677
  %2679 = vdwg.mxu0
  %v2680 = vadd.f32 %v2600, %v2678
  %s2681 = scalar_lea.vmem [#allocation5], 7
  %v2682 = vld [vmem:[%s2681] ss:$8 sm:$0x3]
  %v2683 = vld [vmem:[%s12 + $0x700] sm:$0xff]
  %v2684 = vld [vmem:[%s12 + $0x708] sm:$0xff]
  %v2685 = vld [vmem:[%s12 + $0x710] sm:$0xff]
  %v2686 = vld [vmem:[%s12 + $0x718] sm:$0xff]
  %v2687 = vld [vmem:[%s12 + $0x720] sm:$0xff]
  %v2688 = vld [vmem:[%s12 + $0x728] sm:$0xff]
  %v2689 = vld [vmem:[%s12 + $0x730] sm:$0xff]
  %v2690 = vld [vmem:[%s12 + $0x738] sm:$0xff]
  %v2691 = vld [vmem:[%s12 + $0x740] sm:$0xff]
  %v2692 = vld [vmem:[%s12 + $0x748] sm:$0xff]
  %v2693 = vld [vmem:[%s12 + $0x750] sm:$0xff]
  %v2694 = vld [vmem:[%s12 + $0x758] sm:$0xff]
  %v2695 = vld [vmem:[%s12 + $0x760] sm:$0xff]
  %v2696 = vld [vmem:[%s12 + $0x768] sm:$0xff]
  %v2697 = vld [vmem:[%s12 + $0x770] sm:$0xff]
  %v2698 = vld [vmem:[%s12 + $0x778] sm:$0xff]
  %v2699 = vld [vmem:[%s12 + $0x780] sm:$0xff]
  %v2700 = vld [vmem:[%s12 + $0x788] sm:$0xff]
  %v2701 = vld [vmem:[%s12 + $0x790] sm:$0xff]
  %v2702 = vld [vmem:[%s12 + $0x798] sm:$0xff]
  %v2703 = vld [vmem:[%s12 + $0x7a0] sm:$0xff]
  %v2704 = vld [vmem:[%s12 + $0x7a8] sm:$0xff]
  %v2705 = vld [vmem:[%s12 + $0x7b0] sm:$0xff]
  %v2706 = vld [vmem:[%s12 + $0x7b8] sm:$0xff]
  %v2707 = vld [vmem:[%s12 + $0x7c0] sm:$0xff]
  %v2708 = vld [vmem:[%s12 + $0x7c8] sm:$0xff]
  %v2709 = vld [vmem:[%s12 + $0x7d0] sm:$0xff]
  %v2710 = vld [vmem:[%s12 + $0x7d8] sm:$0xff]
  %v2711 = vld [vmem:[%s12 + $0x7e0] sm:$0xff]
  %v2712 = vld [vmem:[%s12 + $0x7e8] sm:$0xff]
  %v2713 = vld [vmem:[%s12 + $0x7f0] sm:$0xff]
  %v2714 = vld [vmem:[%s12 + $0x7f8] sm:$0xff]
  %v2716 = vperm.slane %v2682, 0
  %v2717 = vperm.slane %v2682, 1
  %2720 = vmatpush.msra.mxu0 %v2698
  %2721 = vmatpush.msra.mxu0 %v2697
  %2722 = vmatpush.msra.mxu0 %v2696
  %2723 = vmatpush.msra.mxu0 %v2695
  %2724 = vmatpush.msra.mxu0 %v2694
  %2725 = vmatpush.msra.mxu0 %v2693
  %2726 = vmatpush.msra.mxu0 %v2692
  %2727 = vmatpush.msra.mxu0 %v2691
  %2728 = vmatpush.msra.mxu0 %v2690
  %2729 = vmatpush.msra.mxu0 %v2689
  %2730 = vmatpush.msra.mxu0 %v2688
  %2731 = vmatpush.msra.mxu0 %v2687
  %2732 = vmatpush.msra.mxu0 %v2686
  %2733 = vmatpush.msra.mxu0 %v2685
  %2734 = vmatpush.msra.mxu0 %v2684
  %2735 = vmatpush.msra.mxu0 %v2683
  %2736 = vmatmul.f32.gmra.mxu0 %v2716
  %v2737 = vpop.f32.mrf.mxu0
  %v2738 = vadd.f32 0.0, %v2737
  %2739 = vdwg.mxu0
  %2740 = vmatpush.msra.mxu0 %v2714
  %2741 = vmatpush.msra.mxu0 %v2713
  %2742 = vmatpush.msra.mxu0 %v2712
  %2743 = vmatpush.msra.mxu0 %v2711
  %2744 = vmatpush.msra.mxu0 %v2710
  %2745 = vmatpush.msra.mxu0 %v2709
  %2746 = vmatpush.msra.mxu0 %v2708
  %2747 = vmatpush.msra.mxu0 %v2707
  %2748 = vmatpush.msra.mxu0 %v2706
  %2749 = vmatpush.msra.mxu0 %v2705
  %2750 = vmatpush.msra.mxu0 %v2704
  %2751 = vmatpush.msra.mxu0 %v2703
  %2752 = vmatpush.msra.mxu0 %v2702
  %2753 = vmatpush.msra.mxu0 %v2701
  %2754 = vmatpush.msra.mxu0 %v2700
  %2755 = vmatpush.msra.mxu0 %v2699
  %2756 = vmatmul.f32.gmra.mxu0 %v2717
  %v2757 = vpop.f32.mrf.mxu0
  %v2758 = vadd.f32 %v2738, %v2757
  %2759 = vdwg.mxu0
  %v2760 = vadd.f32 %v2680, %v2758
  %vm2761 = vcmask 253952
  %2762 = vst.msk [vmem:[#allocation6] sm:$0x1] %vm2761, %v2760
  %s2763 = scalar_lea.vmem %s0, 12
  %v2764 = vld [vmem:[%s2763] sm:$0xff]
  %s2765 = scalar_lea.vmem %s1, 12
  %v2766 = vld [vmem:[%s2765] sm:$0xff]
  %2768 = vst [vmem:[#allocation1] ss:$2 sm:$0xff] %v2766
  %v2769 = vld.sshfl [vmem:[#allocation1] sm:$0xff pattern:$0x75316420]
  %v2770 = vld.sshfl [vmem:[#allocation1 + $0x8] sm:$0xff pattern:$0x75316420]
  %v2771 = vsel %vm174, %v2769, 0
  %v2773 = vsel %vm174, %v2770, 0
  %2775 = vmatpush.msra.mxu0 0.0
  %2776 = vmatpush.msra.mxu0 0.0
  %2777 = vmatpush.msra.mxu0 0.0
  %2778 = vmatpush.msra.mxu0 0.0
  %2779 = vmatpush.msra.mxu0 0.0
  %2780 = vmatpush.msra.mxu0 0.0
  %2781 = vmatpush.msra.mxu0 0.0
  %2782 = vmatpush.msra.mxu0 0.0
  %2783 = vmatpush.msra.mxu0 0.0
  %2784 = vmatpush.msra.mxu0 0.0
  %2785 = vmatpush.msra.mxu0 0.0
  %2786 = vmatpush.msra.mxu0 0.0
  %2787 = vmatpush.msra.mxu0 0.0
  %2788 = vmatpush.msra.mxu0 0.0
  %2789 = vmatpush.msra.mxu0 0.0
  %2790 = vmatpush.msra.mxu0 %v2771
  %2791 = vmatmul.f32.gmra.mxu0 %v172
  %v2792 = vpop.f32.mrf.mxu0
  %v2793 = vadd.f32 0.0, %v2792
  %2794 = vdwg.mxu0
  %2795 = vmatpush.msra.mxu0 0.0
  %2796 = vmatpush.msra.mxu0 0.0
  %2797 = vmatpush.msra.mxu0 0.0
  %2798 = vmatpush.msra.mxu0 0.0
  %2799 = vmatpush.msra.mxu0 0.0
  %2800 = vmatpush.msra.mxu0 0.0
  %2801 = vmatpush.msra.mxu0 0.0
  %2802 = vmatpush.msra.mxu0 0.0
  %2803 = vmatpush.msra.mxu0 0.0
  %2804 = vmatpush.msra.mxu0 0.0
  %2805 = vmatpush.msra.mxu0 0.0
  %2806 = vmatpush.msra.mxu0 0.0
  %2807 = vmatpush.msra.mxu0 0.0
  %2808 = vmatpush.msra.mxu0 0.0
  %2809 = vmatpush.msra.mxu0 0.0
  %2810 = vmatpush.msra.mxu0 %v2773
  %2811 = vmatmul.f32.gmra.mxu0 %v172
  %v2812 = vpop.f32.mrf.mxu0
  %v2813 = vadd.f32 0.0, %v2812
  %2814 = vdwg.mxu0
  %2816 = vst [vmem:[#allocation1] ss:$2 sm:$0xff] %v2764
  %v2817 = vld.sshfl [vmem:[#allocation1] sm:$0xff pattern:$0x75316420]
  %v2818 = vld.sshfl [vmem:[#allocation1 + $0x8] sm:$0xff pattern:$0x75316420]
  %v2819 = vsel %vm174, %v2817, 0
  %v2821 = vsel %vm174, %v2818, 0
  %2823 = vmatpush.msra.mxu0 0.0
  %2824 = vmatpush.msra.mxu0 0.0
  %2825 = vmatpush.msra.mxu0 0.0
  %2826 = vmatpush.msra.mxu0 0.0
  %2827 = vmatpush.msra.mxu0 0.0
  %2828 = vmatpush.msra.mxu0 0.0
  %2829 = vmatpush.msra.mxu0 0.0
  %2830 = vmatpush.msra.mxu0 0.0
  %2831 = vmatpush.msra.mxu0 0.0
  %2832 = vmatpush.msra.mxu0 0.0
  %2833 = vmatpush.msra.mxu0 0.0
  %2834 = vmatpush.msra.mxu0 0.0
  %2835 = vmatpush.msra.mxu0 0.0
  %2836 = vmatpush.msra.mxu0 0.0
  %2837 = vmatpush.msra.mxu0 0.0
  %2838 = vmatpush.msra.mxu0 %v2819
  %2839 = vmatmul.f32.gmra.mxu0 %v224
  %v2840 = vpop.f32.mrf.mxu0
  %v2841 = vadd.f32 %v2793, %v2840
  %2842 = vdwg.mxu0
  %2843 = vmatpush.msra.mxu0 0.0
  %2844 = vmatpush.msra.mxu0 0.0
  %2845 = vmatpush.msra.mxu0 0.0
  %2846 = vmatpush.msra.mxu0 0.0
  %2847 = vmatpush.msra.mxu0 0.0
  %2848 = vmatpush.msra.mxu0 0.0
  %2849 = vmatpush.msra.mxu0 0.0
  %2850 = vmatpush.msra.mxu0 0.0
  %2851 = vmatpush.msra.mxu0 0.0
  %2852 = vmatpush.msra.mxu0 0.0
  %2853 = vmatpush.msra.mxu0 0.0
  %2854 = vmatpush.msra.mxu0 0.0
  %2855 = vmatpush.msra.mxu0 0.0
  %2856 = vmatpush.msra.mxu0 0.0
  %2857 = vmatpush.msra.mxu0 0.0
  %2858 = vmatpush.msra.mxu0 %v2821
  %2859 = vmatmul.f32.gmra.mxu0 %v224
  %v2860 = vpop.f32.mrf.mxu0
  %v2861 = vadd.f32 %v2813, %v2860
  %2862 = vdwg.mxu0
  %v2863 = vld [vmem:[%s2763] sm:$0xff]
  %2865 = vst [vmem:[#allocation1] ss:$2 sm:$0xff] %v2863
  %v2866 = vld.sshfl [vmem:[#allocation1] sm:$0xff pattern:$0x75316420]
  %v2867 = vld.sshfl [vmem:[#allocation1 + $0x8] sm:$0xff pattern:$0x75316420]
  %2868 = vrot.lane.b32.xlu0 %v2866, 127
  %v2869 = vpop.permute.xlu0 %2868
  %2870 = vrot.lane.b32.xlu0 %v2867, 127
  %v2871 = vpop.permute.xlu0 %2870
  %v2872 = vsel %vm279, %v2869, %v2871
  %v2873 = vsel %vm174, %v2872, 0
  %v2875 = vsel %vm174, %v2871, 0
  %2877 = vmatpush.msra.mxu0 0.0
  %2878 = vmatpush.msra.mxu0 0.0
  %2879 = vmatpush.msra.mxu0 0.0
  %2880 = vmatpush.msra.mxu0 0.0
  %2881 = vmatpush.msra.mxu0 0.0
  %2882 = vmatpush.msra.mxu0 0.0
  %2883 = vmatpush.msra.mxu0 0.0
  %2884 = vmatpush.msra.mxu0 0.0
  %2885 = vmatpush.msra.mxu0 0.0
  %2886 = vmatpush.msra.mxu0 0.0
  %2887 = vmatpush.msra.mxu0 0.0
  %2888 = vmatpush.msra.mxu0 0.0
  %2889 = vmatpush.msra.mxu0 0.0
  %2890 = vmatpush.msra.mxu0 0.0
  %2891 = vmatpush.msra.mxu0 0.0
  %2892 = vmatpush.msra.mxu0 %v2873
  %2893 = vmatmul.f32.gmra.mxu0 %v282
  %v2894 = vpop.f32.mrf.mxu0
  %v2895 = vadd.f32 0.0, %v2894
  %2896 = vdwg.mxu0
  %2897 = vmatpush.msra.mxu0 0.0
  %2898 = vmatpush.msra.mxu0 0.0
  %2899 = vmatpush.msra.mxu0 0.0
  %2900 = vmatpush.msra.mxu0 0.0
  %2901 = vmatpush.msra.mxu0 0.0
  %2902 = vmatpush.msra.mxu0 0.0
  %2903 = vmatpush.msra.mxu0 0.0
  %2904 = vmatpush.msra.mxu0 0.0
  %2905 = vmatpush.msra.mxu0 0.0
  %2906 = vmatpush.msra.mxu0 0.0
  %2907 = vmatpush.msra.mxu0 0.0
  %2908 = vmatpush.msra.mxu0 0.0
  %2909 = vmatpush.msra.mxu0 0.0
  %2910 = vmatpush.msra.mxu0 0.0
  %2911 = vmatpush.msra.mxu0 0.0
  %2912 = vmatpush.msra.mxu0 %v2875
  %2913 = vmatmul.f32.gmra.mxu0 %v282
  %v2914 = vpop.f32.mrf.mxu0
  %v2915 = vadd.f32 0.0, %v2914
  %2916 = vdwg.mxu0
  %v2917 = vadd.f32 %v2841, %v2895
  %v2918 = vadd.f32 %v2861, %v2915
  %s2919 = scalar_lea.vmem %s2, 12
  %v2920 = vld [vmem:[%s2919] sm:$0xff]
  %2922 = vst [vmem:[#allocation1] ss:$2 sm:$0xff] %v2920
  %v2923 = vld.sshfl [vmem:[#allocation1] sm:$0xff pattern:$0x75316420]
  %v2924 = vld.sshfl [vmem:[#allocation1 + $0x8] sm:$0xff pattern:$0x75316420]
  %v2925 = vsel %vm174, %v2923, 0
  %v2927 = vsel %vm174, %v2924, 0
  %2929 = vmatpush.msra.mxu0 0.0
  %2930 = vmatpush.msra.mxu0 0.0
  %2931 = vmatpush.msra.mxu0 0.0
  %2932 = vmatpush.msra.mxu0 0.0
  %2933 = vmatpush.msra.mxu0 0.0
  %2934 = vmatpush.msra.mxu0 0.0
  %2935 = vmatpush.msra.mxu0 0.0
  %2936 = vmatpush.msra.mxu0 0.0
  %2937 = vmatpush.msra.mxu0 0.0
  %2938 = vmatpush.msra.mxu0 0.0
  %2939 = vmatpush.msra.mxu0 0.0
  %2940 = vmatpush.msra.mxu0 0.0
  %2941 = vmatpush.msra.mxu0 0.0
  %2942 = vmatpush.msra.mxu0 0.0
  %2943 = vmatpush.msra.mxu0 0.0
  %2944 = vmatpush.msra.mxu0 %v2925
  %2945 = vmatmul.f32.gmra.mxu0 %v336
  %v2946 = vpop.f32.mrf.mxu0
  %v2947 = vadd.f32 0.0, %v2946
  %2948 = vdwg.mxu0
  %2949 = vmatpush.msra.mxu0 0.0
  %2950 = vmatpush.msra.mxu0 0.0
  %2951 = vmatpush.msra.mxu0 0.0
  %2952 = vmatpush.msra.mxu0 0.0
  %2953 = vmatpush.msra.mxu0 0.0
  %2954 = vmatpush.msra.mxu0 0.0
  %2955 = vmatpush.msra.mxu0 0.0
  %2956 = vmatpush.msra.mxu0 0.0
  %2957 = vmatpush.msra.mxu0 0.0
  %2958 = vmatpush.msra.mxu0 0.0
  %2959 = vmatpush.msra.mxu0 0.0
  %2960 = vmatpush.msra.mxu0 0.0
  %2961 = vmatpush.msra.mxu0 0.0
  %2962 = vmatpush.msra.mxu0 0.0
  %2963 = vmatpush.msra.mxu0 0.0
  %2964 = vmatpush.msra.mxu0 %v2927
  %2965 = vmatmul.f32.gmra.mxu0 %v336
  %v2966 = vpop.f32.mrf.mxu0
  %v2967 = vadd.f32 0.0, %v2966
  %2968 = vdwg.mxu0
  %v2969 = vadd.f32 %v2917, %v2947
  %v2970 = vadd.f32 %v2918, %v2967
  %s2971 = scalar_lea.vmem %s3, 12
  %v2972 = vld [vmem:[%s2971] sm:$0xff]
  %2974 = vst [vmem:[#allocation1] ss:$2 sm:$0xff] %v2972
  %v2975 = vld.sshfl [vmem:[#allocation1] sm:$0xff pattern:$0x75316420]
  %v2976 = vld.sshfl [vmem:[#allocation1 + $0x8] sm:$0xff pattern:$0x75316420]
  %v2977 = vsel %vm174, %v2975, 0
  %v2979 = vsel %vm174, %v2976, 0
  %2981 = vmatpush.msra.mxu0 0.0
  %2982 = vmatpush.msra.mxu0 0.0
  %2983 = vmatpush.msra.mxu0 0.0
  %2984 = vmatpush.msra.mxu0 0.0
  %2985 = vmatpush.msra.mxu0 0.0
  %2986 = vmatpush.msra.mxu0 0.0
  %2987 = vmatpush.msra.mxu0 0.0
  %2988 = vmatpush.msra.mxu0 0.0
  %2989 = vmatpush.msra.mxu0 0.0
  %2990 = vmatpush.msra.mxu0 0.0
  %2991 = vmatpush.msra.mxu0 0.0
  %2992 = vmatpush.msra.mxu0 0.0
  %2993 = vmatpush.msra.mxu0 0.0
  %2994 = vmatpush.msra.mxu0 0.0
  %2995 = vmatpush.msra.mxu0 0.0
  %2996 = vmatpush.msra.mxu0 %v2977
  %2997 = vmatmul.f32.gmra.mxu0 %v390
  %v2998 = vpop.f32.mrf.mxu0
  %v2999 = vadd.f32 0.0, %v2998
  %3000 = vdwg.mxu0
  %3001 = vmatpush.msra.mxu0 0.0
  %3002 = vmatpush.msra.mxu0 0.0
  %3003 = vmatpush.msra.mxu0 0.0
  %3004 = vmatpush.msra.mxu0 0.0
  %3005 = vmatpush.msra.mxu0 0.0
  %3006 = vmatpush.msra.mxu0 0.0
  %3007 = vmatpush.msra.mxu0 0.0
  %3008 = vmatpush.msra.mxu0 0.0
  %3009 = vmatpush.msra.mxu0 0.0
  %3010 = vmatpush.msra.mxu0 0.0
  %3011 = vmatpush.msra.mxu0 0.0
  %3012 = vmatpush.msra.mxu0 0.0
  %3013 = vmatpush.msra.mxu0 0.0
  %3014 = vmatpush.msra.mxu0 0.0
  %3015 = vmatpush.msra.mxu0 0.0
  %3016 = vmatpush.msra.mxu0 %v2979
  %3017 = vmatmul.f32.gmra.mxu0 %v390
  %v3018 = vpop.f32.mrf.mxu0
  %v3019 = vadd.f32 0.0, %v3018
  %3020 = vdwg.mxu0
  %v3021 = vadd.f32 %v2969, %v2999
  %v3022 = vadd.f32 %v2970, %v3019
  %v3023 = vld [vmem:[%s2919] sm:$0xff]
  %3025 = vst [vmem:[#allocation1] ss:$2 sm:$0xff] %v3023
  %v3026 = vld.sshfl [vmem:[#allocation1] sm:$0xff pattern:$0x75316420]
  %v3027 = vld.sshfl [vmem:[#allocation1 + $0x8] sm:$0xff pattern:$0x75316420]
  %3028 = vrot.lane.b32.xlu0 %v3026, 127
  %v3029 = vpop.permute.xlu0 %3028
  %3030 = vrot.lane.b32.xlu0 %v3027, 127
  %v3031 = vpop.permute.xlu0 %3030
  %v3032 = vsel %vm279, %v3029, %v3031
  %v3033 = vsel %vm174, %v3032, 0
  %v3035 = vsel %vm174, %v3031, 0
  %3037 = vmatpush.msra.mxu0 0.0
  %3038 = vmatpush.msra.mxu0 0.0
  %3039 = vmatpush.msra.mxu0 0.0
  %3040 = vmatpush.msra.mxu0 0.0
  %3041 = vmatpush.msra.mxu0 0.0
  %3042 = vmatpush.msra.mxu0 0.0
  %3043 = vmatpush.msra.mxu0 0.0
  %3044 = vmatpush.msra.mxu0 0.0
  %3045 = vmatpush.msra.mxu0 0.0
  %3046 = vmatpush.msra.mxu0 0.0
  %3047 = vmatpush.msra.mxu0 0.0
  %3048 = vmatpush.msra.mxu0 0.0
  %3049 = vmatpush.msra.mxu0 0.0
  %3050 = vmatpush.msra.mxu0 0.0
  %3051 = vmatpush.msra.mxu0 0.0
  %3052 = vmatpush.msra.mxu0 %v3033
  %3053 = vmatmul.f32.gmra.mxu0 %v449
  %v3054 = vpop.f32.mrf.mxu0
  %v3055 = vadd.f32 0.0, %v3054
  %3056 = vdwg.mxu0
  %3057 = vmatpush.msra.mxu0 0.0
  %3058 = vmatpush.msra.mxu0 0.0
  %3059 = vmatpush.msra.mxu0 0.0
  %3060 = vmatpush.msra.mxu0 0.0
  %3061 = vmatpush.msra.mxu0 0.0
  %3062 = vmatpush.msra.mxu0 0.0
  %3063 = vmatpush.msra.mxu0 0.0
  %3064 = vmatpush.msra.mxu0 0.0
  %3065 = vmatpush.msra.mxu0 0.0
  %3066 = vmatpush.msra.mxu0 0.0
  %3067 = vmatpush.msra.mxu0 0.0
  %3068 = vmatpush.msra.mxu0 0.0
  %3069 = vmatpush.msra.mxu0 0.0
  %3070 = vmatpush.msra.mxu0 0.0
  %3071 = vmatpush.msra.mxu0 0.0
  %3072 = vmatpush.msra.mxu0 %v3035
  %3073 = vmatmul.f32.gmra.mxu0 %v449
  %v3074 = vpop.f32.mrf.mxu0
  %v3075 = vadd.f32 0.0, %v3074
  %3076 = vdwg.mxu0
  %v3077 = vadd.f32 %v3021, %v3055
  %v3078 = vadd.f32 %v3022, %v3075
  %v3079 = vld [vmem:[%s2763] sm:$0xff]
  %3081 = vst [vmem:[#allocation1] ss:$2 sm:$0xff] %v3079
  %v3082 = vld.sshfl [vmem:[#allocation1] sm:$0xff pattern:$0x75316420]
  %v3083 = vld.sshfl [vmem:[#allocation1 + $0x8] sm:$0xff pattern:$0x75316420]
  %3084 = vrot.lane.b32.xlu0 %v3082, 112
  %v3085 = vpop.permute.xlu0 %3084
  %3086 = vrot.lane.b32.xlu0 %v3083, 112
  %v3087 = vpop.permute.xlu0 %3086
  %v3088 = vsel %vm506, %v3085, %v3087
  %v3089 = vsel %vm174, %v3088, 0
  %v3091 = vsel %vm174, %v3087, 0
  %3093 = vmatpush.msra.mxu0 0.0
  %3094 = vmatpush.msra.mxu0 0.0
  %3095 = vmatpush.msra.mxu0 0.0
  %3096 = vmatpush.msra.mxu0 0.0
  %3097 = vmatpush.msra.mxu0 0.0
  %3098 = vmatpush.msra.mxu0 0.0
  %3099 = vmatpush.msra.mxu0 0.0
  %3100 = vmatpush.msra.mxu0 0.0
  %3101 = vmatpush.msra.mxu0 0.0
  %3102 = vmatpush.msra.mxu0 0.0
  %3103 = vmatpush.msra.mxu0 0.0
  %3104 = vmatpush.msra.mxu0 0.0
  %3105 = vmatpush.msra.mxu0 0.0
  %3106 = vmatpush.msra.mxu0 0.0
  %3107 = vmatpush.msra.mxu0 0.0
  %3108 = vmatpush.msra.mxu0 %v3089
  %3109 = vmatmul.f32.gmra.mxu0 %v509
  %v3110 = vpop.f32.mrf.mxu0
  %v3111 = vadd.f32 0.0, %v3110
  %3112 = vdwg.mxu0
  %3113 = vmatpush.msra.mxu0 0.0
  %3114 = vmatpush.msra.mxu0 0.0
  %3115 = vmatpush.msra.mxu0 0.0
  %3116 = vmatpush.msra.mxu0 0.0
  %3117 = vmatpush.msra.mxu0 0.0
  %3118 = vmatpush.msra.mxu0 0.0
  %3119 = vmatpush.msra.mxu0 0.0
  %3120 = vmatpush.msra.mxu0 0.0
  %3121 = vmatpush.msra.mxu0 0.0
  %3122 = vmatpush.msra.mxu0 0.0
  %3123 = vmatpush.msra.mxu0 0.0
  %3124 = vmatpush.msra.mxu0 0.0
  %3125 = vmatpush.msra.mxu0 0.0
  %3126 = vmatpush.msra.mxu0 0.0
  %3127 = vmatpush.msra.mxu0 0.0
  %3128 = vmatpush.msra.mxu0 %v3091
  %3129 = vmatmul.f32.gmra.mxu0 %v509
  %v3130 = vpop.f32.mrf.mxu0
  %v3131 = vadd.f32 0.0, %v3130
  %3132 = vdwg.mxu0
  %v3133 = vadd.f32 %v3077, %v3111
  %v3134 = vadd.f32 %v3078, %v3131
  %v3135 = vld [vmem:[%s2765] sm:$0xff]
  %3137 = vst [vmem:[#allocation1] ss:$2 sm:$0xff] %v3135
  %v3138 = vld.sshfl [vmem:[#allocation1] sm:$0xff pattern:$0x75316420]
  %v3139 = vld.sshfl [vmem:[#allocation1 + $0x8] sm:$0xff pattern:$0x75316420]
  %3140 = vrot.lane.b32.xlu0 %v3138, 112
  %v3141 = vpop.permute.xlu0 %3140
  %3142 = vrot.lane.b32.xlu0 %v3139, 112
  %v3143 = vpop.permute.xlu0 %3142
  %v3144 = vsel %vm506, %v3141, %v3143
  %v3145 = vsel %vm174, %v3144, 0
  %v3147 = vsel %vm174, %v3143, 0
  %3149 = vmatpush.msra.mxu0 0.0
  %3150 = vmatpush.msra.mxu0 0.0
  %3151 = vmatpush.msra.mxu0 0.0
  %3152 = vmatpush.msra.mxu0 0.0
  %3153 = vmatpush.msra.mxu0 0.0
  %3154 = vmatpush.msra.mxu0 0.0
  %3155 = vmatpush.msra.mxu0 0.0
  %3156 = vmatpush.msra.mxu0 0.0
  %3157 = vmatpush.msra.mxu0 0.0
  %3158 = vmatpush.msra.mxu0 0.0
  %3159 = vmatpush.msra.mxu0 0.0
  %3160 = vmatpush.msra.mxu0 0.0
  %3161 = vmatpush.msra.mxu0 0.0
  %3162 = vmatpush.msra.mxu0 0.0
  %3163 = vmatpush.msra.mxu0 0.0
  %3164 = vmatpush.msra.mxu0 %v3145
  %3165 = vmatmul.f32.gmra.mxu0 %v568
  %v3166 = vpop.f32.mrf.mxu0
  %v3167 = vadd.f32 0.0, %v3166
  %3168 = vdwg.mxu0
  %3169 = vmatpush.msra.mxu0 0.0
  %3170 = vmatpush.msra.mxu0 0.0
  %3171 = vmatpush.msra.mxu0 0.0
  %3172 = vmatpush.msra.mxu0 0.0
  %3173 = vmatpush.msra.mxu0 0.0
  %3174 = vmatpush.msra.mxu0 0.0
  %3175 = vmatpush.msra.mxu0 0.0
  %3176 = vmatpush.msra.mxu0 0.0
  %3177 = vmatpush.msra.mxu0 0.0
  %3178 = vmatpush.msra.mxu0 0.0
  %3179 = vmatpush.msra.mxu0 0.0
  %3180 = vmatpush.msra.mxu0 0.0
  %3181 = vmatpush.msra.mxu0 0.0
  %3182 = vmatpush.msra.mxu0 0.0
  %3183 = vmatpush.msra.mxu0 0.0
  %3184 = vmatpush.msra.mxu0 %v3147
  %3185 = vmatmul.f32.gmra.mxu0 %v568
  %v3186 = vpop.f32.mrf.mxu0
  %v3187 = vadd.f32 0.0, %v3186
  %3188 = vdwg.mxu0
  %v3189 = vadd.f32 %v3133, %v3167
  %v3190 = vadd.f32 %v3134, %v3187
  %v3191 = vld [vmem:[%s2763] sm:$0xff]
  %v3192 = vld [vmem:[%s2763 + $0x8] sm:$0xf]
  %3195 = vst [vmem:[#allocation1] ss:$2 sm:$0xff] %v3191
  %s3196 = scalar_lea.vmem [#allocation1], 16
  %3197 = vst [vmem:[%s3196] ss:$2 sm:$0xff] %v3192
  %v3198 = vld.sshfl [vmem:[#allocation1] sm:$0xff pattern:$0x75316420]
  %v3199 = vld.sshfl [vmem:[#allocation1 + $0x8] sm:$0xff pattern:$0x75316420]
  %v3200 = vld.sshfl [vmem:[#allocation1 + $0x10] sm:$0xff pattern:$0x75316420]
  %3201 = vrot.lane.b32.xlu0 %v3198, 111
  %v3202 = vpop.permute.xlu0 %3201
  %3203 = vrot.lane.b32.xlu0 %v3199, 111
  %v3204 = vpop.permute.xlu0 %3203
  %3205 = vrot.lane.b32.xlu0 %v3200, 111
  %v3206 = vpop.permute.xlu0 %3205
  %v3207 = vsel %vm632, %v3202, %v3204
  %v3208 = vsel %vm632, %v3204, %v3206
  %v3209 = vsel %vm174, %v3207, 0
  %v3211 = vsel %vm174, %v3208, 0
  %3213 = vmatpush.msra.mxu0 0.0
  %3214 = vmatpush.msra.mxu0 0.0
  %3215 = vmatpush.msra.mxu0 0.0
  %3216 = vmatpush.msra.mxu0 0.0
  %3217 = vmatpush.msra.mxu0 0.0
  %3218 = vmatpush.msra.mxu0 0.0
  %3219 = vmatpush.msra.mxu0 0.0
  %3220 = vmatpush.msra.mxu0 0.0
  %3221 = vmatpush.msra.mxu0 0.0
  %3222 = vmatpush.msra.mxu0 0.0
  %3223 = vmatpush.msra.mxu0 0.0
  %3224 = vmatpush.msra.mxu0 0.0
  %3225 = vmatpush.msra.mxu0 0.0
  %3226 = vmatpush.msra.mxu0 0.0
  %3227 = vmatpush.msra.mxu0 0.0
  %3228 = vmatpush.msra.mxu0 %v3209
  %3229 = vmatmul.f32.gmra.mxu0 %v636
  %v3230 = vpop.f32.mrf.mxu0
  %v3231 = vadd.f32 0.0, %v3230
  %3232 = vdwg.mxu0
  %3233 = vmatpush.msra.mxu0 0.0
  %3234 = vmatpush.msra.mxu0 0.0
  %3235 = vmatpush.msra.mxu0 0.0
  %3236 = vmatpush.msra.mxu0 0.0
  %3237 = vmatpush.msra.mxu0 0.0
  %3238 = vmatpush.msra.mxu0 0.0
  %3239 = vmatpush.msra.mxu0 0.0
  %3240 = vmatpush.msra.mxu0 0.0
  %3241 = vmatpush.msra.mxu0 0.0
  %3242 = vmatpush.msra.mxu0 0.0
  %3243 = vmatpush.msra.mxu0 0.0
  %3244 = vmatpush.msra.mxu0 0.0
  %3245 = vmatpush.msra.mxu0 0.0
  %3246 = vmatpush.msra.mxu0 0.0
  %3247 = vmatpush.msra.mxu0 0.0
  %3248 = vmatpush.msra.mxu0 %v3211
  %3249 = vmatmul.f32.gmra.mxu0 %v636
  %v3250 = vpop.f32.mrf.mxu0
  %v3251 = vadd.f32 0.0, %v3250
  %3252 = vdwg.mxu0
  %v3253 = vadd.f32 %v3189, %v3231
  %v3254 = vadd.f32 %v3190, %v3251
  %v3255 = vmul.f32 %v3253, 0.003921569
  %v3256 = vmul.f32 %v3254, 0.003921569
  %v3257 = vadd.f32 %v3255, %v689
  %v3258 = vadd.f32 %v3256, %v689
  %v3259 = vmax.f32 %v3257, 0.0
  %v3260 = vmax.f32 %v3258, 0.0
  %3261 = vst [vmem:[#allocation2] sm:$0xff] %v3259
  %3262 = vst.msk [vmem:[#allocation2 + $0x8] sm:$0xff] %vm506, %v3260
  %v3263 = vld [vmem:[#allocation2] sm:$0xff]
  %v3264 = vld [vmem:[#allocation2 + $0x8] sm:$0xff]
  %3267 = vrot.lane.b32.xlu0 %v3263, 127
  %v3268 = vpop.permute.xlu0 %3267
  %3269 = vrot.lane.b32.xlu0 %v3264, 127
  %v3270 = vpop.permute.xlu0 %3269
  %v3271 = vsel %vm279, %v3268, %v3270
  %3274 = vmatpush.msra.mxu0 0.0
  %3275 = vmatpush.msra.mxu0 0.0
  %3276 = vmatpush.msra.mxu0 0.0
  %3277 = vmatpush.msra.mxu0 0.0
  %3278 = vmatpush.msra.mxu0 0.0
  %3279 = vmatpush.msra.mxu0 0.0
  %3280 = vmatpush.msra.mxu0 0.0
  %3281 = vmatpush.msra.mxu0 0.0
  %3282 = vmatpush.msra.mxu0 0.0
  %3283 = vmatpush.msra.mxu0 0.0
  %3284 = vmatpush.msra.mxu0 0.0
  %3285 = vmatpush.msra.mxu0 0.0
  %3286 = vmatpush.msra.mxu0 0.0
  %3287 = vmatpush.msra.mxu0 0.0
  %3288 = vmatpush.msra.mxu0 0.0
  %3289 = vmatpush.msra.mxu0 %v3271
  %3290 = vmatmul.f32.gmra.mxu0 %v710
  %v3291 = vpop.f32.mrf.mxu0
  %v3292 = vadd.f32 0.0, %v3291
  %3293 = vdwg.mxu0
  %3294 = vmatpush.msra.mxu0 0.0
  %3295 = vmatpush.msra.mxu0 0.0
  %3296 = vmatpush.msra.mxu0 0.0
  %3297 = vmatpush.msra.mxu0 0.0
  %3298 = vmatpush.msra.mxu0 0.0
  %3299 = vmatpush.msra.mxu0 0.0
  %3300 = vmatpush.msra.mxu0 0.0
  %3301 = vmatpush.msra.mxu0 0.0
  %3302 = vmatpush.msra.mxu0 0.0
  %3303 = vmatpush.msra.mxu0 0.0
  %3304 = vmatpush.msra.mxu0 0.0
  %3305 = vmatpush.msra.mxu0 0.0
  %3306 = vmatpush.msra.mxu0 0.0
  %3307 = vmatpush.msra.mxu0 0.0
  %3308 = vmatpush.msra.mxu0 0.0
  %3309 = vmatpush.msra.mxu0 %v3270
  %3310 = vmatmul.f32.gmra.mxu0 %v710
  %v3311 = vpop.f32.mrf.mxu0
  %v3312 = vadd.f32 0.0, %v3311
  %3313 = vdwg.mxu0
  %3314 = vmatpush.msra.mxu0 0.0
  %3315 = vmatpush.msra.mxu0 0.0
  %3316 = vmatpush.msra.mxu0 0.0
  %3317 = vmatpush.msra.mxu0 0.0
  %3318 = vmatpush.msra.mxu0 0.0
  %3319 = vmatpush.msra.mxu0 0.0
  %3320 = vmatpush.msra.mxu0 0.0
  %3321 = vmatpush.msra.mxu0 0.0
  %3322 = vmatpush.msra.mxu0 0.0
  %3323 = vmatpush.msra.mxu0 0.0
  %3324 = vmatpush.msra.mxu0 0.0
  %3325 = vmatpush.msra.mxu0 0.0
  %3326 = vmatpush.msra.mxu0 0.0
  %3327 = vmatpush.msra.mxu0 0.0
  %3328 = vmatpush.msra.mxu0 0.0
  %3329 = vmatpush.msra.mxu0 %v3263
  %3330 = vmatmul.f32.gmra.mxu0 %v753
  %v3331 = vpop.f32.mrf.mxu0
  %v3332 = vadd.f32 %v3292, %v3331
  %3333 = vdwg.mxu0
  %3334 = vmatpush.msra.mxu0 0.0
  %3335 = vmatpush.msra.mxu0 0.0
  %3336 = vmatpush.msra.mxu0 0.0
  %3337 = vmatpush.msra.mxu0 0.0
  %3338 = vmatpush.msra.mxu0 0.0
  %3339 = vmatpush.msra.mxu0 0.0
  %3340 = vmatpush.msra.mxu0 0.0
  %3341 = vmatpush.msra.mxu0 0.0
  %3342 = vmatpush.msra.mxu0 0.0
  %3343 = vmatpush.msra.mxu0 0.0
  %3344 = vmatpush.msra.mxu0 0.0
  %3345 = vmatpush.msra.mxu0 0.0
  %3346 = vmatpush.msra.mxu0 0.0
  %3347 = vmatpush.msra.mxu0 0.0
  %3348 = vmatpush.msra.mxu0 0.0
  %3349 = vmatpush.msra.mxu0 %v3264
  %3350 = vmatmul.f32.gmra.mxu0 %v753
  %v3351 = vpop.f32.mrf.mxu0
  %v3352 = vadd.f32 %v3312, %v3351
  %3353 = vdwg.mxu0
  %3354 = vrot.lane.b32.xlu0 %v3263, 126
  %v3355 = vpop.permute.xlu0 %3354
  %3356 = vrot.lane.b32.xlu0 %v3264, 126
  %v3357 = vpop.permute.xlu0 %3356
  %v3358 = vsel %vm799, %v3355, %v3357
  %3361 = vmatpush.msra.mxu0 0.0
  %3362 = vmatpush.msra.mxu0 0.0
  %3363 = vmatpush.msra.mxu0 0.0
  %3364 = vmatpush.msra.mxu0 0.0
  %3365 = vmatpush.msra.mxu0 0.0
  %3366 = vmatpush.msra.mxu0 0.0
  %3367 = vmatpush.msra.mxu0 0.0
  %3368 = vmatpush.msra.mxu0 0.0
  %3369 = vmatpush.msra.mxu0 0.0
  %3370 = vmatpush.msra.mxu0 0.0
  %3371 = vmatpush.msra.mxu0 0.0
  %3372 = vmatpush.msra.mxu0 0.0
  %3373 = vmatpush.msra.mxu0 0.0
  %3374 = vmatpush.msra.mxu0 0.0
  %3375 = vmatpush.msra.mxu0 0.0
  %3376 = vmatpush.msra.mxu0 %v3358
  %3377 = vmatmul.f32.gmra.mxu0 %v804
  %v3378 = vpop.f32.mrf.mxu0
  %v3379 = vadd.f32 0.0, %v3378
  %3380 = vdwg.mxu0
  %3381 = vmatpush.msra.mxu0 0.0
  %3382 = vmatpush.msra.mxu0 0.0
  %3383 = vmatpush.msra.mxu0 0.0
  %3384 = vmatpush.msra.mxu0 0.0
  %3385 = vmatpush.msra.mxu0 0.0
  %3386 = vmatpush.msra.mxu0 0.0
  %3387 = vmatpush.msra.mxu0 0.0
  %3388 = vmatpush.msra.mxu0 0.0
  %3389 = vmatpush.msra.mxu0 0.0
  %3390 = vmatpush.msra.mxu0 0.0
  %3391 = vmatpush.msra.mxu0 0.0
  %3392 = vmatpush.msra.mxu0 0.0
  %3393 = vmatpush.msra.mxu0 0.0
  %3394 = vmatpush.msra.mxu0 0.0
  %3395 = vmatpush.msra.mxu0 0.0
  %3396 = vmatpush.msra.mxu0 %v3357
  %3397 = vmatmul.f32.gmra.mxu0 %v804
  %v3398 = vpop.f32.mrf.mxu0
  %v3399 = vadd.f32 0.0, %v3398
  %3400 = vdwg.mxu0
  %v3401 = vadd.f32 %v3332, %v3379
  %v3402 = vadd.f32 %v3352, %v3399
  %3403 = vrot.lane.b32.xlu0 %v3263, 112
  %v3404 = vpop.permute.xlu0 %3403
  %3405 = vrot.lane.b32.xlu0 %v3264, 112
  %v3406 = vpop.permute.xlu0 %3405
  %v3407 = vsel %vm506, %v3404, %v3406
  %3410 = vmatpush.msra.mxu0 0.0
  %3411 = vmatpush.msra.mxu0 0.0
  %3412 = vmatpush.msra.mxu0 0.0
  %3413 = vmatpush.msra.mxu0 0.0
  %3414 = vmatpush.msra.mxu0 0.0
  %3415 = vmatpush.msra.mxu0 0.0
  %3416 = vmatpush.msra.mxu0 0.0
  %3417 = vmatpush.msra.mxu0 0.0
  %3418 = vmatpush.msra.mxu0 0.0
  %3419 = vmatpush.msra.mxu0 0.0
  %3420 = vmatpush.msra.mxu0 0.0
  %3421 = vmatpush.msra.mxu0 0.0
  %3422 = vmatpush.msra.mxu0 0.0
  %3423 = vmatpush.msra.mxu0 0.0
  %3424 = vmatpush.msra.mxu0 0.0
  %3425 = vmatpush.msra.mxu0 %v3407
  %3426 = vmatmul.f32.gmra.mxu0 %v856
  %v3427 = vpop.f32.mrf.mxu0
  %v3428 = vadd.f32 0.0, %v3427
  %3429 = vdwg.mxu0
  %3430 = vmatpush.msra.mxu0 0.0
  %3431 = vmatpush.msra.mxu0 0.0
  %3432 = vmatpush.msra.mxu0 0.0
  %3433 = vmatpush.msra.mxu0 0.0
  %3434 = vmatpush.msra.mxu0 0.0
  %3435 = vmatpush.msra.mxu0 0.0
  %3436 = vmatpush.msra.mxu0 0.0
  %3437 = vmatpush.msra.mxu0 0.0
  %3438 = vmatpush.msra.mxu0 0.0
  %3439 = vmatpush.msra.mxu0 0.0
  %3440 = vmatpush.msra.mxu0 0.0
  %3441 = vmatpush.msra.mxu0 0.0
  %3442 = vmatpush.msra.mxu0 0.0
  %3443 = vmatpush.msra.mxu0 0.0
  %3444 = vmatpush.msra.mxu0 0.0
  %3445 = vmatpush.msra.mxu0 %v3406
  %3446 = vmatmul.f32.gmra.mxu0 %v856
  %v3447 = vpop.f32.mrf.mxu0
  %v3448 = vadd.f32 0.0, %v3447
  %3449 = vdwg.mxu0
  %v3450 = vadd.f32 %v3401, %v3428
  %v3451 = vadd.f32 %v3402, %v3448
  %3452 = vrot.lane.b32.xlu0 %v3263, 111
  %v3453 = vpop.permute.xlu0 %3452
  %3454 = vrot.lane.b32.xlu0 %v3264, 111
  %v3455 = vpop.permute.xlu0 %3454
  %v3456 = vsel %vm632, %v3453, %v3455
  %3459 = vmatpush.msra.mxu0 0.0
  %3460 = vmatpush.msra.mxu0 0.0
  %3461 = vmatpush.msra.mxu0 0.0
  %3462 = vmatpush.msra.mxu0 0.0
  %3463 = vmatpush.msra.mxu0 0.0
  %3464 = vmatpush.msra.mxu0 0.0
  %3465 = vmatpush.msra.mxu0 0.0
  %3466 = vmatpush.msra.mxu0 0.0
  %3467 = vmatpush.msra.mxu0 0.0
  %3468 = vmatpush.msra.mxu0 0.0
  %3469 = vmatpush.msra.mxu0 0.0
  %3470 = vmatpush.msra.mxu0 0.0
  %3471 = vmatpush.msra.mxu0 0.0
  %3472 = vmatpush.msra.mxu0 0.0
  %3473 = vmatpush.msra.mxu0 0.0
  %3474 = vmatpush.msra.mxu0 %v3456
  %3475 = vmatmul.f32.gmra.mxu0 %v908
  %v3476 = vpop.f32.mrf.mxu0
  %v3477 = vadd.f32 0.0, %v3476
  %3478 = vdwg.mxu0
  %3479 = vmatpush.msra.mxu0 0.0
  %3480 = vmatpush.msra.mxu0 0.0
  %3481 = vmatpush.msra.mxu0 0.0
  %3482 = vmatpush.msra.mxu0 0.0
  %3483 = vmatpush.msra.mxu0 0.0
  %3484 = vmatpush.msra.mxu0 0.0
  %3485 = vmatpush.msra.mxu0 0.0
  %3486 = vmatpush.msra.mxu0 0.0
  %3487 = vmatpush.msra.mxu0 0.0
  %3488 = vmatpush.msra.mxu0 0.0
  %3489 = vmatpush.msra.mxu0 0.0
  %3490 = vmatpush.msra.mxu0 0.0
  %3491 = vmatpush.msra.mxu0 0.0
  %3492 = vmatpush.msra.mxu0 0.0
  %3493 = vmatpush.msra.mxu0 0.0
  %3494 = vmatpush.msra.mxu0 %v3455
  %3495 = vmatmul.f32.gmra.mxu0 %v908
  %v3496 = vpop.f32.mrf.mxu0
  %v3497 = vadd.f32 0.0, %v3496
  %3498 = vdwg.mxu0
  %v3499 = vadd.f32 %v3450, %v3477
  %v3500 = vadd.f32 %v3451, %v3497
  %3501 = vrot.lane.b32.xlu0 %v3263, 110
  %v3502 = vpop.permute.xlu0 %3501
  %3503 = vrot.lane.b32.xlu0 %v3264, 110
  %v3504 = vpop.permute.xlu0 %3503
  %v3505 = vsel %vm956, %v3502, %v3504
  %3508 = vmatpush.msra.mxu0 0.0
  %3509 = vmatpush.msra.mxu0 0.0
  %3510 = vmatpush.msra.mxu0 0.0
  %3511 = vmatpush.msra.mxu0 0.0
  %3512 = vmatpush.msra.mxu0 0.0
  %3513 = vmatpush.msra.mxu0 0.0
  %3514 = vmatpush.msra.mxu0 0.0
  %3515 = vmatpush.msra.mxu0 0.0
  %3516 = vmatpush.msra.mxu0 0.0
  %3517 = vmatpush.msra.mxu0 0.0
  %3518 = vmatpush.msra.mxu0 0.0
  %3519 = vmatpush.msra.mxu0 0.0
  %3520 = vmatpush.msra.mxu0 0.0
  %3521 = vmatpush.msra.mxu0 0.0
  %3522 = vmatpush.msra.mxu0 0.0
  %3523 = vmatpush.msra.mxu0 %v3505
  %3524 = vmatmul.f32.gmra.mxu0 %v961
  %v3525 = vpop.f32.mrf.mxu0
  %v3526 = vadd.f32 0.0, %v3525
  %3527 = vdwg.mxu0
  %3528 = vmatpush.msra.mxu0 0.0
  %3529 = vmatpush.msra.mxu0 0.0
  %3530 = vmatpush.msra.mxu0 0.0
  %3531 = vmatpush.msra.mxu0 0.0
  %3532 = vmatpush.msra.mxu0 0.0
  %3533 = vmatpush.msra.mxu0 0.0
  %3534 = vmatpush.msra.mxu0 0.0
  %3535 = vmatpush.msra.mxu0 0.0
  %3536 = vmatpush.msra.mxu0 0.0
  %3537 = vmatpush.msra.mxu0 0.0
  %3538 = vmatpush.msra.mxu0 0.0
  %3539 = vmatpush.msra.mxu0 0.0
  %3540 = vmatpush.msra.mxu0 0.0
  %3541 = vmatpush.msra.mxu0 0.0
  %3542 = vmatpush.msra.mxu0 0.0
  %3543 = vmatpush.msra.mxu0 %v3504
  %3544 = vmatmul.f32.gmra.mxu0 %v961
  %v3545 = vpop.f32.mrf.mxu0
  %v3546 = vadd.f32 0.0, %v3545
  %3547 = vdwg.mxu0
  %v3548 = vadd.f32 %v3499, %v3526
  %v3549 = vadd.f32 %v3500, %v3546
  %3550 = vrot.lane.b32.xlu0 %v3263, 96
  %v3551 = vpop.permute.xlu0 %3550
  %3552 = vrot.lane.b32.xlu0 %v3264, 96
  %v3553 = vpop.permute.xlu0 %3552
  %v3554 = vsel %vm1009, %v3551, %v3553
  %3557 = vmatpush.msra.mxu0 0.0
  %3558 = vmatpush.msra.mxu0 0.0
  %3559 = vmatpush.msra.mxu0 0.0
  %3560 = vmatpush.msra.mxu0 0.0
  %3561 = vmatpush.msra.mxu0 0.0
  %3562 = vmatpush.msra.mxu0 0.0
  %3563 = vmatpush.msra.mxu0 0.0
  %3564 = vmatpush.msra.mxu0 0.0
  %3565 = vmatpush.msra.mxu0 0.0
  %3566 = vmatpush.msra.mxu0 0.0
  %3567 = vmatpush.msra.mxu0 0.0
  %3568 = vmatpush.msra.mxu0 0.0
  %3569 = vmatpush.msra.mxu0 0.0
  %3570 = vmatpush.msra.mxu0 0.0
  %3571 = vmatpush.msra.mxu0 0.0
  %3572 = vmatpush.msra.mxu0 %v3554
  %3573 = vmatmul.f32.gmra.mxu0 %v1014
  %v3574 = vpop.f32.mrf.mxu0
  %v3575 = vadd.f32 0.0, %v3574
  %3576 = vdwg.mxu0
  %3577 = vmatpush.msra.mxu0 0.0
  %3578 = vmatpush.msra.mxu0 0.0
  %3579 = vmatpush.msra.mxu0 0.0
  %3580 = vmatpush.msra.mxu0 0.0
  %3581 = vmatpush.msra.mxu0 0.0
  %3582 = vmatpush.msra.mxu0 0.0
  %3583 = vmatpush.msra.mxu0 0.0
  %3584 = vmatpush.msra.mxu0 0.0
  %3585 = vmatpush.msra.mxu0 0.0
  %3586 = vmatpush.msra.mxu0 0.0
  %3587 = vmatpush.msra.mxu0 0.0
  %3588 = vmatpush.msra.mxu0 0.0
  %3589 = vmatpush.msra.mxu0 0.0
  %3590 = vmatpush.msra.mxu0 0.0
  %3591 = vmatpush.msra.mxu0 0.0
  %3592 = vmatpush.msra.mxu0 %v3553
  %3593 = vmatmul.f32.gmra.mxu0 %v1014
  %v3594 = vpop.f32.mrf.mxu0
  %v3595 = vadd.f32 0.0, %v3594
  %3596 = vdwg.mxu0
  %v3597 = vadd.f32 %v3548, %v3575
  %v3598 = vadd.f32 %v3549, %v3595
  %3599 = vrot.lane.b32.xlu0 %v3263, 95
  %v3600 = vpop.permute.xlu0 %3599
  %3601 = vrot.lane.b32.xlu0 %v3264, 95
  %v3602 = vpop.permute.xlu0 %3601
  %v3603 = vsel %vm1062, %v3600, %v3602
  %3606 = vmatpush.msra.mxu0 0.0
  %3607 = vmatpush.msra.mxu0 0.0
  %3608 = vmatpush.msra.mxu0 0.0
  %3609 = vmatpush.msra.mxu0 0.0
  %3610 = vmatpush.msra.mxu0 0.0
  %3611 = vmatpush.msra.mxu0 0.0
  %3612 = vmatpush.msra.mxu0 0.0
  %3613 = vmatpush.msra.mxu0 0.0
  %3614 = vmatpush.msra.mxu0 0.0
  %3615 = vmatpush.msra.mxu0 0.0
  %3616 = vmatpush.msra.mxu0 0.0
  %3617 = vmatpush.msra.mxu0 0.0
  %3618 = vmatpush.msra.mxu0 0.0
  %3619 = vmatpush.msra.mxu0 0.0
  %3620 = vmatpush.msra.mxu0 0.0
  %3621 = vmatpush.msra.mxu0 %v3603
  %3622 = vmatmul.f32.gmra.mxu0 %v1067
  %v3623 = vpop.f32.mrf.mxu0
  %v3624 = vadd.f32 0.0, %v3623
  %3625 = vdwg.mxu0
  %3626 = vmatpush.msra.mxu0 0.0
  %3627 = vmatpush.msra.mxu0 0.0
  %3628 = vmatpush.msra.mxu0 0.0
  %3629 = vmatpush.msra.mxu0 0.0
  %3630 = vmatpush.msra.mxu0 0.0
  %3631 = vmatpush.msra.mxu0 0.0
  %3632 = vmatpush.msra.mxu0 0.0
  %3633 = vmatpush.msra.mxu0 0.0
  %3634 = vmatpush.msra.mxu0 0.0
  %3635 = vmatpush.msra.mxu0 0.0
  %3636 = vmatpush.msra.mxu0 0.0
  %3637 = vmatpush.msra.mxu0 0.0
  %3638 = vmatpush.msra.mxu0 0.0
  %3639 = vmatpush.msra.mxu0 0.0
  %3640 = vmatpush.msra.mxu0 0.0
  %3641 = vmatpush.msra.mxu0 %v3602
  %3642 = vmatmul.f32.gmra.mxu0 %v1067
  %v3643 = vpop.f32.mrf.mxu0
  %v3644 = vadd.f32 0.0, %v3643
  %3645 = vdwg.mxu0
  %v3646 = vadd.f32 %v3597, %v3624
  %v3647 = vadd.f32 %v3598, %v3644
  %3648 = vrot.lane.b32.xlu0 %v3263, 94
  %v3649 = vpop.permute.xlu0 %3648
  %3650 = vrot.lane.b32.xlu0 %v3264, 94
  %v3651 = vpop.permute.xlu0 %3650
  %v3652 = vsel %vm1115, %v3649, %v3651
  %3655 = vmatpush.msra.mxu0 0.0
  %3656 = vmatpush.msra.mxu0 0.0
  %3657 = vmatpush.msra.mxu0 0.0
  %3658 = vmatpush.msra.mxu0 0.0
  %3659 = vmatpush.msra.mxu0 0.0
  %3660 = vmatpush.msra.mxu0 0.0
  %3661 = vmatpush.msra.mxu0 0.0
  %3662 = vmatpush.msra.mxu0 0.0
  %3663 = vmatpush.msra.mxu0 0.0
  %3664 = vmatpush.msra.mxu0 0.0
  %3665 = vmatpush.msra.mxu0 0.0
  %3666 = vmatpush.msra.mxu0 0.0
  %3667 = vmatpush.msra.mxu0 0.0
  %3668 = vmatpush.msra.mxu0 0.0
  %3669 = vmatpush.msra.mxu0 0.0
  %3670 = vmatpush.msra.mxu0 %v3652
  %3671 = vmatmul.f32.gmra.mxu0 %v1120
  %v3672 = vpop.f32.mrf.mxu0
  %v3673 = vadd.f32 0.0, %v3672
  %3674 = vdwg.mxu0
  %3675 = vmatpush.msra.mxu0 0.0
  %3676 = vmatpush.msra.mxu0 0.0
  %3677 = vmatpush.msra.mxu0 0.0
  %3678 = vmatpush.msra.mxu0 0.0
  %3679 = vmatpush.msra.mxu0 0.0
  %3680 = vmatpush.msra.mxu0 0.0
  %3681 = vmatpush.msra.mxu0 0.0
  %3682 = vmatpush.msra.mxu0 0.0
  %3683 = vmatpush.msra.mxu0 0.0
  %3684 = vmatpush.msra.mxu0 0.0
  %3685 = vmatpush.msra.mxu0 0.0
  %3686 = vmatpush.msra.mxu0 0.0
  %3687 = vmatpush.msra.mxu0 0.0
  %3688 = vmatpush.msra.mxu0 0.0
  %3689 = vmatpush.msra.mxu0 0.0
  %3690 = vmatpush.msra.mxu0 %v3651
  %3691 = vmatmul.f32.gmra.mxu0 %v1120
  %v3692 = vpop.f32.mrf.mxu0
  %v3693 = vadd.f32 0.0, %v3692
  %3694 = vdwg.mxu0
  %v3695 = vadd.f32 %v3646, %v3673
  %v3696 = vadd.f32 %v3647, %v3693
  %v3697 = vadd.f32 %v3695, %v1167
  %v3698 = vadd.f32 %v3696, %v1167
  %v3699 = vmax.f32 %v3697, 0.0
  %v3700 = vmax.f32 %v3698, 0.0
  %3701 = vst [vmem:[#allocation3] sm:$0xff] %v3699
  %3702 = vst.msk [vmem:[#allocation3 + $0x8] sm:$0xff] %vm1174, %v3700
  %v3703 = vld [vmem:[#allocation3] sm:$0xff]
  %v3704 = vld [vmem:[#allocation3 + $0x8] sm:$0xff]
  %3707 = vrot.lane.b32.xlu0 %v3703, 127
  %v3708 = vpop.permute.xlu0 %3707
  %3709 = vrot.lane.b32.xlu0 %v3704, 127
  %v3710 = vpop.permute.xlu0 %3709
  %v3711 = vsel %vm279, %v3708, %v3710
  %3714 = vmatpush.msra.mxu0 0.0
  %3715 = vmatpush.msra.mxu0 0.0
  %3716 = vmatpush.msra.mxu0 0.0
  %3717 = vmatpush.msra.mxu0 0.0
  %3718 = vmatpush.msra.mxu0 0.0
  %3719 = vmatpush.msra.mxu0 0.0
  %3720 = vmatpush.msra.mxu0 0.0
  %3721 = vmatpush.msra.mxu0 0.0
  %3722 = vmatpush.msra.mxu0 0.0
  %3723 = vmatpush.msra.mxu0 0.0
  %3724 = vmatpush.msra.mxu0 0.0
  %3725 = vmatpush.msra.mxu0 0.0
  %3726 = vmatpush.msra.mxu0 0.0
  %3727 = vmatpush.msra.mxu0 0.0
  %3728 = vmatpush.msra.mxu0 0.0
  %3729 = vmatpush.msra.mxu0 %v3711
  %3730 = vmatmul.f32.gmra.mxu0 %v1188
  %v3731 = vpop.f32.mrf.mxu0
  %v3732 = vadd.f32 0.0, %v3731
  %3733 = vdwg.mxu0
  %3734 = vmatpush.msra.mxu0 0.0
  %3735 = vmatpush.msra.mxu0 0.0
  %3736 = vmatpush.msra.mxu0 0.0
  %3737 = vmatpush.msra.mxu0 0.0
  %3738 = vmatpush.msra.mxu0 0.0
  %3739 = vmatpush.msra.mxu0 0.0
  %3740 = vmatpush.msra.mxu0 0.0
  %3741 = vmatpush.msra.mxu0 0.0
  %3742 = vmatpush.msra.mxu0 0.0
  %3743 = vmatpush.msra.mxu0 0.0
  %3744 = vmatpush.msra.mxu0 0.0
  %3745 = vmatpush.msra.mxu0 0.0
  %3746 = vmatpush.msra.mxu0 0.0
  %3747 = vmatpush.msra.mxu0 0.0
  %3748 = vmatpush.msra.mxu0 0.0
  %3749 = vmatpush.msra.mxu0 %v3710
  %3750 = vmatmul.f32.gmra.mxu0 %v1188
  %v3751 = vpop.f32.mrf.mxu0
  %v3752 = vadd.f32 0.0, %v3751
  %3753 = vdwg.mxu0
  %3754 = vmatpush.msra.mxu0 0.0
  %3755 = vmatpush.msra.mxu0 0.0
  %3756 = vmatpush.msra.mxu0 0.0
  %3757 = vmatpush.msra.mxu0 0.0
  %3758 = vmatpush.msra.mxu0 0.0
  %3759 = vmatpush.msra.mxu0 0.0
  %3760 = vmatpush.msra.mxu0 0.0
  %3761 = vmatpush.msra.mxu0 0.0
  %3762 = vmatpush.msra.mxu0 0.0
  %3763 = vmatpush.msra.mxu0 0.0
  %3764 = vmatpush.msra.mxu0 0.0
  %3765 = vmatpush.msra.mxu0 0.0
  %3766 = vmatpush.msra.mxu0 0.0
  %3767 = vmatpush.msra.mxu0 0.0
  %3768 = vmatpush.msra.mxu0 0.0
  %3769 = vmatpush.msra.mxu0 %v3703
  %3770 = vmatmul.f32.gmra.mxu0 %v1231
  %v3771 = vpop.f32.mrf.mxu0
  %v3772 = vadd.f32 %v3732, %v3771
  %3773 = vdwg.mxu0
  %3774 = vmatpush.msra.mxu0 0.0
  %3775 = vmatpush.msra.mxu0 0.0
  %3776 = vmatpush.msra.mxu0 0.0
  %3777 = vmatpush.msra.mxu0 0.0
  %3778 = vmatpush.msra.mxu0 0.0
  %3779 = vmatpush.msra.mxu0 0.0
  %3780 = vmatpush.msra.mxu0 0.0
  %3781 = vmatpush.msra.mxu0 0.0
  %3782 = vmatpush.msra.mxu0 0.0
  %3783 = vmatpush.msra.mxu0 0.0
  %3784 = vmatpush.msra.mxu0 0.0
  %3785 = vmatpush.msra.mxu0 0.0
  %3786 = vmatpush.msra.mxu0 0.0
  %3787 = vmatpush.msra.mxu0 0.0
  %3788 = vmatpush.msra.mxu0 0.0
  %3789 = vmatpush.msra.mxu0 %v3704
  %3790 = vmatmul.f32.gmra.mxu0 %v1231
  %v3791 = vpop.f32.mrf.mxu0
  %v3792 = vadd.f32 %v3752, %v3791
  %3793 = vdwg.mxu0
  %3794 = vrot.lane.b32.xlu0 %v3703, 126
  %v3795 = vpop.permute.xlu0 %3794
  %3796 = vrot.lane.b32.xlu0 %v3704, 126
  %v3797 = vpop.permute.xlu0 %3796
  %v3798 = vsel %vm799, %v3795, %v3797
  %3801 = vmatpush.msra.mxu0 0.0
  %3802 = vmatpush.msra.mxu0 0.0
  %3803 = vmatpush.msra.mxu0 0.0
  %3804 = vmatpush.msra.mxu0 0.0
  %3805 = vmatpush.msra.mxu0 0.0
  %3806 = vmatpush.msra.mxu0 0.0
  %3807 = vmatpush.msra.mxu0 0.0
  %3808 = vmatpush.msra.mxu0 0.0
  %3809 = vmatpush.msra.mxu0 0.0
  %3810 = vmatpush.msra.mxu0 0.0
  %3811 = vmatpush.msra.mxu0 0.0
  %3812 = vmatpush.msra.mxu0 0.0
  %3813 = vmatpush.msra.mxu0 0.0
  %3814 = vmatpush.msra.mxu0 0.0
  %3815 = vmatpush.msra.mxu0 0.0
  %3816 = vmatpush.msra.mxu0 %v3798
  %3817 = vmatmul.f32.gmra.mxu0 %v1281
  %v3818 = vpop.f32.mrf.mxu0
  %v3819 = vadd.f32 0.0, %v3818
  %3820 = vdwg.mxu0
  %3821 = vmatpush.msra.mxu0 0.0
  %3822 = vmatpush.msra.mxu0 0.0
  %3823 = vmatpush.msra.mxu0 0.0
  %3824 = vmatpush.msra.mxu0 0.0
  %3825 = vmatpush.msra.mxu0 0.0
  %3826 = vmatpush.msra.mxu0 0.0
  %3827 = vmatpush.msra.mxu0 0.0
  %3828 = vmatpush.msra.mxu0 0.0
  %3829 = vmatpush.msra.mxu0 0.0
  %3830 = vmatpush.msra.mxu0 0.0
  %3831 = vmatpush.msra.mxu0 0.0
  %3832 = vmatpush.msra.mxu0 0.0
  %3833 = vmatpush.msra.mxu0 0.0
  %3834 = vmatpush.msra.mxu0 0.0
  %3835 = vmatpush.msra.mxu0 0.0
  %3836 = vmatpush.msra.mxu0 %v3797
  %3837 = vmatmul.f32.gmra.mxu0 %v1281
  %v3838 = vpop.f32.mrf.mxu0
  %v3839 = vadd.f32 0.0, %v3838
  %3840 = vdwg.mxu0
  %v3841 = vadd.f32 %v3772, %v3819
  %v3842 = vadd.f32 %v3792, %v3839
  %3843 = vrot.lane.b32.xlu0 %v3703, 112
  %v3844 = vpop.permute.xlu0 %3843
  %3845 = vrot.lane.b32.xlu0 %v3704, 112
  %v3846 = vpop.permute.xlu0 %3845
  %v3847 = vsel %vm506, %v3844, %v3846
  %3850 = vmatpush.msra.mxu0 0.0
  %3851 = vmatpush.msra.mxu0 0.0
  %3852 = vmatpush.msra.mxu0 0.0
  %3853 = vmatpush.msra.mxu0 0.0
  %3854 = vmatpush.msra.mxu0 0.0
  %3855 = vmatpush.msra.mxu0 0.0
  %3856 = vmatpush.msra.mxu0 0.0
  %3857 = vmatpush.msra.mxu0 0.0
  %3858 = vmatpush.msra.mxu0 0.0
  %3859 = vmatpush.msra.mxu0 0.0
  %3860 = vmatpush.msra.mxu0 0.0
  %3861 = vmatpush.msra.mxu0 0.0
  %3862 = vmatpush.msra.mxu0 0.0
  %3863 = vmatpush.msra.mxu0 0.0
  %3864 = vmatpush.msra.mxu0 0.0
  %3865 = vmatpush.msra.mxu0 %v3847
  %3866 = vmatmul.f32.gmra.mxu0 %v1333
  %v3867 = vpop.f32.mrf.mxu0
  %v3868 = vadd.f32 0.0, %v3867
  %3869 = vdwg.mxu0
  %3870 = vmatpush.msra.mxu0 0.0
  %3871 = vmatpush.msra.mxu0 0.0
  %3872 = vmatpush.msra.mxu0 0.0
  %3873 = vmatpush.msra.mxu0 0.0
  %3874 = vmatpush.msra.mxu0 0.0
  %3875 = vmatpush.msra.mxu0 0.0
  %3876 = vmatpush.msra.mxu0 0.0
  %3877 = vmatpush.msra.mxu0 0.0
  %3878 = vmatpush.msra.mxu0 0.0
  %3879 = vmatpush.msra.mxu0 0.0
  %3880 = vmatpush.msra.mxu0 0.0
  %3881 = vmatpush.msra.mxu0 0.0
  %3882 = vmatpush.msra.mxu0 0.0
  %3883 = vmatpush.msra.mxu0 0.0
  %3884 = vmatpush.msra.mxu0 0.0
  %3885 = vmatpush.msra.mxu0 %v3846
  %3886 = vmatmul.f32.gmra.mxu0 %v1333
  %v3887 = vpop.f32.mrf.mxu0
  %v3888 = vadd.f32 0.0, %v3887
  %3889 = vdwg.mxu0
  %v3890 = vadd.f32 %v3841, %v3868
  %v3891 = vadd.f32 %v3842, %v3888
  %3892 = vrot.lane.b32.xlu0 %v3703, 111
  %v3893 = vpop.permute.xlu0 %3892
  %3894 = vrot.lane.b32.xlu0 %v3704, 111
  %v3895 = vpop.permute.xlu0 %3894
  %v3896 = vsel %vm632, %v3893, %v3895
  %3899 = vmatpush.msra.mxu0 0.0
  %3900 = vmatpush.msra.mxu0 0.0
  %3901 = vmatpush.msra.mxu0 0.0
  %3902 = vmatpush.msra.mxu0 0.0
  %3903 = vmatpush.msra.mxu0 0.0
  %3904 = vmatpush.msra.mxu0 0.0
  %3905 = vmatpush.msra.mxu0 0.0
  %3906 = vmatpush.msra.mxu0 0.0
  %3907 = vmatpush.msra.mxu0 0.0
  %3908 = vmatpush.msra.mxu0 0.0
  %3909 = vmatpush.msra.mxu0 0.0
  %3910 = vmatpush.msra.mxu0 0.0
  %3911 = vmatpush.msra.mxu0 0.0
  %3912 = vmatpush.msra.mxu0 0.0
  %3913 = vmatpush.msra.mxu0 0.0
  %3914 = vmatpush.msra.mxu0 %v3896
  %3915 = vmatmul.f32.gmra.mxu0 %v1385
  %v3916 = vpop.f32.mrf.mxu0
  %v3917 = vadd.f32 0.0, %v3916
  %3918 = vdwg.mxu0
  %3919 = vmatpush.msra.mxu0 0.0
  %3920 = vmatpush.msra.mxu0 0.0
  %3921 = vmatpush.msra.mxu0 0.0
  %3922 = vmatpush.msra.mxu0 0.0
  %3923 = vmatpush.msra.mxu0 0.0
  %3924 = vmatpush.msra.mxu0 0.0
  %3925 = vmatpush.msra.mxu0 0.0
  %3926 = vmatpush.msra.mxu0 0.0
  %3927 = vmatpush.msra.mxu0 0.0
  %3928 = vmatpush.msra.mxu0 0.0
  %3929 = vmatpush.msra.mxu0 0.0
  %3930 = vmatpush.msra.mxu0 0.0
  %3931 = vmatpush.msra.mxu0 0.0
  %3932 = vmatpush.msra.mxu0 0.0
  %3933 = vmatpush.msra.mxu0 0.0
  %3934 = vmatpush.msra.mxu0 %v3895
  %3935 = vmatmul.f32.gmra.mxu0 %v1385
  %v3936 = vpop.f32.mrf.mxu0
  %v3937 = vadd.f32 0.0, %v3936
  %3938 = vdwg.mxu0
  %v3939 = vadd.f32 %v3890, %v3917
  %v3940 = vadd.f32 %v3891, %v3937
  %3941 = vrot.lane.b32.xlu0 %v3703, 110
  %v3942 = vpop.permute.xlu0 %3941
  %3943 = vrot.lane.b32.xlu0 %v3704, 110
  %v3944 = vpop.permute.xlu0 %3943
  %v3945 = vsel %vm956, %v3942, %v3944
  %3948 = vmatpush.msra.mxu0 0.0
  %3949 = vmatpush.msra.mxu0 0.0
  %3950 = vmatpush.msra.mxu0 0.0
  %3951 = vmatpush.msra.mxu0 0.0
  %3952 = vmatpush.msra.mxu0 0.0
  %3953 = vmatpush.msra.mxu0 0.0
  %3954 = vmatpush.msra.mxu0 0.0
  %3955 = vmatpush.msra.mxu0 0.0
  %3956 = vmatpush.msra.mxu0 0.0
  %3957 = vmatpush.msra.mxu0 0.0
  %3958 = vmatpush.msra.mxu0 0.0
  %3959 = vmatpush.msra.mxu0 0.0
  %3960 = vmatpush.msra.mxu0 0.0
  %3961 = vmatpush.msra.mxu0 0.0
  %3962 = vmatpush.msra.mxu0 0.0
  %3963 = vmatpush.msra.mxu0 %v3945
  %3964 = vmatmul.f32.gmra.mxu0 %v1437
  %v3965 = vpop.f32.mrf.mxu0
  %v3966 = vadd.f32 0.0, %v3965
  %3967 = vdwg.mxu0
  %3968 = vmatpush.msra.mxu0 0.0
  %3969 = vmatpush.msra.mxu0 0.0
  %3970 = vmatpush.msra.mxu0 0.0
  %3971 = vmatpush.msra.mxu0 0.0
  %3972 = vmatpush.msra.mxu0 0.0
  %3973 = vmatpush.msra.mxu0 0.0
  %3974 = vmatpush.msra.mxu0 0.0
  %3975 = vmatpush.msra.mxu0 0.0
  %3976 = vmatpush.msra.mxu0 0.0
  %3977 = vmatpush.msra.mxu0 0.0
  %3978 = vmatpush.msra.mxu0 0.0
  %3979 = vmatpush.msra.mxu0 0.0
  %3980 = vmatpush.msra.mxu0 0.0
  %3981 = vmatpush.msra.mxu0 0.0
  %3982 = vmatpush.msra.mxu0 0.0
  %3983 = vmatpush.msra.mxu0 %v3944
  %3984 = vmatmul.f32.gmra.mxu0 %v1437
  %v3985 = vpop.f32.mrf.mxu0
  %v3986 = vadd.f32 0.0, %v3985
  %3987 = vdwg.mxu0
  %v3988 = vadd.f32 %v3939, %v3966
  %v3989 = vadd.f32 %v3940, %v3986
  %3990 = vrot.lane.b32.xlu0 %v3703, 96
  %v3991 = vpop.permute.xlu0 %3990
  %3992 = vrot.lane.b32.xlu0 %v3704, 96
  %v3993 = vpop.permute.xlu0 %3992
  %v3994 = vsel %vm1009, %v3991, %v3993
  %3997 = vmatpush.msra.mxu0 0.0
  %3998 = vmatpush.msra.mxu0 0.0
  %3999 = vmatpush.msra.mxu0 0.0
  %4000 = vmatpush.msra.mxu0 0.0
  %4001 = vmatpush.msra.mxu0 0.0
  %4002 = vmatpush.msra.mxu0 0.0
  %4003 = vmatpush.msra.mxu0 0.0
  %4004 = vmatpush.msra.mxu0 0.0
  %4005 = vmatpush.msra.mxu0 0.0
  %4006 = vmatpush.msra.mxu0 0.0
  %4007 = vmatpush.msra.mxu0 0.0
  %4008 = vmatpush.msra.mxu0 0.0
  %4009 = vmatpush.msra.mxu0 0.0
  %4010 = vmatpush.msra.mxu0 0.0
  %4011 = vmatpush.msra.mxu0 0.0
  %4012 = vmatpush.msra.mxu0 %v3994
  %4013 = vmatmul.f32.gmra.mxu0 %v1489
  %v4014 = vpop.f32.mrf.mxu0
  %v4015 = vadd.f32 0.0, %v4014
  %4016 = vdwg.mxu0
  %4017 = vmatpush.msra.mxu0 0.0
  %4018 = vmatpush.msra.mxu0 0.0
  %4019 = vmatpush.msra.mxu0 0.0
  %4020 = vmatpush.msra.mxu0 0.0
  %4021 = vmatpush.msra.mxu0 0.0
  %4022 = vmatpush.msra.mxu0 0.0
  %4023 = vmatpush.msra.mxu0 0.0
  %4024 = vmatpush.msra.mxu0 0.0
  %4025 = vmatpush.msra.mxu0 0.0
  %4026 = vmatpush.msra.mxu0 0.0
  %4027 = vmatpush.msra.mxu0 0.0
  %4028 = vmatpush.msra.mxu0 0.0
  %4029 = vmatpush.msra.mxu0 0.0
  %4030 = vmatpush.msra.mxu0 0.0
  %4031 = vmatpush.msra.mxu0 0.0
  %4032 = vmatpush.msra.mxu0 %v3993
  %4033 = vmatmul.f32.gmra.mxu0 %v1489
  %v4034 = vpop.f32.mrf.mxu0
  %v4035 = vadd.f32 0.0, %v4034
  %4036 = vdwg.mxu0
  %v4037 = vadd.f32 %v3988, %v4015
  %v4038 = vadd.f32 %v3989, %v4035
  %4039 = vrot.lane.b32.xlu0 %v3703, 95
  %v4040 = vpop.permute.xlu0 %4039
  %4041 = vrot.lane.b32.xlu0 %v3704, 95
  %v4042 = vpop.permute.xlu0 %4041
  %v4043 = vsel %vm1062, %v4040, %v4042
  %4046 = vmatpush.msra.mxu0 0.0
  %4047 = vmatpush.msra.mxu0 0.0
  %4048 = vmatpush.msra.mxu0 0.0
  %4049 = vmatpush.msra.mxu0 0.0
  %4050 = vmatpush.msra.mxu0 0.0
  %4051 = vmatpush.msra.mxu0 0.0
  %4052 = vmatpush.msra.mxu0 0.0
  %4053 = vmatpush.msra.mxu0 0.0
  %4054 = vmatpush.msra.mxu0 0.0
  %4055 = vmatpush.msra.mxu0 0.0
  %4056 = vmatpush.msra.mxu0 0.0
  %4057 = vmatpush.msra.mxu0 0.0
  %4058 = vmatpush.msra.mxu0 0.0
  %4059 = vmatpush.msra.mxu0 0.0
  %4060 = vmatpush.msra.mxu0 0.0
  %4061 = vmatpush.msra.mxu0 %v4043
  %4062 = vmatmul.f32.gmra.mxu0 %v1541
  %v4063 = vpop.f32.mrf.mxu0
  %v4064 = vadd.f32 0.0, %v4063
  %4065 = vdwg.mxu0
  %4066 = vmatpush.msra.mxu0 0.0
  %4067 = vmatpush.msra.mxu0 0.0
  %4068 = vmatpush.msra.mxu0 0.0
  %4069 = vmatpush.msra.mxu0 0.0
  %4070 = vmatpush.msra.mxu0 0.0
  %4071 = vmatpush.msra.mxu0 0.0
  %4072 = vmatpush.msra.mxu0 0.0
  %4073 = vmatpush.msra.mxu0 0.0
  %4074 = vmatpush.msra.mxu0 0.0
  %4075 = vmatpush.msra.mxu0 0.0
  %4076 = vmatpush.msra.mxu0 0.0
  %4077 = vmatpush.msra.mxu0 0.0
  %4078 = vmatpush.msra.mxu0 0.0
  %4079 = vmatpush.msra.mxu0 0.0
  %4080 = vmatpush.msra.mxu0 0.0
  %4081 = vmatpush.msra.mxu0 %v4042
  %4082 = vmatmul.f32.gmra.mxu0 %v1541
  %v4083 = vpop.f32.mrf.mxu0
  %v4084 = vadd.f32 0.0, %v4083
  %4085 = vdwg.mxu0
  %v4086 = vadd.f32 %v4037, %v4064
  %v4087 = vadd.f32 %v4038, %v4084
  %4088 = vrot.lane.b32.xlu0 %v3703, 94
  %v4089 = vpop.permute.xlu0 %4088
  %4090 = vrot.lane.b32.xlu0 %v3704, 94
  %v4091 = vpop.permute.xlu0 %4090
  %v4092 = vsel %vm1115, %v4089, %v4091
  %4095 = vmatpush.msra.mxu0 0.0
  %4096 = vmatpush.msra.mxu0 0.0
  %4097 = vmatpush.msra.mxu0 0.0
  %4098 = vmatpush.msra.mxu0 0.0
  %4099 = vmatpush.msra.mxu0 0.0
  %4100 = vmatpush.msra.mxu0 0.0
  %4101 = vmatpush.msra.mxu0 0.0
  %4102 = vmatpush.msra.mxu0 0.0
  %4103 = vmatpush.msra.mxu0 0.0
  %4104 = vmatpush.msra.mxu0 0.0
  %4105 = vmatpush.msra.mxu0 0.0
  %4106 = vmatpush.msra.mxu0 0.0
  %4107 = vmatpush.msra.mxu0 0.0
  %4108 = vmatpush.msra.mxu0 0.0
  %4109 = vmatpush.msra.mxu0 0.0
  %4110 = vmatpush.msra.mxu0 %v4092
  %4111 = vmatmul.f32.gmra.mxu0 %v1593
  %v4112 = vpop.f32.mrf.mxu0
  %v4113 = vadd.f32 0.0, %v4112
  %4114 = vdwg.mxu0
  %4115 = vmatpush.msra.mxu0 0.0
  %4116 = vmatpush.msra.mxu0 0.0
  %4117 = vmatpush.msra.mxu0 0.0
  %4118 = vmatpush.msra.mxu0 0.0
  %4119 = vmatpush.msra.mxu0 0.0
  %4120 = vmatpush.msra.mxu0 0.0
  %4121 = vmatpush.msra.mxu0 0.0
  %4122 = vmatpush.msra.mxu0 0.0
  %4123 = vmatpush.msra.mxu0 0.0
  %4124 = vmatpush.msra.mxu0 0.0
  %4125 = vmatpush.msra.mxu0 0.0
  %4126 = vmatpush.msra.mxu0 0.0
  %4127 = vmatpush.msra.mxu0 0.0
  %4128 = vmatpush.msra.mxu0 0.0
  %4129 = vmatpush.msra.mxu0 0.0
  %4130 = vmatpush.msra.mxu0 %v4091
  %4131 = vmatmul.f32.gmra.mxu0 %v1593
  %v4132 = vpop.f32.mrf.mxu0
  %v4133 = vadd.f32 0.0, %v4132
  %4134 = vdwg.mxu0
  %v4135 = vadd.f32 %v4086, %v4113
  %v4136 = vadd.f32 %v4087, %v4133
  %v4137 = vadd.f32 %v4135, %v1640
  %v4138 = vadd.f32 %v4136, %v1640
  %v4139 = vmax.f32 %v4137, 0.0
  %v4140 = vmax.f32 %v4138, 0.0
  %4141 = vst [vmem:[#allocation4] sm:$0xff] %v4139
  %4142 = vst.msk [vmem:[#allocation4 + $0x8] sm:$0xff] %vm1647, %v4140
  %v4143 = vld [vmem:[#allocation4] sm:$0xff]
  %v4144 = vld [vmem:[#allocation4 + $0x8] sm:$0xff]
  %4147 = vrot.lane.b32.xlu0 %v4143, 127
  %v4148 = vpop.permute.xlu0 %4147
  %4149 = vrot.lane.b32.xlu0 %v4144, 127
  %v4150 = vpop.permute.xlu0 %4149
  %v4151 = vsel %vm279, %v4148, %v4150
  %4154 = vmatpush.msra.mxu0 0.0
  %4155 = vmatpush.msra.mxu0 0.0
  %4156 = vmatpush.msra.mxu0 0.0
  %4157 = vmatpush.msra.mxu0 0.0
  %4158 = vmatpush.msra.mxu0 0.0
  %4159 = vmatpush.msra.mxu0 0.0
  %4160 = vmatpush.msra.mxu0 0.0
  %4161 = vmatpush.msra.mxu0 0.0
  %4162 = vmatpush.msra.mxu0 0.0
  %4163 = vmatpush.msra.mxu0 0.0
  %4164 = vmatpush.msra.mxu0 0.0
  %4165 = vmatpush.msra.mxu0 0.0
  %4166 = vmatpush.msra.mxu0 0.0
  %4167 = vmatpush.msra.mxu0 0.0
  %4168 = vmatpush.msra.mxu0 0.0
  %4169 = vmatpush.msra.mxu0 %v4151
  %4170 = vmatmul.f32.gmra.mxu0 %v1661
  %v4171 = vpop.f32.mrf.mxu0
  %v4172 = vadd.f32 0.0, %v4171
  %4173 = vdwg.mxu0
  %4174 = vmatpush.msra.mxu0 0.0
  %4175 = vmatpush.msra.mxu0 0.0
  %4176 = vmatpush.msra.mxu0 0.0
  %4177 = vmatpush.msra.mxu0 0.0
  %4178 = vmatpush.msra.mxu0 0.0
  %4179 = vmatpush.msra.mxu0 0.0
  %4180 = vmatpush.msra.mxu0 0.0
  %4181 = vmatpush.msra.mxu0 0.0
  %4182 = vmatpush.msra.mxu0 0.0
  %4183 = vmatpush.msra.mxu0 0.0
  %4184 = vmatpush.msra.mxu0 0.0
  %4185 = vmatpush.msra.mxu0 0.0
  %4186 = vmatpush.msra.mxu0 0.0
  %4187 = vmatpush.msra.mxu0 0.0
  %4188 = vmatpush.msra.mxu0 0.0
  %4189 = vmatpush.msra.mxu0 %v4150
  %4190 = vmatmul.f32.gmra.mxu0 %v1661
  %v4191 = vpop.f32.mrf.mxu0
  %v4192 = vadd.f32 0.0, %v4191
  %4193 = vdwg.mxu0
  %4194 = vmatpush.msra.mxu0 0.0
  %4195 = vmatpush.msra.mxu0 0.0
  %4196 = vmatpush.msra.mxu0 0.0
  %4197 = vmatpush.msra.mxu0 0.0
  %4198 = vmatpush.msra.mxu0 0.0
  %4199 = vmatpush.msra.mxu0 0.0
  %4200 = vmatpush.msra.mxu0 0.0
  %4201 = vmatpush.msra.mxu0 0.0
  %4202 = vmatpush.msra.mxu0 0.0
  %4203 = vmatpush.msra.mxu0 0.0
  %4204 = vmatpush.msra.mxu0 0.0
  %4205 = vmatpush.msra.mxu0 0.0
  %4206 = vmatpush.msra.mxu0 0.0
  %4207 = vmatpush.msra.mxu0 0.0
  %4208 = vmatpush.msra.mxu0 0.0
  %4209 = vmatpush.msra.mxu0 %v4143
  %4210 = vmatmul.f32.gmra.mxu0 %v1704
  %v4211 = vpop.f32.mrf.mxu0
  %v4212 = vadd.f32 %v4172, %v4211
  %4213 = vdwg.mxu0
  %4214 = vmatpush.msra.mxu0 0.0
  %4215 = vmatpush.msra.mxu0 0.0
  %4216 = vmatpush.msra.mxu0 0.0
  %4217 = vmatpush.msra.mxu0 0.0
  %4218 = vmatpush.msra.mxu0 0.0
  %4219 = vmatpush.msra.mxu0 0.0
  %4220 = vmatpush.msra.mxu0 0.0
  %4221 = vmatpush.msra.mxu0 0.0
  %4222 = vmatpush.msra.mxu0 0.0
  %4223 = vmatpush.msra.mxu0 0.0
  %4224 = vmatpush.msra.mxu0 0.0
  %4225 = vmatpush.msra.mxu0 0.0
  %4226 = vmatpush.msra.mxu0 0.0
  %4227 = vmatpush.msra.mxu0 0.0
  %4228 = vmatpush.msra.mxu0 0.0
  %4229 = vmatpush.msra.mxu0 %v4144
  %4230 = vmatmul.f32.gmra.mxu0 %v1704
  %v4231 = vpop.f32.mrf.mxu0
  %v4232 = vadd.f32 %v4192, %v4231
  %4233 = vdwg.mxu0
  %4234 = vrot.lane.b32.xlu0 %v4143, 126
  %v4235 = vpop.permute.xlu0 %4234
  %4236 = vrot.lane.b32.xlu0 %v4144, 126
  %v4237 = vpop.permute.xlu0 %4236
  %v4238 = vsel %vm799, %v4235, %v4237
  %4241 = vmatpush.msra.mxu0 0.0
  %4242 = vmatpush.msra.mxu0 0.0
  %4243 = vmatpush.msra.mxu0 0.0
  %4244 = vmatpush.msra.mxu0 0.0
  %4245 = vmatpush.msra.mxu0 0.0
  %4246 = vmatpush.msra.mxu0 0.0
  %4247 = vmatpush.msra.mxu0 0.0
  %4248 = vmatpush.msra.mxu0 0.0
  %4249 = vmatpush.msra.mxu0 0.0
  %4250 = vmatpush.msra.mxu0 0.0
  %4251 = vmatpush.msra.mxu0 0.0
  %4252 = vmatpush.msra.mxu0 0.0
  %4253 = vmatpush.msra.mxu0 0.0
  %4254 = vmatpush.msra.mxu0 0.0
  %4255 = vmatpush.msra.mxu0 0.0
  %4256 = vmatpush.msra.mxu0 %v4238
  %4257 = vmatmul.f32.gmra.mxu0 %v1754
  %v4258 = vpop.f32.mrf.mxu0
  %v4259 = vadd.f32 0.0, %v4258
  %4260 = vdwg.mxu0
  %4261 = vmatpush.msra.mxu0 0.0
  %4262 = vmatpush.msra.mxu0 0.0
  %4263 = vmatpush.msra.mxu0 0.0
  %4264 = vmatpush.msra.mxu0 0.0
  %4265 = vmatpush.msra.mxu0 0.0
  %4266 = vmatpush.msra.mxu0 0.0
  %4267 = vmatpush.msra.mxu0 0.0
  %4268 = vmatpush.msra.mxu0 0.0
  %4269 = vmatpush.msra.mxu0 0.0
  %4270 = vmatpush.msra.mxu0 0.0
  %4271 = vmatpush.msra.mxu0 0.0
  %4272 = vmatpush.msra.mxu0 0.0
  %4273 = vmatpush.msra.mxu0 0.0
  %4274 = vmatpush.msra.mxu0 0.0
  %4275 = vmatpush.msra.mxu0 0.0
  %4276 = vmatpush.msra.mxu0 %v4237
  %4277 = vmatmul.f32.gmra.mxu0 %v1754
  %v4278 = vpop.f32.mrf.mxu0
  %v4279 = vadd.f32 0.0, %v4278
  %4280 = vdwg.mxu0
  %v4281 = vadd.f32 %v4212, %v4259
  %v4282 = vadd.f32 %v4232, %v4279
  %4283 = vrot.lane.b32.xlu0 %v4143, 112
  %v4284 = vpop.permute.xlu0 %4283
  %4285 = vrot.lane.b32.xlu0 %v4144, 112
  %v4286 = vpop.permute.xlu0 %4285
  %v4287 = vsel %vm506, %v4284, %v4286
  %4290 = vmatpush.msra.mxu0 0.0
  %4291 = vmatpush.msra.mxu0 0.0
  %4292 = vmatpush.msra.mxu0 0.0
  %4293 = vmatpush.msra.mxu0 0.0
  %4294 = vmatpush.msra.mxu0 0.0
  %4295 = vmatpush.msra.mxu0 0.0
  %4296 = vmatpush.msra.mxu0 0.0
  %4297 = vmatpush.msra.mxu0 0.0
  %4298 = vmatpush.msra.mxu0 0.0
  %4299 = vmatpush.msra.mxu0 0.0
  %4300 = vmatpush.msra.mxu0 0.0
  %4301 = vmatpush.msra.mxu0 0.0
  %4302 = vmatpush.msra.mxu0 0.0
  %4303 = vmatpush.msra.mxu0 0.0
  %4304 = vmatpush.msra.mxu0 0.0
  %4305 = vmatpush.msra.mxu0 %v4287
  %4306 = vmatmul.f32.gmra.mxu0 %v1806
  %v4307 = vpop.f32.mrf.mxu0
  %v4308 = vadd.f32 0.0, %v4307
  %4309 = vdwg.mxu0
  %4310 = vmatpush.msra.mxu0 0.0
  %4311 = vmatpush.msra.mxu0 0.0
  %4312 = vmatpush.msra.mxu0 0.0
  %4313 = vmatpush.msra.mxu0 0.0
  %4314 = vmatpush.msra.mxu0 0.0
  %4315 = vmatpush.msra.mxu0 0.0
  %4316 = vmatpush.msra.mxu0 0.0
  %4317 = vmatpush.msra.mxu0 0.0
  %4318 = vmatpush.msra.mxu0 0.0
  %4319 = vmatpush.msra.mxu0 0.0
  %4320 = vmatpush.msra.mxu0 0.0
  %4321 = vmatpush.msra.mxu0 0.0
  %4322 = vmatpush.msra.mxu0 0.0
  %4323 = vmatpush.msra.mxu0 0.0
  %4324 = vmatpush.msra.mxu0 0.0
  %4325 = vmatpush.msra.mxu0 %v4286
  %4326 = vmatmul.f32.gmra.mxu0 %v1806
  %v4327 = vpop.f32.mrf.mxu0
  %v4328 = vadd.f32 0.0, %v4327
  %4329 = vdwg.mxu0
  %v4330 = vadd.f32 %v4281, %v4308
  %v4331 = vadd.f32 %v4282, %v4328
  %4332 = vrot.lane.b32.xlu0 %v4143, 111
  %v4333 = vpop.permute.xlu0 %4332
  %4334 = vrot.lane.b32.xlu0 %v4144, 111
  %v4335 = vpop.permute.xlu0 %4334
  %v4336 = vsel %vm632, %v4333, %v4335
  %4339 = vmatpush.msra.mxu0 0.0
  %4340 = vmatpush.msra.mxu0 0.0
  %4341 = vmatpush.msra.mxu0 0.0
  %4342 = vmatpush.msra.mxu0 0.0
  %4343 = vmatpush.msra.mxu0 0.0
  %4344 = vmatpush.msra.mxu0 0.0
  %4345 = vmatpush.msra.mxu0 0.0
  %4346 = vmatpush.msra.mxu0 0.0
  %4347 = vmatpush.msra.mxu0 0.0
  %4348 = vmatpush.msra.mxu0 0.0
  %4349 = vmatpush.msra.mxu0 0.0
  %4350 = vmatpush.msra.mxu0 0.0
  %4351 = vmatpush.msra.mxu0 0.0
  %4352 = vmatpush.msra.mxu0 0.0
  %4353 = vmatpush.msra.mxu0 0.0
  %4354 = vmatpush.msra.mxu0 %v4336
  %4355 = vmatmul.f32.gmra.mxu0 %v1858
  %v4356 = vpop.f32.mrf.mxu0
  %v4357 = vadd.f32 0.0, %v4356
  %4358 = vdwg.mxu0
  %4359 = vmatpush.msra.mxu0 0.0
  %4360 = vmatpush.msra.mxu0 0.0
  %4361 = vmatpush.msra.mxu0 0.0
  %4362 = vmatpush.msra.mxu0 0.0
  %4363 = vmatpush.msra.mxu0 0.0
  %4364 = vmatpush.msra.mxu0 0.0
  %4365 = vmatpush.msra.mxu0 0.0
  %4366 = vmatpush.msra.mxu0 0.0
  %4367 = vmatpush.msra.mxu0 0.0
  %4368 = vmatpush.msra.mxu0 0.0
  %4369 = vmatpush.msra.mxu0 0.0
  %4370 = vmatpush.msra.mxu0 0.0
  %4371 = vmatpush.msra.mxu0 0.0
  %4372 = vmatpush.msra.mxu0 0.0
  %4373 = vmatpush.msra.mxu0 0.0
  %4374 = vmatpush.msra.mxu0 %v4335
  %4375 = vmatmul.f32.gmra.mxu0 %v1858
  %v4376 = vpop.f32.mrf.mxu0
  %v4377 = vadd.f32 0.0, %v4376
  %4378 = vdwg.mxu0
  %v4379 = vadd.f32 %v4330, %v4357
  %v4380 = vadd.f32 %v4331, %v4377
  %4381 = vrot.lane.b32.xlu0 %v4143, 110
  %v4382 = vpop.permute.xlu0 %4381
  %4383 = vrot.lane.b32.xlu0 %v4144, 110
  %v4384 = vpop.permute.xlu0 %4383
  %v4385 = vsel %vm956, %v4382, %v4384
  %4388 = vmatpush.msra.mxu0 0.0
  %4389 = vmatpush.msra.mxu0 0.0
  %4390 = vmatpush.msra.mxu0 0.0
  %4391 = vmatpush.msra.mxu0 0.0
  %4392 = vmatpush.msra.mxu0 0.0
  %4393 = vmatpush.msra.mxu0 0.0
  %4394 = vmatpush.msra.mxu0 0.0
  %4395 = vmatpush.msra.mxu0 0.0
  %4396 = vmatpush.msra.mxu0 0.0
  %4397 = vmatpush.msra.mxu0 0.0
  %4398 = vmatpush.msra.mxu0 0.0
  %4399 = vmatpush.msra.mxu0 0.0
  %4400 = vmatpush.msra.mxu0 0.0
  %4401 = vmatpush.msra.mxu0 0.0
  %4402 = vmatpush.msra.mxu0 0.0
  %4403 = vmatpush.msra.mxu0 %v4385
  %4404 = vmatmul.f32.gmra.mxu0 %v1910
  %v4405 = vpop.f32.mrf.mxu0
  %v4406 = vadd.f32 0.0, %v4405
  %4407 = vdwg.mxu0
  %4408 = vmatpush.msra.mxu0 0.0
  %4409 = vmatpush.msra.mxu0 0.0
  %4410 = vmatpush.msra.mxu0 0.0
  %4411 = vmatpush.msra.mxu0 0.0
  %4412 = vmatpush.msra.mxu0 0.0
  %4413 = vmatpush.msra.mxu0 0.0
  %4414 = vmatpush.msra.mxu0 0.0
  %4415 = vmatpush.msra.mxu0 0.0
  %4416 = vmatpush.msra.mxu0 0.0
  %4417 = vmatpush.msra.mxu0 0.0
  %4418 = vmatpush.msra.mxu0 0.0
  %4419 = vmatpush.msra.mxu0 0.0
  %4420 = vmatpush.msra.mxu0 0.0
  %4421 = vmatpush.msra.mxu0 0.0
  %4422 = vmatpush.msra.mxu0 0.0
  %4423 = vmatpush.msra.mxu0 %v4384
  %4424 = vmatmul.f32.gmra.mxu0 %v1910
  %v4425 = vpop.f32.mrf.mxu0
  %v4426 = vadd.f32 0.0, %v4425
  %4427 = vdwg.mxu0
  %v4428 = vadd.f32 %v4379, %v4406
  %v4429 = vadd.f32 %v4380, %v4426
  %4430 = vrot.lane.b32.xlu0 %v4143, 96
  %v4431 = vpop.permute.xlu0 %4430
  %4432 = vrot.lane.b32.xlu0 %v4144, 96
  %v4433 = vpop.permute.xlu0 %4432
  %v4434 = vsel %vm1009, %v4431, %v4433
  %4437 = vmatpush.msra.mxu0 0.0
  %4438 = vmatpush.msra.mxu0 0.0
  %4439 = vmatpush.msra.mxu0 0.0
  %4440 = vmatpush.msra.mxu0 0.0
  %4441 = vmatpush.msra.mxu0 0.0
  %4442 = vmatpush.msra.mxu0 0.0
  %4443 = vmatpush.msra.mxu0 0.0
  %4444 = vmatpush.msra.mxu0 0.0
  %4445 = vmatpush.msra.mxu0 0.0
  %4446 = vmatpush.msra.mxu0 0.0
  %4447 = vmatpush.msra.mxu0 0.0
  %4448 = vmatpush.msra.mxu0 0.0
  %4449 = vmatpush.msra.mxu0 0.0
  %4450 = vmatpush.msra.mxu0 0.0
  %4451 = vmatpush.msra.mxu0 0.0
  %4452 = vmatpush.msra.mxu0 %v4434
  %4453 = vmatmul.f32.gmra.mxu0 %v1962
  %v4454 = vpop.f32.mrf.mxu0
  %v4455 = vadd.f32 0.0, %v4454
  %4456 = vdwg.mxu0
  %4457 = vmatpush.msra.mxu0 0.0
  %4458 = vmatpush.msra.mxu0 0.0
  %4459 = vmatpush.msra.mxu0 0.0
  %4460 = vmatpush.msra.mxu0 0.0
  %4461 = vmatpush.msra.mxu0 0.0
  %4462 = vmatpush.msra.mxu0 0.0
  %4463 = vmatpush.msra.mxu0 0.0
  %4464 = vmatpush.msra.mxu0 0.0
  %4465 = vmatpush.msra.mxu0 0.0
  %4466 = vmatpush.msra.mxu0 0.0
  %4467 = vmatpush.msra.mxu0 0.0
  %4468 = vmatpush.msra.mxu0 0.0
  %4469 = vmatpush.msra.mxu0 0.0
  %4470 = vmatpush.msra.mxu0 0.0
  %4471 = vmatpush.msra.mxu0 0.0
  %4472 = vmatpush.msra.mxu0 %v4433
  %4473 = vmatmul.f32.gmra.mxu0 %v1962
  %v4474 = vpop.f32.mrf.mxu0
  %v4475 = vadd.f32 0.0, %v4474
  %4476 = vdwg.mxu0
  %v4477 = vadd.f32 %v4428, %v4455
  %v4478 = vadd.f32 %v4429, %v4475
  %4479 = vrot.lane.b32.xlu0 %v4143, 95
  %v4480 = vpop.permute.xlu0 %4479
  %4481 = vrot.lane.b32.xlu0 %v4144, 95
  %v4482 = vpop.permute.xlu0 %4481
  %v4483 = vsel %vm1062, %v4480, %v4482
  %4486 = vmatpush.msra.mxu0 0.0
  %4487 = vmatpush.msra.mxu0 0.0
  %4488 = vmatpush.msra.mxu0 0.0
  %4489 = vmatpush.msra.mxu0 0.0
  %4490 = vmatpush.msra.mxu0 0.0
  %4491 = vmatpush.msra.mxu0 0.0
  %4492 = vmatpush.msra.mxu0 0.0
  %4493 = vmatpush.msra.mxu0 0.0
  %4494 = vmatpush.msra.mxu0 0.0
  %4495 = vmatpush.msra.mxu0 0.0
  %4496 = vmatpush.msra.mxu0 0.0
  %4497 = vmatpush.msra.mxu0 0.0
  %4498 = vmatpush.msra.mxu0 0.0
  %4499 = vmatpush.msra.mxu0 0.0
  %4500 = vmatpush.msra.mxu0 0.0
  %4501 = vmatpush.msra.mxu0 %v4483
  %4502 = vmatmul.f32.gmra.mxu0 %v2014
  %v4503 = vpop.f32.mrf.mxu0
  %v4504 = vadd.f32 0.0, %v4503
  %4505 = vdwg.mxu0
  %4506 = vmatpush.msra.mxu0 0.0
  %4507 = vmatpush.msra.mxu0 0.0
  %4508 = vmatpush.msra.mxu0 0.0
  %4509 = vmatpush.msra.mxu0 0.0
  %4510 = vmatpush.msra.mxu0 0.0
  %4511 = vmatpush.msra.mxu0 0.0
  %4512 = vmatpush.msra.mxu0 0.0
  %4513 = vmatpush.msra.mxu0 0.0
  %4514 = vmatpush.msra.mxu0 0.0
  %4515 = vmatpush.msra.mxu0 0.0
  %4516 = vmatpush.msra.mxu0 0.0
  %4517 = vmatpush.msra.mxu0 0.0
  %4518 = vmatpush.msra.mxu0 0.0
  %4519 = vmatpush.msra.mxu0 0.0
  %4520 = vmatpush.msra.mxu0 0.0
  %4521 = vmatpush.msra.mxu0 %v4482
  %4522 = vmatmul.f32.gmra.mxu0 %v2014
  %v4523 = vpop.f32.mrf.mxu0
  %v4524 = vadd.f32 0.0, %v4523
  %4525 = vdwg.mxu0
  %v4526 = vadd.f32 %v4477, %v4504
  %v4527 = vadd.f32 %v4478, %v4524
  %4528 = vrot.lane.b32.xlu0 %v4143, 94
  %v4529 = vpop.permute.xlu0 %4528
  %4530 = vrot.lane.b32.xlu0 %v4144, 94
  %v4531 = vpop.permute.xlu0 %4530
  %v4532 = vsel %vm1115, %v4529, %v4531
  %4535 = vmatpush.msra.mxu0 0.0
  %4536 = vmatpush.msra.mxu0 0.0
  %4537 = vmatpush.msra.mxu0 0.0
  %4538 = vmatpush.msra.mxu0 0.0
  %4539 = vmatpush.msra.mxu0 0.0
  %4540 = vmatpush.msra.mxu0 0.0
  %4541 = vmatpush.msra.mxu0 0.0
  %4542 = vmatpush.msra.mxu0 0.0
  %4543 = vmatpush.msra.mxu0 0.0
  %4544 = vmatpush.msra.mxu0 0.0
  %4545 = vmatpush.msra.mxu0 0.0
  %4546 = vmatpush.msra.mxu0 0.0
  %4547 = vmatpush.msra.mxu0 0.0
  %4548 = vmatpush.msra.mxu0 0.0
  %4549 = vmatpush.msra.mxu0 0.0
  %4550 = vmatpush.msra.mxu0 %v4532
  %4551 = vmatmul.f32.gmra.mxu0 %v2066
  %v4552 = vpop.f32.mrf.mxu0
  %v4553 = vadd.f32 0.0, %v4552
  %4554 = vdwg.mxu0
  %4555 = vmatpush.msra.mxu0 0.0
  %4556 = vmatpush.msra.mxu0 0.0
  %4557 = vmatpush.msra.mxu0 0.0
  %4558 = vmatpush.msra.mxu0 0.0
  %4559 = vmatpush.msra.mxu0 0.0
  %4560 = vmatpush.msra.mxu0 0.0
  %4561 = vmatpush.msra.mxu0 0.0
  %4562 = vmatpush.msra.mxu0 0.0
  %4563 = vmatpush.msra.mxu0 0.0
  %4564 = vmatpush.msra.mxu0 0.0
  %4565 = vmatpush.msra.mxu0 0.0
  %4566 = vmatpush.msra.mxu0 0.0
  %4567 = vmatpush.msra.mxu0 0.0
  %4568 = vmatpush.msra.mxu0 0.0
  %4569 = vmatpush.msra.mxu0 0.0
  %4570 = vmatpush.msra.mxu0 %v4531
  %4571 = vmatmul.f32.gmra.mxu0 %v2066
  %v4572 = vpop.f32.mrf.mxu0
  %v4573 = vadd.f32 0.0, %v4572
  %4574 = vdwg.mxu0
  %v4575 = vadd.f32 %v4526, %v4553
  %v4576 = vadd.f32 %v4527, %v4573
  %v4577 = vadd.f32 %v4575, %v2113
  %v4578 = vadd.f32 %v4576, %v2113
  %v4579 = vmax.f32 %v4577, 0.0
  %v4580 = vmax.f32 %v4578, 0.0
  %4581 = vst [vmem:[#allocation5] sm:$0xff] %v4579
  %4582 = vst.msk [vmem:[#allocation5 + $0x8] sm:$0xff] %vm2120, %v4580
  %v4583 = vld [vmem:[#allocation5] ss:$8 sm:$0x3]
  %v4584 = vld [vmem:[%s12] sm:$0xff]
  %v4585 = vld [vmem:[%s12 + $0x8] sm:$0xff]
  %v4586 = vld [vmem:[%s12 + $0x10] sm:$0xff]
  %v4587 = vld [vmem:[%s12 + $0x18] sm:$0xff]
  %v4588 = vld [vmem:[%s12 + $0x20] sm:$0xff]
  %v4589 = vld [vmem:[%s12 + $0x28] sm:$0xff]
  %v4590 = vld [vmem:[%s12 + $0x30] sm:$0xff]
  %v4591 = vld [vmem:[%s12 + $0x38] sm:$0xff]
  %v4592 = vld [vmem:[%s12 + $0x40] sm:$0xff]
  %v4593 = vld [vmem:[%s12 + $0x48] sm:$0xff]
  %v4594 = vld [vmem:[%s12 + $0x50] sm:$0xff]
  %v4595 = vld [vmem:[%s12 + $0x58] sm:$0xff]
  %v4596 = vld [vmem:[%s12 + $0x60] sm:$0xff]
  %v4597 = vld [vmem:[%s12 + $0x68] sm:$0xff]
  %v4598 = vld [vmem:[%s12 + $0x70] sm:$0xff]
  %v4599 = vld [vmem:[%s12 + $0x78] sm:$0xff]
  %v4600 = vld [vmem:[%s12 + $0x80] sm:$0xff]
  %v4601 = vld [vmem:[%s12 + $0x88] sm:$0xff]
  %v4602 = vld [vmem:[%s12 + $0x90] sm:$0xff]
  %v4603 = vld [vmem:[%s12 + $0x98] sm:$0xff]
  %v4604 = vld [vmem:[%s12 + $0xa0] sm:$0xff]
  %v4605 = vld [vmem:[%s12 + $0xa8] sm:$0xff]
  %v4606 = vld [vmem:[%s12 + $0xb0] sm:$0xff]
  %v4607 = vld [vmem:[%s12 + $0xb8] sm:$0xff]
  %v4608 = vld [vmem:[%s12 + $0xc0] sm:$0xff]
  %v4609 = vld [vmem:[%s12 + $0xc8] sm:$0xff]
  %v4610 = vld [vmem:[%s12 + $0xd0] sm:$0xff]
  %v4611 = vld [vmem:[%s12 + $0xd8] sm:$0xff]
  %v4612 = vld [vmem:[%s12 + $0xe0] sm:$0xff]
  %v4613 = vld [vmem:[%s12 + $0xe8] sm:$0xff]
  %v4614 = vld [vmem:[%s12 + $0xf0] sm:$0xff]
  %v4615 = vld [vmem:[%s12 + $0xf8] sm:$0xff]
  %v4617 = vperm.slane %v4583, 0
  %v4618 = vperm.slane %v4583, 1
  %4621 = vmatpush.msra.mxu0 %v4599
  %4622 = vmatpush.msra.mxu0 %v4598
  %4623 = vmatpush.msra.mxu0 %v4597
  %4624 = vmatpush.msra.mxu0 %v4596
  %4625 = vmatpush.msra.mxu0 %v4595
  %4626 = vmatpush.msra.mxu0 %v4594
  %4627 = vmatpush.msra.mxu0 %v4593
  %4628 = vmatpush.msra.mxu0 %v4592
  %4629 = vmatpush.msra.mxu0 %v4591
  %4630 = vmatpush.msra.mxu0 %v4590
  %4631 = vmatpush.msra.mxu0 %v4589
  %4632 = vmatpush.msra.mxu0 %v4588
  %4633 = vmatpush.msra.mxu0 %v4587
  %4634 = vmatpush.msra.mxu0 %v4586
  %4635 = vmatpush.msra.mxu0 %v4585
  %4636 = vmatpush.msra.mxu0 %v4584
  %4637 = vmatmul.f32.gmra.mxu0 %v4617
  %v4638 = vpop.f32.mrf.mxu0
  %v4639 = vadd.f32 0.0, %v4638
  %4640 = vdwg.mxu0
  %4641 = vmatpush.msra.mxu0 %v4615
  %4642 = vmatpush.msra.mxu0 %v4614
  %4643 = vmatpush.msra.mxu0 %v4613
  %4644 = vmatpush.msra.mxu0 %v4612
  %4645 = vmatpush.msra.mxu0 %v4611
  %4646 = vmatpush.msra.mxu0 %v4610
  %4647 = vmatpush.msra.mxu0 %v4609
  %4648 = vmatpush.msra.mxu0 %v4608
  %4649 = vmatpush.msra.mxu0 %v4607
  %4650 = vmatpush.msra.mxu0 %v4606
  %4651 = vmatpush.msra.mxu0 %v4605
  %4652 = vmatpush.msra.mxu0 %v4604
  %4653 = vmatpush.msra.mxu0 %v4603
  %4654 = vmatpush.msra.mxu0 %v4602
  %4655 = vmatpush.msra.mxu0 %v4601
  %4656 = vmatpush.msra.mxu0 %v4600
  %4657 = vmatmul.f32.gmra.mxu0 %v4618
  %v4658 = vpop.f32.mrf.mxu0
  %v4659 = vadd.f32 %v4639, %v4658
  %4660 = vdwg.mxu0
  %v4661 = vadd.f32 %v163, %v4659
  %v4662 = vld [vmem:[%s2201] ss:$8 sm:$0x3]
  %v4663 = vld [vmem:[%s12 + $0x100] sm:$0xff]
  %v4664 = vld [vmem:[%s12 + $0x108] sm:$0xff]
  %v4665 = vld [vmem:[%s12 + $0x110] sm:$0xff]
  %v4666 = vld [vmem:[%s12 + $0x118] sm:$0xff]
  %v4667 = vld [vmem:[%s12 + $0x120] sm:$0xff]
  %v4668 = vld [vmem:[%s12 + $0x128] sm:$0xff]
  %v4669 = vld [vmem:[%s12 + $0x130] sm:$0xff]
  %v4670 = vld [vmem:[%s12 + $0x138] sm:$0xff]
  %v4671 = vld [vmem:[%s12 + $0x140] sm:$0xff]
  %v4672 = vld [vmem:[%s12 + $0x148] sm:$0xff]
  %v4673 = vld [vmem:[%s12 + $0x150] sm:$0xff]
  %v4674 = vld [vmem:[%s12 + $0x158] sm:$0xff]
  %v4675 = vld [vmem:[%s12 + $0x160] sm:$0xff]
  %v4676 = vld [vmem:[%s12 + $0x168] sm:$0xff]
  %v4677 = vld [vmem:[%s12 + $0x170] sm:$0xff]
  %v4678 = vld [vmem:[%s12 + $0x178] sm:$0xff]
  %v4679 = vld [vmem:[%s12 + $0x180] sm:$0xff]
  %v4680 = vld [vmem:[%s12 + $0x188] sm:$0xff]
  %v4681 = vld [vmem:[%s12 + $0x190] sm:$0xff]
  %v4682 = vld [vmem:[%s12 + $0x198] sm:$0xff]
  %v4683 = vld [vmem:[%s12 + $0x1a0] sm:$0xff]
  %v4684 = vld [vmem:[%s12 + $0x1a8] sm:$0xff]
  %v4685 = vld [vmem:[%s12 + $0x1b0] sm:$0xff]
  %v4686 = vld [vmem:[%s12 + $0x1b8] sm:$0xff]
  %v4687 = vld [vmem:[%s12 + $0x1c0] sm:$0xff]
  %v4688 = vld [vmem:[%s12 + $0x1c8] sm:$0xff]
  %v4689 = vld [vmem:[%s12 + $0x1d0] sm:$0xff]
  %v4690 = vld [vmem:[%s12 + $0x1d8] sm:$0xff]
  %v4691 = vld [vmem:[%s12 + $0x1e0] sm:$0xff]
  %v4692 = vld [vmem:[%s12 + $0x1e8] sm:$0xff]
  %v4693 = vld [vmem:[%s12 + $0x1f0] sm:$0xff]
  %v4694 = vld [vmem:[%s12 + $0x1f8] sm:$0xff]
  %v4696 = vperm.slane %v4662, 0
  %v4697 = vperm.slane %v4662, 1
  %4700 = vmatpush.msra.mxu0 %v4678
  %4701 = vmatpush.msra.mxu0 %v4677
  %4702 = vmatpush.msra.mxu0 %v4676
  %4703 = vmatpush.msra.mxu0 %v4675
  %4704 = vmatpush.msra.mxu0 %v4674
  %4705 = vmatpush.msra.mxu0 %v4673
  %4706 = vmatpush.msra.mxu0 %v4672
  %4707 = vmatpush.msra.mxu0 %v4671
  %4708 = vmatpush.msra.mxu0 %v4670
  %4709 = vmatpush.msra.mxu0 %v4669
  %4710 = vmatpush.msra.mxu0 %v4668
  %4711 = vmatpush.msra.mxu0 %v4667
  %4712 = vmatpush.msra.mxu0 %v4666
  %4713 = vmatpush.msra.mxu0 %v4665
  %4714 = vmatpush.msra.mxu0 %v4664
  %4715 = vmatpush.msra.mxu0 %v4663
  %4716 = vmatmul.f32.gmra.mxu0 %v4696
  %v4717 = vpop.f32.mrf.mxu0
  %v4718 = vadd.f32 0.0, %v4717
  %4719 = vdwg.mxu0
  %4720 = vmatpush.msra.mxu0 %v4694
  %4721 = vmatpush.msra.mxu0 %v4693
  %4722 = vmatpush.msra.mxu0 %v4692
  %4723 = vmatpush.msra.mxu0 %v4691
  %4724 = vmatpush.msra.mxu0 %v4690
  %4725 = vmatpush.msra.mxu0 %v4689
  %4726 = vmatpush.msra.mxu0 %v4688
  %4727 = vmatpush.msra.mxu0 %v4687
  %4728 = vmatpush.msra.mxu0 %v4686
  %4729 = vmatpush.msra.mxu0 %v4685
  %4730 = vmatpush.msra.mxu0 %v4684
  %4731 = vmatpush.msra.mxu0 %v4683
  %4732 = vmatpush.msra.mxu0 %v4682
  %4733 = vmatpush.msra.mxu0 %v4681
  %4734 = vmatpush.msra.mxu0 %v4680
  %4735 = vmatpush.msra.mxu0 %v4679
  %4736 = vmatmul.f32.gmra.mxu0 %v4697
  %v4737 = vpop.f32.mrf.mxu0
  %v4738 = vadd.f32 %v4718, %v4737
  %4739 = vdwg.mxu0
  %v4740 = vadd.f32 %v4661, %v4738
  %v4741 = vld [vmem:[%s2281] ss:$8 sm:$0x3]
  %v4742 = vld [vmem:[%s12 + $0x200] sm:$0xff]
  %v4743 = vld [vmem:[%s12 + $0x208] sm:$0xff]
  %v4744 = vld [vmem:[%s12 + $0x210] sm:$0xff]
  %v4745 = vld [vmem:[%s12 + $0x218] sm:$0xff]
  %v4746 = vld [vmem:[%s12 + $0x220] sm:$0xff]
  %v4747 = vld [vmem:[%s12 + $0x228] sm:$0xff]
  %v4748 = vld [vmem:[%s12 + $0x230] sm:$0xff]
  %v4749 = vld [vmem:[%s12 + $0x238] sm:$0xff]
  %v4750 = vld [vmem:[%s12 + $0x240] sm:$0xff]
  %v4751 = vld [vmem:[%s12 + $0x248] sm:$0xff]
  %v4752 = vld [vmem:[%s12 + $0x250] sm:$0xff]
  %v4753 = vld [vmem:[%s12 + $0x258] sm:$0xff]
  %v4754 = vld [vmem:[%s12 + $0x260] sm:$0xff]
  %v4755 = vld [vmem:[%s12 + $0x268] sm:$0xff]
  %v4756 = vld [vmem:[%s12 + $0x270] sm:$0xff]
  %v4757 = vld [vmem:[%s12 + $0x278] sm:$0xff]
  %v4758 = vld [vmem:[%s12 + $0x280] sm:$0xff]
  %v4759 = vld [vmem:[%s12 + $0x288] sm:$0xff]
  %v4760 = vld [vmem:[%s12 + $0x290] sm:$0xff]
  %v4761 = vld [vmem:[%s12 + $0x298] sm:$0xff]
  %v4762 = vld [vmem:[%s12 + $0x2a0] sm:$0xff]
  %v4763 = vld [vmem:[%s12 + $0x2a8] sm:$0xff]
  %v4764 = vld [vmem:[%s12 + $0x2b0] sm:$0xff]
  %v4765 = vld [vmem:[%s12 + $0x2b8] sm:$0xff]
  %v4766 = vld [vmem:[%s12 + $0x2c0] sm:$0xff]
  %v4767 = vld [vmem:[%s12 + $0x2c8] sm:$0xff]
  %v4768 = vld [vmem:[%s12 + $0x2d0] sm:$0xff]
  %v4769 = vld [vmem:[%s12 + $0x2d8] sm:$0xff]
  %v4770 = vld [vmem:[%s12 + $0x2e0] sm:$0xff]
  %v4771 = vld [vmem:[%s12 + $0x2e8] sm:$0xff]
  %v4772 = vld [vmem:[%s12 + $0x2f0] sm:$0xff]
  %v4773 = vld [vmem:[%s12 + $0x2f8] sm:$0xff]
  %v4775 = vperm.slane %v4741, 0
  %v4776 = vperm.slane %v4741, 1
  %4779 = vmatpush.msra.mxu0 %v4757
  %4780 = vmatpush.msra.mxu0 %v4756
  %4781 = vmatpush.msra.mxu0 %v4755
  %4782 = vmatpush.msra.mxu0 %v4754
  %4783 = vmatpush.msra.mxu0 %v4753
  %4784 = vmatpush.msra.mxu0 %v4752
  %4785 = vmatpush.msra.mxu0 %v4751
  %4786 = vmatpush.msra.mxu0 %v4750
  %4787 = vmatpush.msra.mxu0 %v4749
  %4788 = vmatpush.msra.mxu0 %v4748
  %4789 = vmatpush.msra.mxu0 %v4747
  %4790 = vmatpush.msra.mxu0 %v4746
  %4791 = vmatpush.msra.mxu0 %v4745
  %4792 = vmatpush.msra.mxu0 %v4744
  %4793 = vmatpush.msra.mxu0 %v4743
  %4794 = vmatpush.msra.mxu0 %v4742
  %4795 = vmatmul.f32.gmra.mxu0 %v4775
  %v4796 = vpop.f32.mrf.mxu0
  %v4797 = vadd.f32 0.0, %v4796
  %4798 = vdwg.mxu0
  %4799 = vmatpush.msra.mxu0 %v4773
  %4800 = vmatpush.msra.mxu0 %v4772
  %4801 = vmatpush.msra.mxu0 %v4771
  %4802 = vmatpush.msra.mxu0 %v4770
  %4803 = vmatpush.msra.mxu0 %v4769
  %4804 = vmatpush.msra.mxu0 %v4768
  %4805 = vmatpush.msra.mxu0 %v4767
  %4806 = vmatpush.msra.mxu0 %v4766
  %4807 = vmatpush.msra.mxu0 %v4765
  %4808 = vmatpush.msra.mxu0 %v4764
  %4809 = vmatpush.msra.mxu0 %v4763
  %4810 = vmatpush.msra.mxu0 %v4762
  %4811 = vmatpush.msra.mxu0 %v4761
  %4812 = vmatpush.msra.mxu0 %v4760
  %4813 = vmatpush.msra.mxu0 %v4759
  %4814 = vmatpush.msra.mxu0 %v4758
  %4815 = vmatmul.f32.gmra.mxu0 %v4776
  %v4816 = vpop.f32.mrf.mxu0
  %v4817 = vadd.f32 %v4797, %v4816
  %4818 = vdwg.mxu0
  %v4819 = vadd.f32 %v4740, %v4817
  %v4820 = vld [vmem:[%s2361] ss:$8 sm:$0x3]
  %v4821 = vld [vmem:[%s12 + $0x300] sm:$0xff]
  %v4822 = vld [vmem:[%s12 + $0x308] sm:$0xff]
  %v4823 = vld [vmem:[%s12 + $0x310] sm:$0xff]
  %v4824 = vld [vmem:[%s12 + $0x318] sm:$0xff]
  %v4825 = vld [vmem:[%s12 + $0x320] sm:$0xff]
  %v4826 = vld [vmem:[%s12 + $0x328] sm:$0xff]
  %v4827 = vld [vmem:[%s12 + $0x330] sm:$0xff]
  %v4828 = vld [vmem:[%s12 + $0x338] sm:$0xff]
  %v4829 = vld [vmem:[%s12 + $0x340] sm:$0xff]
  %v4830 = vld [vmem:[%s12 + $0x348] sm:$0xff]
  %v4831 = vld [vmem:[%s12 + $0x350] sm:$0xff]
  %v4832 = vld [vmem:[%s12 + $0x358] sm:$0xff]
  %v4833 = vld [vmem:[%s12 + $0x360] sm:$0xff]
  %v4834 = vld [vmem:[%s12 + $0x368] sm:$0xff]
  %v4835 = vld [vmem:[%s12 + $0x370] sm:$0xff]
  %v4836 = vld [vmem:[%s12 + $0x378] sm:$0xff]
  %v4837 = vld [vmem:[%s12 + $0x380] sm:$0xff]
  %v4838 = vld [vmem:[%s12 + $0x388] sm:$0xff]
  %v4839 = vld [vmem:[%s12 + $0x390] sm:$0xff]
  %v4840 = vld [vmem:[%s12 + $0x398] sm:$0xff]
  %v4841 = vld [vmem:[%s12 + $0x3a0] sm:$0xff]
  %v4842 = vld [vmem:[%s12 + $0x3a8] sm:$0xff]
  %v4843 = vld [vmem:[%s12 + $0x3b0] sm:$0xff]
  %v4844 = vld [vmem:[%s12 + $0x3b8] sm:$0xff]
  %v4845 = vld [vmem:[%s12 + $0x3c0] sm:$0xff]
  %v4846 = vld [vmem:[%s12 + $0x3c8] sm:$0xff]
  %v4847 = vld [vmem:[%s12 + $0x3d0] sm:$0xff]
  %v4848 = vld [vmem:[%s12 + $0x3d8] sm:$0xff]
  %v4849 = vld [vmem:[%s12 + $0x3e0] sm:$0xff]
  %v4850 = vld [vmem:[%s12 + $0x3e8] sm:$0xff]
  %v4851 = vld [vmem:[%s12 + $0x3f0] sm:$0xff]
  %v4852 = vld [vmem:[%s12 + $0x3f8] sm:$0xff]
  %v4854 = vperm.slane %v4820, 0
  %v4855 = vperm.slane %v4820, 1
  %4858 = vmatpush.msra.mxu0 %v4836
  %4859 = vmatpush.msra.mxu0 %v4835
  %4860 = vmatpush.msra.mxu0 %v4834
  %4861 = vmatpush.msra.mxu0 %v4833
  %4862 = vmatpush.msra.mxu0 %v4832
  %4863 = vmatpush.msra.mxu0 %v4831
  %4864 = vmatpush.msra.mxu0 %v4830
  %4865 = vmatpush.msra.mxu0 %v4829
  %4866 = vmatpush.msra.mxu0 %v4828
  %4867 = vmatpush.msra.mxu0 %v4827
  %4868 = vmatpush.msra.mxu0 %v4826
  %4869 = vmatpush.msra.mxu0 %v4825
  %4870 = vmatpush.msra.mxu0 %v4824
  %4871 = vmatpush.msra.mxu0 %v4823
  %4872 = vmatpush.msra.mxu0 %v4822
  %4873 = vmatpush.msra.mxu0 %v4821
  %4874 = vmatmul.f32.gmra.mxu0 %v4854
  %v4875 = vpop.f32.mrf.mxu0
  %v4876 = vadd.f32 0.0, %v4875
  %4877 = vdwg.mxu0
  %4878 = vmatpush.msra.mxu0 %v4852
  %4879 = vmatpush.msra.mxu0 %v4851
  %4880 = vmatpush.msra.mxu0 %v4850
  %4881 = vmatpush.msra.mxu0 %v4849
  %4882 = vmatpush.msra.mxu0 %v4848
  %4883 = vmatpush.msra.mxu0 %v4847
  %4884 = vmatpush.msra.mxu0 %v4846
  %4885 = vmatpush.msra.mxu0 %v4845
  %4886 = vmatpush.msra.mxu0 %v4844
  %4887 = vmatpush.msra.mxu0 %v4843
  %4888 = vmatpush.msra.mxu0 %v4842
  %4889 = vmatpush.msra.mxu0 %v4841
  %4890 = vmatpush.msra.mxu0 %v4840
  %4891 = vmatpush.msra.mxu0 %v4839
  %4892 = vmatpush.msra.mxu0 %v4838
  %4893 = vmatpush.msra.mxu0 %v4837
  %4894 = vmatmul.f32.gmra.mxu0 %v4855
  %v4895 = vpop.f32.mrf.mxu0
  %v4896 = vadd.f32 %v4876, %v4895
  %4897 = vdwg.mxu0
  %v4898 = vadd.f32 %v4819, %v4896
  %v4899 = vld [vmem:[%s2441] ss:$8 sm:$0x3]
  %v4900 = vld [vmem:[%s12 + $0x400] sm:$0xff]
  %v4901 = vld [vmem:[%s12 + $0x408] sm:$0xff]
  %v4902 = vld [vmem:[%s12 + $0x410] sm:$0xff]
  %v4903 = vld [vmem:[%s12 + $0x418] sm:$0xff]
  %v4904 = vld [vmem:[%s12 + $0x420] sm:$0xff]
  %v4905 = vld [vmem:[%s12 + $0x428] sm:$0xff]
  %v4906 = vld [vmem:[%s12 + $0x430] sm:$0xff]
  %v4907 = vld [vmem:[%s12 + $0x438] sm:$0xff]
  %v4908 = vld [vmem:[%s12 + $0x440] sm:$0xff]
  %v4909 = vld [vmem:[%s12 + $0x448] sm:$0xff]
  %v4910 = vld [vmem:[%s12 + $0x450] sm:$0xff]
  %v4911 = vld [vmem:[%s12 + $0x458] sm:$0xff]
  %v4912 = vld [vmem:[%s12 + $0x460] sm:$0xff]
  %v4913 = vld [vmem:[%s12 + $0x468] sm:$0xff]
  %v4914 = vld [vmem:[%s12 + $0x470] sm:$0xff]
  %v4915 = vld [vmem:[%s12 + $0x478] sm:$0xff]
  %v4916 = vld [vmem:[%s12 + $0x480] sm:$0xff]
  %v4917 = vld [vmem:[%s12 + $0x488] sm:$0xff]
  %v4918 = vld [vmem:[%s12 + $0x490] sm:$0xff]
  %v4919 = vld [vmem:[%s12 + $0x498] sm:$0xff]
  %v4920 = vld [vmem:[%s12 + $0x4a0] sm:$0xff]
  %v4921 = vld [vmem:[%s12 + $0x4a8] sm:$0xff]
  %v4922 = vld [vmem:[%s12 + $0x4b0] sm:$0xff]
  %v4923 = vld [vmem:[%s12 + $0x4b8] sm:$0xff]
  %v4924 = vld [vmem:[%s12 + $0x4c0] sm:$0xff]
  %v4925 = vld [vmem:[%s12 + $0x4c8] sm:$0xff]
  %v4926 = vld [vmem:[%s12 + $0x4d0] sm:$0xff]
  %v4927 = vld [vmem:[%s12 + $0x4d8] sm:$0xff]
  %v4928 = vld [vmem:[%s12 + $0x4e0] sm:$0xff]
  %v4929 = vld [vmem:[%s12 + $0x4e8] sm:$0xff]
  %v4930 = vld [vmem:[%s12 + $0x4f0] sm:$0xff]
  %v4931 = vld [vmem:[%s12 + $0x4f8] sm:$0xff]
  %v4933 = vperm.slane %v4899, 0
  %v4934 = vperm.slane %v4899, 1
  %4937 = vmatpush.msra.mxu0 %v4915
  %4938 = vmatpush.msra.mxu0 %v4914
  %4939 = vmatpush.msra.mxu0 %v4913
  %4940 = vmatpush.msra.mxu0 %v4912
  %4941 = vmatpush.msra.mxu0 %v4911
  %4942 = vmatpush.msra.mxu0 %v4910
  %4943 = vmatpush.msra.mxu0 %v4909
  %4944 = vmatpush.msra.mxu0 %v4908
  %4945 = vmatpush.msra.mxu0 %v4907
  %4946 = vmatpush.msra.mxu0 %v4906
  %4947 = vmatpush.msra.mxu0 %v4905
  %4948 = vmatpush.msra.mxu0 %v4904
  %4949 = vmatpush.msra.mxu0 %v4903
  %4950 = vmatpush.msra.mxu0 %v4902
  %4951 = vmatpush.msra.mxu0 %v4901
  %4952 = vmatpush.msra.mxu0 %v4900
  %4953 = vmatmul.f32.gmra.mxu0 %v4933
  %v4954 = vpop.f32.mrf.mxu0
  %v4955 = vadd.f32 0.0, %v4954
  %4956 = vdwg.mxu0
  %4957 = vmatpush.msra.mxu0 %v4931
  %4958 = vmatpush.msra.mxu0 %v4930
  %4959 = vmatpush.msra.mxu0 %v4929
  %4960 = vmatpush.msra.mxu0 %v4928
  %4961 = vmatpush.msra.mxu0 %v4927
  %4962 = vmatpush.msra.mxu0 %v4926
  %4963 = vmatpush.msra.mxu0 %v4925
  %4964 = vmatpush.msra.mxu0 %v4924
  %4965 = vmatpush.msra.mxu0 %v4923
  %4966 = vmatpush.msra.mxu0 %v4922
  %4967 = vmatpush.msra.mxu0 %v4921
  %4968 = vmatpush.msra.mxu0 %v4920
  %4969 = vmatpush.msra.mxu0 %v4919
  %4970 = vmatpush.msra.mxu0 %v4918
  %4971 = vmatpush.msra.mxu0 %v4917
  %4972 = vmatpush.msra.mxu0 %v4916
  %4973 = vmatmul.f32.gmra.mxu0 %v4934
  %v4974 = vpop.f32.mrf.mxu0
  %v4975 = vadd.f32 %v4955, %v4974
  %4976 = vdwg.mxu0
  %v4977 = vadd.f32 %v4898, %v4975
  %v4978 = vld [vmem:[%s2521] ss:$8 sm:$0x3]
  %v4979 = vld [vmem:[%s12 + $0x500] sm:$0xff]
  %v4980 = vld [vmem:[%s12 + $0x508] sm:$0xff]
  %v4981 = vld [vmem:[%s12 + $0x510] sm:$0xff]
  %v4982 = vld [vmem:[%s12 + $0x518] sm:$0xff]
  %v4983 = vld [vmem:[%s12 + $0x520] sm:$0xff]
  %v4984 = vld [vmem:[%s12 + $0x528] sm:$0xff]
  %v4985 = vld [vmem:[%s12 + $0x530] sm:$0xff]
  %v4986 = vld [vmem:[%s12 + $0x538] sm:$0xff]
  %v4987 = vld [vmem:[%s12 + $0x540] sm:$0xff]
  %v4988 = vld [vmem:[%s12 + $0x548] sm:$0xff]
  %v4989 = vld [vmem:[%s12 + $0x550] sm:$0xff]
  %v4990 = vld [vmem:[%s12 + $0x558] sm:$0xff]
  %v4991 = vld [vmem:[%s12 + $0x560] sm:$0xff]
  %v4992 = vld [vmem:[%s12 + $0x568] sm:$0xff]
  %v4993 = vld [vmem:[%s12 + $0x570] sm:$0xff]
  %v4994 = vld [vmem:[%s12 + $0x578] sm:$0xff]
  %v4995 = vld [vmem:[%s12 + $0x580] sm:$0xff]
  %v4996 = vld [vmem:[%s12 + $0x588] sm:$0xff]
  %v4997 = vld [vmem:[%s12 + $0x590] sm:$0xff]
  %v4998 = vld [vmem:[%s12 + $0x598] sm:$0xff]
  %v4999 = vld [vmem:[%s12 + $0x5a0] sm:$0xff]
  %v5000 = vld [vmem:[%s12 + $0x5a8] sm:$0xff]
  %v5001 = vld [vmem:[%s12 + $0x5b0] sm:$0xff]
  %v5002 = vld [vmem:[%s12 + $0x5b8] sm:$0xff]
  %v5003 = vld [vmem:[%s12 + $0x5c0] sm:$0xff]
  %v5004 = vld [vmem:[%s12 + $0x5c8] sm:$0xff]
  %v5005 = vld [vmem:[%s12 + $0x5d0] sm:$0xff]
  %v5006 = vld [vmem:[%s12 + $0x5d8] sm:$0xff]
  %v5007 = vld [vmem:[%s12 + $0x5e0] sm:$0xff]
  %v5008 = vld [vmem:[%s12 + $0x5e8] sm:$0xff]
  %v5009 = vld [vmem:[%s12 + $0x5f0] sm:$0xff]
  %v5010 = vld [vmem:[%s12 + $0x5f8] sm:$0xff]
  %v5012 = vperm.slane %v4978, 0
  %v5013 = vperm.slane %v4978, 1
  %5016 = vmatpush.msra.mxu0 %v4994
  %5017 = vmatpush.msra.mxu0 %v4993
  %5018 = vmatpush.msra.mxu0 %v4992
  %5019 = vmatpush.msra.mxu0 %v4991
  %5020 = vmatpush.msra.mxu0 %v4990
  %5021 = vmatpush.msra.mxu0 %v4989
  %5022 = vmatpush.msra.mxu0 %v4988
  %5023 = vmatpush.msra.mxu0 %v4987
  %5024 = vmatpush.msra.mxu0 %v4986
  %5025 = vmatpush.msra.mxu0 %v4985
  %5026 = vmatpush.msra.mxu0 %v4984
  %5027 = vmatpush.msra.mxu0 %v4983
  %5028 = vmatpush.msra.mxu0 %v4982
  %5029 = vmatpush.msra.mxu0 %v4981
  %5030 = vmatpush.msra.mxu0 %v4980
  %5031 = vmatpush.msra.mxu0 %v4979
  %5032 = vmatmul.f32.gmra.mxu0 %v5012
  %v5033 = vpop.f32.mrf.mxu0
  %v5034 = vadd.f32 0.0, %v5033
  %5035 = vdwg.mxu0
  %5036 = vmatpush.msra.mxu0 %v5010
  %5037 = vmatpush.msra.mxu0 %v5009
  %5038 = vmatpush.msra.mxu0 %v5008
  %5039 = vmatpush.msra.mxu0 %v5007
  %5040 = vmatpush.msra.mxu0 %v5006
  %5041 = vmatpush.msra.mxu0 %v5005
  %5042 = vmatpush.msra.mxu0 %v5004
  %5043 = vmatpush.msra.mxu0 %v5003
  %5044 = vmatpush.msra.mxu0 %v5002
  %5045 = vmatpush.msra.mxu0 %v5001
  %5046 = vmatpush.msra.mxu0 %v5000
  %5047 = vmatpush.msra.mxu0 %v4999
  %5048 = vmatpush.msra.mxu0 %v4998
  %5049 = vmatpush.msra.mxu0 %v4997
  %5050 = vmatpush.msra.mxu0 %v4996
  %5051 = vmatpush.msra.mxu0 %v4995
  %5052 = vmatmul.f32.gmra.mxu0 %v5013
  %v5053 = vpop.f32.mrf.mxu0
  %v5054 = vadd.f32 %v5034, %v5053
  %5055 = vdwg.mxu0
  %v5056 = vadd.f32 %v4977, %v5054
  %v5057 = vld [vmem:[%s2601] ss:$8 sm:$0x3]
  %v5058 = vld [vmem:[%s12 + $0x600] sm:$0xff]
  %v5059 = vld [vmem:[%s12 + $0x608] sm:$0xff]
  %v5060 = vld [vmem:[%s12 + $0x610] sm:$0xff]
  %v5061 = vld [vmem:[%s12 + $0x618] sm:$0xff]
  %v5062 = vld [vmem:[%s12 + $0x620] sm:$0xff]
  %v5063 = vld [vmem:[%s12 + $0x628] sm:$0xff]
  %v5064 = vld [vmem:[%s12 + $0x630] sm:$0xff]
  %v5065 = vld [vmem:[%s12 + $0x638] sm:$0xff]
  %v5066 = vld [vmem:[%s12 + $0x640] sm:$0xff]
  %v5067 = vld [vmem:[%s12 + $0x648] sm:$0xff]
  %v5068 = vld [vmem:[%s12 + $0x650] sm:$0xff]
  %v5069 = vld [vmem:[%s12 + $0x658] sm:$0xff]
  %v5070 = vld [vmem:[%s12 + $0x660] sm:$0xff]
  %v5071 = vld [vmem:[%s12 + $0x668] sm:$0xff]
  %v5072 = vld [vmem:[%s12 + $0x670] sm:$0xff]
  %v5073 = vld [vmem:[%s12 + $0x678] sm:$0xff]
  %v5074 = vld [vmem:[%s12 + $0x680] sm:$0xff]
  %v5075 = vld [vmem:[%s12 + $0x688] sm:$0xff]
  %v5076 = vld [vmem:[%s12 + $0x690] sm:$0xff]
  %v5077 = vld [vmem:[%s12 + $0x698] sm:$0xff]
  %v5078 = vld [vmem:[%s12 + $0x6a0] sm:$0xff]
  %v5079 = vld [vmem:[%s12 + $0x6a8] sm:$0xff]
  %v5080 = vld [vmem:[%s12 + $0x6b0] sm:$0xff]
  %v5081 = vld [vmem:[%s12 + $0x6b8] sm:$0xff]
  %v5082 = vld [vmem:[%s12 + $0x6c0] sm:$0xff]
  %v5083 = vld [vmem:[%s12 + $0x6c8] sm:$0xff]
  %v5084 = vld [vmem:[%s12 + $0x6d0] sm:$0xff]
  %v5085 = vld [vmem:[%s12 + $0x6d8] sm:$0xff]
  %v5086 = vld [vmem:[%s12 + $0x6e0] sm:$0xff]
  %v5087 = vld [vmem:[%s12 + $0x6e8] sm:$0xff]
  %v5088 = vld [vmem:[%s12 + $0x6f0] sm:$0xff]
  %v5089 = vld [vmem:[%s12 + $0x6f8] sm:$0xff]
  %v5091 = vperm.slane %v5057, 0
  %v5092 = vperm.slane %v5057, 1
  %5095 = vmatpush.msra.mxu0 %v5073
  %5096 = vmatpush.msra.mxu0 %v5072
  %5097 = vmatpush.msra.mxu0 %v5071
  %5098 = vmatpush.msra.mxu0 %v5070
  %5099 = vmatpush.msra.mxu0 %v5069
  %5100 = vmatpush.msra.mxu0 %v5068
  %5101 = vmatpush.msra.mxu0 %v5067
  %5102 = vmatpush.msra.mxu0 %v5066
  %5103 = vmatpush.msra.mxu0 %v5065
  %5104 = vmatpush.msra.mxu0 %v5064
  %5105 = vmatpush.msra.mxu0 %v5063
  %5106 = vmatpush.msra.mxu0 %v5062
  %5107 = vmatpush.msra.mxu0 %v5061
  %5108 = vmatpush.msra.mxu0 %v5060
  %5109 = vmatpush.msra.mxu0 %v5059
  %5110 = vmatpush.msra.mxu0 %v5058
  %5111 = vmatmul.f32.gmra.mxu0 %v5091
  %v5112 = vpop.f32.mrf.mxu0
  %v5113 = vadd.f32 0.0, %v5112
  %5114 = vdwg.mxu0
  %5115 = vmatpush.msra.mxu0 %v5089
  %5116 = vmatpush.msra.mxu0 %v5088
  %5117 = vmatpush.msra.mxu0 %v5087
  %5118 = vmatpush.msra.mxu0 %v5086
  %5119 = vmatpush.msra.mxu0 %v5085
  %5120 = vmatpush.msra.mxu0 %v5084
  %5121 = vmatpush.msra.mxu0 %v5083
  %5122 = vmatpush.msra.mxu0 %v5082
  %5123 = vmatpush.msra.mxu0 %v5081
  %5124 = vmatpush.msra.mxu0 %v5080
  %5125 = vmatpush.msra.mxu0 %v5079
  %5126 = vmatpush.msra.mxu0 %v5078
  %5127 = vmatpush.msra.mxu0 %v5077
  %5128 = vmatpush.msra.mxu0 %v5076
  %5129 = vmatpush.msra.mxu0 %v5075
  %5130 = vmatpush.msra.mxu0 %v5074
  %5131 = vmatmul.f32.gmra.mxu0 %v5092
  %v5132 = vpop.f32.mrf.mxu0
  %v5133 = vadd.f32 %v5113, %v5132
  %5134 = vdwg.mxu0
  %v5135 = vadd.f32 %v5056, %v5133
  %v5136 = vld [vmem:[%s2681] ss:$8 sm:$0x3]
  %v5137 = vld [vmem:[%s12 + $0x700] sm:$0xff]
  %v5138 = vld [vmem:[%s12 + $0x708] sm:$0xff]
  %v5139 = vld [vmem:[%s12 + $0x710] sm:$0xff]
  %v5140 = vld [vmem:[%s12 + $0x718] sm:$0xff]
  %v5141 = vld [vmem:[%s12 + $0x720] sm:$0xff]
  %v5142 = vld [vmem:[%s12 + $0x728] sm:$0xff]
  %v5143 = vld [vmem:[%s12 + $0x730] sm:$0xff]
  %v5144 = vld [vmem:[%s12 + $0x738] sm:$0xff]
  %v5145 = vld [vmem:[%s12 + $0x740] sm:$0xff]
  %v5146 = vld [vmem:[%s12 + $0x748] sm:$0xff]
  %v5147 = vld [vmem:[%s12 + $0x750] sm:$0xff]
  %v5148 = vld [vmem:[%s12 + $0x758] sm:$0xff]
  %v5149 = vld [vmem:[%s12 + $0x760] sm:$0xff]
  %v5150 = vld [vmem:[%s12 + $0x768] sm:$0xff]
  %v5151 = vld [vmem:[%s12 + $0x770] sm:$0xff]
  %v5152 = vld [vmem:[%s12 + $0x778] sm:$0xff]
  %v5153 = vld [vmem:[%s12 + $0x780] sm:$0xff]
  %v5154 = vld [vmem:[%s12 + $0x788] sm:$0xff]
  %v5155 = vld [vmem:[%s12 + $0x790] sm:$0xff]
  %v5156 = vld [vmem:[%s12 + $0x798] sm:$0xff]
  %v5157 = vld [vmem:[%s12 + $0x7a0] sm:$0xff]
  %v5158 = vld [vmem:[%s12 + $0x7a8] sm:$0xff]
  %v5159 = vld [vmem:[%s12 + $0x7b0] sm:$0xff]
  %v5160 = vld [vmem:[%s12 + $0x7b8] sm:$0xff]
  %v5161 = vld [vmem:[%s12 + $0x7c0] sm:$0xff]
  %v5162 = vld [vmem:[%s12 + $0x7c8] sm:$0xff]
  %v5163 = vld [vmem:[%s12 + $0x7d0] sm:$0xff]
  %v5164 = vld [vmem:[%s12 + $0x7d8] sm:$0xff]
  %v5165 = vld [vmem:[%s12 + $0x7e0] sm:$0xff]
  %v5166 = vld [vmem:[%s12 + $0x7e8] sm:$0xff]
  %v5167 = vld [vmem:[%s12 + $0x7f0] sm:$0xff]
  %v5168 = vld [vmem:[%s12 + $0x7f8] sm:$0xff]
  %v5170 = vperm.slane %v5136, 0
  %v5171 = vperm.slane %v5136, 1
  %5174 = vmatpush.msra.mxu0 %v5152
  %5175 = vmatpush.msra.mxu0 %v5151
  %5176 = vmatpush.msra.mxu0 %v5150
  %5177 = vmatpush.msra.mxu0 %v5149
  %5178 = vmatpush.msra.mxu0 %v5148
  %5179 = vmatpush.msra.mxu0 %v5147
  %5180 = vmatpush.msra.mxu0 %v5146
  %5181 = vmatpush.msra.mxu0 %v5145
  %5182 = vmatpush.msra.mxu0 %v5144
  %5183 = vmatpush.msra.mxu0 %v5143
  %5184 = vmatpush.msra.mxu0 %v5142
  %5185 = vmatpush.msra.mxu0 %v5141
  %5186 = vmatpush.msra.mxu0 %v5140
  %5187 = vmatpush.msra.mxu0 %v5139
  %5188 = vmatpush.msra.mxu0 %v5138
  %5189 = vmatpush.msra.mxu0 %v5137
  %5190 = vmatmul.f32.gmra.mxu0 %v5170
  %v5191 = vpop.f32.mrf.mxu0
  %v5192 = vadd.f32 0.0, %v5191
  %5193 = vdwg.mxu0
  %5194 = vmatpush.msra.mxu0 %v5168
  %5195 = vmatpush.msra.mxu0 %v5167
  %5196 = vmatpush.msra.mxu0 %v5166
  %5197 = vmatpush.msra.mxu0 %v5165
  %5198 = vmatpush.msra.mxu0 %v5164
  %5199 = vmatpush.msra.mxu0 %v5163
  %5200 = vmatpush.msra.mxu0 %v5162
  %5201 = vmatpush.msra.mxu0 %v5161
  %5202 = vmatpush.msra.mxu0 %v5160
  %5203 = vmatpush.msra.mxu0 %v5159
  %5204 = vmatpush.msra.mxu0 %v5158
  %5205 = vmatpush.msra.mxu0 %v5157
  %5206 = vmatpush.msra.mxu0 %v5156
  %5207 = vmatpush.msra.mxu0 %v5155
  %5208 = vmatpush.msra.mxu0 %v5154
  %5209 = vmatpush.msra.mxu0 %v5153
  %5210 = vmatmul.f32.gmra.mxu0 %v5171
  %v5211 = vpop.f32.mrf.mxu0
  %v5212 = vadd.f32 %v5192, %v5211
  %5213 = vdwg.mxu0
  %v5214 = vadd.f32 %v5135, %v5212
  %5215 = vst.msk [vmem:[#allocation6 + $0x1] sm:$0x1] %vm2761, %v5214
  %v5216 = vld [vmem:[#allocation6] sm:$0xff]
  %v5217 = vsel %vm88, %v5216, 0.0
  %5218 = vadd.xlane.f32.xlu0 %v5217
  %v5219 = vpop.xlane.xlu0 %5218
  %v5220 = vrcp.pop 32.0
  %v5221 = vmul.f32 32.0, %v5220
  %v5222 = vsub.f32 1.0, %v5221
  %v5223 = vmul.f32 %v5220, %v5222
  %v5224 = vadd.f32 %v5220, %v5223
  %vm5225 = vweird.f32 %v5220
  %v5226 = vsel %vm5225, %v5220, %v5224
  %v5227 = vmul.f32 %v5219, %v5226
  %v5228 = vsub.f32 %v5216, %v5227
  %v5229 = vmul.f32 %v5228, %v5228
  %v5230 = vsel %vm88, %v5229, 0.0
  %5231 = vadd.xlane.f32.xlu0 %v5230
  %v5232 = vpop.xlane.xlu0 %5231
  %v5233 = vmul.f32 %v5232, %v5226
  %v5234 = vadd.f32 %v5233, 1e-05
  %v5235 = vrsqrt.pop %v5234
  %v5236 = vmul.f32 %v5235, %v5234
  %v5237 = vmul.f32 %v5236, %v5235
  %v5238 = vmul.f32 0.5, %v5237
  %v5239 = vsub.f32 1.5, %v5238
  %v5240 = vmul.f32 %v5235, %v5239
  %vm5241 = vweird.f32 %v5234
  %vm5242 = vweird.f32 %v5235
  %vm5243 = vmor %vm5241, %vm5242
  %v5244 = vsel %vm5243, %v5235, %v5240
  %v5245 = vmul.f32 %v5228, %v5244
  %v5246 = vld [vmem:[%s14] sm:$0x1]
  %v5248 = vperm.slane %v5246, 0
  %v5250 = vmul.f32 %v5245, %v5248
  %v5251 = vld [vmem:[%s15] sm:$0x1]
  %v5253 = vperm.slane %v5251, 0
  %v5255 = vadd.f32 %v5250, %v5253
  %v5256 = vtanh.pop %v5255
  %v5257 = vld [vmem:[%s16] sm:$0xff]
  %v5258 = vld [vmem:[%s16 + $0x8] sm:$0xff]
  %v5259 = vld [vmem:[%s16 + $0x10] sm:$0xff]
  %v5260 = vld [vmem:[%s16 + $0x18] sm:$0xff]
  %v5261 = vld [vmem:[%s17] sm:$0x1]
  %v5263 = vperm.slane %v5261, 0
  %v5266 = vsel %vm88, %v5256, 0
  %5268 = vmatpush.msra.mxu0 0.0
  %5269 = vmatpush.msra.mxu0 0.0
  %5270 = vmatpush.msra.mxu0 0.0
  %5271 = vmatpush.msra.mxu0 0.0
  %5272 = vmatpush.msra.mxu0 0.0
  %5273 = vmatpush.msra.mxu0 0.0
  %5274 = vmatpush.msra.mxu0 0.0
  %5275 = vmatpush.msra.mxu0 0.0
  %5276 = vmatpush.msra.mxu0 0.0
  %5277 = vmatpush.msra.mxu0 0.0
  %5278 = vmatpush.msra.mxu0 0.0
  %5279 = vmatpush.msra.mxu0 0.0
  %5280 = vmatpush.msra.mxu0 %v5260
  %5281 = vmatpush.msra.mxu0 %v5259
  %5282 = vmatpush.msra.mxu0 %v5258
  %5283 = vmatpush.msra.mxu0 %v5257
  %5284 = vmatmul.f32.gmra.mxu0 %v5266
  %v5285 = vpop.f32.mrf.mxu0
  %v5286 = vadd.f32 %v5263, %v5285
  %5287 = vdwg.mxu0
  %v5288 = vmax.f32 %v5286, 0.0
  %v5289 = vld [vmem:[%s18] sm:$0xff]
  %v5290 = vld [vmem:[%s18 + $0x8] sm:$0xff]
  %v5291 = vld [vmem:[%s18 + $0x10] sm:$0xff]
  %v5292 = vld [vmem:[%s18 + $0x18] sm:$0xff]
  %v5293 = vld [vmem:[%s19] sm:$0x1]
  %v5295 = vperm.slane %v5293, 0
  %v5298 = vsel %vm88, %v5288, 0
  %5300 = vmatpush.msra.mxu0 0.0
  %5301 = vmatpush.msra.mxu0 0.0
  %5302 = vmatpush.msra.mxu0 0.0
  %5303 = vmatpush.msra.mxu0 0.0
  %5304 = vmatpush.msra.mxu0 0.0
  %5305 = vmatpush.msra.mxu0 0.0
  %5306 = vmatpush.msra.mxu0 0.0
  %5307 = vmatpush.msra.mxu0 0.0
  %5308 = vmatpush.msra.mxu0 0.0
  %5309 = vmatpush.msra.mxu0 0.0
  %5310 = vmatpush.msra.mxu0 0.0
  %5311 = vmatpush.msra.mxu0 0.0
  %5312 = vmatpush.msra.mxu0 %v5292
  %5313 = vmatpush.msra.mxu0 %v5291
  %5314 = vmatpush.msra.mxu0 %v5290
  %5315 = vmatpush.msra.mxu0 %v5289
  %5316 = vmatmul.f32.gmra.mxu0 %v5298
  %v5317 = vpop.f32.mrf.mxu0
  %v5318 = vadd.f32 %v5295, %v5317
  %5319 = vdwg.mxu0
  %v5320 = vmax.f32 %v5318, 0.0
  %v5321 = vld [vmem:[%s20] sm:$0xff]
  %v5322 = vld [vmem:[%s20 + $0x8] sm:$0xff]
  %v5323 = vld [vmem:[%s20 + $0x10] sm:$0xff]
  %v5324 = vld [vmem:[%s20 + $0x18] sm:$0xff]
  %v5325 = vld [vmem:[%s21] sm:$0x1]
  %v5327 = vperm.slane %v5325, 0
  %v5330 = vsel %vm88, %v5320, 0
  %5332 = vmatpush.msra.mxu0 0.0
  %5333 = vmatpush.msra.mxu0 0.0
  %5334 = vmatpush.msra.mxu0 0.0
  %5335 = vmatpush.msra.mxu0 0.0
  %5336 = vmatpush.msra.mxu0 0.0
  %5337 = vmatpush.msra.mxu0 0.0
  %5338 = vmatpush.msra.mxu0 0.0
  %5339 = vmatpush.msra.mxu0 0.0
  %5340 = vmatpush.msra.mxu0 0.0
  %5341 = vmatpush.msra.mxu0 0.0
  %5342 = vmatpush.msra.mxu0 0.0
  %5343 = vmatpush.msra.mxu0 0.0
  %5344 = vmatpush.msra.mxu0 %v5324
  %5345 = vmatpush.msra.mxu0 %v5323
  %5346 = vmatpush.msra.mxu0 %v5322
  %5347 = vmatpush.msra.mxu0 %v5321
  %5348 = vmatmul.f32.gmra.mxu0 %v5330
  %v5349 = vpop.f32.mrf.mxu0
  %v5350 = vadd.f32 %v5327, %v5349
  %5351 = vdwg.mxu0
  %v5352 = vld [vmem:[%s22] sm:$0xff]
  %v5353 = vld [vmem:[%s22 + $0x8] sm:$0xff]
  %v5354 = vld [vmem:[%s22 + $0x10] sm:$0xff]
  %v5355 = vld [vmem:[%s22 + $0x18] sm:$0xff]
  %v5356 = vld [vmem:[%s23] sm:$0x1]
  %v5358 = vperm.slane %v5356, 0
  %5360 = vmatpush.msra.mxu0 0.0
  %5361 = vmatpush.msra.mxu0 0.0
  %5362 = vmatpush.msra.mxu0 0.0
  %5363 = vmatpush.msra.mxu0 0.0
  %5364 = vmatpush.msra.mxu0 0.0
  %5365 = vmatpush.msra.mxu0 0.0
  %5366 = vmatpush.msra.mxu0 0.0
  %5367 = vmatpush.msra.mxu0 0.0
  %5368 = vmatpush.msra.mxu0 0.0
  %5369 = vmatpush.msra.mxu0 0.0
  %5370 = vmatpush.msra.mxu0 0.0
  %5371 = vmatpush.msra.mxu0 0.0
  %5372 = vmatpush.msra.mxu0 %v5355
  %5373 = vmatpush.msra.mxu0 %v5354
  %5374 = vmatpush.msra.mxu0 %v5353
  %5375 = vmatpush.msra.mxu0 %v5352
  %5376 = vmatmul.f32.gmra.mxu0 %v5330
  %v5377 = vpop.f32.mrf.mxu0
  %v5378 = vadd.f32 %v5358, %v5377
  %5379 = vdwg.mxu0
  %v5380 = vtanh.pop %v5378
  %v5381 = vadd.f32 %v5380, 1.0
  %v5382 = vmul.f32 %v5381, 6.0
  %v5383 = vadd.f32 %v5382, -10.0
  %v5384 = vld [vmem:[%s24] sm:$0xff]
  %v5385 = vmul.f32 %v5383, 1.442695
  %v5386 = vpow.pop %v5385
  %v5387 = vmul.f32 %v5384, %v5386
  %v5388 = vadd.f32 %v5350, %v5387
  %v5389 = vmul.f32 %v5384, %v5384
  %v5390 = vmul.f32 %v5389, -0.5
  %v5391 = vsub.f32 %v5390, %v5383
  %v5392 = vsel %vm170, %v5391, 0.0
  %5393 = vadd.xlane.f32.xlu0 %v5392
  %v5394 = vpop.xlane.xlu0 %5393
  %v5395 = vsub.f32 %v5394, 3.675754
  %v5396 = vtanh.pop %v5350
  %v5397 = vtanh.pop %v5388
  %v5398 = vmul.f32 %v5397, %v5397
  %v5399 = vsub.f32 1.0, %v5398
  %v5400 = vmax.f32 %v5399, 0.0
  %v5401 = vadd.f32 %v5400, 1e-06
  %v5402 = vlog2.pop %v5401
  %v5403 = vmul.f32 %v5402, 0.6931472
  %v5404 = vsel %vm170, %v5403, 0.0
  %5405 = vadd.xlane.f32.xlu0 %v5404
  %v5406 = vpop.xlane.xlu0 %5405
  %v5407 = vsub.f32 %v5395, %v5406
  %5408 = vst.msk [vmem:[%s25] sm:$0xff] %vm170, %v5396
  %5410 = vrot.lane.b32.xlu0 %v5397, 4
  %v5411 = vpop.permute.xlu0 %5410
  %vm5413 = vcmask 64544
  %5414 = vst.msk [vmem:[%s25] sm:$0xff] %vm5413, %v5411
  %5416 = vrot.lane.b32.xlu0 %v5383, 8
  %v5417 = vpop.permute.xlu0 %5416
  %vm5419 = vcmask 97344
  %5420 = vst.msk [vmem:[%s25] sm:$0xff] %vm5419, %v5417
  %vm5421 = vcmask 105568
  %5422 = vst.msk [vmem:[%s25] sm:$0xff] %vm5421, %v5407
  // Predicated region
  $region102: #{sacae_actor_forward.1} parent=0 // pred_check
    _
  $region103: #{sacae_actor_forward.1} parent=0 // pred_check_branch
    %5424 = sbr.rel (0) target = $region105
  $region104: #{sacae_actor_forward.1} parent=0 // pred_region
    _
  $region105: #{sacae_actor_forward.1} parent=0 // pred_fallthru
    _
  // Predicated region
  $region106: #{sacae_actor_forward.1} parent=0 // pred_check
    _
  $region107: #{sacae_actor_forward.1} parent=0 // pred_check_branch
    %5426 = sbr.rel (0) target = $region109
  $region108: #{sacae_actor_forward.1} parent=0 // pred_region
    _
  $region109: #{sacae_actor_forward.1} parent=0 // pred_fallthru
    _

</llo_original>
